<compile_context>
chip_gen: v5e
topology: v5e:2x2
jax: 0.10.0
libtpu: 0.0.40
codegen_flags: <defaults>
</compile_context>

<pallas_src>
import functools

import jax
import jax.numpy as jnp
import numpy as np
from jax import lax
from jax.experimental import pallas as pl
from jax.experimental.pallas import tpu as pltpu


def _round_up(x, m):
    return ((x + m - 1) // m) * m


# ---------------------------------------------------------------------------
# Fused kernel: per (batch n, output-row tile i) compute
#   out[n, i*th:(i+1)*th, :, :] =
#       sum_{kh,kw} Xr_patch(kh,kw) @ W1[kh,kw] + Xi_patch(kh,kw) @ W2[kh,kw] + bias
# Patches are sliced from a row tile (+ halo) of the dilated/padded NHWC input in
# VMEM -- nothing patch-shaped ever hits HBM.
# ---------------------------------------------------------------------------
def _cconvt_kernel(xr_ref, xrh_ref, xi_ref, xih_ref, w1_ref, w2_ref, b_ref, o_ref,
                   *, ksize, dil, row_tile, w_out, halo_rows):
    if halo_rows > 0:
        xr = jnp.concatenate([xr_ref[0], xrh_ref[0]], axis=0)
        xi = jnp.concatenate([xi_ref[0], xih_ref[0]], axis=0)
    else:
        xr = xr_ref[0]
        xi = xi_ref[0]

    w1 = w1_ref[...]                      # (K, K, C_pad, 2*C_out), small
    w2 = w2_ref[...]
    c_in = xr.shape[-1]
    n_cols = o_ref.shape[-1]              # 2 * C_out
    m_rows = row_tile * w_out

    acc = jnp.zeros((m_rows, n_cols), jnp.float32)
    for kh in range(ksize):
        r0 = kh * dil
        xr_rows = xr[r0:r0 + row_tile]
        xi_rows = xi[r0:r0 + row_tile]
        for kw in range(ksize):
            c0 = kw * dil
            pr = xr_rows[:, c0:c0 + w_out, :].reshape(m_rows, c_in)
            pi = xi_rows[:, c0:c0 + w_out, :].reshape(m_rows, c_in)
            # Fused complex contribution of this (kh, kw) tap: single value-level
            # accumulation (no VMEM scratch read-modify-write).
            acc = acc + (
                jnp.dot(pr, w1[kh, kw], preferred_element_type=jnp.float32)
                + jnp.dot(pi, w2[kh, kw], preferred_element_type=jnp.float32)
            )

    acc = acc + b_ref[...].astype(jnp.float32)
    o_ref[...] = acc.reshape(1, row_tile, w_out, n_cols).astype(o_ref.dtype)


def _choose_row_tile(h_out, halo_rows, n_batch, wp, c_in, n_cols, w_out, itemsize,
                     budget_bytes=12 * 1024 * 1024):
    """Largest output-row tile that (a) is a multiple of the halo depth, (b) fits a
    conservative VMEM budget (double-buffered blocks + in-kernel temporaries),
    (c) prefers dividing h_out exactly (no padded output rows / output slice pass)
    and (d) keeps >= 2 parallel grid steps so both v7x TensorCores get work."""
    step = max(halo_rows, 1)
    per_row = itemsize * (
        4 * wp * c_in          # 2 inputs x double buffering
        + 2 * wp * c_in        # in-kernel window copies (concat)
        + 2 * w_out * n_cols   # output block, double buffered
        + 2 * w_out * c_in     # patch temporaries
    )
    th_max = max(step, budget_bytes // max(per_row, 1))
    h_ceil = min(h_out, th_max)

    tile = None
    for t in range(h_ceil, step - 1, -1):
        if t % step == 0 and h_out % t == 0:
            tile = t
            break
    if tile is None:
        tile = max(step, (h_ceil // step) * step)

    n_tiles = -(-h_out // tile)
    if n_batch * n_tiles < 2:              # megacore: try to expose >= 2 grid steps
        halved = (tile // 2 // step) * step
        if halved >= step:
            tile = halved
    return tile


def complex_conv_transpose2d(x, w_re, b_re, w_im, b_im, *, stride=1, padding=0,
                             output_padding=0, dilation=1, row_tile=None,
                             compute_dtype=None):
    """Equivalent of ComplexConvTranspose2d.forward (groups=1, bias=True).

    x: (N, C_in, H, W, 2); weights: (C_in, C_out, K, K); biases: (C_out,).
    Returns (N, C_out, H_out, W_out, 2).
    """
    N, C_in, H, W, two = x.shape
    assert two == 2
    C_in_w, C_out, K, K2 = w_re.shape
    assert K == K2 and C_in_w == C_in and w_im.shape == w_re.shape
    assert b_re.shape == (C_out,) and b_im.shape == (C_out,)

    pad_lo = dilation * (K - 1) - padding
    assert pad_lo >= 0, "padding too large for this kernel-size/dilation"
    pad_hi = pad_lo + output_padding
    halo_rows = dilation * (K - 1)

    H_d = (H - 1) * stride + 1
    W_d = (W - 1) * stride + 1
    H_out = (H - 1) * stride - 2 * padding + dilation * (K - 1) + output_padding + 1
    W_out = (W - 1) * stride - 2 * padding + dilation * (K - 1) + output_padding + 1
    Wp = W_d + pad_lo + pad_hi            # == W_out + halo_rows

    out_dtype = x.dtype
    comp_dtype = out_dtype if compute_dtype is None else compute_dtype
    itemsize = jnp.dtype(comp_dtype).itemsize

    C_pad = _round_up(C_in, 8)            # keep the MXU contraction dim >= 8
    n_cols = 2 * C_out
    hb = max(halo_rows, 1)

    if row_tile is None:
        th = _choose_row_tile(H_out, halo_rows, N, Wp, C_pad, n_cols, W_out, itemsize)
    else:
        th = int(row_tile)
        assert th >= 1 and (halo_rows == 0 or th % halo_rows == 0), \
            "row_tile must be a positive multiple of dilation*(K-1)"
    nH = -(-H_out // th)
    H_out_pad = nH * th
    # One extra (never-read) zero row tile keeps every BlockSpec dim exactly
    # divisible and gives the last tile's halo somewhere valid to point.
    H_store = (nH + 1) * th

    # --- one fused pad per input: stride dilation + spatial padding + channel ---
    # --- padding + row-tile padding, directly in NHWC (single HBM write pass). ---
    x_nhwc = jnp.transpose(x, (0, 2, 3, 4, 1))            # (N, H, W, 2, C_in)
    zero = jnp.zeros((), out_dtype)
    pad_cfg = (
        (0, 0, 0),
        (pad_lo, H_store - pad_lo - H_d, stride - 1),
        (pad_lo, Wp - pad_lo - W_d, stride - 1),
        (0, C_pad - C_in, 0),
    )
    xr_pad = lax.pad(x_nhwc[..., 0, :], zero, pad_cfg)    # (N, H_store, Wp, C_pad)
    xi_pad = lax.pad(x_nhwc[..., 1, :], zero, pad_cfg)
    if comp_dtype != out_dtype:
        xr_pad = xr_pad.astype(comp_dtype)
        xi_pad = xi_pad.astype(comp_dtype)

    # --- fused complex weights / bias ---
    # real = Pr@Wre - Pi@Wim + (b_re - b_im);  imag = Pr@Wim + Pi@Wre + (b_re + b_im)
    w_re_t = jnp.flip(w_re, axis=(2, 3)).transpose(2, 3, 0, 1)   # (K, K, C_in, C_out)
    w_im_t = jnp.flip(w_im, axis=(2, 3)).transpose(2, 3, 0, 1)
    w1 = jnp.concatenate([w_re_t, w_im_t], axis=-1)              # multiplies P_r
    w2 = jnp.concatenate([-w_im_t, w_re_t], axis=-1)             # multiplies P_i
    if C_pad != C_in:
        cpad = ((0, 0), (0, 0), (0, C_pad - C_in), (0, 0))
        w1 = jnp.pad(w1, cpad)
        w2 = jnp.pad(w2, cpad)
    w1 = w1.astype(comp_dtype)
    w2 = w2.astype(comp_dtype)
    bias2 = jnp.concatenate([b_re - b_im, b_re + b_im]).reshape(1, n_cols)
    bias2 = bias2.astype(jnp.float32)

    kernel = functools.partial(
        _cconvt_kernel, ksize=K, dil=dilation, row_tile=th, w_out=W_out,
        halo_rows=halo_rows)

    halo_idx = th // hb
    in_specs = [
        pl.BlockSpec((1, th, Wp, C_pad), lambda n, i: (n, i, 0, 0)),
        pl.BlockSpec((1, hb, Wp, C_pad), lambda n, i: (n, (i + 1) * halo_idx, 0, 0)),
        pl.BlockSpec((1, th, Wp, C_pad), lambda n, i: (n, i, 0, 0)),
        pl.BlockSpec((1, hb, Wp, C_pad), lambda n, i: (n, (i + 1) * halo_idx, 0, 0)),
        pl.BlockSpec((K, K, C_pad, n_cols), lambda n, i: (0, 0, 0, 0)),
        pl.BlockSpec((K, K, C_pad, n_cols), lambda n, i: (0, 0, 0, 0)),
        pl.BlockSpec((1, n_cols), lambda n, i: (0, 0)),
    ]
    out_specs = pl.BlockSpec((1, th, W_out, n_cols), lambda n, i: (n, i, 0, 0))

    out_arr = pl.pallas_call(
        kernel,
        out_shape=jax.ShapeDtypeStruct((N, H_out_pad, W_out, n_cols), out_dtype),
        grid_spec=pltpu.PrefetchScalarGridSpec(
            num_scalar_prefetch=0,
            grid=(N, nH),
            in_specs=in_specs,
            out_specs=out_specs,
        ),
        compiler_params=pltpu.CompilerParams(
            dimension_semantics=("parallel", "parallel"),
            vmem_limit_bytes=32 * 1024 * 1024,
        ),
    )(xr_pad, xr_pad, xi_pad, xi_pad, w1, w2, bias2)

    if H_out_pad != H_out:
        out_arr = out_arr[:, :H_out]
    out = out_arr.reshape(N, H_out, W_out, 2, C_out)
    return jnp.transpose(out, (0, 4, 1, 2, 3))   # (N, C_out, H_out, W_out, 2)


# ---------------------------------------------------------------------------
# Pure-numpy reference (direct transposed-conv definition) for verification
# ---------------------------------------------------------------------------
def _tconv_ref_np(x, w, b, stride, padding, output_padding, dilation):
    N, C_in, H, W = x.shape
    _, C_out, K1, K2 = w.shape
    H_out = (H - 1) * stride - 2 * padding + dilation * (K1 - 1) + output_padding + 1
    W_out = (W - 1) * stride - 2 * padding + dilation * (K2 - 1) + output_padding + 1
    out = np.zeros((N, C_out, H_out, W_out), dtype=np.float64)
    for ih in range(H):
        for iw in range(W):
            for kh in range(K1):
                for kw in range(K2):
                    oh = ih * stride - padding + kh * dilation
                    ow = iw * stride - padding + kw * dilation
                    if 0 <= oh < H_out and 0 <= ow < W_out:
                        out[:, :, oh, ow] += np.einsum(
                            "ni,io->no", x[:, :, ih, iw], w[:, :, kh, kw]
                        )
    return out + b[None, :, None, None]


def _complex_ref_np(x, w_re, b_re, w_im, b_im, **kw):
    xr, xi = x[..., 0], x[..., 1]
    real = _tconv_ref_np(xr, w_re, b_re, **kw) - _tconv_ref_np(xi, w_im, b_im, **kw)
    imag = _tconv_ref_np(xi, w_re, b_re, **kw) + _tconv_ref_np(xr, w_im, b_im, **kw)
    return np.stack([real, imag], axis=-1)


def _run_case(key, *, N, C_in, C_out, H, W, K, stride, padding, output_padding,
              dilation, row_tile=None):
    k1, k2, k3, k4, k5 = jax.random.split(key, 5)
    x = jax.random.normal(k1, (N, C_in, H, W, 2), dtype=jnp.float32)
    w_re = jax.random.normal(k2, (C_in, C_out, K, K), dtype=jnp.float32) * 0.1
    w_im = jax.random.normal(k3, (C_in, C_out, K, K), dtype=jnp.float32) * 0.1
    b_re = jax.random.normal(k4, (C_out,), dtype=jnp.float32) * 0.1
    b_im = jax.random.normal(k5, (C_out,), dtype=jnp.float32) * 0.1

    fwd = jax.jit(functools.partial(
        complex_conv_transpose2d, stride=stride, padding=padding,
        output_padding=output_padding, dilation=dilation, row_tile=row_tile))
    out = jax.block_until_ready(fwd(x, w_re, b_re, w_im, b_im))

    H_out = (H - 1) * stride - 2 * padding + dilation * (K - 1) + output_padding + 1
    W_out = (W - 1) * stride - 2 * padding + dilation * (K - 1) + output_padding + 1
    assert out.shape == (N, C_out, H_out, W_out, 2), out.shape

    ref = _complex_ref_np(
        np.asarray(x, np.float64), np.asarray(w_re, np.float64),
        np.asarray(b_re, np.float64), np.asarray(w_im, np.float64),
        np.asarray(b_im, np.float64), stride=stride, padding=padding,
        output_padding=output_padding, dilation=dilation)
    np.testing.assert_allclose(np.asarray(out), ref, rtol=1e-4, atol=1e-4)


if __name__ == "__main__":
    root = jax.random.PRNGKey(0)
    key_a, key_b = jax.random.split(root, 2)

    # Main config: stride-2 upsampling transposed conv (single row tile + halo).
    _run_case(key_a, N=2, C_in=4, C_out=4, H=16, W=16, K=3,
              stride=2, padding=1, output_padding=1, dilation=1)

    # Multi-row-tile config: exercises the halo BlockSpec across tile boundaries.
    _run_case(key_b, N=1, C_in=4, C_out=4, H=8, W=8, K=3,
              stride=1, padding=1, output_padding=0, dilation=1, row_tile=4)

    print("KERNEL_OK")
</pallas_src>

<mosaic_0001>
module attributes {stable_mosaic.version = 11 : i64} {
  func.func @_cconvt_kernel(%arg0: i32, %arg1: i32, %arg2: memref<1x32x34x8xf32, #tpu.memory_space<vmem>>, %arg3: memref<1x2x34x8xf32, #tpu.memory_space<vmem>>, %arg4: memref<1x32x34x8xf32, #tpu.memory_space<vmem>>, %arg5: memref<1x2x34x8xf32, #tpu.memory_space<vmem>>, %arg6: memref<3x3x8x8xf32, #tpu.memory_space<vmem>>, %arg7: memref<3x3x8x8xf32, #tpu.memory_space<vmem>>, %arg8: memref<1x8xf32, #tpu.memory_space<vmem>>, %arg9: memref<1x32x32x8xf32, #tpu.memory_space<vmem>>) attributes {dimension_semantics = [#tpu.dimension_semantics<parallel>, #tpu.dimension_semantics<parallel>], iteration_bounds = array<i64: 2, 1>, scalar_prefetch = 0 : i64, scratch_operands = 0 : i64, tpu.core_type = #tpu.core_type<tc>, window_params = [{transform_indices = @transform_0, window_bounds = array<i64: 1, 32, 34, 8>}, {transform_indices = @transform_1, window_bounds = array<i64: 1, 2, 34, 8>}, {transform_indices = @transform_2, window_bounds = array<i64: 1, 32, 34, 8>}, {transform_indices = @transform_3, window_bounds = array<i64: 1, 2, 34, 8>}, {pipeline_mode = #tpu.pipeline_mode<synchronous>, transform_indices = @transform_4, window_bounds = array<i64: 3, 3, 8, 8>}, {pipeline_mode = #tpu.pipeline_mode<synchronous>, transform_indices = @transform_5, window_bounds = array<i64: 3, 3, 8, 8>}, {pipeline_mode = #tpu.pipeline_mode<synchronous>, transform_indices = @transform_6, window_bounds = array<i64: 1, 8>}, {transform_indices = @transform_7, window_bounds = array<i64: 1, 32, 32, 8>}]} {
    %c0 = arith.constant 0 : index
    %c0_0 = arith.constant 0 : index
    %c0_1 = arith.constant 0 : index
    %c0_2 = arith.constant 0 : index
    %0 = vector.load %arg2[%c0, %c0_0, %c0_1, %c0_2] : memref<1x32x34x8xf32, #tpu.memory_space<vmem>>, vector<1x32x34x8xf32>
    %1 = vector.shape_cast %0 : vector<1x32x34x8xf32> to vector<32x34x8xf32>
    %c0_3 = arith.constant 0 : index
    %c0_4 = arith.constant 0 : index
    %c0_5 = arith.constant 0 : index
    %c0_6 = arith.constant 0 : index
    %2 = vector.load %arg3[%c0_3, %c0_4, %c0_5, %c0_6] : memref<1x2x34x8xf32, #tpu.memory_space<vmem>>, vector<1x2x34x8xf32>
    %3 = vector.shape_cast %2 : vector<1x2x34x8xf32> to vector<2x34x8xf32>
    %4 = tpu.concatenate %1, %3 in 0 : vector<32x34x8xf32>, vector<2x34x8xf32> -> vector<34x34x8xf32>
    %c0_7 = arith.constant 0 : index
    %c0_8 = arith.constant 0 : index
    %c0_9 = arith.constant 0 : index
    %c0_10 = arith.constant 0 : index
    %5 = vector.load %arg4[%c0_7, %c0_8, %c0_9, %c0_10] : memref<1x32x34x8xf32, #tpu.memory_space<vmem>>, vector<1x32x34x8xf32>
    %6 = vector.shape_cast %5 : vector<1x32x34x8xf32> to vector<32x34x8xf32>
    %c0_11 = arith.constant 0 : index
    %c0_12 = arith.constant 0 : index
    %c0_13 = arith.constant 0 : index
    %c0_14 = arith.constant 0 : index
    %7 = vector.load %arg5[%c0_11, %c0_12, %c0_13, %c0_14] : memref<1x2x34x8xf32, #tpu.memory_space<vmem>>, vector<1x2x34x8xf32>
    %8 = vector.shape_cast %7 : vector<1x2x34x8xf32> to vector<2x34x8xf32>
    %9 = tpu.concatenate %6, %8 in 0 : vector<32x34x8xf32>, vector<2x34x8xf32> -> vector<34x34x8xf32>
    %c0_15 = arith.constant 0 : index
    %c0_16 = arith.constant 0 : index
    %c0_17 = arith.constant 0 : index
    %c0_18 = arith.constant 0 : index
    %10 = vector.load %arg6[%c0_15, %c0_16, %c0_17, %c0_18] : memref<3x3x8x8xf32, #tpu.memory_space<vmem>>, vector<3x3x8x8xf32>
    %c0_19 = arith.constant 0 : index
    %c0_20 = arith.constant 0 : index
    %c0_21 = arith.constant 0 : index
    %c0_22 = arith.constant 0 : index
    %11 = vector.load %arg7[%c0_19, %c0_20, %c0_21, %c0_22] : memref<3x3x8x8xf32, #tpu.memory_space<vmem>>, vector<3x3x8x8xf32>
    %cst = arith.constant 0.000000e+00 : f32
    %12 = vector.broadcast %cst : f32 to vector<1024x8xf32>
    %13 = vector.extract_strided_slice %4 {offsets = [0, 0, 0], sizes = [32, 34, 8], strides = [1, 1, 1]} : vector<34x34x8xf32> to vector<32x34x8xf32>
    %14 = vector.extract_strided_slice %9 {offsets = [0, 0, 0], sizes = [32, 34, 8], strides = [1, 1, 1]} : vector<34x34x8xf32> to vector<32x34x8xf32>
    %15 = vector.extract_strided_slice %13 {offsets = [0, 0, 0], sizes = [32, 32, 8], strides = [1, 1, 1]} : vector<32x34x8xf32> to vector<32x32x8xf32>
    %16 = vector.shape_cast %15 : vector<32x32x8xf32> to vector<1024x8xf32>
    %17 = vector.extract_strided_slice %14 {offsets = [0, 0, 0], sizes = [32, 32, 8], strides = [1, 1, 1]} : vector<32x34x8xf32> to vector<32x32x8xf32>
    %18 = vector.shape_cast %17 : vector<32x32x8xf32> to vector<1024x8xf32>
    %19 = vector.extract_strided_slice %10 {offsets = [0, 0, 0, 0], sizes = [1, 1, 8, 8], strides = [1, 1, 1, 1]} : vector<3x3x8x8xf32> to vector<1x1x8x8xf32>
    %20 = vector.shape_cast %19 : vector<1x1x8x8xf32> to vector<8x8xf32>
    %cst_23 = arith.constant dense<0.000000e+00> : vector<1024x8xf32>
    %21 = tpu.matmul %16, %20, %cst_23 {dimension_numbers = #tpu.dot_dimension_numbers<[1], [0], [0], [1], [0, 0, 1, 1], [], []>} : vector<1024x8xf32>, vector<8x8xf32>, vector<1024x8xf32> -> vector<1024x8xf32>
    %22 = vector.extract_strided_slice %11 {offsets = [0, 0, 0, 0], sizes = [1, 1, 8, 8], strides = [1, 1, 1, 1]} : vector<3x3x8x8xf32> to vector<1x1x8x8xf32>
    %23 = vector.shape_cast %22 : vector<1x1x8x8xf32> to vector<8x8xf32>
    %cst_24 = arith.constant dense<0.000000e+00> : vector<1024x8xf32>
    %24 = tpu.matmul %18, %23, %cst_24 {dimension_numbers = #tpu.dot_dimension_numbers<[1], [0], [0], [1], [0, 0, 1, 1], [], []>} : vector<1024x8xf32>, vector<8x8xf32>, vector<1024x8xf32> -> vector<1024x8xf32>
    %25 = arith.addf %21, %24 : vector<1024x8xf32>
    %26 = arith.addf %12, %25 : vector<1024x8xf32>
    %27 = vector.extract_strided_slice %13 {offsets = [0, 1, 0], sizes = [32, 32, 8], strides = [1, 1, 1]} : vector<32x34x8xf32> to vector<32x32x8xf32>
    %28 = vector.shape_cast %27 : vector<32x32x8xf32> to vector<1024x8xf32>
    %29 = vector.extract_strided_slice %14 {offsets = [0, 1, 0], sizes = [32, 32, 8], strides = [1, 1, 1]} : vector<32x34x8xf32> to vector<32x32x8xf32>
    %30 = vector.shape_cast %29 : vector<32x32x8xf32> to vector<1024x8xf32>
    %31 = vector.extract_strided_slice %10 {offsets = [0, 1, 0, 0], sizes = [1, 1, 8, 8], strides = [1, 1, 1, 1]} : vector<3x3x8x8xf32> to vector<1x1x8x8xf32>
    %32 = vector.shape_cast %31 : vector<1x1x8x8xf32> to vector<8x8xf32>
    %cst_25 = arith.constant dense<0.000000e+00> : vector<1024x8xf32>
    %33 = tpu.matmul %28, %32, %cst_25 {dimension_numbers = #tpu.dot_dimension_numbers<[1], [0], [0], [1], [0, 0, 1, 1], [], []>} : vector<1024x8xf32>, vector<8x8xf32>, vector<1024x8xf32> -> vector<1024x8xf32>
    %34 = vector.extract_strided_slice %11 {offsets = [0, 1, 0, 0], sizes = [1, 1, 8, 8], strides = [1, 1, 1, 1]} : vector<3x3x8x8xf32> to vector<1x1x8x8xf32>
    %35 = vector.shape_cast %34 : vector<1x1x8x8xf32> to vector<8x8xf32>
    %cst_26 = arith.constant dense<0.000000e+00> : vector<1024x8xf32>
    %36 = tpu.matmul %30, %35, %cst_26 {dimension_numbers = #tpu.dot_dimension_numbers<[1], [0], [0], [1], [0, 0, 1, 1], [], []>} : vector<1024x8xf32>, vector<8x8xf32>, vector<1024x8xf32> -> vector<1024x8xf32>
    %37 = arith.addf %33, %36 : vector<1024x8xf32>
    %38 = arith.addf %26, %37 : vector<1024x8xf32>
    %39 = vector.extract_strided_slice %13 {offsets = [0, 2, 0], sizes = [32, 32, 8], strides = [1, 1, 1]} : vector<32x34x8xf32> to vector<32x32x8xf32>
    %40 = vector.shape_cast %39 : vector<32x32x8xf32> to vector<1024x8xf32>
    %41 = vector.extract_strided_slice %14 {offsets = [0, 2, 0], sizes = [32, 32, 8], strides = [1, 1, 1]} : vector<32x34x8xf32> to vector<32x32x8xf32>
    %42 = vector.shape_cast %41 : vector<32x32x8xf32> to vector<1024x8xf32>
    %43 = vector.extract_strided_slice %10 {offsets = [0, 2, 0, 0], sizes = [1, 1, 8, 8], strides = [1, 1, 1, 1]} : vector<3x3x8x8xf32> to vector<1x1x8x8xf32>
    %44 = vector.shape_cast %43 : vector<1x1x8x8xf32> to vector<8x8xf32>
    %cst_27 = arith.constant dense<0.000000e+00> : vector<1024x8xf32>
    %45 = tpu.matmul %40, %44, %cst_27 {dimension_numbers = #tpu.dot_dimension_numbers<[1], [0], [0], [1], [0, 0, 1, 1], [], []>} : vector<1024x8xf32>, vector<8x8xf32>, vector<1024x8xf32> -> vector<1024x8xf32>
    %46 = vector.extract_strided_slice %11 {offsets = [0, 2, 0, 0], sizes = [1, 1, 8, 8], strides = [1, 1, 1, 1]} : vector<3x3x8x8xf32> to vector<1x1x8x8xf32>
    %47 = vector.shape_cast %46 : vector<1x1x8x8xf32> to vector<8x8xf32>
    %cst_28 = arith.constant dense<0.000000e+00> : vector<1024x8xf32>
    %48 = tpu.matmul %42, %47, %cst_28 {dimension_numbers = #tpu.dot_dimension_numbers<[1], [0], [0], [1], [0, 0, 1, 1], [], []>} : vector<1024x8xf32>, vector<8x8xf32>, vector<1024x8xf32> -> vector<1024x8xf32>
    %49 = arith.addf %45, %48 : vector<1024x8xf32>
    %50 = arith.addf %38, %49 : vector<1024x8xf32>
    %51 = vector.extract_strided_slice %4 {offsets = [1, 0, 0], sizes = [32, 34, 8], strides = [1, 1, 1]} : vector<34x34x8xf32> to vector<32x34x8xf32>
    %52 = vector.extract_strided_slice %9 {offsets = [1, 0, 0], sizes = [32, 34, 8], strides = [1, 1, 1]} : vector<34x34x8xf32> to vector<32x34x8xf32>
    %53 = vector.extract_strided_slice %51 {offsets = [0, 0, 0], sizes = [32, 32, 8], strides = [1, 1, 1]} : vector<32x34x8xf32> to vector<32x32x8xf32>
    %54 = vector.shape_cast %53 : vector<32x32x8xf32> to vector<1024x8xf32>
    %55 = vector.extract_strided_slice %52 {offsets = [0, 0, 0], sizes = [32, 32, 8], strides = [1, 1, 1]} : vector<32x34x8xf32> to vector<32x32x8xf32>
    %56 = vector.shape_cast %55 : vector<32x32x8xf32> to vector<1024x8xf32>
    %57 = vector.extract_strided_slice %10 {offsets = [1, 0, 0, 0], sizes = [1, 1, 8, 8], strides = [1, 1, 1, 1]} : vector<3x3x8x8xf32> to vector<1x1x8x8xf32>
    %58 = vector.shape_cast %57 : vector<1x1x8x8xf32> to vector<8x8xf32>
    %cst_29 = arith.constant dense<0.000000e+00> : vector<1024x8xf32>
    %59 = tpu.matmul %54, %58, %cst_29 {dimension_numbers = #tpu.dot_dimension_numbers<[1], [0], [0], [1], [0, 0, 1, 1], [], []>} : vector<1024x8xf32>, vector<8x8xf32>, vector<1024x8xf32> -> vector<1024x8xf32>
    %60 = vector.extract_strided_slice %11 {offsets = [1, 0, 0, 0], sizes = [1, 1, 8, 8], strides = [1, 1, 1, 1]} : vector<3x3x8x8xf32> to vector<1x1x8x8xf32>
    %61 = vector.shape_cast %60 : vector<1x1x8x8xf32> to vector<8x8xf32>
    %cst_30 = arith.constant dense<0.000000e+00> : vector<1024x8xf32>
    %62 = tpu.matmul %56, %61, %cst_30 {dimension_numbers = #tpu.dot_dimension_numbers<[1], [0], [0], [1], [0, 0, 1, 1], [], []>} : vector<1024x8xf32>, vector<8x8xf32>, vector<1024x8xf32> -> vector<1024x8xf32>
    %63 = arith.addf %59, %62 : vector<1024x8xf32>
    %64 = arith.addf %50, %63 : vector<1024x8xf32>
    %65 = vector.extract_strided_slice %51 {offsets = [0, 1, 0], sizes = [32, 32, 8], strides = [1, 1, 1]} : vector<32x34x8xf32> to vector<32x32x8xf32>
    %66 = vector.shape_cast %65 : vector<32x32x8xf32> to vector<1024x8xf32>
    %67 = vector.extract_strided_slice %52 {offsets = [0, 1, 0], sizes = [32, 32, 8], strides = [1, 1, 1]} : vector<32x34x8xf32> to vector<32x32x8xf32>
    %68 = vector.shape_cast %67 : vector<32x32x8xf32> to vector<1024x8xf32>
    %69 = vector.extract_strided_slice %10 {offsets = [1, 1, 0, 0], sizes = [1, 1, 8, 8], strides = [1, 1, 1, 1]} : vector<3x3x8x8xf32> to vector<1x1x8x8xf32>
    %70 = vector.shape_cast %69 : vector<1x1x8x8xf32> to vector<8x8xf32>
    %cst_31 = arith.constant dense<0.000000e+00> : vector<1024x8xf32>
    %71 = tpu.matmul %66, %70, %cst_31 {dimension_numbers = #tpu.dot_dimension_numbers<[1], [0], [0], [1], [0, 0, 1, 1], [], []>} : vector<1024x8xf32>, vector<8x8xf32>, vector<1024x8xf32> -> vector<1024x8xf32>
    %72 = vector.extract_strided_slice %11 {offsets = [1, 1, 0, 0], sizes = [1, 1, 8, 8], strides = [1, 1, 1, 1]} : vector<3x3x8x8xf32> to vector<1x1x8x8xf32>
    %73 = vector.shape_cast %72 : vector<1x1x8x8xf32> to vector<8x8xf32>
    %cst_32 = arith.constant dense<0.000000e+00> : vector<1024x8xf32>
    %74 = tpu.matmul %68, %73, %cst_32 {dimension_numbers = #tpu.dot_dimension_numbers<[1], [0], [0], [1], [0, 0, 1, 1], [], []>} : vector<1024x8xf32>, vector<8x8xf32>, vector<1024x8xf32> -> vector<1024x8xf32>
    %75 = arith.addf %71, %74 : vector<1024x8xf32>
    %76 = arith.addf %64, %75 : vector<1024x8xf32>
    %77 = vector.extract_strided_slice %51 {offsets = [0, 2, 0], sizes = [32, 32, 8], strides = [1, 1, 1]} : vector<32x34x8xf32> to vector<32x32x8xf32>
    %78 = vector.shape_cast %77 : vector<32x32x8xf32> to vector<1024x8xf32>
    %79 = vector.extract_strided_slice %52 {offsets = [0, 2, 0], sizes = [32, 32, 8], strides = [1, 1, 1]} : vector<32x34x8xf32> to vector<32x32x8xf32>
    %80 = vector.shape_cast %79 : vector<32x32x8xf32> to vector<1024x8xf32>
    %81 = vector.extract_strided_slice %10 {offsets = [1, 2, 0, 0], sizes = [1, 1, 8, 8], strides = [1, 1, 1, 1]} : vector<3x3x8x8xf32> to vector<1x1x8x8xf32>
    %82 = vector.shape_cast %81 : vector<1x1x8x8xf32> to vector<8x8xf32>
    %cst_33 = arith.constant dense<0.000000e+00> : vector<1024x8xf32>
    %83 = tpu.matmul %78, %82, %cst_33 {dimension_numbers = #tpu.dot_dimension_numbers<[1], [0], [0], [1], [0, 0, 1, 1], [], []>} : vector<1024x8xf32>, vector<8x8xf32>, vector<1024x8xf32> -> vector<1024x8xf32>
    %84 = vector.extract_strided_slice %11 {offsets = [1, 2, 0, 0], sizes = [1, 1, 8, 8], strides = [1, 1, 1, 1]} : vector<3x3x8x8xf32> to vector<1x1x8x8xf32>
    %85 = vector.shape_cast %84 : vector<1x1x8x8xf32> to vector<8x8xf32>
    %cst_34 = arith.constant dense<0.000000e+00> : vector<1024x8xf32>
    %86 = tpu.matmul %80, %85, %cst_34 {dimension_numbers = #tpu.dot_dimension_numbers<[1], [0], [0], [1], [0, 0, 1, 1], [], []>} : vector<1024x8xf32>, vector<8x8xf32>, vector<1024x8xf32> -> vector<1024x8xf32>
    %87 = arith.addf %83, %86 : vector<1024x8xf32>
    %88 = arith.addf %76, %87 : vector<1024x8xf32>
    %89 = vector.extract_strided_slice %4 {offsets = [2, 0, 0], sizes = [32, 34, 8], strides = [1, 1, 1]} : vector<34x34x8xf32> to vector<32x34x8xf32>
    %90 = vector.extract_strided_slice %9 {offsets = [2, 0, 0], sizes = [32, 34, 8], strides = [1, 1, 1]} : vector<34x34x8xf32> to vector<32x34x8xf32>
    %91 = vector.extract_strided_slice %89 {offsets = [0, 0, 0], sizes = [32, 32, 8], strides = [1, 1, 1]} : vector<32x34x8xf32> to vector<32x32x8xf32>
    %92 = vector.shape_cast %91 : vector<32x32x8xf32> to vector<1024x8xf32>
    %93 = vector.extract_strided_slice %90 {offsets = [0, 0, 0], sizes = [32, 32, 8], strides = [1, 1, 1]} : vector<32x34x8xf32> to vector<32x32x8xf32>
    %94 = vector.shape_cast %93 : vector<32x32x8xf32> to vector<1024x8xf32>
    %95 = vector.extract_strided_slice %10 {offsets = [2, 0, 0, 0], sizes = [1, 1, 8, 8], strides = [1, 1, 1, 1]} : vector<3x3x8x8xf32> to vector<1x1x8x8xf32>
    %96 = vector.shape_cast %95 : vector<1x1x8x8xf32> to vector<8x8xf32>
    %cst_35 = arith.constant dense<0.000000e+00> : vector<1024x8xf32>
    %97 = tpu.matmul %92, %96, %cst_35 {dimension_numbers = #tpu.dot_dimension_numbers<[1], [0], [0], [1], [0, 0, 1, 1], [], []>} : vector<1024x8xf32>, vector<8x8xf32>, vector<1024x8xf32> -> vector<1024x8xf32>
    %98 = vector.extract_strided_slice %11 {offsets = [2, 0, 0, 0], sizes = [1, 1, 8, 8], strides = [1, 1, 1, 1]} : vector<3x3x8x8xf32> to vector<1x1x8x8xf32>
    %99 = vector.shape_cast %98 : vector<1x1x8x8xf32> to vector<8x8xf32>
    %cst_36 = arith.constant dense<0.000000e+00> : vector<1024x8xf32>
    %100 = tpu.matmul %94, %99, %cst_36 {dimension_numbers = #tpu.dot_dimension_numbers<[1], [0], [0], [1], [0, 0, 1, 1], [], []>} : vector<1024x8xf32>, vector<8x8xf32>, vector<1024x8xf32> -> vector<1024x8xf32>
    %101 = arith.addf %97, %100 : vector<1024x8xf32>
    %102 = arith.addf %88, %101 : vector<1024x8xf32>
    %103 = vector.extract_strided_slice %89 {offsets = [0, 1, 0], sizes = [32, 32, 8], strides = [1, 1, 1]} : vector<32x34x8xf32> to vector<32x32x8xf32>
    %104 = vector.shape_cast %103 : vector<32x32x8xf32> to vector<1024x8xf32>
    %105 = vector.extract_strided_slice %90 {offsets = [0, 1, 0], sizes = [32, 32, 8], strides = [1, 1, 1]} : vector<32x34x8xf32> to vector<32x32x8xf32>
    %106 = vector.shape_cast %105 : vector<32x32x8xf32> to vector<1024x8xf32>
    %107 = vector.extract_strided_slice %10 {offsets = [2, 1, 0, 0], sizes = [1, 1, 8, 8], strides = [1, 1, 1, 1]} : vector<3x3x8x8xf32> to vector<1x1x8x8xf32>
    %108 = vector.shape_cast %107 : vector<1x1x8x8xf32> to vector<8x8xf32>
    %cst_37 = arith.constant dense<0.000000e+00> : vector<1024x8xf32>
    %109 = tpu.matmul %104, %108, %cst_37 {dimension_numbers = #tpu.dot_dimension_numbers<[1], [0], [0], [1], [0, 0, 1, 1], [], []>} : vector<1024x8xf32>, vector<8x8xf32>, vector<1024x8xf32> -> vector<1024x8xf32>
    %110 = vector.extract_strided_slice %11 {offsets = [2, 1, 0, 0], sizes = [1, 1, 8, 8], strides = [1, 1, 1, 1]} : vector<3x3x8x8xf32> to vector<1x1x8x8xf32>
    %111 = vector.shape_cast %110 : vector<1x1x8x8xf32> to vector<8x8xf32>
    %cst_38 = arith.constant dense<0.000000e+00> : vector<1024x8xf32>
    %112 = tpu.matmul %106, %111, %cst_38 {dimension_numbers = #tpu.dot_dimension_numbers<[1], [0], [0], [1], [0, 0, 1, 1], [], []>} : vector<1024x8xf32>, vector<8x8xf32>, vector<1024x8xf32> -> vector<1024x8xf32>
    %113 = arith.addf %109, %112 : vector<1024x8xf32>
    %114 = arith.addf %102, %113 : vector<1024x8xf32>
    %115 = vector.extract_strided_slice %89 {offsets = [0, 2, 0], sizes = [32, 32, 8], strides = [1, 1, 1]} : vector<32x34x8xf32> to vector<32x32x8xf32>
    %116 = vector.shape_cast %115 : vector<32x32x8xf32> to vector<1024x8xf32>
    %117 = vector.extract_strided_slice %90 {offsets = [0, 2, 0], sizes = [32, 32, 8], strides = [1, 1, 1]} : vector<32x34x8xf32> to vector<32x32x8xf32>
    %118 = vector.shape_cast %117 : vector<32x32x8xf32> to vector<1024x8xf32>
    %119 = vector.extract_strided_slice %10 {offsets = [2, 2, 0, 0], sizes = [1, 1, 8, 8], strides = [1, 1, 1, 1]} : vector<3x3x8x8xf32> to vector<1x1x8x8xf32>
    %120 = vector.shape_cast %119 : vector<1x1x8x8xf32> to vector<8x8xf32>
    %cst_39 = arith.constant dense<0.000000e+00> : vector<1024x8xf32>
    %121 = tpu.matmul %116, %120, %cst_39 {dimension_numbers = #tpu.dot_dimension_numbers<[1], [0], [0], [1], [0, 0, 1, 1], [], []>} : vector<1024x8xf32>, vector<8x8xf32>, vector<1024x8xf32> -> vector<1024x8xf32>
    %122 = vector.extract_strided_slice %11 {offsets = [2, 2, 0, 0], sizes = [1, 1, 8, 8], strides = [1, 1, 1, 1]} : vector<3x3x8x8xf32> to vector<1x1x8x8xf32>
    %123 = vector.shape_cast %122 : vector<1x1x8x8xf32> to vector<8x8xf32>
    %cst_40 = arith.constant dense<0.000000e+00> : vector<1024x8xf32>
    %124 = tpu.matmul %118, %123, %cst_40 {dimension_numbers = #tpu.dot_dimension_numbers<[1], [0], [0], [1], [0, 0, 1, 1], [], []>} : vector<1024x8xf32>, vector<8x8xf32>, vector<1024x8xf32> -> vector<1024x8xf32>
    %125 = arith.addf %121, %124 : vector<1024x8xf32>
    %126 = arith.addf %114, %125 : vector<1024x8xf32>
    %c0_41 = arith.constant 0 : index
    %c0_42 = arith.constant 0 : index
    %127 = vector.load %arg8[%c0_41, %c0_42] : memref<1x8xf32, #tpu.memory_space<vmem>>, vector<1x8xf32>
    %128 = vector.broadcast %127 : vector<1x8xf32> to vector<1024x8xf32>
    %129 = arith.addf %126, %128 : vector<1024x8xf32>
    %130 = vector.shape_cast %129 : vector<1024x8xf32> to vector<1x32x32x8xf32>
    %c0_43 = arith.constant 0 : index
    %c0_44 = arith.constant 0 : index
    %c0_45 = arith.constant 0 : index
    %c0_46 = arith.constant 0 : index
    %131 = vector.load %arg9[%c0_43, %c0_44, %c0_45, %c0_46] : memref<1x32x32x8xf32, #tpu.memory_space<vmem>>, vector<1x32x32x8xf32>
    tpu.vector_store %arg9[%c0_43, %c0_44, %c0_45, %c0_46], %130 {strides = array<i32>} : memref<1x32x32x8xf32, #tpu.memory_space<vmem>>, vector<1x32x32x8xf32>,
    return
  }
  func.func @transform_0(%arg0: i32, %arg1: i32) -> (i32, i32, i32, i32) {
    %c0_i32 = arith.constant 0 : i32
    %c0_i32_0 = arith.constant 0 : i32
    %c0_i32_1 = arith.constant 0 : i32
    return %arg0, %arg1, %c0_i32, %c0_i32_0 : i32, i32, i32, i32
  }
  func.func @transform_1(%arg0: i32, %arg1: i32) -> (i32, i32, i32, i32) {
    %c1_i32 = arith.constant 1 : i32
    %0 = arith.addi %arg1, %c1_i32 : i32
    %c16_i32 = arith.constant 16 : i32
    %1 = arith.muli %0, %c16_i32 : i32
    %c0_i32 = arith.constant 0 : i32
    %c0_i32_0 = arith.constant 0 : i32
    %c0_i32_1 = arith.constant 0 : i32
    return %arg0, %1, %c0_i32, %c0_i32_0 : i32, i32, i32, i32
  }
  func.func @transform_2(%arg0: i32, %arg1: i32) -> (i32, i32, i32, i32) {
    %c0_i32 = arith.constant 0 : i32
    %c0_i32_0 = arith.constant 0 : i32
    %c0_i32_1 = arith.constant 0 : i32
    return %arg0, %arg1, %c0_i32, %c0_i32_0 : i32, i32, i32, i32
  }
  func.func @transform_3(%arg0: i32, %arg1: i32) -> (i32, i32, i32, i32) {
    %c1_i32 = arith.constant 1 : i32
    %0 = arith.addi %arg1, %c1_i32 : i32
    %c16_i32 = arith.constant 16 : i32
    %1 = arith.muli %0, %c16_i32 : i32
    %c0_i32 = arith.constant 0 : i32
    %c0_i32_0 = arith.constant 0 : i32
    %c0_i32_1 = arith.constant 0 : i32
    return %arg0, %1, %c0_i32, %c0_i32_0 : i32, i32, i32, i32
  }
  func.func @transform_4(%arg0: i32, %arg1: i32) -> (i32, i32, i32, i32) {
    %c0_i32 = arith.constant 0 : i32
    %c0_i32_0 = arith.constant 0 : i32
    %c0_i32_1 = arith.constant 0 : i32
    %c0_i32_2 = arith.constant 0 : i32
    %c0_i32_3 = arith.constant 0 : i32
    return %c0_i32, %c0_i32_0, %c0_i32_1, %c0_i32_2 : i32, i32, i32, i32
  }
  func.func @transform_5(%arg0: i32, %arg1: i32) -> (i32, i32, i32, i32) {
    %c0_i32 = arith.constant 0 : i32
    %c0_i32_0 = arith.constant 0 : i32
    %c0_i32_1 = arith.constant 0 : i32
    %c0_i32_2 = arith.constant 0 : i32
    %c0_i32_3 = arith.constant 0 : i32
    return %c0_i32, %c0_i32_0, %c0_i32_1, %c0_i32_2 : i32, i32, i32, i32
  }
  func.func @transform_6(%arg0: i32, %arg1: i32) -> (i32, i32) {
    %c0_i32 = arith.constant 0 : i32
    %c0_i32_0 = arith.constant 0 : i32
    %c0_i32_1 = arith.constant 0 : i32
    return %c0_i32, %c0_i32_0 : i32, i32
  }
  func.func @transform_7(%arg0: i32, %arg1: i32) -> (i32, i32, i32, i32) {
    %c0_i32 = arith.constant 0 : i32
    %c0_i32_0 = arith.constant 0 : i32
    %c0_i32_1 = arith.constant 0 : i32
    return %arg0, %arg1, %c0_i32, %c0_i32_0 : i32, i32, i32, i32
  }
}

</mosaic_0001>

<llo_original>
// kernel: complex_conv_transpose2d.1
$region0: #{complex_conv_transpose2d.1}
  #allocation0 [shape = 'u32[]', space=smem, size = 0x4, offset = 0x4, fixed_abs, tag = 'smem constant byte address 0x4 - core index']
  #allocation1 [shape = 'u32[72,128]{1,0:T(1,128)}', space=vmem, size = 0x9000, scoped, tag = 'internal scratch']
  %s0 = inlined_call_operand.vmem [shape: f32[2,64,34,8], index: 0, kind: input, shape index: {}, may-alias: {0,1}]
  %s1 = inlined_call_operand.vmem [shape: f32[2,64,34,8], index: 1, kind: input, shape index: {}, may-alias: {0,1}]
  %s2 = inlined_call_operand.vmem [shape: f32[2,64,34,8], index: 2, kind: input, shape index: {}, may-alias: {2,3}]
  %s3 = inlined_call_operand.vmem [shape: f32[2,64,34,8], index: 3, kind: input, shape index: {}, may-alias: {2,3}]
  %s4 = inlined_call_operand.vmem [shape: f32[3,3,8,8], index: 4, kind: input, shape index: {}]
  %s5 = inlined_call_operand.vmem [shape: f32[3,3,8,8], index: 5, kind: input, shape index: {}]
  %s6 = inlined_call_operand.vmem [shape: f32[1,8], index: 6, kind: input, shape index: {}]
  %s7 = inlined_call_operand.vmem [shape: f32[2,32,32,8], index: 7, kind: output, shape index: {}]
  %s8 = sld [smem:[#allocation0]]
  $region61: #{complex_conv_transpose2d.1} parent=0
    _
  %s10 = ssub.s32 1, %s8
  %s11 = scalar_select 0, %s10, %s8
  loop: start=0, step=1, limit=4
  $region2: #{complex_conv_transpose2d.1} parent=0 // loop_pre_header
    _
  $region3: #{complex_conv_transpose2d.1} parent=0 // loop_header
    %s13 = sphi 0, %s17
    %p14 = scmp.ge.s32.totalorder %s13, 4
    %s20 = sphi 0, %s32
    %s21 = sphi 0, %s28
    %s22 = sphi 0, %s20
    %s23 = sphi 0, %s21
    %s24 = sphi 0, %s22
    %s25 = sphi 0, %s23
    %s37 = sphi 0, %s39
    %s40 = sphi 0, %s37
    %s41 = sphi 0, %s40
    %s57 = sphi 0, %s41
    %s69 = sphi 0, %s71
    %s72 = sphi 0, %s69
    %s73 = sphi 0, %s72
    %s89 = sphi 0, %s73
    %s97 = sphi 0, %s99
    %s100 = sphi 0, %s97
    %s101 = sphi 0, %s100
    %s117 = sphi 0, %s101
    %s129 = sphi 0, %s131
    %s132 = sphi 0, %s129
    %s133 = sphi 0, %s132
    %s149 = sphi 0, %s133
    %s153 = sphi 0, %s153
    %s155 = sphi 0, %s153
    %s156 = sphi 0, %s155
    %s170 = sphi 0, %s156
    %s174 = sphi 0, %s174
    %s176 = sphi 0, %s174
    %s177 = sphi 0, %s176
    %s191 = sphi 0, %s177
    %s195 = sphi 0, %s195
    %s197 = sphi 0, %s195
    %s198 = sphi 0, %s197
    %s212 = sphi 0, %s198
    %s220 = sphi 0, %s222
    %s223 = sphi 0, %s220
    %s224 = sphi 0, %s223
    %s240 = sphi 0, %s224
  $region4: #{complex_conv_transpose2d.1} parent=0 // loop_header_branch
    %16 = sbr.rel (%p14) target = $region8
  $region5: #{complex_conv_transpose2d.1} parent=0 // loop_body
    %s18 = ssub.s32 %s13, 1
    %s19 = ssub.s32 %s13, 2
    %s26 = sadd.s32 1, %s21
    %p27 = scmp.ge.s32.totalorder %s26, 1
    %s28 = scalar_select %p27, 0, %s26
    %s29 = sadd.s32 1, %s20
    %s30 = scalar_select %p27, %s29, %s20
    %p31 = scmp.ge.s32.totalorder %s30, 2
    %s32 = scalar_select %p31, 0, %s30
    %s33 = ssub.s32 %s20, %s32
    %s34 = ssub.s32 %s21, %s28
    %s35 = sor.u32 %s33, %s34
    %p36 = scmp.eq.s32.totalorder %s35, 0
    %s38 = sadd.s32 %s37, 1
    %s39 = scalar_select %p36, %s37, %s38
    %p42 = pneg %p36
    %p43 = scmp.eq.s32.totalorder %s13, 1
    %p44 = por %p42, %p43
    %p45 = scmp.ne.s32.totalorder %s37, %s40
    %p46 = scmp.eq.s32.totalorder %s13, 0
    %p47 = por %p45, %p46
    %p48 = scmp.ne.s32.totalorder %s37, %s40
    %p49 = scmp.eq.s32.totalorder %s18, 1
    %p50 = por %p48, %p49
    %p51 = scmp.ne.s32.totalorder %s40, %s41
    %p52 = scmp.eq.s32.totalorder %s18, 0
    %p53 = por %p51, %p52
    %p54 = scmp.ne.s32.totalorder %s40, %s41
    %p55 = scmp.eq.s32.totalorder %s19, 1
    %p56 = por %p54, %p55
    %p58 = scmp.ne.s32.totalorder %s41, %s57
    %p59 = scmp.eq.s32.totalorder %s19, 0
    %p60 = por %p58, %p59
    %s61 = sadd.s32 %s21, 1
    %s62 = smul.u32 %s61, 16
    %s63 = sadd.s32 %s28, 1
    %s64 = smul.u32 %s63, 16
    %s65 = ssub.s32 %s20, %s32
    %s66 = ssub.s32 %s62, %s64
    %s67 = sor.u32 %s65, %s66
    %p68 = scmp.eq.s32.totalorder %s67, 0
    %s70 = sadd.s32 %s69, 1
    %s71 = scalar_select %p68, %s69, %s70
    %p74 = pneg %p68
    %p75 = scmp.eq.s32.totalorder %s13, 1
    %p76 = por %p74, %p75
    %p77 = scmp.ne.s32.totalorder %s69, %s72
    %p78 = scmp.eq.s32.totalorder %s13, 0
    %p79 = por %p77, %p78
    %p80 = scmp.ne.s32.totalorder %s69, %s72
    %p81 = scmp.eq.s32.totalorder %s18, 1
    %p82 = por %p80, %p81
    %p83 = scmp.ne.s32.totalorder %s72, %s73
    %p84 = scmp.eq.s32.totalorder %s18, 0
    %p85 = por %p83, %p84
    %p86 = scmp.ne.s32.totalorder %s72, %s73
    %p87 = scmp.eq.s32.totalorder %s19, 1
    %p88 = por %p86, %p87
    %p90 = scmp.ne.s32.totalorder %s73, %s89
    %p91 = scmp.eq.s32.totalorder %s19, 0
    %p92 = por %p90, %p91
    %s93 = ssub.s32 %s20, %s32
    %s94 = ssub.s32 %s21, %s28
    %s95 = sor.u32 %s93, %s94
    %p96 = scmp.eq.s32.totalorder %s95, 0
    %s98 = sadd.s32 %s97, 1
    %s99 = scalar_select %p96, %s97, %s98
    %p102 = pneg %p96
    %p103 = scmp.eq.s32.totalorder %s13, 1
    %p104 = por %p102, %p103
    %p105 = scmp.ne.s32.totalorder %s97, %s100
    %p106 = scmp.eq.s32.totalorder %s13, 0
    %p107 = por %p105, %p106
    %p108 = scmp.ne.s32.totalorder %s97, %s100
    %p109 = scmp.eq.s32.totalorder %s18, 1
    %p110 = por %p108, %p109
    %p111 = scmp.ne.s32.totalorder %s100, %s101
    %p112 = scmp.eq.s32.totalorder %s18, 0
    %p113 = por %p111, %p112
    %p114 = scmp.ne.s32.totalorder %s100, %s101
    %p115 = scmp.eq.s32.totalorder %s19, 1
    %p116 = por %p114, %p115
    %p118 = scmp.ne.s32.totalorder %s101, %s117
    %p119 = scmp.eq.s32.totalorder %s19, 0
    %p120 = por %p118, %p119
    %s121 = sadd.s32 %s21, 1
    %s122 = smul.u32 %s121, 16
    %s123 = sadd.s32 %s28, 1
    %s124 = smul.u32 %s123, 16
    %s125 = ssub.s32 %s20, %s32
    %s126 = ssub.s32 %s122, %s124
    %s127 = sor.u32 %s125, %s126
    %p128 = scmp.eq.s32.totalorder %s127, 0
    %s130 = sadd.s32 %s129, 1
    %s131 = scalar_select %p128, %s129, %s130
    %p134 = pneg %p128
    %p135 = scmp.eq.s32.totalorder %s13, 1
    %p136 = por %p134, %p135
    %p137 = scmp.ne.s32.totalorder %s129, %s132
    %p138 = scmp.eq.s32.totalorder %s13, 0
    %p139 = por %p137, %p138
    %p140 = scmp.ne.s32.totalorder %s129, %s132
    %p141 = scmp.eq.s32.totalorder %s18, 1
    %p142 = por %p140, %p141
    %p143 = scmp.ne.s32.totalorder %s132, %s133
    %p144 = scmp.eq.s32.totalorder %s18, 0
    %p145 = por %p143, %p144
    %p146 = scmp.ne.s32.totalorder %s132, %s133
    %p147 = scmp.eq.s32.totalorder %s19, 1
    %p148 = por %p146, %p147
    %p150 = scmp.ne.s32.totalorder %s133, %s149
    %p151 = scmp.eq.s32.totalorder %s19, 0
    %p152 = por %p150, %p151
    %s154 = sadd.s32 %s153, 1
    %p157 = scmp.eq.s32.totalorder %s13, 1
    %p158 = scmp.ne.s32.totalorder %s153, %s155
    %p159 = scmp.eq.s32.totalorder %s13, 0
    %p160 = por %p158, %p159
    %p161 = scmp.ne.s32.totalorder %s153, %s155
    %p162 = scmp.eq.s32.totalorder %s18, 1
    %p163 = por %p161, %p162
    %p164 = scmp.ne.s32.totalorder %s155, %s156
    %p165 = scmp.eq.s32.totalorder %s18, 0
    %p166 = por %p164, %p165
    %p167 = scmp.ne.s32.totalorder %s155, %s156
    %p168 = scmp.eq.s32.totalorder %s19, 1
    %p169 = por %p167, %p168
    %p171 = scmp.ne.s32.totalorder %s156, %s170
    %p172 = scmp.eq.s32.totalorder %s19, 0
    %p173 = por %p171, %p172
    %s175 = sadd.s32 %s174, 1
    %p178 = scmp.eq.s32.totalorder %s13, 1
    %p179 = scmp.ne.s32.totalorder %s174, %s176
    %p180 = scmp.eq.s32.totalorder %s13, 0
    %p181 = por %p179, %p180
    %p182 = scmp.ne.s32.totalorder %s174, %s176
    %p183 = scmp.eq.s32.totalorder %s18, 1
    %p184 = por %p182, %p183
    %p185 = scmp.ne.s32.totalorder %s176, %s177
    %p186 = scmp.eq.s32.totalorder %s18, 0
    %p187 = por %p185, %p186
    %p188 = scmp.ne.s32.totalorder %s176, %s177
    %p189 = scmp.eq.s32.totalorder %s19, 1
    %p190 = por %p188, %p189
    %p192 = scmp.ne.s32.totalorder %s177, %s191
    %p193 = scmp.eq.s32.totalorder %s19, 0
    %p194 = por %p192, %p193
    %s196 = sadd.s32 %s195, 1
    %p199 = scmp.eq.s32.totalorder %s13, 1
    %p200 = scmp.ne.s32.totalorder %s195, %s197
    %p201 = scmp.eq.s32.totalorder %s13, 0
    %p202 = por %p200, %p201
    %p203 = scmp.ne.s32.totalorder %s195, %s197
    %p204 = scmp.eq.s32.totalorder %s18, 1
    %p205 = por %p203, %p204
    %p206 = scmp.ne.s32.totalorder %s197, %s198
    %p207 = scmp.eq.s32.totalorder %s18, 0
    %p208 = por %p206, %p207
    %p209 = scmp.ne.s32.totalorder %s197, %s198
    %p210 = scmp.eq.s32.totalorder %s19, 1
    %p211 = por %p209, %p210
    %p213 = scmp.ne.s32.totalorder %s198, %s212
    %p214 = scmp.eq.s32.totalorder %s19, 0
    %p215 = por %p213, %p214
    %s216 = ssub.s32 %s20, %s32
    %s217 = ssub.s32 %s21, %s28
    %s218 = sor.u32 %s216, %s217
    %p219 = scmp.eq.s32.totalorder %s218, 0
    %s221 = sadd.s32 %s220, 1
    %s222 = scalar_select %p219, %s220, %s221
    %p225 = pneg %p219
    %p226 = scmp.eq.s32.totalorder %s13, 1
    %p227 = por %p225, %p226
    %p228 = scmp.ne.s32.totalorder %s220, %s223
    %p229 = scmp.eq.s32.totalorder %s13, 0
    %p230 = por %p228, %p229
    %p231 = scmp.ne.s32.totalorder %s220, %s223
    %p232 = scmp.eq.s32.totalorder %s18, 1
    %p233 = por %p231, %p232
    %p234 = scmp.ne.s32.totalorder %s223, %s224
    %p235 = scmp.eq.s32.totalorder %s18, 0
    %p236 = por %p234, %p235
    %p237 = scmp.ne.s32.totalorder %s223, %s224
    %p238 = scmp.eq.s32.totalorder %s19, 1
    %p239 = por %p237, %p238
    %p241 = scmp.ne.s32.totalorder %s224, %s240
    %p242 = scmp.eq.s32.totalorder %s19, 0
    %p243 = por %p241, %p242
    %p244 = scmp.le.s32.totalorder 1, %s13
    %p245 = scmp.lt.s32.totalorder %s13, 3
    %p246 = pnand %p244, %p245
    %p247 = pneg %p246
    // Predicated region
    $region9: #{complex_conv_transpose2d.1} parent=5 // pred_check
      _
    $region10: #{complex_conv_transpose2d.1} parent=5 // pred_check_branch
      %249 = sbr.rel (%p246) target = $region12
    $region11: #{complex_conv_transpose2d.1} parent=5 // pred_region
      %s250 = ssub.s32 %s13, 1
      // Predicated region
      $region13: #{complex_conv_transpose2d.1} parent=11 // pred_check
        %p251 = pneg %p166
      $region14: #{complex_conv_transpose2d.1} parent=11 // pred_check_branch
        %253 = sbr.rel (%p251) target = $region16
      $region15: #{complex_conv_transpose2d.1} parent=11 // pred_region
        _
      $region16: #{complex_conv_transpose2d.1} parent=11 // pred_fallthru
        _
      // Predicated region
      $region17: #{complex_conv_transpose2d.1} parent=11 // pred_check
        %p254 = pneg %p187
      $region18: #{complex_conv_transpose2d.1} parent=11 // pred_check_branch
        %256 = sbr.rel (%p254) target = $region20
      $region19: #{complex_conv_transpose2d.1} parent=11 // pred_region
        _
      $region20: #{complex_conv_transpose2d.1} parent=11 // pred_fallthru
        _
      // Predicated region
      $region21: #{complex_conv_transpose2d.1} parent=11 // pred_check
        %p257 = pneg %p208
      $region22: #{complex_conv_transpose2d.1} parent=11 // pred_check_branch
        %259 = sbr.rel (%p257) target = $region24
      $region23: #{complex_conv_transpose2d.1} parent=11 // pred_region
        _
      $region24: #{complex_conv_transpose2d.1} parent=11 // pred_fallthru
        _
    $region12: #{complex_conv_transpose2d.1} parent=5 // pred_fallthru
      _
    %p260 = scmp.lt.s32.totalorder %s13, 2
    // Predicated region
    $region25: #{complex_conv_transpose2d.1} parent=5 // pred_check
      %p261 = pneg %p260
    $region26: #{complex_conv_transpose2d.1} parent=5 // pred_check_branch
      %263 = sbr.rel (%p261) target = $region28
    $region27: #{complex_conv_transpose2d.1} parent=5 // pred_region
      // Predicated region
      $region29: #{complex_conv_transpose2d.1} parent=27 // pred_check
        %p264 = pneg %p47
      $region30: #{complex_conv_transpose2d.1} parent=27 // pred_check_branch
        %266 = sbr.rel (%p264) target = $region32
      $region31: #{complex_conv_transpose2d.1} parent=27 // pred_region
        %s267 = smul.u32 32, %s21
        %p268 = scmp.lt.s32.totalorder %s20, 1
        %s269 = scalar_select %p268, %s20, 1
        %p270 = scmp.lt.s32.totalorder %s267, 63
        %s271 = scalar_select %p270, %s267, 63
        %s272 = smul.addr %s271, 5
        %s273 = smul.addr %s269, 320
        %s274 = sadd.s32 %s272, %s273
        %s275 = smul.addr %s274, 8
        %s276 = scalar_lea.vmem %s0, %s275
        %s277 = smul.u32 32, %s21
      $region32: #{complex_conv_transpose2d.1} parent=27 // pred_fallthru
        _
      // Predicated region
      $region33: #{complex_conv_transpose2d.1} parent=27 // pred_check
        %p278 = pneg %p79
      $region34: #{complex_conv_transpose2d.1} parent=27 // pred_check_branch
        %280 = sbr.rel (%p278) target = $region36
      $region35: #{complex_conv_transpose2d.1} parent=27 // pred_region
        %s281 = sadd.s32 %s21, 1
        %s282 = smul.u32 %s281, 16
        %s283 = smul.u32 2, %s282
        %p284 = scmp.lt.s32.totalorder %s20, 1
        %s285 = scalar_select %p284, %s20, 1
        %p286 = scmp.lt.s32.totalorder %s283, 63
        %s287 = scalar_select %p286, %s283, 63
        %s288 = smul.addr %s287, 5
        %s289 = smul.addr %s285, 320
        %s290 = sadd.s32 %s288, %s289
        %s291 = smul.addr %s290, 8
        %s292 = scalar_lea.vmem %s1, %s291
        %s293 = sadd.s32 %s21, 1
        %s294 = smul.u32 %s293, 16
        %s295 = smul.u32 2, %s294
      $region36: #{complex_conv_transpose2d.1} parent=27 // pred_fallthru
        _
      // Predicated region
      $region37: #{complex_conv_transpose2d.1} parent=27 // pred_check
        %p296 = pneg %p107
      $region38: #{complex_conv_transpose2d.1} parent=27 // pred_check_branch
        %298 = sbr.rel (%p296) target = $region40
      $region39: #{complex_conv_transpose2d.1} parent=27 // pred_region
        %s299 = smul.u32 32, %s21
        %p300 = scmp.lt.s32.totalorder %s20, 1
        %s301 = scalar_select %p300, %s20, 1
        %p302 = scmp.lt.s32.totalorder %s299, 63
        %s303 = scalar_select %p302, %s299, 63
        %s304 = smul.addr %s303, 5
        %s305 = smul.addr %s301, 320
        %s306 = sadd.s32 %s304, %s305
        %s307 = smul.addr %s306, 8
        %s308 = scalar_lea.vmem %s2, %s307
        %s309 = smul.u32 32, %s21
      $region40: #{complex_conv_transpose2d.1} parent=27 // pred_fallthru
        _
      // Predicated region
      $region41: #{complex_conv_transpose2d.1} parent=27 // pred_check
        %p310 = pneg %p139
      $region42: #{complex_conv_transpose2d.1} parent=27 // pred_check_branch
        %312 = sbr.rel (%p310) target = $region44
      $region43: #{complex_conv_transpose2d.1} parent=27 // pred_region
        %s313 = sadd.s32 %s21, 1
        %s314 = smul.u32 %s313, 16
        %s315 = smul.u32 2, %s314
        %p316 = scmp.lt.s32.totalorder %s20, 1
        %s317 = scalar_select %p316, %s20, 1
        %p318 = scmp.lt.s32.totalorder %s315, 63
        %s319 = scalar_select %p318, %s315, 63
        %s320 = smul.addr %s319, 5
        %s321 = smul.addr %s317, 320
        %s322 = sadd.s32 %s320, %s321
        %s323 = smul.addr %s322, 8
        %s324 = scalar_lea.vmem %s3, %s323
        %s325 = sadd.s32 %s21, 1
        %s326 = smul.u32 %s325, 16
        %s327 = smul.u32 2, %s326
      $region44: #{complex_conv_transpose2d.1} parent=27 // pred_fallthru
        _
    $region28: #{complex_conv_transpose2d.1} parent=5 // pred_fallthru
      _
    %p328 = scmp.le.s32.totalorder 1, %s13
    %p329 = scmp.lt.s32.totalorder %s13, 3
    %p330 = pnand %p328, %p329
    %p331 = pneg %p330
    // Predicated region
    $region45: #{complex_conv_transpose2d.1} parent=5 // pred_check
      _
    $region46: #{complex_conv_transpose2d.1} parent=5 // pred_check_branch
      %333 = sbr.rel (%p330) target = $region48
    $region47: #{complex_conv_transpose2d.1} parent=5 // pred_region
      %s334 = ssub.s32 %s13, 1
      %s335 = smul.u32 32, %s23
      %p336 = scmp.lt.s32.totalorder %s22, 1
      %s337 = scalar_select %p336, %s22, 1
      %p338 = scmp.lt.s32.totalorder %s335, 63
      %s339 = scalar_select %p338, %s335, 63
      %s340 = smul.addr %s339, 5
      %s341 = smul.addr %s337, 320
      %s342 = sadd.s32 %s340, %s341
      %s343 = smul.addr %s342, 8
      %s344 = scalar_lea.vmem %s0, %s343
      %p345 = pneg %p53
      %p346 = pneg %p50
      %s347 = sadd.s32 %s23, 1
      %s348 = smul.u32 %s347, 16
      %s349 = smul.u32 2, %s348
      %p350 = scmp.lt.s32.totalorder %s22, 1
      %s351 = scalar_select %p350, %s22, 1
      %p352 = scmp.lt.s32.totalorder %s349, 63
      %s353 = scalar_select %p352, %s349, 63
      %s354 = smul.addr %s353, 5
      %s355 = smul.addr %s351, 320
      %s356 = sadd.s32 %s354, %s355
      %s357 = smul.addr %s356, 8
      %s358 = scalar_lea.vmem %s1, %s357
      %p359 = pneg %p85
      %p360 = pneg %p82
      %s361 = smul.u32 32, %s23
      %p362 = scmp.lt.s32.totalorder %s22, 1
      %s363 = scalar_select %p362, %s22, 1
      %p364 = scmp.lt.s32.totalorder %s361, 63
      %s365 = scalar_select %p364, %s361, 63
      %s366 = smul.addr %s365, 5
      %s367 = smul.addr %s363, 320
      %s368 = sadd.s32 %s366, %s367
      %s369 = smul.addr %s368, 8
      %s370 = scalar_lea.vmem %s2, %s369
      %p371 = pneg %p113
      %p372 = pneg %p110
      %s373 = sadd.s32 %s23, 1
      %s374 = smul.u32 %s373, 16
      %s375 = smul.u32 2, %s374
      %p376 = scmp.lt.s32.totalorder %s22, 1
      %s377 = scalar_select %p376, %s22, 1
      %p378 = scmp.lt.s32.totalorder %s375, 63
      %s379 = scalar_select %p378, %s375, 63
      %s380 = smul.addr %s379, 5
      %s381 = smul.addr %s377, 320
      %s382 = sadd.s32 %s380, %s381
      %s383 = smul.addr %s382, 8
      %s384 = scalar_lea.vmem %s3, %s383
      %p385 = pneg %p145
      %p386 = pneg %p142
      %p387 = pneg %p166
      %p388 = pneg %p163
      %p389 = pneg %p187
      %p390 = pneg %p184
      %p391 = pneg %p208
      %p392 = pneg %p205
      %p393 = pneg %p236
      %p394 = pneg %p233
      %s395 = smul.u32 32, %s23
      %p396 = scmp.lt.s32.totalorder %s22, 1
      %s397 = scalar_select %p396, %s22, 1
      %p398 = scmp.lt.s32.totalorder %s395, 31
      %s399 = scalar_select %p398, %s395, 31
      %s400 = smul.addr %s399, 4
      %s401 = smul.addr %s397, 128
      %s402 = sadd.s32 %s400, %s401
      %s403 = smul.addr %s402, 8
      %s404 = scalar_lea.vmem %s7, %s403
      %s405 = smul.u32 32, %s23
      %p406 = scmp.lt.s32.totalorder %s22, 1
      %s407 = scalar_select %p406, %s22, 1
      %p408 = scmp.lt.s32.totalorder %s405, 63
      %s409 = scalar_select %p408, %s405, 63
      %s410 = smul.addr %s409, 5
      %s411 = smul.addr %s407, 320
      %s412 = sadd.s32 %s410, %s411
      %s413 = smul.addr %s412, 8
      %s414 = scalar_lea.vmem %s0, %s413
      %s415 = smul.u32 32, %s23
      %s416 = sadd.s32 %s23, 1
      %s417 = smul.u32 %s416, 16
      %s418 = smul.u32 2, %s417
      %p419 = scmp.lt.s32.totalorder %s22, 1
      %s420 = scalar_select %p419, %s22, 1
      %p421 = scmp.lt.s32.totalorder %s418, 63
      %s422 = scalar_select %p421, %s418, 63
      %s423 = smul.addr %s422, 5
      %s424 = smul.addr %s420, 320
      %s425 = sadd.s32 %s423, %s424
      %s426 = smul.addr %s425, 8
      %s427 = scalar_lea.vmem %s1, %s426
      %s428 = sadd.s32 %s23, 1
      %s429 = smul.u32 %s428, 16
      %s430 = smul.u32 2, %s429
      %s431 = smul.u32 32, %s23
      %p432 = scmp.lt.s32.totalorder %s22, 1
      %s433 = scalar_select %p432, %s22, 1
      %p434 = scmp.lt.s32.totalorder %s431, 63
      %s435 = scalar_select %p434, %s431, 63
      %s436 = smul.addr %s435, 5
      %s437 = smul.addr %s433, 320
      %s438 = sadd.s32 %s436, %s437
      %s439 = smul.addr %s438, 8
      %s440 = scalar_lea.vmem %s2, %s439
      %s441 = smul.u32 32, %s23
      %s442 = sadd.s32 %s23, 1
      %s443 = smul.u32 %s442, 16
      %s444 = smul.u32 2, %s443
      %p445 = scmp.lt.s32.totalorder %s22, 1
      %s446 = scalar_select %p445, %s22, 1
      %p447 = scmp.lt.s32.totalorder %s444, 63
      %s448 = scalar_select %p447, %s444, 63
      %s449 = smul.addr %s448, 5
      %s450 = smul.addr %s446, 320
      %s451 = sadd.s32 %s449, %s450
      %s452 = smul.addr %s451, 8
      %s453 = scalar_lea.vmem %s3, %s452
      %s454 = sadd.s32 %s23, 1
      %s455 = smul.u32 %s454, 16
      %s456 = smul.u32 2, %s455
      %s457 = smul.u32 32, %s23
      %p458 = scmp.lt.s32.totalorder %s22, 1
      %s459 = scalar_select %p458, %s22, 1
      %p460 = scmp.lt.s32.totalorder %s457, 31
      %s461 = scalar_select %p460, %s457, 31
      %s462 = smul.addr %s461, 4
      %s463 = smul.addr %s459, 128
      %s464 = sadd.s32 %s462, %s463
      %s465 = smul.addr %s464, 8
      %s466 = scalar_lea.vmem %s7, %s465
      %s467 = smul.u32 32, %s23
      %v468 = vld [vmem:[%s414] sm:$0xff]
      %v469 = vld [vmem:[%s414 + $0x8] sm:$0xff]
      %v470 = vld [vmem:[%s414 + $0x10] sm:$0xff]
      %v471 = vld [vmem:[%s414 + $0x18] sm:$0xff]
      %v472 = vld [vmem:[%s414 + $0x20] sm:$0x3]
      %v473 = vld [vmem:[%s414 + $0x28] sm:$0xff]
      %v474 = vld [vmem:[%s414 + $0x30] sm:$0xff]
      %v475 = vld [vmem:[%s414 + $0x38] sm:$0xff]
      %v476 = vld [vmem:[%s414 + $0x40] sm:$0xff]
      %v477 = vld [vmem:[%s414 + $0x48] sm:$0x3]
      %v478 = vld [vmem:[%s414 + $0x50] sm:$0xff]
      %v479 = vld [vmem:[%s414 + $0x58] sm:$0xff]
      %v480 = vld [vmem:[%s414 + $0x60] sm:$0xff]
      %v481 = vld [vmem:[%s414 + $0x68] sm:$0xff]
      %v482 = vld [vmem:[%s414 + $0x70] sm:$0x3]
      %v483 = vld [vmem:[%s414 + $0x78] sm:$0xff]
      %v484 = vld [vmem:[%s414 + $0x80] sm:$0xff]
      %v485 = vld [vmem:[%s414 + $0x88] sm:$0xff]
      %v486 = vld [vmem:[%s414 + $0x90] sm:$0xff]
      %v487 = vld [vmem:[%s414 + $0x98] sm:$0x3]
      %v488 = vld [vmem:[%s414 + $0xa0] sm:$0xff]
      %v489 = vld [vmem:[%s414 + $0xa8] sm:$0xff]
      %v490 = vld [vmem:[%s414 + $0xb0] sm:$0xff]
      %v491 = vld [vmem:[%s414 + $0xb8] sm:$0xff]
      %v492 = vld [vmem:[%s414 + $0xc0] sm:$0x3]
      %v493 = vld [vmem:[%s414 + $0xc8] sm:$0xff]
      %v494 = vld [vmem:[%s414 + $0xd0] sm:$0xff]
      %v495 = vld [vmem:[%s414 + $0xd8] sm:$0xff]
      %v496 = vld [vmem:[%s414 + $0xe0] sm:$0xff]
      %v497 = vld [vmem:[%s414 + $0xe8] sm:$0x3]
      %v498 = vld [vmem:[%s414 + $0xf0] sm:$0xff]
      %v499 = vld [vmem:[%s414 + $0xf8] sm:$0xff]
      %v500 = vld [vmem:[%s414 + $0x100] sm:$0xff]
      %v501 = vld [vmem:[%s414 + $0x108] sm:$0xff]
      %v502 = vld [vmem:[%s414 + $0x110] sm:$0x3]
      %v503 = vld [vmem:[%s414 + $0x118] sm:$0xff]
      %v504 = vld [vmem:[%s414 + $0x120] sm:$0xff]
      %v505 = vld [vmem:[%s414 + $0x128] sm:$0xff]
      %v506 = vld [vmem:[%s414 + $0x130] sm:$0xff]
      %v507 = vld [vmem:[%s414 + $0x138] sm:$0x3]
      %v508 = vld [vmem:[%s414 + $0x140] sm:$0xff]
      %v509 = vld [vmem:[%s414 + $0x148] sm:$0xff]
      %v510 = vld [vmem:[%s414 + $0x150] sm:$0xff]
      %v511 = vld [vmem:[%s414 + $0x158] sm:$0xff]
      %v512 = vld [vmem:[%s414 + $0x160] sm:$0x3]
      %v513 = vld [vmem:[%s414 + $0x168] sm:$0xff]
      %v514 = vld [vmem:[%s414 + $0x170] sm:$0xff]
      %v515 = vld [vmem:[%s414 + $0x178] sm:$0xff]
      %v516 = vld [vmem:[%s414 + $0x180] sm:$0xff]
      %v517 = vld [vmem:[%s414 + $0x188] sm:$0x3]
      %v518 = vld [vmem:[%s414 + $0x190] sm:$0xff]
      %v519 = vld [vmem:[%s414 + $0x198] sm:$0xff]
      %v520 = vld [vmem:[%s414 + $0x1a0] sm:$0xff]
      %v521 = vld [vmem:[%s414 + $0x1a8] sm:$0xff]
      %v522 = vld [vmem:[%s414 + $0x1b0] sm:$0x3]
      %v523 = vld [vmem:[%s414 + $0x1b8] sm:$0xff]
      %v524 = vld [vmem:[%s414 + $0x1c0] sm:$0xff]
      %v525 = vld [vmem:[%s414 + $0x1c8] sm:$0xff]
      %v526 = vld [vmem:[%s414 + $0x1d0] sm:$0xff]
      %v527 = vld [vmem:[%s414 + $0x1d8] sm:$0x3]
      %v528 = vld [vmem:[%s414 + $0x1e0] sm:$0xff]
      %v529 = vld [vmem:[%s414 + $0x1e8] sm:$0xff]
      %v530 = vld [vmem:[%s414 + $0x1f0] sm:$0xff]
      %v531 = vld [vmem:[%s414 + $0x1f8] sm:$0xff]
      %v532 = vld [vmem:[%s414 + $0x200] sm:$0x3]
      %v533 = vld [vmem:[%s414 + $0x208] sm:$0xff]
      %v534 = vld [vmem:[%s414 + $0x210] sm:$0xff]
      %v535 = vld [vmem:[%s414 + $0x218] sm:$0xff]
      %v536 = vld [vmem:[%s414 + $0x220] sm:$0xff]
      %v537 = vld [vmem:[%s414 + $0x228] sm:$0x3]
      %v538 = vld [vmem:[%s414 + $0x230] sm:$0xff]
      %v539 = vld [vmem:[%s414 + $0x238] sm:$0xff]
      %v540 = vld [vmem:[%s414 + $0x240] sm:$0xff]
      %v541 = vld [vmem:[%s414 + $0x248] sm:$0xff]
      %v542 = vld [vmem:[%s414 + $0x250] sm:$0x3]
      %v543 = vld [vmem:[%s414 + $0x258] sm:$0xff]
      %v544 = vld [vmem:[%s414 + $0x260] sm:$0xff]
      %v545 = vld [vmem:[%s414 + $0x268] sm:$0xff]
      %v546 = vld [vmem:[%s414 + $0x270] sm:$0xff]
      %v547 = vld [vmem:[%s414 + $0x278] sm:$0x3]
      %v548 = vld [vmem:[%s414 + $0x280] sm:$0xff]
      %v549 = vld [vmem:[%s414 + $0x288] sm:$0xff]
      %v550 = vld [vmem:[%s414 + $0x290] sm:$0xff]
      %v551 = vld [vmem:[%s414 + $0x298] sm:$0xff]
      %v552 = vld [vmem:[%s414 + $0x2a0] sm:$0x3]
      %v553 = vld [vmem:[%s414 + $0x2a8] sm:$0xff]
      %v554 = vld [vmem:[%s414 + $0x2b0] sm:$0xff]
      %v555 = vld [vmem:[%s414 + $0x2b8] sm:$0xff]
      %v556 = vld [vmem:[%s414 + $0x2c0] sm:$0xff]
      %v557 = vld [vmem:[%s414 + $0x2c8] sm:$0x3]
      %v558 = vld [vmem:[%s414 + $0x2d0] sm:$0xff]
      %v559 = vld [vmem:[%s414 + $0x2d8] sm:$0xff]
      %v560 = vld [vmem:[%s414 + $0x2e0] sm:$0xff]
      %v561 = vld [vmem:[%s414 + $0x2e8] sm:$0xff]
      %v562 = vld [vmem:[%s414 + $0x2f0] sm:$0x3]
      %v563 = vld [vmem:[%s414 + $0x2f8] sm:$0xff]
      %v564 = vld [vmem:[%s414 + $0x300] sm:$0xff]
      %v565 = vld [vmem:[%s414 + $0x308] sm:$0xff]
      %v566 = vld [vmem:[%s414 + $0x310] sm:$0xff]
      %v567 = vld [vmem:[%s414 + $0x318] sm:$0x3]
      %v568 = vld [vmem:[%s414 + $0x320] sm:$0xff]
      %v569 = vld [vmem:[%s414 + $0x328] sm:$0xff]
      %v570 = vld [vmem:[%s414 + $0x330] sm:$0xff]
      %v571 = vld [vmem:[%s414 + $0x338] sm:$0xff]
      %v572 = vld [vmem:[%s414 + $0x340] sm:$0x3]
      %v573 = vld [vmem:[%s414 + $0x348] sm:$0xff]
      %v574 = vld [vmem:[%s414 + $0x350] sm:$0xff]
      %v575 = vld [vmem:[%s414 + $0x358] sm:$0xff]
      %v576 = vld [vmem:[%s414 + $0x360] sm:$0xff]
      %v577 = vld [vmem:[%s414 + $0x368] sm:$0x3]
      %v578 = vld [vmem:[%s414 + $0x370] sm:$0xff]
      %v579 = vld [vmem:[%s414 + $0x378] sm:$0xff]
      %v580 = vld [vmem:[%s414 + $0x380] sm:$0xff]
      %v581 = vld [vmem:[%s414 + $0x388] sm:$0xff]
      %v582 = vld [vmem:[%s414 + $0x390] sm:$0x3]
      %v583 = vld [vmem:[%s414 + $0x398] sm:$0xff]
      %v584 = vld [vmem:[%s414 + $0x3a0] sm:$0xff]
      %v585 = vld [vmem:[%s414 + $0x3a8] sm:$0xff]
      %v586 = vld [vmem:[%s414 + $0x3b0] sm:$0xff]
      %v587 = vld [vmem:[%s414 + $0x3b8] sm:$0x3]
      %v588 = vld [vmem:[%s414 + $0x3c0] sm:$0xff]
      %v589 = vld [vmem:[%s414 + $0x3c8] sm:$0xff]
      %v590 = vld [vmem:[%s414 + $0x3d0] sm:$0xff]
      %v591 = vld [vmem:[%s414 + $0x3d8] sm:$0xff]
      %v592 = vld [vmem:[%s414 + $0x3e0] sm:$0x3]
      %v593 = vld [vmem:[%s414 + $0x3e8] sm:$0xff]
      %v594 = vld [vmem:[%s414 + $0x3f0] sm:$0xff]
      %v595 = vld [vmem:[%s414 + $0x3f8] sm:$0xff]
      %v596 = vld [vmem:[%s414 + $0x400] sm:$0xff]
      %v597 = vld [vmem:[%s414 + $0x408] sm:$0x3]
      %v598 = vld [vmem:[%s414 + $0x410] sm:$0xff]
      %v599 = vld [vmem:[%s414 + $0x418] sm:$0xff]
      %v600 = vld [vmem:[%s414 + $0x420] sm:$0xff]
      %v601 = vld [vmem:[%s414 + $0x428] sm:$0xff]
      %v602 = vld [vmem:[%s414 + $0x430] sm:$0x3]
      %v603 = vld [vmem:[%s414 + $0x438] sm:$0xff]
      %v604 = vld [vmem:[%s414 + $0x440] sm:$0xff]
      %v605 = vld [vmem:[%s414 + $0x448] sm:$0xff]
      %v606 = vld [vmem:[%s414 + $0x450] sm:$0xff]
      %v607 = vld [vmem:[%s414 + $0x458] sm:$0x3]
      %v608 = vld [vmem:[%s414 + $0x460] sm:$0xff]
      %v609 = vld [vmem:[%s414 + $0x468] sm:$0xff]
      %v610 = vld [vmem:[%s414 + $0x470] sm:$0xff]
      %v611 = vld [vmem:[%s414 + $0x478] sm:$0xff]
      %v612 = vld [vmem:[%s414 + $0x480] sm:$0x3]
      %v613 = vld [vmem:[%s414 + $0x488] sm:$0xff]
      %v614 = vld [vmem:[%s414 + $0x490] sm:$0xff]
      %v615 = vld [vmem:[%s414 + $0x498] sm:$0xff]
      %v616 = vld [vmem:[%s414 + $0x4a0] sm:$0xff]
      %v617 = vld [vmem:[%s414 + $0x4a8] sm:$0x3]
      %v618 = vld [vmem:[%s414 + $0x4b0] sm:$0xff]
      %v619 = vld [vmem:[%s414 + $0x4b8] sm:$0xff]
      %v620 = vld [vmem:[%s414 + $0x4c0] sm:$0xff]
      %v621 = vld [vmem:[%s414 + $0x4c8] sm:$0xff]
      %v622 = vld [vmem:[%s414 + $0x4d0] sm:$0x3]
      %v623 = vld [vmem:[%s414 + $0x4d8] sm:$0xff]
      %v624 = vld [vmem:[%s414 + $0x4e0] sm:$0xff]
      %v625 = vld [vmem:[%s414 + $0x4e8] sm:$0xff]
      %v626 = vld [vmem:[%s414 + $0x4f0] sm:$0xff]
      %v627 = vld [vmem:[%s414 + $0x4f8] sm:$0x3]
      %v628 = vld [vmem:[%s427] sm:$0xff]
      %v629 = vld [vmem:[%s427 + $0x8] sm:$0xff]
      %v630 = vld [vmem:[%s427 + $0x10] sm:$0xff]
      %v631 = vld [vmem:[%s427 + $0x18] sm:$0xff]
      %v632 = vld [vmem:[%s427 + $0x20] sm:$0x3]
      %v633 = vld [vmem:[%s427 + $0x28] sm:$0xff]
      %v634 = vld [vmem:[%s427 + $0x30] sm:$0xff]
      %v635 = vld [vmem:[%s427 + $0x38] sm:$0xff]
      %v636 = vld [vmem:[%s427 + $0x40] sm:$0xff]
      %v637 = vld [vmem:[%s427 + $0x48] sm:$0x3]
      %v638 = vld [vmem:[%s440] sm:$0xff]
      %v639 = vld [vmem:[%s440 + $0x8] sm:$0xff]
      %v640 = vld [vmem:[%s440 + $0x10] sm:$0xff]
      %v641 = vld [vmem:[%s440 + $0x18] sm:$0xff]
      %v642 = vld [vmem:[%s440 + $0x20] sm:$0x3]
      %v643 = vld [vmem:[%s440 + $0x28] sm:$0xff]
      %v644 = vld [vmem:[%s440 + $0x30] sm:$0xff]
      %v645 = vld [vmem:[%s440 + $0x38] sm:$0xff]
      %v646 = vld [vmem:[%s440 + $0x40] sm:$0xff]
      %v647 = vld [vmem:[%s440 + $0x48] sm:$0x3]
      %v648 = vld [vmem:[%s440 + $0x50] sm:$0xff]
      %v649 = vld [vmem:[%s440 + $0x58] sm:$0xff]
      %v650 = vld [vmem:[%s440 + $0x60] sm:$0xff]
      %v651 = vld [vmem:[%s440 + $0x68] sm:$0xff]
      %v652 = vld [vmem:[%s440 + $0x70] sm:$0x3]
      %v653 = vld [vmem:[%s440 + $0x78] sm:$0xff]
      %v654 = vld [vmem:[%s440 + $0x80] sm:$0xff]
      %v655 = vld [vmem:[%s440 + $0x88] sm:$0xff]
      %v656 = vld [vmem:[%s440 + $0x90] sm:$0xff]
      %v657 = vld [vmem:[%s440 + $0x98] sm:$0x3]
      %v658 = vld [vmem:[%s440 + $0xa0] sm:$0xff]
      %v659 = vld [vmem:[%s440 + $0xa8] sm:$0xff]
      %v660 = vld [vmem:[%s440 + $0xb0] sm:$0xff]
      %v661 = vld [vmem:[%s440 + $0xb8] sm:$0xff]
      %v662 = vld [vmem:[%s440 + $0xc0] sm:$0x3]
      %v663 = vld [vmem:[%s440 + $0xc8] sm:$0xff]
      %v664 = vld [vmem:[%s440 + $0xd0] sm:$0xff]
      %v665 = vld [vmem:[%s440 + $0xd8] sm:$0xff]
      %v666 = vld [vmem:[%s440 + $0xe0] sm:$0xff]
      %v667 = vld [vmem:[%s440 + $0xe8] sm:$0x3]
      %v668 = vld [vmem:[%s440 + $0xf0] sm:$0xff]
      %v669 = vld [vmem:[%s440 + $0xf8] sm:$0xff]
      %v670 = vld [vmem:[%s440 + $0x100] sm:$0xff]
      %v671 = vld [vmem:[%s440 + $0x108] sm:$0xff]
      %v672 = vld [vmem:[%s440 + $0x110] sm:$0x3]
      %v673 = vld [vmem:[%s440 + $0x118] sm:$0xff]
      %v674 = vld [vmem:[%s440 + $0x120] sm:$0xff]
      %v675 = vld [vmem:[%s440 + $0x128] sm:$0xff]
      %v676 = vld [vmem:[%s440 + $0x130] sm:$0xff]
      %v677 = vld [vmem:[%s440 + $0x138] sm:$0x3]
      %v678 = vld [vmem:[%s440 + $0x140] sm:$0xff]
      %v679 = vld [vmem:[%s440 + $0x148] sm:$0xff]
      %v680 = vld [vmem:[%s440 + $0x150] sm:$0xff]
      %v681 = vld [vmem:[%s440 + $0x158] sm:$0xff]
      %v682 = vld [vmem:[%s440 + $0x160] sm:$0x3]
      %v683 = vld [vmem:[%s440 + $0x168] sm:$0xff]
      %v684 = vld [vmem:[%s440 + $0x170] sm:$0xff]
      %v685 = vld [vmem:[%s440 + $0x178] sm:$0xff]
      %v686 = vld [vmem:[%s440 + $0x180] sm:$0xff]
      %v687 = vld [vmem:[%s440 + $0x188] sm:$0x3]
      %v688 = vld [vmem:[%s440 + $0x190] sm:$0xff]
      %v689 = vld [vmem:[%s440 + $0x198] sm:$0xff]
      %v690 = vld [vmem:[%s440 + $0x1a0] sm:$0xff]
      %v691 = vld [vmem:[%s440 + $0x1a8] sm:$0xff]
      %v692 = vld [vmem:[%s440 + $0x1b0] sm:$0x3]
      %v693 = vld [vmem:[%s440 + $0x1b8] sm:$0xff]
      %v694 = vld [vmem:[%s440 + $0x1c0] sm:$0xff]
      %v695 = vld [vmem:[%s440 + $0x1c8] sm:$0xff]
      %v696 = vld [vmem:[%s440 + $0x1d0] sm:$0xff]
      %v697 = vld [vmem:[%s440 + $0x1d8] sm:$0x3]
      %v698 = vld [vmem:[%s440 + $0x1e0] sm:$0xff]
      %v699 = vld [vmem:[%s440 + $0x1e8] sm:$0xff]
      %v700 = vld [vmem:[%s440 + $0x1f0] sm:$0xff]
      %v701 = vld [vmem:[%s440 + $0x1f8] sm:$0xff]
      %v702 = vld [vmem:[%s440 + $0x200] sm:$0x3]
      %v703 = vld [vmem:[%s440 + $0x208] sm:$0xff]
      %v704 = vld [vmem:[%s440 + $0x210] sm:$0xff]
      %v705 = vld [vmem:[%s440 + $0x218] sm:$0xff]
      %v706 = vld [vmem:[%s440 + $0x220] sm:$0xff]
      %v707 = vld [vmem:[%s440 + $0x228] sm:$0x3]
      %v708 = vld [vmem:[%s440 + $0x230] sm:$0xff]
      %v709 = vld [vmem:[%s440 + $0x238] sm:$0xff]
      %v710 = vld [vmem:[%s440 + $0x240] sm:$0xff]
      %v711 = vld [vmem:[%s440 + $0x248] sm:$0xff]
      %v712 = vld [vmem:[%s440 + $0x250] sm:$0x3]
      %v713 = vld [vmem:[%s440 + $0x258] sm:$0xff]
      %v714 = vld [vmem:[%s440 + $0x260] sm:$0xff]
      %v715 = vld [vmem:[%s440 + $0x268] sm:$0xff]
      %v716 = vld [vmem:[%s440 + $0x270] sm:$0xff]
      %v717 = vld [vmem:[%s440 + $0x278] sm:$0x3]
      %v718 = vld [vmem:[%s440 + $0x280] sm:$0xff]
      %v719 = vld [vmem:[%s440 + $0x288] sm:$0xff]
      %v720 = vld [vmem:[%s440 + $0x290] sm:$0xff]
      %v721 = vld [vmem:[%s440 + $0x298] sm:$0xff]
      %v722 = vld [vmem:[%s440 + $0x2a0] sm:$0x3]
      %v723 = vld [vmem:[%s440 + $0x2a8] sm:$0xff]
      %v724 = vld [vmem:[%s440 + $0x2b0] sm:$0xff]
      %v725 = vld [vmem:[%s440 + $0x2b8] sm:$0xff]
      %v726 = vld [vmem:[%s440 + $0x2c0] sm:$0xff]
      %v727 = vld [vmem:[%s440 + $0x2c8] sm:$0x3]
      %v728 = vld [vmem:[%s440 + $0x2d0] sm:$0xff]
      %v729 = vld [vmem:[%s440 + $0x2d8] sm:$0xff]
      %v730 = vld [vmem:[%s440 + $0x2e0] sm:$0xff]
      %v731 = vld [vmem:[%s440 + $0x2e8] sm:$0xff]
      %v732 = vld [vmem:[%s440 + $0x2f0] sm:$0x3]
      %v733 = vld [vmem:[%s440 + $0x2f8] sm:$0xff]
      %v734 = vld [vmem:[%s440 + $0x300] sm:$0xff]
      %v735 = vld [vmem:[%s440 + $0x308] sm:$0xff]
      %v736 = vld [vmem:[%s440 + $0x310] sm:$0xff]
      %v737 = vld [vmem:[%s440 + $0x318] sm:$0x3]
      %v738 = vld [vmem:[%s440 + $0x320] sm:$0xff]
      %v739 = vld [vmem:[%s440 + $0x328] sm:$0xff]
      %v740 = vld [vmem:[%s440 + $0x330] sm:$0xff]
      %v741 = vld [vmem:[%s440 + $0x338] sm:$0xff]
      %v742 = vld [vmem:[%s440 + $0x340] sm:$0x3]
      %v743 = vld [vmem:[%s440 + $0x348] sm:$0xff]
      %v744 = vld [vmem:[%s440 + $0x350] sm:$0xff]
      %v745 = vld [vmem:[%s440 + $0x358] sm:$0xff]
      %v746 = vld [vmem:[%s440 + $0x360] sm:$0xff]
      %v747 = vld [vmem:[%s440 + $0x368] sm:$0x3]
      %v748 = vld [vmem:[%s440 + $0x370] sm:$0xff]
      %v749 = vld [vmem:[%s440 + $0x378] sm:$0xff]
      %v750 = vld [vmem:[%s440 + $0x380] sm:$0xff]
      %v751 = vld [vmem:[%s440 + $0x388] sm:$0xff]
      %v752 = vld [vmem:[%s440 + $0x390] sm:$0x3]
      %v753 = vld [vmem:[%s440 + $0x398] sm:$0xff]
      %v754 = vld [vmem:[%s440 + $0x3a0] sm:$0xff]
      %v755 = vld [vmem:[%s440 + $0x3a8] sm:$0xff]
      %v756 = vld [vmem:[%s440 + $0x3b0] sm:$0xff]
      %v757 = vld [vmem:[%s440 + $0x3b8] sm:$0x3]
      %v758 = vld [vmem:[%s440 + $0x3c0] sm:$0xff]
      %v759 = vld [vmem:[%s440 + $0x3c8] sm:$0xff]
      %v760 = vld [vmem:[%s440 + $0x3d0] sm:$0xff]
      %v761 = vld [vmem:[%s440 + $0x3d8] sm:$0xff]
      %v762 = vld [vmem:[%s440 + $0x3e0] sm:$0x3]
      %v763 = vld [vmem:[%s440 + $0x3e8] sm:$0xff]
      %v764 = vld [vmem:[%s440 + $0x3f0] sm:$0xff]
      %v765 = vld [vmem:[%s440 + $0x3f8] sm:$0xff]
      %v766 = vld [vmem:[%s440 + $0x400] sm:$0xff]
      %v767 = vld [vmem:[%s440 + $0x408] sm:$0x3]
      %v768 = vld [vmem:[%s440 + $0x410] sm:$0xff]
      %v769 = vld [vmem:[%s440 + $0x418] sm:$0xff]
      %v770 = vld [vmem:[%s440 + $0x420] sm:$0xff]
      %v771 = vld [vmem:[%s440 + $0x428] sm:$0xff]
      %v772 = vld [vmem:[%s440 + $0x430] sm:$0x3]
      %v773 = vld [vmem:[%s440 + $0x438] sm:$0xff]
      %v774 = vld [vmem:[%s440 + $0x440] sm:$0xff]
      %v775 = vld [vmem:[%s440 + $0x448] sm:$0xff]
      %v776 = vld [vmem:[%s440 + $0x450] sm:$0xff]
      %v777 = vld [vmem:[%s440 + $0x458] sm:$0x3]
      %v778 = vld [vmem:[%s440 + $0x460] sm:$0xff]
      %v779 = vld [vmem:[%s440 + $0x468] sm:$0xff]
      %v780 = vld [vmem:[%s440 + $0x470] sm:$0xff]
      %v781 = vld [vmem:[%s440 + $0x478] sm:$0xff]
      %v782 = vld [vmem:[%s440 + $0x480] sm:$0x3]
      %v783 = vld [vmem:[%s440 + $0x488] sm:$0xff]
      %v784 = vld [vmem:[%s440 + $0x490] sm:$0xff]
      %v785 = vld [vmem:[%s440 + $0x498] sm:$0xff]
      %v786 = vld [vmem:[%s440 + $0x4a0] sm:$0xff]
      %v787 = vld [vmem:[%s440 + $0x4a8] sm:$0x3]
      %v788 = vld [vmem:[%s440 + $0x4b0] sm:$0xff]
      %v789 = vld [vmem:[%s440 + $0x4b8] sm:$0xff]
      %v790 = vld [vmem:[%s440 + $0x4c0] sm:$0xff]
      %v791 = vld [vmem:[%s440 + $0x4c8] sm:$0xff]
      %v792 = vld [vmem:[%s440 + $0x4d0] sm:$0x3]
      %v793 = vld [vmem:[%s440 + $0x4d8] sm:$0xff]
      %v794 = vld [vmem:[%s440 + $0x4e0] sm:$0xff]
      %v795 = vld [vmem:[%s440 + $0x4e8] sm:$0xff]
      %v796 = vld [vmem:[%s440 + $0x4f0] sm:$0xff]
      %v797 = vld [vmem:[%s440 + $0x4f8] sm:$0x3]
      %v798 = vld [vmem:[%s453] sm:$0xff]
      %v799 = vld [vmem:[%s453 + $0x8] sm:$0xff]
      %v800 = vld [vmem:[%s453 + $0x10] sm:$0xff]
      %v801 = vld [vmem:[%s453 + $0x18] sm:$0xff]
      %v802 = vld [vmem:[%s453 + $0x20] sm:$0x3]
      %v803 = vld [vmem:[%s453 + $0x28] sm:$0xff]
      %v804 = vld [vmem:[%s453 + $0x30] sm:$0xff]
      %v805 = vld [vmem:[%s453 + $0x38] sm:$0xff]
      %v806 = vld [vmem:[%s453 + $0x40] sm:$0xff]
      %v807 = vld [vmem:[%s453 + $0x48] sm:$0x3]
      %v808 = vld [vmem:[%s4] sm:$0xff]
      %v809 = vld [vmem:[%s4 + $0x8] sm:$0xff]
      %v810 = vld [vmem:[%s4 + $0x10] sm:$0xff]
      %v811 = vld [vmem:[%s4 + $0x18] sm:$0xff]
      %v812 = vld [vmem:[%s4 + $0x20] sm:$0xff]
      %v813 = vld [vmem:[%s4 + $0x28] sm:$0xff]
      %v814 = vld [vmem:[%s4 + $0x30] sm:$0xff]
      %v815 = vld [vmem:[%s4 + $0x38] sm:$0xff]
      %v816 = vld [vmem:[%s4 + $0x40] sm:$0xff]
      %v817 = vld [vmem:[%s5] sm:$0xff]
      %v818 = vld [vmem:[%s5 + $0x8] sm:$0xff]
      %v819 = vld [vmem:[%s5 + $0x10] sm:$0xff]
      %v820 = vld [vmem:[%s5 + $0x18] sm:$0xff]
      %v821 = vld [vmem:[%s5 + $0x20] sm:$0xff]
      %v822 = vld [vmem:[%s5 + $0x28] sm:$0xff]
      %v823 = vld [vmem:[%s5 + $0x30] sm:$0xff]
      %v824 = vld [vmem:[%s5 + $0x38] sm:$0xff]
      %v825 = vld [vmem:[%s5 + $0x40] sm:$0xff]
      %vm826 = vcmask 64512
      %v828 = vsel %vm826, %v638, 0
      %v831 = vsel %vm826, %v639, 0
      %v834 = vsel %vm826, %v640, 0
      %v837 = vsel %vm826, %v641, 0
      %v840 = vsel %vm826, %v643, 0
      %v843 = vsel %vm826, %v644, 0
      %v846 = vsel %vm826, %v645, 0
      %v849 = vsel %vm826, %v646, 0
      %v852 = vsel %vm826, %v648, 0
      %v855 = vsel %vm826, %v649, 0
      %v858 = vsel %vm826, %v650, 0
      %v861 = vsel %vm826, %v651, 0
      %v864 = vsel %vm826, %v653, 0
      %v867 = vsel %vm826, %v654, 0
      %v870 = vsel %vm826, %v655, 0
      %v873 = vsel %vm826, %v656, 0
      %v876 = vsel %vm826, %v658, 0
      %v879 = vsel %vm826, %v659, 0
      %v882 = vsel %vm826, %v660, 0
      %v885 = vsel %vm826, %v661, 0
      %v888 = vsel %vm826, %v663, 0
      %v891 = vsel %vm826, %v664, 0
      %v894 = vsel %vm826, %v665, 0
      %v897 = vsel %vm826, %v666, 0
      %v900 = vsel %vm826, %v668, 0
      %v903 = vsel %vm826, %v669, 0
      %v906 = vsel %vm826, %v670, 0
      %v909 = vsel %vm826, %v671, 0
      %v912 = vsel %vm826, %v673, 0
      %v915 = vsel %vm826, %v674, 0
      %v918 = vsel %vm826, %v675, 0
      %v921 = vsel %vm826, %v676, 0
      %v924 = vsel %vm826, %v678, 0
      %v927 = vsel %vm826, %v679, 0
      %v930 = vsel %vm826, %v680, 0
      %v933 = vsel %vm826, %v681, 0
      %v936 = vsel %vm826, %v683, 0
      %v939 = vsel %vm826, %v684, 0
      %v942 = vsel %vm826, %v685, 0
      %v945 = vsel %vm826, %v686, 0
      %v948 = vsel %vm826, %v688, 0
      %v951 = vsel %vm826, %v689, 0
      %v954 = vsel %vm826, %v690, 0
      %v957 = vsel %vm826, %v691, 0
      %v960 = vsel %vm826, %v693, 0
      %v963 = vsel %vm826, %v694, 0
      %v966 = vsel %vm826, %v695, 0
      %v969 = vsel %vm826, %v696, 0
      %v972 = vsel %vm826, %v698, 0
      %v975 = vsel %vm826, %v699, 0
      %v978 = vsel %vm826, %v700, 0
      %v981 = vsel %vm826, %v701, 0
      %v984 = vsel %vm826, %v703, 0
      %v987 = vsel %vm826, %v704, 0
      %v990 = vsel %vm826, %v705, 0
      %v993 = vsel %vm826, %v706, 0
      %v996 = vsel %vm826, %v708, 0
      %v999 = vsel %vm826, %v709, 0
      %v1002 = vsel %vm826, %v710, 0
      %v1005 = vsel %vm826, %v711, 0
      %v1008 = vsel %vm826, %v713, 0
      %v1011 = vsel %vm826, %v714, 0
      %v1014 = vsel %vm826, %v715, 0
      %v1017 = vsel %vm826, %v716, 0
      %v1020 = vsel %vm826, %v718, 0
      %v1023 = vsel %vm826, %v719, 0
      %v1026 = vsel %vm826, %v720, 0
      %v1029 = vsel %vm826, %v721, 0
      %v1032 = vsel %vm826, %v723, 0
      %v1035 = vsel %vm826, %v724, 0
      %v1038 = vsel %vm826, %v725, 0
      %v1041 = vsel %vm826, %v726, 0
      %v1044 = vsel %vm826, %v728, 0
      %v1047 = vsel %vm826, %v729, 0
      %v1050 = vsel %vm826, %v730, 0
      %v1053 = vsel %vm826, %v731, 0
      %v1056 = vsel %vm826, %v733, 0
      %v1059 = vsel %vm826, %v734, 0
      %v1062 = vsel %vm826, %v735, 0
      %v1065 = vsel %vm826, %v736, 0
      %v1068 = vsel %vm826, %v738, 0
      %v1071 = vsel %vm826, %v739, 0
      %v1074 = vsel %vm826, %v740, 0
      %v1077 = vsel %vm826, %v741, 0
      %v1080 = vsel %vm826, %v743, 0
      %v1083 = vsel %vm826, %v744, 0
      %v1086 = vsel %vm826, %v745, 0
      %v1089 = vsel %vm826, %v746, 0
      %v1092 = vsel %vm826, %v748, 0
      %v1095 = vsel %vm826, %v749, 0
      %v1098 = vsel %vm826, %v750, 0
      %v1101 = vsel %vm826, %v751, 0
      %v1104 = vsel %vm826, %v753, 0
      %v1107 = vsel %vm826, %v754, 0
      %v1110 = vsel %vm826, %v755, 0
      %v1113 = vsel %vm826, %v756, 0
      %v1116 = vsel %vm826, %v758, 0
      %v1119 = vsel %vm826, %v759, 0
      %v1122 = vsel %vm826, %v760, 0
      %v1125 = vsel %vm826, %v761, 0
      %v1128 = vsel %vm826, %v763, 0
      %v1131 = vsel %vm826, %v764, 0
      %v1134 = vsel %vm826, %v765, 0
      %v1137 = vsel %vm826, %v766, 0
      %v1140 = vsel %vm826, %v768, 0
      %v1143 = vsel %vm826, %v769, 0
      %v1146 = vsel %vm826, %v770, 0
      %v1149 = vsel %vm826, %v771, 0
      %v1152 = vsel %vm826, %v773, 0
      %v1155 = vsel %vm826, %v774, 0
      %v1158 = vsel %vm826, %v775, 0
      %v1161 = vsel %vm826, %v776, 0
      %v1164 = vsel %vm826, %v778, 0
      %v1167 = vsel %vm826, %v779, 0
      %v1170 = vsel %vm826, %v780, 0
      %v1173 = vsel %vm826, %v781, 0
      %v1176 = vsel %vm826, %v783, 0
      %v1179 = vsel %vm826, %v784, 0
      %v1182 = vsel %vm826, %v785, 0
      %v1185 = vsel %vm826, %v786, 0
      %v1188 = vsel %vm826, %v788, 0
      %v1191 = vsel %vm826, %v789, 0
      %v1194 = vsel %vm826, %v790, 0
      %v1197 = vsel %vm826, %v791, 0
      %v1200 = vsel %vm826, %v793, 0
      %v1203 = vsel %vm826, %v794, 0
      %v1206 = vsel %vm826, %v795, 0
      %v1209 = vsel %vm826, %v796, 0
      %1211 = vmatpush.msra.mxu0 0.0
      %1212 = vmatpush.msra.mxu0 0.0
      %1213 = vmatpush.msra.mxu0 0.0
      %1214 = vmatpush.msra.mxu0 0.0
      %1215 = vmatpush.msra.mxu0 0.0
      %1216 = vmatpush.msra.mxu0 0.0
      %1217 = vmatpush.msra.mxu0 0.0
      %1218 = vmatpush.msra.mxu0 0.0
      %1219 = vmatpush.msra.mxu0 0.0
      %1220 = vmatpush.msra.mxu0 0.0
      %1221 = vmatpush.msra.mxu0 0.0
      %1222 = vmatpush.msra.mxu0 0.0
      %1223 = vmatpush.msra.mxu0 0.0
      %1224 = vmatpush.msra.mxu0 0.0
      %1225 = vmatpush.msra.mxu0 0.0
      %1226 = vmatpush.msra.mxu0 %v817
      %1227 = vmatmul.f32.gmra.mxu0 %v828
      %v1228 = vpop.f32.mrf.mxu0
      %v1229 = vadd.f32 0.0, %v1228
      %1230 = vmatmul.f32.gmra.mxu0 %v831
      %v1231 = vpop.f32.mrf.mxu0
      %v1232 = vadd.f32 0.0, %v1231
      %1233 = vmatmul.f32.gmra.mxu0 %v834
      %v1234 = vpop.f32.mrf.mxu0
      %v1235 = vadd.f32 0.0, %v1234
      %1236 = vmatmul.f32.gmra.mxu0 %v837
      %v1237 = vpop.f32.mrf.mxu0
      %v1238 = vadd.f32 0.0, %v1237
      %1239 = vmatmul.f32.gmra.mxu0 %v840
      %v1240 = vpop.f32.mrf.mxu0
      %v1241 = vadd.f32 0.0, %v1240
      %1242 = vmatmul.f32.gmra.mxu0 %v843
      %v1243 = vpop.f32.mrf.mxu0
      %v1244 = vadd.f32 0.0, %v1243
      %1245 = vmatmul.f32.gmra.mxu0 %v846
      %v1246 = vpop.f32.mrf.mxu0
      %v1247 = vadd.f32 0.0, %v1246
      %1248 = vmatmul.f32.gmra.mxu0 %v849
      %v1249 = vpop.f32.mrf.mxu0
      %v1250 = vadd.f32 0.0, %v1249
      %1251 = vmatmul.f32.gmra.mxu0 %v852
      %v1252 = vpop.f32.mrf.mxu0
      %v1253 = vadd.f32 0.0, %v1252
      %1254 = vmatmul.f32.gmra.mxu0 %v855
      %v1255 = vpop.f32.mrf.mxu0
      %v1256 = vadd.f32 0.0, %v1255
      %1257 = vmatmul.f32.gmra.mxu0 %v858
      %v1258 = vpop.f32.mrf.mxu0
      %v1259 = vadd.f32 0.0, %v1258
      %1260 = vmatmul.f32.gmra.mxu0 %v861
      %v1261 = vpop.f32.mrf.mxu0
      %v1262 = vadd.f32 0.0, %v1261
      %1263 = vmatmul.f32.gmra.mxu0 %v864
      %v1264 = vpop.f32.mrf.mxu0
      %v1265 = vadd.f32 0.0, %v1264
      %1266 = vmatmul.f32.gmra.mxu0 %v867
      %v1267 = vpop.f32.mrf.mxu0
      %v1268 = vadd.f32 0.0, %v1267
      %1269 = vmatmul.f32.gmra.mxu0 %v870
      %v1270 = vpop.f32.mrf.mxu0
      %v1271 = vadd.f32 0.0, %v1270
      %1272 = vmatmul.f32.gmra.mxu0 %v873
      %v1273 = vpop.f32.mrf.mxu0
      %v1274 = vadd.f32 0.0, %v1273
      %1275 = vmatmul.f32.gmra.mxu0 %v876
      %v1276 = vpop.f32.mrf.mxu0
      %v1277 = vadd.f32 0.0, %v1276
      %1278 = vmatmul.f32.gmra.mxu0 %v879
      %v1279 = vpop.f32.mrf.mxu0
      %v1280 = vadd.f32 0.0, %v1279
      %1281 = vmatmul.f32.gmra.mxu0 %v882
      %v1282 = vpop.f32.mrf.mxu0
      %v1283 = vadd.f32 0.0, %v1282
      %1284 = vmatmul.f32.gmra.mxu0 %v885
      %v1285 = vpop.f32.mrf.mxu0
      %v1286 = vadd.f32 0.0, %v1285
      %1287 = vmatmul.f32.gmra.mxu0 %v888
      %v1288 = vpop.f32.mrf.mxu0
      %v1289 = vadd.f32 0.0, %v1288
      %1290 = vmatmul.f32.gmra.mxu0 %v891
      %v1291 = vpop.f32.mrf.mxu0
      %v1292 = vadd.f32 0.0, %v1291
      %1293 = vmatmul.f32.gmra.mxu0 %v894
      %v1294 = vpop.f32.mrf.mxu0
      %v1295 = vadd.f32 0.0, %v1294
      %1296 = vmatmul.f32.gmra.mxu0 %v897
      %v1297 = vpop.f32.mrf.mxu0
      %v1298 = vadd.f32 0.0, %v1297
      %1299 = vmatmul.f32.gmra.mxu0 %v900
      %v1300 = vpop.f32.mrf.mxu0
      %v1301 = vadd.f32 0.0, %v1300
      %1302 = vmatmul.f32.gmra.mxu0 %v903
      %v1303 = vpop.f32.mrf.mxu0
      %v1304 = vadd.f32 0.0, %v1303
      %1305 = vmatmul.f32.gmra.mxu0 %v906
      %v1306 = vpop.f32.mrf.mxu0
      %v1307 = vadd.f32 0.0, %v1306
      %1308 = vmatmul.f32.gmra.mxu0 %v909
      %v1309 = vpop.f32.mrf.mxu0
      %v1310 = vadd.f32 0.0, %v1309
      %1311 = vmatmul.f32.gmra.mxu0 %v912
      %v1312 = vpop.f32.mrf.mxu0
      %v1313 = vadd.f32 0.0, %v1312
      %1314 = vmatmul.f32.gmra.mxu0 %v915
      %v1315 = vpop.f32.mrf.mxu0
      %v1316 = vadd.f32 0.0, %v1315
      %1317 = vmatmul.f32.gmra.mxu0 %v918
      %v1318 = vpop.f32.mrf.mxu0
      %v1319 = vadd.f32 0.0, %v1318
      %1320 = vmatmul.f32.gmra.mxu0 %v921
      %v1321 = vpop.f32.mrf.mxu0
      %v1322 = vadd.f32 0.0, %v1321
      %1323 = vmatmul.f32.gmra.mxu0 %v924
      %v1324 = vpop.f32.mrf.mxu0
      %v1325 = vadd.f32 0.0, %v1324
      %1326 = vmatmul.f32.gmra.mxu0 %v927
      %v1327 = vpop.f32.mrf.mxu0
      %v1328 = vadd.f32 0.0, %v1327
      %1329 = vmatmul.f32.gmra.mxu0 %v930
      %v1330 = vpop.f32.mrf.mxu0
      %v1331 = vadd.f32 0.0, %v1330
      %1332 = vmatmul.f32.gmra.mxu0 %v933
      %v1333 = vpop.f32.mrf.mxu0
      %v1334 = vadd.f32 0.0, %v1333
      %1335 = vmatmul.f32.gmra.mxu0 %v936
      %v1336 = vpop.f32.mrf.mxu0
      %v1337 = vadd.f32 0.0, %v1336
      %1338 = vmatmul.f32.gmra.mxu0 %v939
      %v1339 = vpop.f32.mrf.mxu0
      %v1340 = vadd.f32 0.0, %v1339
      %1341 = vmatmul.f32.gmra.mxu0 %v942
      %v1342 = vpop.f32.mrf.mxu0
      %v1343 = vadd.f32 0.0, %v1342
      %1344 = vmatmul.f32.gmra.mxu0 %v945
      %v1345 = vpop.f32.mrf.mxu0
      %v1346 = vadd.f32 0.0, %v1345
      %1347 = vmatmul.f32.gmra.mxu0 %v948
      %v1348 = vpop.f32.mrf.mxu0
      %v1349 = vadd.f32 0.0, %v1348
      %1350 = vmatmul.f32.gmra.mxu0 %v951
      %v1351 = vpop.f32.mrf.mxu0
      %v1352 = vadd.f32 0.0, %v1351
      %1353 = vmatmul.f32.gmra.mxu0 %v954
      %v1354 = vpop.f32.mrf.mxu0
      %v1355 = vadd.f32 0.0, %v1354
      %1356 = vmatmul.f32.gmra.mxu0 %v957
      %v1357 = vpop.f32.mrf.mxu0
      %v1358 = vadd.f32 0.0, %v1357
      %1359 = vmatmul.f32.gmra.mxu0 %v960
      %v1360 = vpop.f32.mrf.mxu0
      %v1361 = vadd.f32 0.0, %v1360
      %1362 = vmatmul.f32.gmra.mxu0 %v963
      %v1363 = vpop.f32.mrf.mxu0
      %v1364 = vadd.f32 0.0, %v1363
      %1365 = vmatmul.f32.gmra.mxu0 %v966
      %v1366 = vpop.f32.mrf.mxu0
      %v1367 = vadd.f32 0.0, %v1366
      %1368 = vmatmul.f32.gmra.mxu0 %v969
      %v1369 = vpop.f32.mrf.mxu0
      %v1370 = vadd.f32 0.0, %v1369
      %1371 = vmatmul.f32.gmra.mxu0 %v972
      %v1372 = vpop.f32.mrf.mxu0
      %v1373 = vadd.f32 0.0, %v1372
      %1374 = vmatmul.f32.gmra.mxu0 %v975
      %v1375 = vpop.f32.mrf.mxu0
      %v1376 = vadd.f32 0.0, %v1375
      %1377 = vmatmul.f32.gmra.mxu0 %v978
      %v1378 = vpop.f32.mrf.mxu0
      %v1379 = vadd.f32 0.0, %v1378
      %1380 = vmatmul.f32.gmra.mxu0 %v981
      %v1381 = vpop.f32.mrf.mxu0
      %v1382 = vadd.f32 0.0, %v1381
      %1383 = vmatmul.f32.gmra.mxu0 %v984
      %v1384 = vpop.f32.mrf.mxu0
      %v1385 = vadd.f32 0.0, %v1384
      %1386 = vmatmul.f32.gmra.mxu0 %v987
      %v1387 = vpop.f32.mrf.mxu0
      %v1388 = vadd.f32 0.0, %v1387
      %1389 = vmatmul.f32.gmra.mxu0 %v990
      %v1390 = vpop.f32.mrf.mxu0
      %v1391 = vadd.f32 0.0, %v1390
      %1392 = vmatmul.f32.gmra.mxu0 %v993
      %v1393 = vpop.f32.mrf.mxu0
      %v1394 = vadd.f32 0.0, %v1393
      %1395 = vmatmul.f32.gmra.mxu0 %v996
      %v1396 = vpop.f32.mrf.mxu0
      %v1397 = vadd.f32 0.0, %v1396
      %1398 = vmatmul.f32.gmra.mxu0 %v999
      %v1399 = vpop.f32.mrf.mxu0
      %v1400 = vadd.f32 0.0, %v1399
      %1401 = vmatmul.f32.gmra.mxu0 %v1002
      %v1402 = vpop.f32.mrf.mxu0
      %v1403 = vadd.f32 0.0, %v1402
      %1404 = vmatmul.f32.gmra.mxu0 %v1005
      %v1405 = vpop.f32.mrf.mxu0
      %v1406 = vadd.f32 0.0, %v1405
      %1407 = vmatmul.f32.gmra.mxu0 %v1008
      %v1408 = vpop.f32.mrf.mxu0
      %v1409 = vadd.f32 0.0, %v1408
      %1410 = vmatmul.f32.gmra.mxu0 %v1011
      %v1411 = vpop.f32.mrf.mxu0
      %v1412 = vadd.f32 0.0, %v1411
      %1413 = vmatmul.f32.gmra.mxu0 %v1014
      %v1414 = vpop.f32.mrf.mxu0
      %v1415 = vadd.f32 0.0, %v1414
      %1416 = vmatmul.f32.gmra.mxu0 %v1017
      %v1417 = vpop.f32.mrf.mxu0
      %v1418 = vadd.f32 0.0, %v1417
      %1419 = vmatmul.f32.gmra.mxu0 %v1020
      %v1420 = vpop.f32.mrf.mxu0
      %v1421 = vadd.f32 0.0, %v1420
      %1422 = vmatmul.f32.gmra.mxu0 %v1023
      %v1423 = vpop.f32.mrf.mxu0
      %v1424 = vadd.f32 0.0, %v1423
      %1425 = vmatmul.f32.gmra.mxu0 %v1026
      %v1426 = vpop.f32.mrf.mxu0
      %v1427 = vadd.f32 0.0, %v1426
      %1428 = vmatmul.f32.gmra.mxu0 %v1029
      %v1429 = vpop.f32.mrf.mxu0
      %v1430 = vadd.f32 0.0, %v1429
      %1431 = vmatmul.f32.gmra.mxu0 %v1032
      %v1432 = vpop.f32.mrf.mxu0
      %v1433 = vadd.f32 0.0, %v1432
      %1434 = vmatmul.f32.gmra.mxu0 %v1035
      %v1435 = vpop.f32.mrf.mxu0
      %v1436 = vadd.f32 0.0, %v1435
      %1437 = vmatmul.f32.gmra.mxu0 %v1038
      %v1438 = vpop.f32.mrf.mxu0
      %v1439 = vadd.f32 0.0, %v1438
      %1440 = vmatmul.f32.gmra.mxu0 %v1041
      %v1441 = vpop.f32.mrf.mxu0
      %v1442 = vadd.f32 0.0, %v1441
      %1443 = vmatmul.f32.gmra.mxu0 %v1044
      %v1444 = vpop.f32.mrf.mxu0
      %v1445 = vadd.f32 0.0, %v1444
      %1446 = vmatmul.f32.gmra.mxu0 %v1047
      %v1447 = vpop.f32.mrf.mxu0
      %v1448 = vadd.f32 0.0, %v1447
      %1449 = vmatmul.f32.gmra.mxu0 %v1050
      %v1450 = vpop.f32.mrf.mxu0
      %v1451 = vadd.f32 0.0, %v1450
      %1452 = vmatmul.f32.gmra.mxu0 %v1053
      %v1453 = vpop.f32.mrf.mxu0
      %v1454 = vadd.f32 0.0, %v1453
      %1455 = vmatmul.f32.gmra.mxu0 %v1056
      %v1456 = vpop.f32.mrf.mxu0
      %v1457 = vadd.f32 0.0, %v1456
      %1458 = vmatmul.f32.gmra.mxu0 %v1059
      %v1459 = vpop.f32.mrf.mxu0
      %v1460 = vadd.f32 0.0, %v1459
      %1461 = vmatmul.f32.gmra.mxu0 %v1062
      %v1462 = vpop.f32.mrf.mxu0
      %v1463 = vadd.f32 0.0, %v1462
      %1464 = vmatmul.f32.gmra.mxu0 %v1065
      %v1465 = vpop.f32.mrf.mxu0
      %v1466 = vadd.f32 0.0, %v1465
      %1467 = vmatmul.f32.gmra.mxu0 %v1068
      %v1468 = vpop.f32.mrf.mxu0
      %v1469 = vadd.f32 0.0, %v1468
      %1470 = vmatmul.f32.gmra.mxu0 %v1071
      %v1471 = vpop.f32.mrf.mxu0
      %v1472 = vadd.f32 0.0, %v1471
      %1473 = vmatmul.f32.gmra.mxu0 %v1074
      %v1474 = vpop.f32.mrf.mxu0
      %v1475 = vadd.f32 0.0, %v1474
      %1476 = vmatmul.f32.gmra.mxu0 %v1077
      %v1477 = vpop.f32.mrf.mxu0
      %v1478 = vadd.f32 0.0, %v1477
      %1479 = vmatmul.f32.gmra.mxu0 %v1080
      %v1480 = vpop.f32.mrf.mxu0
      %v1481 = vadd.f32 0.0, %v1480
      %1482 = vmatmul.f32.gmra.mxu0 %v1083
      %v1483 = vpop.f32.mrf.mxu0
      %v1484 = vadd.f32 0.0, %v1483
      %1485 = vmatmul.f32.gmra.mxu0 %v1086
      %v1486 = vpop.f32.mrf.mxu0
      %v1487 = vadd.f32 0.0, %v1486
      %1488 = vmatmul.f32.gmra.mxu0 %v1089
      %v1489 = vpop.f32.mrf.mxu0
      %v1490 = vadd.f32 0.0, %v1489
      %1491 = vmatmul.f32.gmra.mxu0 %v1092
      %v1492 = vpop.f32.mrf.mxu0
      %v1493 = vadd.f32 0.0, %v1492
      %1494 = vmatmul.f32.gmra.mxu0 %v1095
      %v1495 = vpop.f32.mrf.mxu0
      %v1496 = vadd.f32 0.0, %v1495
      %1497 = vmatmul.f32.gmra.mxu0 %v1098
      %v1498 = vpop.f32.mrf.mxu0
      %v1499 = vadd.f32 0.0, %v1498
      %1500 = vmatmul.f32.gmra.mxu0 %v1101
      %v1501 = vpop.f32.mrf.mxu0
      %v1502 = vadd.f32 0.0, %v1501
      %1503 = vmatmul.f32.gmra.mxu0 %v1104
      %v1504 = vpop.f32.mrf.mxu0
      %v1505 = vadd.f32 0.0, %v1504
      %1506 = vmatmul.f32.gmra.mxu0 %v1107
      %v1507 = vpop.f32.mrf.mxu0
      %v1508 = vadd.f32 0.0, %v1507
      %1509 = vmatmul.f32.gmra.mxu0 %v1110
      %v1510 = vpop.f32.mrf.mxu0
      %v1511 = vadd.f32 0.0, %v1510
      %1512 = vmatmul.f32.gmra.mxu0 %v1113
      %v1513 = vpop.f32.mrf.mxu0
      %v1514 = vadd.f32 0.0, %v1513
      %1515 = vmatmul.f32.gmra.mxu0 %v1116
      %v1516 = vpop.f32.mrf.mxu0
      %v1517 = vadd.f32 0.0, %v1516
      %1518 = vmatmul.f32.gmra.mxu0 %v1119
      %v1519 = vpop.f32.mrf.mxu0
      %v1520 = vadd.f32 0.0, %v1519
      %1521 = vmatmul.f32.gmra.mxu0 %v1122
      %v1522 = vpop.f32.mrf.mxu0
      %v1523 = vadd.f32 0.0, %v1522
      %1524 = vmatmul.f32.gmra.mxu0 %v1125
      %v1525 = vpop.f32.mrf.mxu0
      %v1526 = vadd.f32 0.0, %v1525
      %1527 = vmatmul.f32.gmra.mxu0 %v1128
      %v1528 = vpop.f32.mrf.mxu0
      %v1529 = vadd.f32 0.0, %v1528
      %1530 = vmatmul.f32.gmra.mxu0 %v1131
      %v1531 = vpop.f32.mrf.mxu0
      %v1532 = vadd.f32 0.0, %v1531
      %1533 = vmatmul.f32.gmra.mxu0 %v1134
      %v1534 = vpop.f32.mrf.mxu0
      %v1535 = vadd.f32 0.0, %v1534
      %1536 = vmatmul.f32.gmra.mxu0 %v1137
      %v1537 = vpop.f32.mrf.mxu0
      %v1538 = vadd.f32 0.0, %v1537
      %1539 = vmatmul.f32.gmra.mxu0 %v1140
      %v1540 = vpop.f32.mrf.mxu0
      %v1541 = vadd.f32 0.0, %v1540
      %1542 = vmatmul.f32.gmra.mxu0 %v1143
      %v1543 = vpop.f32.mrf.mxu0
      %v1544 = vadd.f32 0.0, %v1543
      %1545 = vmatmul.f32.gmra.mxu0 %v1146
      %v1546 = vpop.f32.mrf.mxu0
      %v1547 = vadd.f32 0.0, %v1546
      %1548 = vmatmul.f32.gmra.mxu0 %v1149
      %v1549 = vpop.f32.mrf.mxu0
      %v1550 = vadd.f32 0.0, %v1549
      %1551 = vmatmul.f32.gmra.mxu0 %v1152
      %v1552 = vpop.f32.mrf.mxu0
      %v1553 = vadd.f32 0.0, %v1552
      %1554 = vmatmul.f32.gmra.mxu0 %v1155
      %v1555 = vpop.f32.mrf.mxu0
      %v1556 = vadd.f32 0.0, %v1555
      %1557 = vmatmul.f32.gmra.mxu0 %v1158
      %v1558 = vpop.f32.mrf.mxu0
      %v1559 = vadd.f32 0.0, %v1558
      %1560 = vmatmul.f32.gmra.mxu0 %v1161
      %v1561 = vpop.f32.mrf.mxu0
      %v1562 = vadd.f32 0.0, %v1561
      %1563 = vmatmul.f32.gmra.mxu0 %v1164
      %v1564 = vpop.f32.mrf.mxu0
      %v1565 = vadd.f32 0.0, %v1564
      %1566 = vmatmul.f32.gmra.mxu0 %v1167
      %v1567 = vpop.f32.mrf.mxu0
      %v1568 = vadd.f32 0.0, %v1567
      %1569 = vmatmul.f32.gmra.mxu0 %v1170
      %v1570 = vpop.f32.mrf.mxu0
      %v1571 = vadd.f32 0.0, %v1570
      %1572 = vmatmul.f32.gmra.mxu0 %v1173
      %v1573 = vpop.f32.mrf.mxu0
      %v1574 = vadd.f32 0.0, %v1573
      %1575 = vmatmul.f32.gmra.mxu0 %v1176
      %v1576 = vpop.f32.mrf.mxu0
      %v1577 = vadd.f32 0.0, %v1576
      %1578 = vmatmul.f32.gmra.mxu0 %v1179
      %v1579 = vpop.f32.mrf.mxu0
      %v1580 = vadd.f32 0.0, %v1579
      %1581 = vmatmul.f32.gmra.mxu0 %v1182
      %v1582 = vpop.f32.mrf.mxu0
      %v1583 = vadd.f32 0.0, %v1582
      %1584 = vmatmul.f32.gmra.mxu0 %v1185
      %v1585 = vpop.f32.mrf.mxu0
      %v1586 = vadd.f32 0.0, %v1585
      %1587 = vmatmul.f32.gmra.mxu0 %v1188
      %v1588 = vpop.f32.mrf.mxu0
      %v1589 = vadd.f32 0.0, %v1588
      %1590 = vmatmul.f32.gmra.mxu0 %v1191
      %v1591 = vpop.f32.mrf.mxu0
      %v1592 = vadd.f32 0.0, %v1591
      %1593 = vmatmul.f32.gmra.mxu0 %v1194
      %v1594 = vpop.f32.mrf.mxu0
      %v1595 = vadd.f32 0.0, %v1594
      %1596 = vmatmul.f32.gmra.mxu0 %v1197
      %v1597 = vpop.f32.mrf.mxu0
      %v1598 = vadd.f32 0.0, %v1597
      %1599 = vmatmul.f32.gmra.mxu0 %v1200
      %v1600 = vpop.f32.mrf.mxu0
      %v1601 = vadd.f32 0.0, %v1600
      %1602 = vmatmul.f32.gmra.mxu0 %v1203
      %v1603 = vpop.f32.mrf.mxu0
      %v1604 = vadd.f32 0.0, %v1603
      %1605 = vmatmul.f32.gmra.mxu0 %v1206
      %v1606 = vpop.f32.mrf.mxu0
      %v1607 = vadd.f32 0.0, %v1606
      %1608 = vmatmul.f32.gmra.mxu0 %v1209
      %v1609 = vpop.f32.mrf.mxu0
      %v1610 = vadd.f32 0.0, %v1609
      %1611 = vdwg.mxu0
      %v1613 = vsel %vm826, %v468, 0
      %v1616 = vsel %vm826, %v469, 0
      %v1619 = vsel %vm826, %v470, 0
      %v1622 = vsel %vm826, %v471, 0
      %v1625 = vsel %vm826, %v473, 0
      %v1628 = vsel %vm826, %v474, 0
      %v1631 = vsel %vm826, %v475, 0
      %v1634 = vsel %vm826, %v476, 0
      %v1637 = vsel %vm826, %v478, 0
      %v1640 = vsel %vm826, %v479, 0
      %v1643 = vsel %vm826, %v480, 0
      %v1646 = vsel %vm826, %v481, 0
      %v1649 = vsel %vm826, %v483, 0
      %v1652 = vsel %vm826, %v484, 0
      %v1655 = vsel %vm826, %v485, 0
      %v1658 = vsel %vm826, %v486, 0
      %v1661 = vsel %vm826, %v488, 0
      %v1664 = vsel %vm826, %v489, 0
      %v1667 = vsel %vm826, %v490, 0
      %v1670 = vsel %vm826, %v491, 0
      %v1673 = vsel %vm826, %v493, 0
      %v1676 = vsel %vm826, %v494, 0
      %v1679 = vsel %vm826, %v495, 0
      %v1682 = vsel %vm826, %v496, 0
      %v1685 = vsel %vm826, %v498, 0
      %v1688 = vsel %vm826, %v499, 0
      %v1691 = vsel %vm826, %v500, 0
      %v1694 = vsel %vm826, %v501, 0
      %v1697 = vsel %vm826, %v503, 0
      %v1700 = vsel %vm826, %v504, 0
      %v1703 = vsel %vm826, %v505, 0
      %v1706 = vsel %vm826, %v506, 0
      %v1709 = vsel %vm826, %v508, 0
      %v1712 = vsel %vm826, %v509, 0
      %v1715 = vsel %vm826, %v510, 0
      %v1718 = vsel %vm826, %v511, 0
      %v1721 = vsel %vm826, %v513, 0
      %v1724 = vsel %vm826, %v514, 0
      %v1727 = vsel %vm826, %v515, 0
      %v1730 = vsel %vm826, %v516, 0
      %v1733 = vsel %vm826, %v518, 0
      %v1736 = vsel %vm826, %v519, 0
      %v1739 = vsel %vm826, %v520, 0
      %v1742 = vsel %vm826, %v521, 0
      %v1745 = vsel %vm826, %v523, 0
      %v1748 = vsel %vm826, %v524, 0
      %v1751 = vsel %vm826, %v525, 0
      %v1754 = vsel %vm826, %v526, 0
      %v1757 = vsel %vm826, %v528, 0
      %v1760 = vsel %vm826, %v529, 0
      %v1763 = vsel %vm826, %v530, 0
      %v1766 = vsel %vm826, %v531, 0
      %v1769 = vsel %vm826, %v533, 0
      %v1772 = vsel %vm826, %v534, 0
      %v1775 = vsel %vm826, %v535, 0
      %v1778 = vsel %vm826, %v536, 0
      %v1781 = vsel %vm826, %v538, 0
      %v1784 = vsel %vm826, %v539, 0
      %v1787 = vsel %vm826, %v540, 0
      %v1790 = vsel %vm826, %v541, 0
      %v1793 = vsel %vm826, %v543, 0
      %v1796 = vsel %vm826, %v544, 0
      %v1799 = vsel %vm826, %v545, 0
      %v1802 = vsel %vm826, %v546, 0
      %v1805 = vsel %vm826, %v548, 0
      %v1808 = vsel %vm826, %v549, 0
      %v1811 = vsel %vm826, %v550, 0
      %v1814 = vsel %vm826, %v551, 0
      %v1817 = vsel %vm826, %v553, 0
      %v1820 = vsel %vm826, %v554, 0
      %v1823 = vsel %vm826, %v555, 0
      %v1826 = vsel %vm826, %v556, 0
      %v1829 = vsel %vm826, %v558, 0
      %v1832 = vsel %vm826, %v559, 0
      %v1835 = vsel %vm826, %v560, 0
      %v1838 = vsel %vm826, %v561, 0
      %v1841 = vsel %vm826, %v563, 0
      %v1844 = vsel %vm826, %v564, 0
      %v1847 = vsel %vm826, %v565, 0
      %v1850 = vsel %vm826, %v566, 0
      %v1853 = vsel %vm826, %v568, 0
      %v1856 = vsel %vm826, %v569, 0
      %v1859 = vsel %vm826, %v570, 0
      %v1862 = vsel %vm826, %v571, 0
      %v1865 = vsel %vm826, %v573, 0
      %v1868 = vsel %vm826, %v574, 0
      %v1871 = vsel %vm826, %v575, 0
      %v1874 = vsel %vm826, %v576, 0
      %v1877 = vsel %vm826, %v578, 0
      %v1880 = vsel %vm826, %v579, 0
      %v1883 = vsel %vm826, %v580, 0
      %v1886 = vsel %vm826, %v581, 0
      %v1889 = vsel %vm826, %v583, 0
      %v1892 = vsel %vm826, %v584, 0
      %v1895 = vsel %vm826, %v585, 0
      %v1898 = vsel %vm826, %v586, 0
      %v1901 = vsel %vm826, %v588, 0
      %v1904 = vsel %vm826, %v589, 0
      %v1907 = vsel %vm826, %v590, 0
      %v1910 = vsel %vm826, %v591, 0
      %v1913 = vsel %vm826, %v593, 0
      %v1916 = vsel %vm826, %v594, 0
      %v1919 = vsel %vm826, %v595, 0
      %v1922 = vsel %vm826, %v596, 0
      %v1925 = vsel %vm826, %v598, 0
      %v1928 = vsel %vm826, %v599, 0
      %v1931 = vsel %vm826, %v600, 0
      %v1934 = vsel %vm826, %v601, 0
      %v1937 = vsel %vm826, %v603, 0
      %v1940 = vsel %vm826, %v604, 0
      %v1943 = vsel %vm826, %v605, 0
      %v1946 = vsel %vm826, %v606, 0
      %v1949 = vsel %vm826, %v608, 0
      %v1952 = vsel %vm826, %v609, 0
      %v1955 = vsel %vm826, %v610, 0
      %v1958 = vsel %vm826, %v611, 0
      %v1961 = vsel %vm826, %v613, 0
      %v1964 = vsel %vm826, %v614, 0
      %v1967 = vsel %vm826, %v615, 0
      %v1970 = vsel %vm826, %v616, 0
      %v1973 = vsel %vm826, %v618, 0
      %v1976 = vsel %vm826, %v619, 0
      %v1979 = vsel %vm826, %v620, 0
      %v1982 = vsel %vm826, %v621, 0
      %v1985 = vsel %vm826, %v623, 0
      %v1988 = vsel %vm826, %v624, 0
      %v1991 = vsel %vm826, %v625, 0
      %v1994 = vsel %vm826, %v626, 0
      %1996 = vmatpush.msra.mxu0 0.0
      %1997 = vmatpush.msra.mxu0 0.0
      %1998 = vmatpush.msra.mxu0 0.0
      %1999 = vmatpush.msra.mxu0 0.0
      %2000 = vmatpush.msra.mxu0 0.0
      %2001 = vmatpush.msra.mxu0 0.0
      %2002 = vmatpush.msra.mxu0 0.0
      %2003 = vmatpush.msra.mxu0 0.0
      %2004 = vmatpush.msra.mxu0 0.0
      %2005 = vmatpush.msra.mxu0 0.0
      %2006 = vmatpush.msra.mxu0 0.0
      %2007 = vmatpush.msra.mxu0 0.0
      %2008 = vmatpush.msra.mxu0 0.0
      %2009 = vmatpush.msra.mxu0 0.0
      %2010 = vmatpush.msra.mxu0 0.0
      %2011 = vmatpush.msra.mxu0 %v808
      %2012 = vmatmul.f32.gmra.mxu0 %v1613
      %v2013 = vpop.f32.mrf.mxu0
      %v2014 = vadd.f32 %v1229, %v2013
      %2015 = vmatmul.f32.gmra.mxu0 %v1616
      %v2016 = vpop.f32.mrf.mxu0
      %v2017 = vadd.f32 %v1232, %v2016
      %2018 = vmatmul.f32.gmra.mxu0 %v1619
      %v2019 = vpop.f32.mrf.mxu0
      %v2020 = vadd.f32 %v1235, %v2019
      %2021 = vmatmul.f32.gmra.mxu0 %v1622
      %v2022 = vpop.f32.mrf.mxu0
      %v2023 = vadd.f32 %v1238, %v2022
      %2024 = vmatmul.f32.gmra.mxu0 %v1625
      %v2025 = vpop.f32.mrf.mxu0
      %v2026 = vadd.f32 %v1241, %v2025
      %2027 = vmatmul.f32.gmra.mxu0 %v1628
      %v2028 = vpop.f32.mrf.mxu0
      %v2029 = vadd.f32 %v1244, %v2028
      %2030 = vmatmul.f32.gmra.mxu0 %v1631
      %v2031 = vpop.f32.mrf.mxu0
      %v2032 = vadd.f32 %v1247, %v2031
      %2033 = vmatmul.f32.gmra.mxu0 %v1634
      %v2034 = vpop.f32.mrf.mxu0
      %v2035 = vadd.f32 %v1250, %v2034
      %2036 = vmatmul.f32.gmra.mxu0 %v1637
      %v2037 = vpop.f32.mrf.mxu0
      %v2038 = vadd.f32 %v1253, %v2037
      %2039 = vmatmul.f32.gmra.mxu0 %v1640
      %v2040 = vpop.f32.mrf.mxu0
      %v2041 = vadd.f32 %v1256, %v2040
      %2042 = vmatmul.f32.gmra.mxu0 %v1643
      %v2043 = vpop.f32.mrf.mxu0
      %v2044 = vadd.f32 %v1259, %v2043
      %2045 = vmatmul.f32.gmra.mxu0 %v1646
      %v2046 = vpop.f32.mrf.mxu0
      %v2047 = vadd.f32 %v1262, %v2046
      %2048 = vmatmul.f32.gmra.mxu0 %v1649
      %v2049 = vpop.f32.mrf.mxu0
      %v2050 = vadd.f32 %v1265, %v2049
      %2051 = vmatmul.f32.gmra.mxu0 %v1652
      %v2052 = vpop.f32.mrf.mxu0
      %v2053 = vadd.f32 %v1268, %v2052
      %2054 = vmatmul.f32.gmra.mxu0 %v1655
      %v2055 = vpop.f32.mrf.mxu0
      %v2056 = vadd.f32 %v1271, %v2055
      %2057 = vmatmul.f32.gmra.mxu0 %v1658
      %v2058 = vpop.f32.mrf.mxu0
      %v2059 = vadd.f32 %v1274, %v2058
      %2060 = vmatmul.f32.gmra.mxu0 %v1661
      %v2061 = vpop.f32.mrf.mxu0
      %v2062 = vadd.f32 %v1277, %v2061
      %2063 = vmatmul.f32.gmra.mxu0 %v1664
      %v2064 = vpop.f32.mrf.mxu0
      %v2065 = vadd.f32 %v1280, %v2064
      %2066 = vmatmul.f32.gmra.mxu0 %v1667
      %v2067 = vpop.f32.mrf.mxu0
      %v2068 = vadd.f32 %v1283, %v2067
      %2069 = vmatmul.f32.gmra.mxu0 %v1670
      %v2070 = vpop.f32.mrf.mxu0
      %v2071 = vadd.f32 %v1286, %v2070
      %2072 = vmatmul.f32.gmra.mxu0 %v1673
      %v2073 = vpop.f32.mrf.mxu0
      %v2074 = vadd.f32 %v1289, %v2073
      %2075 = vmatmul.f32.gmra.mxu0 %v1676
      %v2076 = vpop.f32.mrf.mxu0
      %v2077 = vadd.f32 %v1292, %v2076
      %2078 = vmatmul.f32.gmra.mxu0 %v1679
      %v2079 = vpop.f32.mrf.mxu0
      %v2080 = vadd.f32 %v1295, %v2079
      %2081 = vmatmul.f32.gmra.mxu0 %v1682
      %v2082 = vpop.f32.mrf.mxu0
      %v2083 = vadd.f32 %v1298, %v2082
      %2084 = vmatmul.f32.gmra.mxu0 %v1685
      %v2085 = vpop.f32.mrf.mxu0
      %v2086 = vadd.f32 %v1301, %v2085
      %2087 = vmatmul.f32.gmra.mxu0 %v1688
      %v2088 = vpop.f32.mrf.mxu0
      %v2089 = vadd.f32 %v1304, %v2088
      %2090 = vmatmul.f32.gmra.mxu0 %v1691
      %v2091 = vpop.f32.mrf.mxu0
      %v2092 = vadd.f32 %v1307, %v2091
      %2093 = vmatmul.f32.gmra.mxu0 %v1694
      %v2094 = vpop.f32.mrf.mxu0
      %v2095 = vadd.f32 %v1310, %v2094
      %2096 = vmatmul.f32.gmra.mxu0 %v1697
      %v2097 = vpop.f32.mrf.mxu0
      %v2098 = vadd.f32 %v1313, %v2097
      %2099 = vmatmul.f32.gmra.mxu0 %v1700
      %v2100 = vpop.f32.mrf.mxu0
      %v2101 = vadd.f32 %v1316, %v2100
      %2102 = vmatmul.f32.gmra.mxu0 %v1703
      %v2103 = vpop.f32.mrf.mxu0
      %v2104 = vadd.f32 %v1319, %v2103
      %2105 = vmatmul.f32.gmra.mxu0 %v1706
      %v2106 = vpop.f32.mrf.mxu0
      %v2107 = vadd.f32 %v1322, %v2106
      %2108 = vmatmul.f32.gmra.mxu0 %v1709
      %v2109 = vpop.f32.mrf.mxu0
      %v2110 = vadd.f32 %v1325, %v2109
      %2111 = vmatmul.f32.gmra.mxu0 %v1712
      %v2112 = vpop.f32.mrf.mxu0
      %v2113 = vadd.f32 %v1328, %v2112
      %2114 = vmatmul.f32.gmra.mxu0 %v1715
      %v2115 = vpop.f32.mrf.mxu0
      %v2116 = vadd.f32 %v1331, %v2115
      %2117 = vmatmul.f32.gmra.mxu0 %v1718
      %v2118 = vpop.f32.mrf.mxu0
      %v2119 = vadd.f32 %v1334, %v2118
      %2120 = vmatmul.f32.gmra.mxu0 %v1721
      %v2121 = vpop.f32.mrf.mxu0
      %v2122 = vadd.f32 %v1337, %v2121
      %2123 = vmatmul.f32.gmra.mxu0 %v1724
      %v2124 = vpop.f32.mrf.mxu0
      %v2125 = vadd.f32 %v1340, %v2124
      %2126 = vmatmul.f32.gmra.mxu0 %v1727
      %v2127 = vpop.f32.mrf.mxu0
      %v2128 = vadd.f32 %v1343, %v2127
      %2129 = vmatmul.f32.gmra.mxu0 %v1730
      %v2130 = vpop.f32.mrf.mxu0
      %v2131 = vadd.f32 %v1346, %v2130
      %2132 = vmatmul.f32.gmra.mxu0 %v1733
      %v2133 = vpop.f32.mrf.mxu0
      %v2134 = vadd.f32 %v1349, %v2133
      %2135 = vmatmul.f32.gmra.mxu0 %v1736
      %v2136 = vpop.f32.mrf.mxu0
      %v2137 = vadd.f32 %v1352, %v2136
      %2138 = vmatmul.f32.gmra.mxu0 %v1739
      %v2139 = vpop.f32.mrf.mxu0
      %v2140 = vadd.f32 %v1355, %v2139
      %2141 = vmatmul.f32.gmra.mxu0 %v1742
      %v2142 = vpop.f32.mrf.mxu0
      %v2143 = vadd.f32 %v1358, %v2142
      %2144 = vmatmul.f32.gmra.mxu0 %v1745
      %v2145 = vpop.f32.mrf.mxu0
      %v2146 = vadd.f32 %v1361, %v2145
      %2147 = vmatmul.f32.gmra.mxu0 %v1748
      %v2148 = vpop.f32.mrf.mxu0
      %v2149 = vadd.f32 %v1364, %v2148
      %2150 = vmatmul.f32.gmra.mxu0 %v1751
      %v2151 = vpop.f32.mrf.mxu0
      %v2152 = vadd.f32 %v1367, %v2151
      %2153 = vmatmul.f32.gmra.mxu0 %v1754
      %v2154 = vpop.f32.mrf.mxu0
      %v2155 = vadd.f32 %v1370, %v2154
      %2156 = vmatmul.f32.gmra.mxu0 %v1757
      %v2157 = vpop.f32.mrf.mxu0
      %v2158 = vadd.f32 %v1373, %v2157
      %2159 = vmatmul.f32.gmra.mxu0 %v1760
      %v2160 = vpop.f32.mrf.mxu0
      %v2161 = vadd.f32 %v1376, %v2160
      %2162 = vmatmul.f32.gmra.mxu0 %v1763
      %v2163 = vpop.f32.mrf.mxu0
      %v2164 = vadd.f32 %v1379, %v2163
      %2165 = vmatmul.f32.gmra.mxu0 %v1766
      %v2166 = vpop.f32.mrf.mxu0
      %v2167 = vadd.f32 %v1382, %v2166
      %2168 = vmatmul.f32.gmra.mxu0 %v1769
      %v2169 = vpop.f32.mrf.mxu0
      %v2170 = vadd.f32 %v1385, %v2169
      %2171 = vmatmul.f32.gmra.mxu0 %v1772
      %v2172 = vpop.f32.mrf.mxu0
      %v2173 = vadd.f32 %v1388, %v2172
      %2174 = vmatmul.f32.gmra.mxu0 %v1775
      %v2175 = vpop.f32.mrf.mxu0
      %v2176 = vadd.f32 %v1391, %v2175
      %2177 = vmatmul.f32.gmra.mxu0 %v1778
      %v2178 = vpop.f32.mrf.mxu0
      %v2179 = vadd.f32 %v1394, %v2178
      %2180 = vmatmul.f32.gmra.mxu0 %v1781
      %v2181 = vpop.f32.mrf.mxu0
      %v2182 = vadd.f32 %v1397, %v2181
      %2183 = vmatmul.f32.gmra.mxu0 %v1784
      %v2184 = vpop.f32.mrf.mxu0
      %v2185 = vadd.f32 %v1400, %v2184
      %2186 = vmatmul.f32.gmra.mxu0 %v1787
      %v2187 = vpop.f32.mrf.mxu0
      %v2188 = vadd.f32 %v1403, %v2187
      %2189 = vmatmul.f32.gmra.mxu0 %v1790
      %v2190 = vpop.f32.mrf.mxu0
      %v2191 = vadd.f32 %v1406, %v2190
      %2192 = vmatmul.f32.gmra.mxu0 %v1793
      %v2193 = vpop.f32.mrf.mxu0
      %v2194 = vadd.f32 %v1409, %v2193
      %2195 = vmatmul.f32.gmra.mxu0 %v1796
      %v2196 = vpop.f32.mrf.mxu0
      %v2197 = vadd.f32 %v1412, %v2196
      %2198 = vmatmul.f32.gmra.mxu0 %v1799
      %v2199 = vpop.f32.mrf.mxu0
      %v2200 = vadd.f32 %v1415, %v2199
      %2201 = vmatmul.f32.gmra.mxu0 %v1802
      %v2202 = vpop.f32.mrf.mxu0
      %v2203 = vadd.f32 %v1418, %v2202
      %2204 = vmatmul.f32.gmra.mxu0 %v1805
      %v2205 = vpop.f32.mrf.mxu0
      %v2206 = vadd.f32 %v1421, %v2205
      %2207 = vmatmul.f32.gmra.mxu0 %v1808
      %v2208 = vpop.f32.mrf.mxu0
      %v2209 = vadd.f32 %v1424, %v2208
      %2210 = vmatmul.f32.gmra.mxu0 %v1811
      %v2211 = vpop.f32.mrf.mxu0
      %v2212 = vadd.f32 %v1427, %v2211
      %2213 = vmatmul.f32.gmra.mxu0 %v1814
      %v2214 = vpop.f32.mrf.mxu0
      %v2215 = vadd.f32 %v1430, %v2214
      %2216 = vmatmul.f32.gmra.mxu0 %v1817
      %v2217 = vpop.f32.mrf.mxu0
      %v2218 = vadd.f32 %v1433, %v2217
      %2219 = vmatmul.f32.gmra.mxu0 %v1820
      %v2220 = vpop.f32.mrf.mxu0
      %v2221 = vadd.f32 %v1436, %v2220
      %2222 = vmatmul.f32.gmra.mxu0 %v1823
      %v2223 = vpop.f32.mrf.mxu0
      %v2224 = vadd.f32 %v1439, %v2223
      %2225 = vmatmul.f32.gmra.mxu0 %v1826
      %v2226 = vpop.f32.mrf.mxu0
      %v2227 = vadd.f32 %v1442, %v2226
      %2228 = vmatmul.f32.gmra.mxu0 %v1829
      %v2229 = vpop.f32.mrf.mxu0
      %v2230 = vadd.f32 %v1445, %v2229
      %2231 = vmatmul.f32.gmra.mxu0 %v1832
      %v2232 = vpop.f32.mrf.mxu0
      %v2233 = vadd.f32 %v1448, %v2232
      %2234 = vmatmul.f32.gmra.mxu0 %v1835
      %v2235 = vpop.f32.mrf.mxu0
      %v2236 = vadd.f32 %v1451, %v2235
      %2237 = vmatmul.f32.gmra.mxu0 %v1838
      %v2238 = vpop.f32.mrf.mxu0
      %v2239 = vadd.f32 %v1454, %v2238
      %2240 = vmatmul.f32.gmra.mxu0 %v1841
      %v2241 = vpop.f32.mrf.mxu0
      %v2242 = vadd.f32 %v1457, %v2241
      %2243 = vmatmul.f32.gmra.mxu0 %v1844
      %v2244 = vpop.f32.mrf.mxu0
      %v2245 = vadd.f32 %v1460, %v2244
      %2246 = vmatmul.f32.gmra.mxu0 %v1847
      %v2247 = vpop.f32.mrf.mxu0
      %v2248 = vadd.f32 %v1463, %v2247
      %2249 = vmatmul.f32.gmra.mxu0 %v1850
      %v2250 = vpop.f32.mrf.mxu0
      %v2251 = vadd.f32 %v1466, %v2250
      %2252 = vmatmul.f32.gmra.mxu0 %v1853
      %v2253 = vpop.f32.mrf.mxu0
      %v2254 = vadd.f32 %v1469, %v2253
      %2255 = vmatmul.f32.gmra.mxu0 %v1856
      %v2256 = vpop.f32.mrf.mxu0
      %v2257 = vadd.f32 %v1472, %v2256
      %2258 = vmatmul.f32.gmra.mxu0 %v1859
      %v2259 = vpop.f32.mrf.mxu0
      %v2260 = vadd.f32 %v1475, %v2259
      %2261 = vmatmul.f32.gmra.mxu0 %v1862
      %v2262 = vpop.f32.mrf.mxu0
      %v2263 = vadd.f32 %v1478, %v2262
      %2264 = vmatmul.f32.gmra.mxu0 %v1865
      %v2265 = vpop.f32.mrf.mxu0
      %v2266 = vadd.f32 %v1481, %v2265
      %2267 = vmatmul.f32.gmra.mxu0 %v1868
      %v2268 = vpop.f32.mrf.mxu0
      %v2269 = vadd.f32 %v1484, %v2268
      %2270 = vmatmul.f32.gmra.mxu0 %v1871
      %v2271 = vpop.f32.mrf.mxu0
      %v2272 = vadd.f32 %v1487, %v2271
      %2273 = vmatmul.f32.gmra.mxu0 %v1874
      %v2274 = vpop.f32.mrf.mxu0
      %v2275 = vadd.f32 %v1490, %v2274
      %2276 = vmatmul.f32.gmra.mxu0 %v1877
      %v2277 = vpop.f32.mrf.mxu0
      %v2278 = vadd.f32 %v1493, %v2277
      %2279 = vmatmul.f32.gmra.mxu0 %v1880
      %v2280 = vpop.f32.mrf.mxu0
      %v2281 = vadd.f32 %v1496, %v2280
      %2282 = vmatmul.f32.gmra.mxu0 %v1883
      %v2283 = vpop.f32.mrf.mxu0
      %v2284 = vadd.f32 %v1499, %v2283
      %2285 = vmatmul.f32.gmra.mxu0 %v1886
      %v2286 = vpop.f32.mrf.mxu0
      %v2287 = vadd.f32 %v1502, %v2286
      %2288 = vmatmul.f32.gmra.mxu0 %v1889
      %v2289 = vpop.f32.mrf.mxu0
      %v2290 = vadd.f32 %v1505, %v2289
      %2291 = vmatmul.f32.gmra.mxu0 %v1892
      %v2292 = vpop.f32.mrf.mxu0
      %v2293 = vadd.f32 %v1508, %v2292
      %2294 = vmatmul.f32.gmra.mxu0 %v1895
      %v2295 = vpop.f32.mrf.mxu0
      %v2296 = vadd.f32 %v1511, %v2295
      %2297 = vmatmul.f32.gmra.mxu0 %v1898
      %v2298 = vpop.f32.mrf.mxu0
      %v2299 = vadd.f32 %v1514, %v2298
      %2300 = vmatmul.f32.gmra.mxu0 %v1901
      %v2301 = vpop.f32.mrf.mxu0
      %v2302 = vadd.f32 %v1517, %v2301
      %2303 = vmatmul.f32.gmra.mxu0 %v1904
      %v2304 = vpop.f32.mrf.mxu0
      %v2305 = vadd.f32 %v1520, %v2304
      %2306 = vmatmul.f32.gmra.mxu0 %v1907
      %v2307 = vpop.f32.mrf.mxu0
      %v2308 = vadd.f32 %v1523, %v2307
      %2309 = vmatmul.f32.gmra.mxu0 %v1910
      %v2310 = vpop.f32.mrf.mxu0
      %v2311 = vadd.f32 %v1526, %v2310
      %2312 = vmatmul.f32.gmra.mxu0 %v1913
      %v2313 = vpop.f32.mrf.mxu0
      %v2314 = vadd.f32 %v1529, %v2313
      %2315 = vmatmul.f32.gmra.mxu0 %v1916
      %v2316 = vpop.f32.mrf.mxu0
      %v2317 = vadd.f32 %v1532, %v2316
      %2318 = vmatmul.f32.gmra.mxu0 %v1919
      %v2319 = vpop.f32.mrf.mxu0
      %v2320 = vadd.f32 %v1535, %v2319
      %2321 = vmatmul.f32.gmra.mxu0 %v1922
      %v2322 = vpop.f32.mrf.mxu0
      %v2323 = vadd.f32 %v1538, %v2322
      %2324 = vmatmul.f32.gmra.mxu0 %v1925
      %v2325 = vpop.f32.mrf.mxu0
      %v2326 = vadd.f32 %v1541, %v2325
      %2327 = vmatmul.f32.gmra.mxu0 %v1928
      %v2328 = vpop.f32.mrf.mxu0
      %v2329 = vadd.f32 %v1544, %v2328
      %2330 = vmatmul.f32.gmra.mxu0 %v1931
      %v2331 = vpop.f32.mrf.mxu0
      %v2332 = vadd.f32 %v1547, %v2331
      %2333 = vmatmul.f32.gmra.mxu0 %v1934
      %v2334 = vpop.f32.mrf.mxu0
      %v2335 = vadd.f32 %v1550, %v2334
      %2336 = vmatmul.f32.gmra.mxu0 %v1937
      %v2337 = vpop.f32.mrf.mxu0
      %v2338 = vadd.f32 %v1553, %v2337
      %2339 = vmatmul.f32.gmra.mxu0 %v1940
      %v2340 = vpop.f32.mrf.mxu0
      %v2341 = vadd.f32 %v1556, %v2340
      %2342 = vmatmul.f32.gmra.mxu0 %v1943
      %v2343 = vpop.f32.mrf.mxu0
      %v2344 = vadd.f32 %v1559, %v2343
      %2345 = vmatmul.f32.gmra.mxu0 %v1946
      %v2346 = vpop.f32.mrf.mxu0
      %v2347 = vadd.f32 %v1562, %v2346
      %2348 = vmatmul.f32.gmra.mxu0 %v1949
      %v2349 = vpop.f32.mrf.mxu0
      %v2350 = vadd.f32 %v1565, %v2349
      %2351 = vmatmul.f32.gmra.mxu0 %v1952
      %v2352 = vpop.f32.mrf.mxu0
      %v2353 = vadd.f32 %v1568, %v2352
      %2354 = vmatmul.f32.gmra.mxu0 %v1955
      %v2355 = vpop.f32.mrf.mxu0
      %v2356 = vadd.f32 %v1571, %v2355
      %2357 = vmatmul.f32.gmra.mxu0 %v1958
      %v2358 = vpop.f32.mrf.mxu0
      %v2359 = vadd.f32 %v1574, %v2358
      %2360 = vmatmul.f32.gmra.mxu0 %v1961
      %v2361 = vpop.f32.mrf.mxu0
      %v2362 = vadd.f32 %v1577, %v2361
      %2363 = vmatmul.f32.gmra.mxu0 %v1964
      %v2364 = vpop.f32.mrf.mxu0
      %v2365 = vadd.f32 %v1580, %v2364
      %2366 = vmatmul.f32.gmra.mxu0 %v1967
      %v2367 = vpop.f32.mrf.mxu0
      %v2368 = vadd.f32 %v1583, %v2367
      %2369 = vmatmul.f32.gmra.mxu0 %v1970
      %v2370 = vpop.f32.mrf.mxu0
      %v2371 = vadd.f32 %v1586, %v2370
      %2372 = vmatmul.f32.gmra.mxu0 %v1973
      %v2373 = vpop.f32.mrf.mxu0
      %v2374 = vadd.f32 %v1589, %v2373
      %2375 = vmatmul.f32.gmra.mxu0 %v1976
      %v2376 = vpop.f32.mrf.mxu0
      %v2377 = vadd.f32 %v1592, %v2376
      %2378 = vmatmul.f32.gmra.mxu0 %v1979
      %v2379 = vpop.f32.mrf.mxu0
      %v2380 = vadd.f32 %v1595, %v2379
      %2381 = vmatmul.f32.gmra.mxu0 %v1982
      %v2382 = vpop.f32.mrf.mxu0
      %v2383 = vadd.f32 %v1598, %v2382
      %2384 = vmatmul.f32.gmra.mxu0 %v1985
      %v2385 = vpop.f32.mrf.mxu0
      %v2386 = vadd.f32 %v1601, %v2385
      %2387 = vmatmul.f32.gmra.mxu0 %v1988
      %v2388 = vpop.f32.mrf.mxu0
      %v2389 = vadd.f32 %v1604, %v2388
      %2390 = vmatmul.f32.gmra.mxu0 %v1991
      %v2391 = vpop.f32.mrf.mxu0
      %v2392 = vadd.f32 %v1607, %v2391
      %2393 = vmatmul.f32.gmra.mxu0 %v1994
      %v2394 = vpop.f32.mrf.mxu0
      %v2395 = vadd.f32 %v1610, %v2394
      %2396 = vdwg.mxu0
      %v2397 = vadd.f32 %v2014, 0.0
      %v2398 = vadd.f32 %v2017, 0.0
      %v2399 = vadd.f32 %v2020, 0.0
      %v2400 = vadd.f32 %v2023, 0.0
      %v2401 = vadd.f32 %v2026, 0.0
      %v2402 = vadd.f32 %v2029, 0.0
      %v2403 = vadd.f32 %v2032, 0.0
      %v2404 = vadd.f32 %v2035, 0.0
      %v2405 = vadd.f32 %v2038, 0.0
      %v2406 = vadd.f32 %v2041, 0.0
      %v2407 = vadd.f32 %v2044, 0.0
      %v2408 = vadd.f32 %v2047, 0.0
      %v2409 = vadd.f32 %v2050, 0.0
      %v2410 = vadd.f32 %v2053, 0.0
      %v2411 = vadd.f32 %v2056, 0.0
      %v2412 = vadd.f32 %v2059, 0.0
      %v2413 = vadd.f32 %v2062, 0.0
      %v2414 = vadd.f32 %v2065, 0.0
      %v2415 = vadd.f32 %v2068, 0.0
      %v2416 = vadd.f32 %v2071, 0.0
      %v2417 = vadd.f32 %v2074, 0.0
      %v2418 = vadd.f32 %v2077, 0.0
      %v2419 = vadd.f32 %v2080, 0.0
      %v2420 = vadd.f32 %v2083, 0.0
      %v2421 = vadd.f32 %v2086, 0.0
      %v2422 = vadd.f32 %v2089, 0.0
      %v2423 = vadd.f32 %v2092, 0.0
      %v2424 = vadd.f32 %v2095, 0.0
      %v2425 = vadd.f32 %v2098, 0.0
      %v2426 = vadd.f32 %v2101, 0.0
      %v2427 = vadd.f32 %v2104, 0.0
      %v2428 = vadd.f32 %v2107, 0.0
      %v2429 = vadd.f32 %v2110, 0.0
      %v2430 = vadd.f32 %v2113, 0.0
      %v2431 = vadd.f32 %v2116, 0.0
      %v2432 = vadd.f32 %v2119, 0.0
      %v2433 = vadd.f32 %v2122, 0.0
      %v2434 = vadd.f32 %v2125, 0.0
      %v2435 = vadd.f32 %v2128, 0.0
      %v2436 = vadd.f32 %v2131, 0.0
      %v2437 = vadd.f32 %v2134, 0.0
      %v2438 = vadd.f32 %v2137, 0.0
      %v2439 = vadd.f32 %v2140, 0.0
      %v2440 = vadd.f32 %v2143, 0.0
      %v2441 = vadd.f32 %v2146, 0.0
      %v2442 = vadd.f32 %v2149, 0.0
      %v2443 = vadd.f32 %v2152, 0.0
      %v2444 = vadd.f32 %v2155, 0.0
      %v2445 = vadd.f32 %v2158, 0.0
      %v2446 = vadd.f32 %v2161, 0.0
      %v2447 = vadd.f32 %v2164, 0.0
      %v2448 = vadd.f32 %v2167, 0.0
      %v2449 = vadd.f32 %v2170, 0.0
      %v2450 = vadd.f32 %v2173, 0.0
      %v2451 = vadd.f32 %v2176, 0.0
      %v2452 = vadd.f32 %v2179, 0.0
      %v2453 = vadd.f32 %v2182, 0.0
      %v2454 = vadd.f32 %v2185, 0.0
      %v2455 = vadd.f32 %v2188, 0.0
      %v2456 = vadd.f32 %v2191, 0.0
      %v2457 = vadd.f32 %v2194, 0.0
      %v2458 = vadd.f32 %v2197, 0.0
      %v2459 = vadd.f32 %v2200, 0.0
      %v2460 = vadd.f32 %v2203, 0.0
      %v2461 = vadd.f32 %v2206, 0.0
      %v2462 = vadd.f32 %v2209, 0.0
      %v2463 = vadd.f32 %v2212, 0.0
      %v2464 = vadd.f32 %v2215, 0.0
      %v2465 = vadd.f32 %v2218, 0.0
      %v2466 = vadd.f32 %v2221, 0.0
      %v2467 = vadd.f32 %v2224, 0.0
      %v2468 = vadd.f32 %v2227, 0.0
      %v2469 = vadd.f32 %v2230, 0.0
      %v2470 = vadd.f32 %v2233, 0.0
      %v2471 = vadd.f32 %v2236, 0.0
      %v2472 = vadd.f32 %v2239, 0.0
      %v2473 = vadd.f32 %v2242, 0.0
      %v2474 = vadd.f32 %v2245, 0.0
      %v2475 = vadd.f32 %v2248, 0.0
      %v2476 = vadd.f32 %v2251, 0.0
      %v2477 = vadd.f32 %v2254, 0.0
      %v2478 = vadd.f32 %v2257, 0.0
      %v2479 = vadd.f32 %v2260, 0.0
      %v2480 = vadd.f32 %v2263, 0.0
      %v2481 = vadd.f32 %v2266, 0.0
      %v2482 = vadd.f32 %v2269, 0.0
      %v2483 = vadd.f32 %v2272, 0.0
      %v2484 = vadd.f32 %v2275, 0.0
      %v2485 = vadd.f32 %v2278, 0.0
      %v2486 = vadd.f32 %v2281, 0.0
      %v2487 = vadd.f32 %v2284, 0.0
      %v2488 = vadd.f32 %v2287, 0.0
      %v2489 = vadd.f32 %v2290, 0.0
      %v2490 = vadd.f32 %v2293, 0.0
      %v2491 = vadd.f32 %v2296, 0.0
      %v2492 = vadd.f32 %v2299, 0.0
      %v2493 = vadd.f32 %v2302, 0.0
      %v2494 = vadd.f32 %v2305, 0.0
      %v2495 = vadd.f32 %v2308, 0.0
      %v2496 = vadd.f32 %v2311, 0.0
      %v2497 = vadd.f32 %v2314, 0.0
      %v2498 = vadd.f32 %v2317, 0.0
      %v2499 = vadd.f32 %v2320, 0.0
      %v2500 = vadd.f32 %v2323, 0.0
      %v2501 = vadd.f32 %v2326, 0.0
      %v2502 = vadd.f32 %v2329, 0.0
      %v2503 = vadd.f32 %v2332, 0.0
      %v2504 = vadd.f32 %v2335, 0.0
      %v2505 = vadd.f32 %v2338, 0.0
      %v2506 = vadd.f32 %v2341, 0.0
      %v2507 = vadd.f32 %v2344, 0.0
      %v2508 = vadd.f32 %v2347, 0.0
      %v2509 = vadd.f32 %v2350, 0.0
      %v2510 = vadd.f32 %v2353, 0.0
      %v2511 = vadd.f32 %v2356, 0.0
      %v2512 = vadd.f32 %v2359, 0.0
      %v2513 = vadd.f32 %v2362, 0.0
      %v2514 = vadd.f32 %v2365, 0.0
      %v2515 = vadd.f32 %v2368, 0.0
      %v2516 = vadd.f32 %v2371, 0.0
      %v2517 = vadd.f32 %v2374, 0.0
      %v2518 = vadd.f32 %v2377, 0.0
      %v2519 = vadd.f32 %v2380, 0.0
      %v2520 = vadd.f32 %v2383, 0.0
      %v2521 = vadd.f32 %v2386, 0.0
      %v2522 = vadd.f32 %v2389, 0.0
      %v2523 = vadd.f32 %v2392, 0.0
      %v2524 = vadd.f32 %v2395, 0.0
      %vm2557 = vcmask 1046528
      %v2558 = vrot.slane %v468, 1
      %v2559 = vrot.slane %v469, 1
      %v2560 = vsel %vm2557, %v2558, %v2559
      %v2561 = vrot.slane %v470, 1
      %v2562 = vsel %vm2557, %v2559, %v2561
      %v2563 = vrot.slane %v471, 1
      %v2564 = vsel %vm2557, %v2561, %v2563
      %v2565 = vrot.slane %v472, 1
      %v2566 = vsel %vm2557, %v2563, %v2565
      %v2567 = vrot.slane %v473, 1
      %v2568 = vrot.slane %v474, 1
      %v2569 = vsel %vm2557, %v2567, %v2568
      %v2570 = vrot.slane %v475, 1
      %v2571 = vsel %vm2557, %v2568, %v2570
      %v2572 = vrot.slane %v476, 1
      %v2573 = vsel %vm2557, %v2570, %v2572
      %v2574 = vrot.slane %v477, 1
      %v2575 = vsel %vm2557, %v2572, %v2574
      %v2576 = vrot.slane %v478, 1
      %v2577 = vrot.slane %v479, 1
      %v2578 = vsel %vm2557, %v2576, %v2577
      %v2579 = vrot.slane %v480, 1
      %v2580 = vsel %vm2557, %v2577, %v2579
      %v2581 = vrot.slane %v481, 1
      %v2582 = vsel %vm2557, %v2579, %v2581
      %v2583 = vrot.slane %v482, 1
      %v2584 = vsel %vm2557, %v2581, %v2583
      %v2585 = vrot.slane %v483, 1
      %v2586 = vrot.slane %v484, 1
      %v2587 = vsel %vm2557, %v2585, %v2586
      %v2588 = vrot.slane %v485, 1
      %v2589 = vsel %vm2557, %v2586, %v2588
      %v2590 = vrot.slane %v486, 1
      %v2591 = vsel %vm2557, %v2588, %v2590
      %v2592 = vrot.slane %v487, 1
      %v2593 = vsel %vm2557, %v2590, %v2592
      %v2594 = vrot.slane %v488, 1
      %v2595 = vrot.slane %v489, 1
      %v2596 = vsel %vm2557, %v2594, %v2595
      %v2597 = vrot.slane %v490, 1
      %v2598 = vsel %vm2557, %v2595, %v2597
      %v2599 = vrot.slane %v491, 1
      %v2600 = vsel %vm2557, %v2597, %v2599
      %v2601 = vrot.slane %v492, 1
      %v2602 = vsel %vm2557, %v2599, %v2601
      %v2603 = vrot.slane %v493, 1
      %v2604 = vrot.slane %v494, 1
      %v2605 = vsel %vm2557, %v2603, %v2604
      %v2606 = vrot.slane %v495, 1
      %v2607 = vsel %vm2557, %v2604, %v2606
      %v2608 = vrot.slane %v496, 1
      %v2609 = vsel %vm2557, %v2606, %v2608
      %v2610 = vrot.slane %v497, 1
      %v2611 = vsel %vm2557, %v2608, %v2610
      %v2612 = vrot.slane %v498, 1
      %v2613 = vrot.slane %v499, 1
      %v2614 = vsel %vm2557, %v2612, %v2613
      %v2615 = vrot.slane %v500, 1
      %v2616 = vsel %vm2557, %v2613, %v2615
      %v2617 = vrot.slane %v501, 1
      %v2618 = vsel %vm2557, %v2615, %v2617
      %v2619 = vrot.slane %v502, 1
      %v2620 = vsel %vm2557, %v2617, %v2619
      %v2621 = vrot.slane %v503, 1
      %v2622 = vrot.slane %v504, 1
      %v2623 = vsel %vm2557, %v2621, %v2622
      %v2624 = vrot.slane %v505, 1
      %v2625 = vsel %vm2557, %v2622, %v2624
      %v2626 = vrot.slane %v506, 1
      %v2627 = vsel %vm2557, %v2624, %v2626
      %v2628 = vrot.slane %v507, 1
      %v2629 = vsel %vm2557, %v2626, %v2628
      %v2630 = vrot.slane %v508, 1
      %v2631 = vrot.slane %v509, 1
      %v2632 = vsel %vm2557, %v2630, %v2631
      %v2633 = vrot.slane %v510, 1
      %v2634 = vsel %vm2557, %v2631, %v2633
      %v2635 = vrot.slane %v511, 1
      %v2636 = vsel %vm2557, %v2633, %v2635
      %v2637 = vrot.slane %v512, 1
      %v2638 = vsel %vm2557, %v2635, %v2637
      %v2639 = vrot.slane %v513, 1
      %v2640 = vrot.slane %v514, 1
      %v2641 = vsel %vm2557, %v2639, %v2640
      %v2642 = vrot.slane %v515, 1
      %v2643 = vsel %vm2557, %v2640, %v2642
      %v2644 = vrot.slane %v516, 1
      %v2645 = vsel %vm2557, %v2642, %v2644
      %v2646 = vrot.slane %v517, 1
      %v2647 = vsel %vm2557, %v2644, %v2646
      %v2648 = vrot.slane %v518, 1
      %v2649 = vrot.slane %v519, 1
      %v2650 = vsel %vm2557, %v2648, %v2649
      %v2651 = vrot.slane %v520, 1
      %v2652 = vsel %vm2557, %v2649, %v2651
      %v2653 = vrot.slane %v521, 1
      %v2654 = vsel %vm2557, %v2651, %v2653
      %v2655 = vrot.slane %v522, 1
      %v2656 = vsel %vm2557, %v2653, %v2655
      %v2657 = vrot.slane %v523, 1
      %v2658 = vrot.slane %v524, 1
      %v2659 = vsel %vm2557, %v2657, %v2658
      %v2660 = vrot.slane %v525, 1
      %v2661 = vsel %vm2557, %v2658, %v2660
      %v2662 = vrot.slane %v526, 1
      %v2663 = vsel %vm2557, %v2660, %v2662
      %v2664 = vrot.slane %v527, 1
      %v2665 = vsel %vm2557, %v2662, %v2664
      %v2666 = vrot.slane %v528, 1
      %v2667 = vrot.slane %v529, 1
      %v2668 = vsel %vm2557, %v2666, %v2667
      %v2669 = vrot.slane %v530, 1
      %v2670 = vsel %vm2557, %v2667, %v2669
      %v2671 = vrot.slane %v531, 1
      %v2672 = vsel %vm2557, %v2669, %v2671
      %v2673 = vrot.slane %v532, 1
      %v2674 = vsel %vm2557, %v2671, %v2673
      %v2675 = vrot.slane %v533, 1
      %v2676 = vrot.slane %v534, 1
      %v2677 = vsel %vm2557, %v2675, %v2676
      %v2678 = vrot.slane %v535, 1
      %v2679 = vsel %vm2557, %v2676, %v2678
      %v2680 = vrot.slane %v536, 1
      %v2681 = vsel %vm2557, %v2678, %v2680
      %v2682 = vrot.slane %v537, 1
      %v2683 = vsel %vm2557, %v2680, %v2682
      %v2684 = vrot.slane %v538, 1
      %v2685 = vrot.slane %v539, 1
      %v2686 = vsel %vm2557, %v2684, %v2685
      %v2687 = vrot.slane %v540, 1
      %v2688 = vsel %vm2557, %v2685, %v2687
      %v2689 = vrot.slane %v541, 1
      %v2690 = vsel %vm2557, %v2687, %v2689
      %v2691 = vrot.slane %v542, 1
      %v2692 = vsel %vm2557, %v2689, %v2691
      %v2693 = vrot.slane %v543, 1
      %v2694 = vrot.slane %v544, 1
      %v2695 = vsel %vm2557, %v2693, %v2694
      %v2696 = vrot.slane %v545, 1
      %v2697 = vsel %vm2557, %v2694, %v2696
      %v2698 = vrot.slane %v546, 1
      %v2699 = vsel %vm2557, %v2696, %v2698
      %v2700 = vrot.slane %v547, 1
      %v2701 = vsel %vm2557, %v2698, %v2700
      %v2702 = vrot.slane %v548, 1
      %v2703 = vrot.slane %v549, 1
      %v2704 = vsel %vm2557, %v2702, %v2703
      %v2705 = vrot.slane %v550, 1
      %v2706 = vsel %vm2557, %v2703, %v2705
      %v2707 = vrot.slane %v551, 1
      %v2708 = vsel %vm2557, %v2705, %v2707
      %v2709 = vrot.slane %v552, 1
      %v2710 = vsel %vm2557, %v2707, %v2709
      %v2711 = vrot.slane %v553, 1
      %v2712 = vrot.slane %v554, 1
      %v2713 = vsel %vm2557, %v2711, %v2712
      %v2714 = vrot.slane %v555, 1
      %v2715 = vsel %vm2557, %v2712, %v2714
      %v2716 = vrot.slane %v556, 1
      %v2717 = vsel %vm2557, %v2714, %v2716
      %v2718 = vrot.slane %v557, 1
      %v2719 = vsel %vm2557, %v2716, %v2718
      %v2720 = vrot.slane %v558, 1
      %v2721 = vrot.slane %v559, 1
      %v2722 = vsel %vm2557, %v2720, %v2721
      %v2723 = vrot.slane %v560, 1
      %v2724 = vsel %vm2557, %v2721, %v2723
      %v2725 = vrot.slane %v561, 1
      %v2726 = vsel %vm2557, %v2723, %v2725
      %v2727 = vrot.slane %v562, 1
      %v2728 = vsel %vm2557, %v2725, %v2727
      %v2729 = vrot.slane %v563, 1
      %v2730 = vrot.slane %v564, 1
      %v2731 = vsel %vm2557, %v2729, %v2730
      %v2732 = vrot.slane %v565, 1
      %v2733 = vsel %vm2557, %v2730, %v2732
      %v2734 = vrot.slane %v566, 1
      %v2735 = vsel %vm2557, %v2732, %v2734
      %v2736 = vrot.slane %v567, 1
      %v2737 = vsel %vm2557, %v2734, %v2736
      %v2738 = vrot.slane %v568, 1
      %v2739 = vrot.slane %v569, 1
      %v2740 = vsel %vm2557, %v2738, %v2739
      %v2741 = vrot.slane %v570, 1
      %v2742 = vsel %vm2557, %v2739, %v2741
      %v2743 = vrot.slane %v571, 1
      %v2744 = vsel %vm2557, %v2741, %v2743
      %v2745 = vrot.slane %v572, 1
      %v2746 = vsel %vm2557, %v2743, %v2745
      %v2747 = vrot.slane %v573, 1
      %v2748 = vrot.slane %v574, 1
      %v2749 = vsel %vm2557, %v2747, %v2748
      %v2750 = vrot.slane %v575, 1
      %v2751 = vsel %vm2557, %v2748, %v2750
      %v2752 = vrot.slane %v576, 1
      %v2753 = vsel %vm2557, %v2750, %v2752
      %v2754 = vrot.slane %v577, 1
      %v2755 = vsel %vm2557, %v2752, %v2754
      %v2756 = vrot.slane %v578, 1
      %v2757 = vrot.slane %v579, 1
      %v2758 = vsel %vm2557, %v2756, %v2757
      %v2759 = vrot.slane %v580, 1
      %v2760 = vsel %vm2557, %v2757, %v2759
      %v2761 = vrot.slane %v581, 1
      %v2762 = vsel %vm2557, %v2759, %v2761
      %v2763 = vrot.slane %v582, 1
      %v2764 = vsel %vm2557, %v2761, %v2763
      %v2765 = vrot.slane %v583, 1
      %v2766 = vrot.slane %v584, 1
      %v2767 = vsel %vm2557, %v2765, %v2766
      %v2768 = vrot.slane %v585, 1
      %v2769 = vsel %vm2557, %v2766, %v2768
      %v2770 = vrot.slane %v586, 1
      %v2771 = vsel %vm2557, %v2768, %v2770
      %v2772 = vrot.slane %v587, 1
      %v2773 = vsel %vm2557, %v2770, %v2772
      %v2774 = vrot.slane %v588, 1
      %v2775 = vrot.slane %v589, 1
      %v2776 = vsel %vm2557, %v2774, %v2775
      %v2777 = vrot.slane %v590, 1
      %v2778 = vsel %vm2557, %v2775, %v2777
      %v2779 = vrot.slane %v591, 1
      %v2780 = vsel %vm2557, %v2777, %v2779
      %v2781 = vrot.slane %v592, 1
      %v2782 = vsel %vm2557, %v2779, %v2781
      %v2783 = vrot.slane %v593, 1
      %v2784 = vrot.slane %v594, 1
      %v2785 = vsel %vm2557, %v2783, %v2784
      %v2786 = vrot.slane %v595, 1
      %v2787 = vsel %vm2557, %v2784, %v2786
      %v2788 = vrot.slane %v596, 1
      %v2789 = vsel %vm2557, %v2786, %v2788
      %v2790 = vrot.slane %v597, 1
      %v2791 = vsel %vm2557, %v2788, %v2790
      %v2792 = vrot.slane %v598, 1
      %v2793 = vrot.slane %v599, 1
      %v2794 = vsel %vm2557, %v2792, %v2793
      %v2795 = vrot.slane %v600, 1
      %v2796 = vsel %vm2557, %v2793, %v2795
      %v2797 = vrot.slane %v601, 1
      %v2798 = vsel %vm2557, %v2795, %v2797
      %v2799 = vrot.slane %v602, 1
      %v2800 = vsel %vm2557, %v2797, %v2799
      %v2801 = vrot.slane %v603, 1
      %v2802 = vrot.slane %v604, 1
      %v2803 = vsel %vm2557, %v2801, %v2802
      %v2804 = vrot.slane %v605, 1
      %v2805 = vsel %vm2557, %v2802, %v2804
      %v2806 = vrot.slane %v606, 1
      %v2807 = vsel %vm2557, %v2804, %v2806
      %v2808 = vrot.slane %v607, 1
      %v2809 = vsel %vm2557, %v2806, %v2808
      %v2810 = vrot.slane %v608, 1
      %v2811 = vrot.slane %v609, 1
      %v2812 = vsel %vm2557, %v2810, %v2811
      %v2813 = vrot.slane %v610, 1
      %v2814 = vsel %vm2557, %v2811, %v2813
      %v2815 = vrot.slane %v611, 1
      %v2816 = vsel %vm2557, %v2813, %v2815
      %v2817 = vrot.slane %v612, 1
      %v2818 = vsel %vm2557, %v2815, %v2817
      %v2819 = vrot.slane %v613, 1
      %v2820 = vrot.slane %v614, 1
      %v2821 = vsel %vm2557, %v2819, %v2820
      %v2822 = vrot.slane %v615, 1
      %v2823 = vsel %vm2557, %v2820, %v2822
      %v2824 = vrot.slane %v616, 1
      %v2825 = vsel %vm2557, %v2822, %v2824
      %v2826 = vrot.slane %v617, 1
      %v2827 = vsel %vm2557, %v2824, %v2826
      %v2828 = vrot.slane %v618, 1
      %v2829 = vrot.slane %v619, 1
      %v2830 = vsel %vm2557, %v2828, %v2829
      %v2831 = vrot.slane %v620, 1
      %v2832 = vsel %vm2557, %v2829, %v2831
      %v2833 = vrot.slane %v621, 1
      %v2834 = vsel %vm2557, %v2831, %v2833
      %v2835 = vrot.slane %v622, 1
      %v2836 = vsel %vm2557, %v2833, %v2835
      %v2837 = vrot.slane %v623, 1
      %v2838 = vrot.slane %v624, 1
      %v2839 = vsel %vm2557, %v2837, %v2838
      %v2840 = vrot.slane %v625, 1
      %v2841 = vsel %vm2557, %v2838, %v2840
      %v2842 = vrot.slane %v626, 1
      %v2843 = vsel %vm2557, %v2840, %v2842
      %v2844 = vrot.slane %v627, 1
      %v2845 = vsel %vm2557, %v2842, %v2844
      %v2878 = vrot.slane %v638, 1
      %v2879 = vrot.slane %v639, 1
      %v2880 = vsel %vm2557, %v2878, %v2879
      %v2881 = vrot.slane %v640, 1
      %v2882 = vsel %vm2557, %v2879, %v2881
      %v2883 = vrot.slane %v641, 1
      %v2884 = vsel %vm2557, %v2881, %v2883
      %v2885 = vrot.slane %v642, 1
      %v2886 = vsel %vm2557, %v2883, %v2885
      %v2887 = vrot.slane %v643, 1
      %v2888 = vrot.slane %v644, 1
      %v2889 = vsel %vm2557, %v2887, %v2888
      %v2890 = vrot.slane %v645, 1
      %v2891 = vsel %vm2557, %v2888, %v2890
      %v2892 = vrot.slane %v646, 1
      %v2893 = vsel %vm2557, %v2890, %v2892
      %v2894 = vrot.slane %v647, 1
      %v2895 = vsel %vm2557, %v2892, %v2894
      %v2896 = vrot.slane %v648, 1
      %v2897 = vrot.slane %v649, 1
      %v2898 = vsel %vm2557, %v2896, %v2897
      %v2899 = vrot.slane %v650, 1
      %v2900 = vsel %vm2557, %v2897, %v2899
      %v2901 = vrot.slane %v651, 1
      %v2902 = vsel %vm2557, %v2899, %v2901
      %v2903 = vrot.slane %v652, 1
      %v2904 = vsel %vm2557, %v2901, %v2903
      %v2905 = vrot.slane %v653, 1
      %v2906 = vrot.slane %v654, 1
      %v2907 = vsel %vm2557, %v2905, %v2906
      %v2908 = vrot.slane %v655, 1
      %v2909 = vsel %vm2557, %v2906, %v2908
      %v2910 = vrot.slane %v656, 1
      %v2911 = vsel %vm2557, %v2908, %v2910
      %v2912 = vrot.slane %v657, 1
      %v2913 = vsel %vm2557, %v2910, %v2912
      %v2914 = vrot.slane %v658, 1
      %v2915 = vrot.slane %v659, 1
      %v2916 = vsel %vm2557, %v2914, %v2915
      %v2917 = vrot.slane %v660, 1
      %v2918 = vsel %vm2557, %v2915, %v2917
      %v2919 = vrot.slane %v661, 1
      %v2920 = vsel %vm2557, %v2917, %v2919
      %v2921 = vrot.slane %v662, 1
      %v2922 = vsel %vm2557, %v2919, %v2921
      %v2923 = vrot.slane %v663, 1
      %v2924 = vrot.slane %v664, 1
      %v2925 = vsel %vm2557, %v2923, %v2924
      %v2926 = vrot.slane %v665, 1
      %v2927 = vsel %vm2557, %v2924, %v2926
      %v2928 = vrot.slane %v666, 1
      %v2929 = vsel %vm2557, %v2926, %v2928
      %v2930 = vrot.slane %v667, 1
      %v2931 = vsel %vm2557, %v2928, %v2930
      %v2932 = vrot.slane %v668, 1
      %v2933 = vrot.slane %v669, 1
      %v2934 = vsel %vm2557, %v2932, %v2933
      %v2935 = vrot.slane %v670, 1
      %v2936 = vsel %vm2557, %v2933, %v2935
      %v2937 = vrot.slane %v671, 1
      %v2938 = vsel %vm2557, %v2935, %v2937
      %v2939 = vrot.slane %v672, 1
      %v2940 = vsel %vm2557, %v2937, %v2939
      %v2941 = vrot.slane %v673, 1
      %v2942 = vrot.slane %v674, 1
      %v2943 = vsel %vm2557, %v2941, %v2942
      %v2944 = vrot.slane %v675, 1
      %v2945 = vsel %vm2557, %v2942, %v2944
      %v2946 = vrot.slane %v676, 1
      %v2947 = vsel %vm2557, %v2944, %v2946
      %v2948 = vrot.slane %v677, 1
      %v2949 = vsel %vm2557, %v2946, %v2948
      %v2950 = vrot.slane %v678, 1
      %v2951 = vrot.slane %v679, 1
      %v2952 = vsel %vm2557, %v2950, %v2951
      %v2953 = vrot.slane %v680, 1
      %v2954 = vsel %vm2557, %v2951, %v2953
      %v2955 = vrot.slane %v681, 1
      %v2956 = vsel %vm2557, %v2953, %v2955
      %v2957 = vrot.slane %v682, 1
      %v2958 = vsel %vm2557, %v2955, %v2957
      %v2959 = vrot.slane %v683, 1
      %v2960 = vrot.slane %v684, 1
      %v2961 = vsel %vm2557, %v2959, %v2960
      %v2962 = vrot.slane %v685, 1
      %v2963 = vsel %vm2557, %v2960, %v2962
      %v2964 = vrot.slane %v686, 1
      %v2965 = vsel %vm2557, %v2962, %v2964
      %v2966 = vrot.slane %v687, 1
      %v2967 = vsel %vm2557, %v2964, %v2966
      %v2968 = vrot.slane %v688, 1
      %v2969 = vrot.slane %v689, 1
      %v2970 = vsel %vm2557, %v2968, %v2969
      %v2971 = vrot.slane %v690, 1
      %v2972 = vsel %vm2557, %v2969, %v2971
      %v2973 = vrot.slane %v691, 1
      %v2974 = vsel %vm2557, %v2971, %v2973
      %v2975 = vrot.slane %v692, 1
      %v2976 = vsel %vm2557, %v2973, %v2975
      %v2977 = vrot.slane %v693, 1
      %v2978 = vrot.slane %v694, 1
      %v2979 = vsel %vm2557, %v2977, %v2978
      %v2980 = vrot.slane %v695, 1
      %v2981 = vsel %vm2557, %v2978, %v2980
      %v2982 = vrot.slane %v696, 1
      %v2983 = vsel %vm2557, %v2980, %v2982
      %v2984 = vrot.slane %v697, 1
      %v2985 = vsel %vm2557, %v2982, %v2984
      %v2986 = vrot.slane %v698, 1
      %v2987 = vrot.slane %v699, 1
      %v2988 = vsel %vm2557, %v2986, %v2987
      %v2989 = vrot.slane %v700, 1
      %v2990 = vsel %vm2557, %v2987, %v2989
      %v2991 = vrot.slane %v701, 1
      %v2992 = vsel %vm2557, %v2989, %v2991
      %v2993 = vrot.slane %v702, 1
      %v2994 = vsel %vm2557, %v2991, %v2993
      %v2995 = vrot.slane %v703, 1
      %v2996 = vrot.slane %v704, 1
      %v2997 = vsel %vm2557, %v2995, %v2996
      %v2998 = vrot.slane %v705, 1
      %v2999 = vsel %vm2557, %v2996, %v2998
      %v3000 = vrot.slane %v706, 1
      %v3001 = vsel %vm2557, %v2998, %v3000
      %v3002 = vrot.slane %v707, 1
      %v3003 = vsel %vm2557, %v3000, %v3002
      %v3004 = vrot.slane %v708, 1
      %v3005 = vrot.slane %v709, 1
      %v3006 = vsel %vm2557, %v3004, %v3005
      %v3007 = vrot.slane %v710, 1
      %v3008 = vsel %vm2557, %v3005, %v3007
      %v3009 = vrot.slane %v711, 1
      %v3010 = vsel %vm2557, %v3007, %v3009
      %v3011 = vrot.slane %v712, 1
      %v3012 = vsel %vm2557, %v3009, %v3011
      %v3013 = vrot.slane %v713, 1
      %v3014 = vrot.slane %v714, 1
      %v3015 = vsel %vm2557, %v3013, %v3014
      %v3016 = vrot.slane %v715, 1
      %v3017 = vsel %vm2557, %v3014, %v3016
      %v3018 = vrot.slane %v716, 1
      %v3019 = vsel %vm2557, %v3016, %v3018
      %v3020 = vrot.slane %v717, 1
      %v3021 = vsel %vm2557, %v3018, %v3020
      %v3022 = vrot.slane %v718, 1
      %v3023 = vrot.slane %v719, 1
      %v3024 = vsel %vm2557, %v3022, %v3023
      %v3025 = vrot.slane %v720, 1
      %v3026 = vsel %vm2557, %v3023, %v3025
      %v3027 = vrot.slane %v721, 1
      %v3028 = vsel %vm2557, %v3025, %v3027
      %v3029 = vrot.slane %v722, 1
      %v3030 = vsel %vm2557, %v3027, %v3029
      %v3031 = vrot.slane %v723, 1
      %v3032 = vrot.slane %v724, 1
      %v3033 = vsel %vm2557, %v3031, %v3032
      %v3034 = vrot.slane %v725, 1
      %v3035 = vsel %vm2557, %v3032, %v3034
      %v3036 = vrot.slane %v726, 1
      %v3037 = vsel %vm2557, %v3034, %v3036
      %v3038 = vrot.slane %v727, 1
      %v3039 = vsel %vm2557, %v3036, %v3038
      %v3040 = vrot.slane %v728, 1
      %v3041 = vrot.slane %v729, 1
      %v3042 = vsel %vm2557, %v3040, %v3041
      %v3043 = vrot.slane %v730, 1
      %v3044 = vsel %vm2557, %v3041, %v3043
      %v3045 = vrot.slane %v731, 1
      %v3046 = vsel %vm2557, %v3043, %v3045
      %v3047 = vrot.slane %v732, 1
      %v3048 = vsel %vm2557, %v3045, %v3047
      %v3049 = vrot.slane %v733, 1
      %v3050 = vrot.slane %v734, 1
      %v3051 = vsel %vm2557, %v3049, %v3050
      %v3052 = vrot.slane %v735, 1
      %v3053 = vsel %vm2557, %v3050, %v3052
      %v3054 = vrot.slane %v736, 1
      %v3055 = vsel %vm2557, %v3052, %v3054
      %v3056 = vrot.slane %v737, 1
      %v3057 = vsel %vm2557, %v3054, %v3056
      %v3058 = vrot.slane %v738, 1
      %v3059 = vrot.slane %v739, 1
      %v3060 = vsel %vm2557, %v3058, %v3059
      %v3061 = vrot.slane %v740, 1
      %v3062 = vsel %vm2557, %v3059, %v3061
      %v3063 = vrot.slane %v741, 1
      %v3064 = vsel %vm2557, %v3061, %v3063
      %v3065 = vrot.slane %v742, 1
      %v3066 = vsel %vm2557, %v3063, %v3065
      %v3067 = vrot.slane %v743, 1
      %v3068 = vrot.slane %v744, 1
      %v3069 = vsel %vm2557, %v3067, %v3068
      %v3070 = vrot.slane %v745, 1
      %v3071 = vsel %vm2557, %v3068, %v3070
      %v3072 = vrot.slane %v746, 1
      %v3073 = vsel %vm2557, %v3070, %v3072
      %v3074 = vrot.slane %v747, 1
      %v3075 = vsel %vm2557, %v3072, %v3074
      %v3076 = vrot.slane %v748, 1
      %v3077 = vrot.slane %v749, 1
      %v3078 = vsel %vm2557, %v3076, %v3077
      %v3079 = vrot.slane %v750, 1
      %v3080 = vsel %vm2557, %v3077, %v3079
      %v3081 = vrot.slane %v751, 1
      %v3082 = vsel %vm2557, %v3079, %v3081
      %v3083 = vrot.slane %v752, 1
      %v3084 = vsel %vm2557, %v3081, %v3083
      %v3085 = vrot.slane %v753, 1
      %v3086 = vrot.slane %v754, 1
      %v3087 = vsel %vm2557, %v3085, %v3086
      %v3088 = vrot.slane %v755, 1
      %v3089 = vsel %vm2557, %v3086, %v3088
      %v3090 = vrot.slane %v756, 1
      %v3091 = vsel %vm2557, %v3088, %v3090
      %v3092 = vrot.slane %v757, 1
      %v3093 = vsel %vm2557, %v3090, %v3092
      %v3094 = vrot.slane %v758, 1
      %v3095 = vrot.slane %v759, 1
      %v3096 = vsel %vm2557, %v3094, %v3095
      %v3097 = vrot.slane %v760, 1
      %v3098 = vsel %vm2557, %v3095, %v3097
      %v3099 = vrot.slane %v761, 1
      %v3100 = vsel %vm2557, %v3097, %v3099
      %v3101 = vrot.slane %v762, 1
      %v3102 = vsel %vm2557, %v3099, %v3101
      %v3103 = vrot.slane %v763, 1
      %v3104 = vrot.slane %v764, 1
      %v3105 = vsel %vm2557, %v3103, %v3104
      %v3106 = vrot.slane %v765, 1
      %v3107 = vsel %vm2557, %v3104, %v3106
      %v3108 = vrot.slane %v766, 1
      %v3109 = vsel %vm2557, %v3106, %v3108
      %v3110 = vrot.slane %v767, 1
      %v3111 = vsel %vm2557, %v3108, %v3110
      %v3112 = vrot.slane %v768, 1
      %v3113 = vrot.slane %v769, 1
      %v3114 = vsel %vm2557, %v3112, %v3113
      %v3115 = vrot.slane %v770, 1
      %v3116 = vsel %vm2557, %v3113, %v3115
      %v3117 = vrot.slane %v771, 1
      %v3118 = vsel %vm2557, %v3115, %v3117
      %v3119 = vrot.slane %v772, 1
      %v3120 = vsel %vm2557, %v3117, %v3119
      %v3121 = vrot.slane %v773, 1
      %v3122 = vrot.slane %v774, 1
      %v3123 = vsel %vm2557, %v3121, %v3122
      %v3124 = vrot.slane %v775, 1
      %v3125 = vsel %vm2557, %v3122, %v3124
      %v3126 = vrot.slane %v776, 1
      %v3127 = vsel %vm2557, %v3124, %v3126
      %v3128 = vrot.slane %v777, 1
      %v3129 = vsel %vm2557, %v3126, %v3128
      %v3130 = vrot.slane %v778, 1
      %v3131 = vrot.slane %v779, 1
      %v3132 = vsel %vm2557, %v3130, %v3131
      %v3133 = vrot.slane %v780, 1
      %v3134 = vsel %vm2557, %v3131, %v3133
      %v3135 = vrot.slane %v781, 1
      %v3136 = vsel %vm2557, %v3133, %v3135
      %v3137 = vrot.slane %v782, 1
      %v3138 = vsel %vm2557, %v3135, %v3137
      %v3139 = vrot.slane %v783, 1
      %v3140 = vrot.slane %v784, 1
      %v3141 = vsel %vm2557, %v3139, %v3140
      %v3142 = vrot.slane %v785, 1
      %v3143 = vsel %vm2557, %v3140, %v3142
      %v3144 = vrot.slane %v786, 1
      %v3145 = vsel %vm2557, %v3142, %v3144
      %v3146 = vrot.slane %v787, 1
      %v3147 = vsel %vm2557, %v3144, %v3146
      %v3148 = vrot.slane %v788, 1
      %v3149 = vrot.slane %v789, 1
      %v3150 = vsel %vm2557, %v3148, %v3149
      %v3151 = vrot.slane %v790, 1
      %v3152 = vsel %vm2557, %v3149, %v3151
      %v3153 = vrot.slane %v791, 1
      %v3154 = vsel %vm2557, %v3151, %v3153
      %v3155 = vrot.slane %v792, 1
      %v3156 = vsel %vm2557, %v3153, %v3155
      %v3157 = vrot.slane %v793, 1
      %v3158 = vrot.slane %v794, 1
      %v3159 = vsel %vm2557, %v3157, %v3158
      %v3160 = vrot.slane %v795, 1
      %v3161 = vsel %vm2557, %v3158, %v3160
      %v3162 = vrot.slane %v796, 1
      %v3163 = vsel %vm2557, %v3160, %v3162
      %v3164 = vrot.slane %v797, 1
      %v3165 = vsel %vm2557, %v3162, %v3164
      %v3166 = vsel %vm826, %v2880, 0
      %v3168 = vsel %vm826, %v2882, 0
      %v3170 = vsel %vm826, %v2884, 0
      %v3172 = vsel %vm826, %v2886, 0
      %v3174 = vsel %vm826, %v2889, 0
      %v3176 = vsel %vm826, %v2891, 0
      %v3178 = vsel %vm826, %v2893, 0
      %v3180 = vsel %vm826, %v2895, 0
      %v3182 = vsel %vm826, %v2898, 0
      %v3184 = vsel %vm826, %v2900, 0
      %v3186 = vsel %vm826, %v2902, 0
      %v3188 = vsel %vm826, %v2904, 0
      %v3190 = vsel %vm826, %v2907, 0
      %v3192 = vsel %vm826, %v2909, 0
      %v3194 = vsel %vm826, %v2911, 0
      %v3196 = vsel %vm826, %v2913, 0
      %v3198 = vsel %vm826, %v2916, 0
      %v3200 = vsel %vm826, %v2918, 0
      %v3202 = vsel %vm826, %v2920, 0
      %v3204 = vsel %vm826, %v2922, 0
      %v3206 = vsel %vm826, %v2925, 0
      %v3208 = vsel %vm826, %v2927, 0
      %v3210 = vsel %vm826, %v2929, 0
      %v3212 = vsel %vm826, %v2931, 0
      %v3214 = vsel %vm826, %v2934, 0
      %v3216 = vsel %vm826, %v2936, 0
      %v3218 = vsel %vm826, %v2938, 0
      %v3220 = vsel %vm826, %v2940, 0
      %v3222 = vsel %vm826, %v2943, 0
      %v3224 = vsel %vm826, %v2945, 0
      %v3226 = vsel %vm826, %v2947, 0
      %v3228 = vsel %vm826, %v2949, 0
      %v3230 = vsel %vm826, %v2952, 0
      %v3232 = vsel %vm826, %v2954, 0
      %v3234 = vsel %vm826, %v2956, 0
      %v3236 = vsel %vm826, %v2958, 0
      %v3238 = vsel %vm826, %v2961, 0
      %v3240 = vsel %vm826, %v2963, 0
      %v3242 = vsel %vm826, %v2965, 0
      %v3244 = vsel %vm826, %v2967, 0
      %v3246 = vsel %vm826, %v2970, 0
      %v3248 = vsel %vm826, %v2972, 0
      %v3250 = vsel %vm826, %v2974, 0
      %v3252 = vsel %vm826, %v2976, 0
      %v3254 = vsel %vm826, %v2979, 0
      %v3256 = vsel %vm826, %v2981, 0
      %v3258 = vsel %vm826, %v2983, 0
      %v3260 = vsel %vm826, %v2985, 0
      %v3262 = vsel %vm826, %v2988, 0
      %v3264 = vsel %vm826, %v2990, 0
      %v3266 = vsel %vm826, %v2992, 0
      %v3268 = vsel %vm826, %v2994, 0
      %v3270 = vsel %vm826, %v2997, 0
      %v3272 = vsel %vm826, %v2999, 0
      %v3274 = vsel %vm826, %v3001, 0
      %v3276 = vsel %vm826, %v3003, 0
      %v3278 = vsel %vm826, %v3006, 0
      %v3280 = vsel %vm826, %v3008, 0
      %v3282 = vsel %vm826, %v3010, 0
      %v3284 = vsel %vm826, %v3012, 0
      %v3286 = vsel %vm826, %v3015, 0
      %v3288 = vsel %vm826, %v3017, 0
      %v3290 = vsel %vm826, %v3019, 0
      %v3292 = vsel %vm826, %v3021, 0
      %v3294 = vsel %vm826, %v3024, 0
      %v3296 = vsel %vm826, %v3026, 0
      %v3298 = vsel %vm826, %v3028, 0
      %v3300 = vsel %vm826, %v3030, 0
      %v3302 = vsel %vm826, %v3033, 0
      %v3304 = vsel %vm826, %v3035, 0
      %v3306 = vsel %vm826, %v3037, 0
      %v3308 = vsel %vm826, %v3039, 0
      %v3310 = vsel %vm826, %v3042, 0
      %v3312 = vsel %vm826, %v3044, 0
      %v3314 = vsel %vm826, %v3046, 0
      %v3316 = vsel %vm826, %v3048, 0
      %v3318 = vsel %vm826, %v3051, 0
      %v3320 = vsel %vm826, %v3053, 0
      %v3322 = vsel %vm826, %v3055, 0
      %v3324 = vsel %vm826, %v3057, 0
      %v3326 = vsel %vm826, %v3060, 0
      %v3328 = vsel %vm826, %v3062, 0
      %v3330 = vsel %vm826, %v3064, 0
      %v3332 = vsel %vm826, %v3066, 0
      %v3334 = vsel %vm826, %v3069, 0
      %v3336 = vsel %vm826, %v3071, 0
      %v3338 = vsel %vm826, %v3073, 0
      %v3340 = vsel %vm826, %v3075, 0
      %v3342 = vsel %vm826, %v3078, 0
      %v3344 = vsel %vm826, %v3080, 0
      %v3346 = vsel %vm826, %v3082, 0
      %v3348 = vsel %vm826, %v3084, 0
      %v3350 = vsel %vm826, %v3087, 0
      %v3352 = vsel %vm826, %v3089, 0
      %v3354 = vsel %vm826, %v3091, 0
      %v3356 = vsel %vm826, %v3093, 0
      %v3358 = vsel %vm826, %v3096, 0
      %v3360 = vsel %vm826, %v3098, 0
      %v3362 = vsel %vm826, %v3100, 0
      %v3364 = vsel %vm826, %v3102, 0
      %v3366 = vsel %vm826, %v3105, 0
      %v3368 = vsel %vm826, %v3107, 0
      %v3370 = vsel %vm826, %v3109, 0
      %v3372 = vsel %vm826, %v3111, 0
      %v3374 = vsel %vm826, %v3114, 0
      %v3376 = vsel %vm826, %v3116, 0
      %v3378 = vsel %vm826, %v3118, 0
      %v3380 = vsel %vm826, %v3120, 0
      %v3382 = vsel %vm826, %v3123, 0
      %v3384 = vsel %vm826, %v3125, 0
      %v3386 = vsel %vm826, %v3127, 0
      %v3388 = vsel %vm826, %v3129, 0
      %v3390 = vsel %vm826, %v3132, 0
      %v3392 = vsel %vm826, %v3134, 0
      %v3394 = vsel %vm826, %v3136, 0
      %v3396 = vsel %vm826, %v3138, 0
      %v3398 = vsel %vm826, %v3141, 0
      %v3400 = vsel %vm826, %v3143, 0
      %v3402 = vsel %vm826, %v3145, 0
      %v3404 = vsel %vm826, %v3147, 0
      %v3406 = vsel %vm826, %v3150, 0
      %v3408 = vsel %vm826, %v3152, 0
      %v3410 = vsel %vm826, %v3154, 0
      %v3412 = vsel %vm826, %v3156, 0
      %v3414 = vsel %vm826, %v3159, 0
      %v3416 = vsel %vm826, %v3161, 0
      %v3418 = vsel %vm826, %v3163, 0
      %v3420 = vsel %vm826, %v3165, 0
      %3422 = vmatpush.msra.mxu0 0.0
      %3423 = vmatpush.msra.mxu0 0.0
      %3424 = vmatpush.msra.mxu0 0.0
      %3425 = vmatpush.msra.mxu0 0.0
      %3426 = vmatpush.msra.mxu0 0.0
      %3427 = vmatpush.msra.mxu0 0.0
      %3428 = vmatpush.msra.mxu0 0.0
      %3429 = vmatpush.msra.mxu0 0.0
      %3430 = vmatpush.msra.mxu0 0.0
      %3431 = vmatpush.msra.mxu0 0.0
      %3432 = vmatpush.msra.mxu0 0.0
      %3433 = vmatpush.msra.mxu0 0.0
      %3434 = vmatpush.msra.mxu0 0.0
      %3435 = vmatpush.msra.mxu0 0.0
      %3436 = vmatpush.msra.mxu0 0.0
      %3437 = vmatpush.msra.mxu0 %v818
      %3438 = vmatmul.f32.gmra.mxu0 %v3166
      %v3439 = vpop.f32.mrf.mxu0
      %v3440 = vadd.f32 0.0, %v3439
      %3441 = vmatmul.f32.gmra.mxu0 %v3168
      %v3442 = vpop.f32.mrf.mxu0
      %v3443 = vadd.f32 0.0, %v3442
      %3444 = vmatmul.f32.gmra.mxu0 %v3170
      %v3445 = vpop.f32.mrf.mxu0
      %v3446 = vadd.f32 0.0, %v3445
      %3447 = vmatmul.f32.gmra.mxu0 %v3172
      %v3448 = vpop.f32.mrf.mxu0
      %v3449 = vadd.f32 0.0, %v3448
      %3450 = vmatmul.f32.gmra.mxu0 %v3174
      %v3451 = vpop.f32.mrf.mxu0
      %v3452 = vadd.f32 0.0, %v3451
      %3453 = vmatmul.f32.gmra.mxu0 %v3176
      %v3454 = vpop.f32.mrf.mxu0
      %v3455 = vadd.f32 0.0, %v3454
      %3456 = vmatmul.f32.gmra.mxu0 %v3178
      %v3457 = vpop.f32.mrf.mxu0
      %v3458 = vadd.f32 0.0, %v3457
      %3459 = vmatmul.f32.gmra.mxu0 %v3180
      %v3460 = vpop.f32.mrf.mxu0
      %v3461 = vadd.f32 0.0, %v3460
      %3462 = vmatmul.f32.gmra.mxu0 %v3182
      %v3463 = vpop.f32.mrf.mxu0
      %v3464 = vadd.f32 0.0, %v3463
      %3465 = vmatmul.f32.gmra.mxu0 %v3184
      %v3466 = vpop.f32.mrf.mxu0
      %v3467 = vadd.f32 0.0, %v3466
      %3468 = vmatmul.f32.gmra.mxu0 %v3186
      %v3469 = vpop.f32.mrf.mxu0
      %v3470 = vadd.f32 0.0, %v3469
      %3471 = vmatmul.f32.gmra.mxu0 %v3188
      %v3472 = vpop.f32.mrf.mxu0
      %v3473 = vadd.f32 0.0, %v3472
      %3474 = vmatmul.f32.gmra.mxu0 %v3190
      %v3475 = vpop.f32.mrf.mxu0
      %v3476 = vadd.f32 0.0, %v3475
      %3477 = vmatmul.f32.gmra.mxu0 %v3192
      %v3478 = vpop.f32.mrf.mxu0
      %v3479 = vadd.f32 0.0, %v3478
      %3480 = vmatmul.f32.gmra.mxu0 %v3194
      %v3481 = vpop.f32.mrf.mxu0
      %v3482 = vadd.f32 0.0, %v3481
      %3483 = vmatmul.f32.gmra.mxu0 %v3196
      %v3484 = vpop.f32.mrf.mxu0
      %v3485 = vadd.f32 0.0, %v3484
      %3486 = vmatmul.f32.gmra.mxu0 %v3198
      %v3487 = vpop.f32.mrf.mxu0
      %v3488 = vadd.f32 0.0, %v3487
      %3489 = vmatmul.f32.gmra.mxu0 %v3200
      %v3490 = vpop.f32.mrf.mxu0
      %v3491 = vadd.f32 0.0, %v3490
      %3492 = vmatmul.f32.gmra.mxu0 %v3202
      %v3493 = vpop.f32.mrf.mxu0
      %v3494 = vadd.f32 0.0, %v3493
      %3495 = vmatmul.f32.gmra.mxu0 %v3204
      %v3496 = vpop.f32.mrf.mxu0
      %v3497 = vadd.f32 0.0, %v3496
      %3498 = vmatmul.f32.gmra.mxu0 %v3206
      %v3499 = vpop.f32.mrf.mxu0
      %v3500 = vadd.f32 0.0, %v3499
      %3501 = vmatmul.f32.gmra.mxu0 %v3208
      %v3502 = vpop.f32.mrf.mxu0
      %v3503 = vadd.f32 0.0, %v3502
      %3504 = vmatmul.f32.gmra.mxu0 %v3210
      %v3505 = vpop.f32.mrf.mxu0
      %v3506 = vadd.f32 0.0, %v3505
      %3507 = vmatmul.f32.gmra.mxu0 %v3212
      %v3508 = vpop.f32.mrf.mxu0
      %v3509 = vadd.f32 0.0, %v3508
      %3510 = vmatmul.f32.gmra.mxu0 %v3214
      %v3511 = vpop.f32.mrf.mxu0
      %v3512 = vadd.f32 0.0, %v3511
      %3513 = vmatmul.f32.gmra.mxu0 %v3216
      %v3514 = vpop.f32.mrf.mxu0
      %v3515 = vadd.f32 0.0, %v3514
      %3516 = vmatmul.f32.gmra.mxu0 %v3218
      %v3517 = vpop.f32.mrf.mxu0
      %v3518 = vadd.f32 0.0, %v3517
      %3519 = vmatmul.f32.gmra.mxu0 %v3220
      %v3520 = vpop.f32.mrf.mxu0
      %v3521 = vadd.f32 0.0, %v3520
      %3522 = vmatmul.f32.gmra.mxu0 %v3222
      %v3523 = vpop.f32.mrf.mxu0
      %v3524 = vadd.f32 0.0, %v3523
      %3525 = vmatmul.f32.gmra.mxu0 %v3224
      %v3526 = vpop.f32.mrf.mxu0
      %v3527 = vadd.f32 0.0, %v3526
      %3528 = vmatmul.f32.gmra.mxu0 %v3226
      %v3529 = vpop.f32.mrf.mxu0
      %v3530 = vadd.f32 0.0, %v3529
      %3531 = vmatmul.f32.gmra.mxu0 %v3228
      %v3532 = vpop.f32.mrf.mxu0
      %v3533 = vadd.f32 0.0, %v3532
      %3534 = vmatmul.f32.gmra.mxu0 %v3230
      %v3535 = vpop.f32.mrf.mxu0
      %v3536 = vadd.f32 0.0, %v3535
      %3537 = vmatmul.f32.gmra.mxu0 %v3232
      %v3538 = vpop.f32.mrf.mxu0
      %v3539 = vadd.f32 0.0, %v3538
      %3540 = vmatmul.f32.gmra.mxu0 %v3234
      %v3541 = vpop.f32.mrf.mxu0
      %v3542 = vadd.f32 0.0, %v3541
      %3543 = vmatmul.f32.gmra.mxu0 %v3236
      %v3544 = vpop.f32.mrf.mxu0
      %v3545 = vadd.f32 0.0, %v3544
      %3546 = vmatmul.f32.gmra.mxu0 %v3238
      %v3547 = vpop.f32.mrf.mxu0
      %v3548 = vadd.f32 0.0, %v3547
      %3549 = vmatmul.f32.gmra.mxu0 %v3240
      %v3550 = vpop.f32.mrf.mxu0
      %v3551 = vadd.f32 0.0, %v3550
      %3552 = vmatmul.f32.gmra.mxu0 %v3242
      %v3553 = vpop.f32.mrf.mxu0
      %v3554 = vadd.f32 0.0, %v3553
      %3555 = vmatmul.f32.gmra.mxu0 %v3244
      %v3556 = vpop.f32.mrf.mxu0
      %v3557 = vadd.f32 0.0, %v3556
      %3558 = vmatmul.f32.gmra.mxu0 %v3246
      %v3559 = vpop.f32.mrf.mxu0
      %v3560 = vadd.f32 0.0, %v3559
      %3561 = vmatmul.f32.gmra.mxu0 %v3248
      %v3562 = vpop.f32.mrf.mxu0
      %v3563 = vadd.f32 0.0, %v3562
      %3564 = vmatmul.f32.gmra.mxu0 %v3250
      %v3565 = vpop.f32.mrf.mxu0
      %v3566 = vadd.f32 0.0, %v3565
      %3567 = vmatmul.f32.gmra.mxu0 %v3252
      %v3568 = vpop.f32.mrf.mxu0
      %v3569 = vadd.f32 0.0, %v3568
      %3570 = vmatmul.f32.gmra.mxu0 %v3254
      %v3571 = vpop.f32.mrf.mxu0
      %v3572 = vadd.f32 0.0, %v3571
      %3573 = vmatmul.f32.gmra.mxu0 %v3256
      %v3574 = vpop.f32.mrf.mxu0
      %v3575 = vadd.f32 0.0, %v3574
      %3576 = vmatmul.f32.gmra.mxu0 %v3258
      %v3577 = vpop.f32.mrf.mxu0
      %v3578 = vadd.f32 0.0, %v3577
      %3579 = vmatmul.f32.gmra.mxu0 %v3260
      %v3580 = vpop.f32.mrf.mxu0
      %v3581 = vadd.f32 0.0, %v3580
      %3582 = vmatmul.f32.gmra.mxu0 %v3262
      %v3583 = vpop.f32.mrf.mxu0
      %v3584 = vadd.f32 0.0, %v3583
      %3585 = vmatmul.f32.gmra.mxu0 %v3264
      %v3586 = vpop.f32.mrf.mxu0
      %v3587 = vadd.f32 0.0, %v3586
      %3588 = vmatmul.f32.gmra.mxu0 %v3266
      %v3589 = vpop.f32.mrf.mxu0
      %v3590 = vadd.f32 0.0, %v3589
      %3591 = vmatmul.f32.gmra.mxu0 %v3268
      %v3592 = vpop.f32.mrf.mxu0
      %v3593 = vadd.f32 0.0, %v3592
      %3594 = vmatmul.f32.gmra.mxu0 %v3270
      %v3595 = vpop.f32.mrf.mxu0
      %v3596 = vadd.f32 0.0, %v3595
      %3597 = vmatmul.f32.gmra.mxu0 %v3272
      %v3598 = vpop.f32.mrf.mxu0
      %v3599 = vadd.f32 0.0, %v3598
      %3600 = vmatmul.f32.gmra.mxu0 %v3274
      %v3601 = vpop.f32.mrf.mxu0
      %v3602 = vadd.f32 0.0, %v3601
      %3603 = vmatmul.f32.gmra.mxu0 %v3276
      %v3604 = vpop.f32.mrf.mxu0
      %v3605 = vadd.f32 0.0, %v3604
      %3606 = vmatmul.f32.gmra.mxu0 %v3278
      %v3607 = vpop.f32.mrf.mxu0
      %v3608 = vadd.f32 0.0, %v3607
      %3609 = vmatmul.f32.gmra.mxu0 %v3280
      %v3610 = vpop.f32.mrf.mxu0
      %v3611 = vadd.f32 0.0, %v3610
      %3612 = vmatmul.f32.gmra.mxu0 %v3282
      %v3613 = vpop.f32.mrf.mxu0
      %v3614 = vadd.f32 0.0, %v3613
      %3615 = vmatmul.f32.gmra.mxu0 %v3284
      %v3616 = vpop.f32.mrf.mxu0
      %v3617 = vadd.f32 0.0, %v3616
      %3618 = vmatmul.f32.gmra.mxu0 %v3286
      %v3619 = vpop.f32.mrf.mxu0
      %v3620 = vadd.f32 0.0, %v3619
      %3621 = vmatmul.f32.gmra.mxu0 %v3288
      %v3622 = vpop.f32.mrf.mxu0
      %v3623 = vadd.f32 0.0, %v3622
      %3624 = vmatmul.f32.gmra.mxu0 %v3290
      %v3625 = vpop.f32.mrf.mxu0
      %v3626 = vadd.f32 0.0, %v3625
      %3627 = vmatmul.f32.gmra.mxu0 %v3292
      %v3628 = vpop.f32.mrf.mxu0
      %v3629 = vadd.f32 0.0, %v3628
      %3630 = vmatmul.f32.gmra.mxu0 %v3294
      %v3631 = vpop.f32.mrf.mxu0
      %v3632 = vadd.f32 0.0, %v3631
      %3633 = vmatmul.f32.gmra.mxu0 %v3296
      %v3634 = vpop.f32.mrf.mxu0
      %v3635 = vadd.f32 0.0, %v3634
      %3636 = vmatmul.f32.gmra.mxu0 %v3298
      %v3637 = vpop.f32.mrf.mxu0
      %v3638 = vadd.f32 0.0, %v3637
      %3639 = vmatmul.f32.gmra.mxu0 %v3300
      %v3640 = vpop.f32.mrf.mxu0
      %v3641 = vadd.f32 0.0, %v3640
      %3642 = vmatmul.f32.gmra.mxu0 %v3302
      %v3643 = vpop.f32.mrf.mxu0
      %v3644 = vadd.f32 0.0, %v3643
      %3645 = vmatmul.f32.gmra.mxu0 %v3304
      %v3646 = vpop.f32.mrf.mxu0
      %v3647 = vadd.f32 0.0, %v3646
      %3648 = vmatmul.f32.gmra.mxu0 %v3306
      %v3649 = vpop.f32.mrf.mxu0
      %v3650 = vadd.f32 0.0, %v3649
      %3651 = vmatmul.f32.gmra.mxu0 %v3308
      %v3652 = vpop.f32.mrf.mxu0
      %v3653 = vadd.f32 0.0, %v3652
      %3654 = vmatmul.f32.gmra.mxu0 %v3310
      %v3655 = vpop.f32.mrf.mxu0
      %v3656 = vadd.f32 0.0, %v3655
      %3657 = vmatmul.f32.gmra.mxu0 %v3312
      %v3658 = vpop.f32.mrf.mxu0
      %v3659 = vadd.f32 0.0, %v3658
      %3660 = vmatmul.f32.gmra.mxu0 %v3314
      %v3661 = vpop.f32.mrf.mxu0
      %v3662 = vadd.f32 0.0, %v3661
      %3663 = vmatmul.f32.gmra.mxu0 %v3316
      %v3664 = vpop.f32.mrf.mxu0
      %v3665 = vadd.f32 0.0, %v3664
      %3666 = vmatmul.f32.gmra.mxu0 %v3318
      %v3667 = vpop.f32.mrf.mxu0
      %v3668 = vadd.f32 0.0, %v3667
      %3669 = vmatmul.f32.gmra.mxu0 %v3320
      %v3670 = vpop.f32.mrf.mxu0
      %v3671 = vadd.f32 0.0, %v3670
      %3672 = vmatmul.f32.gmra.mxu0 %v3322
      %v3673 = vpop.f32.mrf.mxu0
      %v3674 = vadd.f32 0.0, %v3673
      %3675 = vmatmul.f32.gmra.mxu0 %v3324
      %v3676 = vpop.f32.mrf.mxu0
      %v3677 = vadd.f32 0.0, %v3676
      %3678 = vmatmul.f32.gmra.mxu0 %v3326
      %v3679 = vpop.f32.mrf.mxu0
      %v3680 = vadd.f32 0.0, %v3679
      %3681 = vmatmul.f32.gmra.mxu0 %v3328
      %v3682 = vpop.f32.mrf.mxu0
      %v3683 = vadd.f32 0.0, %v3682
      %3684 = vmatmul.f32.gmra.mxu0 %v3330
      %v3685 = vpop.f32.mrf.mxu0
      %v3686 = vadd.f32 0.0, %v3685
      %3687 = vmatmul.f32.gmra.mxu0 %v3332
      %v3688 = vpop.f32.mrf.mxu0
      %v3689 = vadd.f32 0.0, %v3688
      %3690 = vmatmul.f32.gmra.mxu0 %v3334
      %v3691 = vpop.f32.mrf.mxu0
      %v3692 = vadd.f32 0.0, %v3691
      %3693 = vmatmul.f32.gmra.mxu0 %v3336
      %v3694 = vpop.f32.mrf.mxu0
      %v3695 = vadd.f32 0.0, %v3694
      %3696 = vmatmul.f32.gmra.mxu0 %v3338
      %v3697 = vpop.f32.mrf.mxu0
      %v3698 = vadd.f32 0.0, %v3697
      %3699 = vmatmul.f32.gmra.mxu0 %v3340
      %v3700 = vpop.f32.mrf.mxu0
      %v3701 = vadd.f32 0.0, %v3700
      %3702 = vmatmul.f32.gmra.mxu0 %v3342
      %v3703 = vpop.f32.mrf.mxu0
      %v3704 = vadd.f32 0.0, %v3703
      %3705 = vmatmul.f32.gmra.mxu0 %v3344
      %v3706 = vpop.f32.mrf.mxu0
      %v3707 = vadd.f32 0.0, %v3706
      %3708 = vmatmul.f32.gmra.mxu0 %v3346
      %v3709 = vpop.f32.mrf.mxu0
      %v3710 = vadd.f32 0.0, %v3709
      %3711 = vmatmul.f32.gmra.mxu0 %v3348
      %v3712 = vpop.f32.mrf.mxu0
      %v3713 = vadd.f32 0.0, %v3712
      %3714 = vmatmul.f32.gmra.mxu0 %v3350
      %v3715 = vpop.f32.mrf.mxu0
      %v3716 = vadd.f32 0.0, %v3715
      %3717 = vmatmul.f32.gmra.mxu0 %v3352
      %v3718 = vpop.f32.mrf.mxu0
      %v3719 = vadd.f32 0.0, %v3718
      %3720 = vmatmul.f32.gmra.mxu0 %v3354
      %v3721 = vpop.f32.mrf.mxu0
      %v3722 = vadd.f32 0.0, %v3721
      %3723 = vmatmul.f32.gmra.mxu0 %v3356
      %v3724 = vpop.f32.mrf.mxu0
      %v3725 = vadd.f32 0.0, %v3724
      %3726 = vmatmul.f32.gmra.mxu0 %v3358
      %v3727 = vpop.f32.mrf.mxu0
      %v3728 = vadd.f32 0.0, %v3727
      %3729 = vmatmul.f32.gmra.mxu0 %v3360
      %v3730 = vpop.f32.mrf.mxu0
      %v3731 = vadd.f32 0.0, %v3730
      %3732 = vmatmul.f32.gmra.mxu0 %v3362
      %v3733 = vpop.f32.mrf.mxu0
      %v3734 = vadd.f32 0.0, %v3733
      %3735 = vmatmul.f32.gmra.mxu0 %v3364
      %v3736 = vpop.f32.mrf.mxu0
      %v3737 = vadd.f32 0.0, %v3736
      %3738 = vmatmul.f32.gmra.mxu0 %v3366
      %v3739 = vpop.f32.mrf.mxu0
      %v3740 = vadd.f32 0.0, %v3739
      %3741 = vmatmul.f32.gmra.mxu0 %v3368
      %v3742 = vpop.f32.mrf.mxu0
      %v3743 = vadd.f32 0.0, %v3742
      %3744 = vmatmul.f32.gmra.mxu0 %v3370
      %v3745 = vpop.f32.mrf.mxu0
      %v3746 = vadd.f32 0.0, %v3745
      %3747 = vmatmul.f32.gmra.mxu0 %v3372
      %v3748 = vpop.f32.mrf.mxu0
      %v3749 = vadd.f32 0.0, %v3748
      %3750 = vmatmul.f32.gmra.mxu0 %v3374
      %v3751 = vpop.f32.mrf.mxu0
      %v3752 = vadd.f32 0.0, %v3751
      %3753 = vmatmul.f32.gmra.mxu0 %v3376
      %v3754 = vpop.f32.mrf.mxu0
      %v3755 = vadd.f32 0.0, %v3754
      %3756 = vmatmul.f32.gmra.mxu0 %v3378
      %v3757 = vpop.f32.mrf.mxu0
      %v3758 = vadd.f32 0.0, %v3757
      %3759 = vmatmul.f32.gmra.mxu0 %v3380
      %v3760 = vpop.f32.mrf.mxu0
      %v3761 = vadd.f32 0.0, %v3760
      %3762 = vmatmul.f32.gmra.mxu0 %v3382
      %v3763 = vpop.f32.mrf.mxu0
      %v3764 = vadd.f32 0.0, %v3763
      %3765 = vmatmul.f32.gmra.mxu0 %v3384
      %v3766 = vpop.f32.mrf.mxu0
      %v3767 = vadd.f32 0.0, %v3766
      %3768 = vmatmul.f32.gmra.mxu0 %v3386
      %v3769 = vpop.f32.mrf.mxu0
      %v3770 = vadd.f32 0.0, %v3769
      %3771 = vmatmul.f32.gmra.mxu0 %v3388
      %v3772 = vpop.f32.mrf.mxu0
      %v3773 = vadd.f32 0.0, %v3772
      %3774 = vmatmul.f32.gmra.mxu0 %v3390
      %v3775 = vpop.f32.mrf.mxu0
      %v3776 = vadd.f32 0.0, %v3775
      %3777 = vmatmul.f32.gmra.mxu0 %v3392
      %v3778 = vpop.f32.mrf.mxu0
      %v3779 = vadd.f32 0.0, %v3778
      %3780 = vmatmul.f32.gmra.mxu0 %v3394
      %v3781 = vpop.f32.mrf.mxu0
      %v3782 = vadd.f32 0.0, %v3781
      %3783 = vmatmul.f32.gmra.mxu0 %v3396
      %v3784 = vpop.f32.mrf.mxu0
      %v3785 = vadd.f32 0.0, %v3784
      %3786 = vmatmul.f32.gmra.mxu0 %v3398
      %v3787 = vpop.f32.mrf.mxu0
      %v3788 = vadd.f32 0.0, %v3787
      %3789 = vmatmul.f32.gmra.mxu0 %v3400
      %v3790 = vpop.f32.mrf.mxu0
      %v3791 = vadd.f32 0.0, %v3790
      %3792 = vmatmul.f32.gmra.mxu0 %v3402
      %v3793 = vpop.f32.mrf.mxu0
      %v3794 = vadd.f32 0.0, %v3793
      %3795 = vmatmul.f32.gmra.mxu0 %v3404
      %v3796 = vpop.f32.mrf.mxu0
      %v3797 = vadd.f32 0.0, %v3796
      %3798 = vmatmul.f32.gmra.mxu0 %v3406
      %v3799 = vpop.f32.mrf.mxu0
      %v3800 = vadd.f32 0.0, %v3799
      %3801 = vmatmul.f32.gmra.mxu0 %v3408
      %v3802 = vpop.f32.mrf.mxu0
      %v3803 = vadd.f32 0.0, %v3802
      %3804 = vmatmul.f32.gmra.mxu0 %v3410
      %v3805 = vpop.f32.mrf.mxu0
      %v3806 = vadd.f32 0.0, %v3805
      %3807 = vmatmul.f32.gmra.mxu0 %v3412
      %v3808 = vpop.f32.mrf.mxu0
      %v3809 = vadd.f32 0.0, %v3808
      %3810 = vmatmul.f32.gmra.mxu0 %v3414
      %v3811 = vpop.f32.mrf.mxu0
      %v3812 = vadd.f32 0.0, %v3811
      %3813 = vmatmul.f32.gmra.mxu0 %v3416
      %v3814 = vpop.f32.mrf.mxu0
      %v3815 = vadd.f32 0.0, %v3814
      %3816 = vmatmul.f32.gmra.mxu0 %v3418
      %v3817 = vpop.f32.mrf.mxu0
      %v3818 = vadd.f32 0.0, %v3817
      %3819 = vmatmul.f32.gmra.mxu0 %v3420
      %v3820 = vpop.f32.mrf.mxu0
      %v3821 = vadd.f32 0.0, %v3820
      %3822 = vdwg.mxu0
      %v3823 = vsel %vm826, %v2560, 0
      %v3825 = vsel %vm826, %v2562, 0
      %v3827 = vsel %vm826, %v2564, 0
      %v3829 = vsel %vm826, %v2566, 0
      %v3831 = vsel %vm826, %v2569, 0
      %v3833 = vsel %vm826, %v2571, 0
      %v3835 = vsel %vm826, %v2573, 0
      %v3837 = vsel %vm826, %v2575, 0
      %v3839 = vsel %vm826, %v2578, 0
      %v3841 = vsel %vm826, %v2580, 0
      %v3843 = vsel %vm826, %v2582, 0
      %v3845 = vsel %vm826, %v2584, 0
      %v3847 = vsel %vm826, %v2587, 0
      %v3849 = vsel %vm826, %v2589, 0
      %v3851 = vsel %vm826, %v2591, 0
      %v3853 = vsel %vm826, %v2593, 0
      %v3855 = vsel %vm826, %v2596, 0
      %v3857 = vsel %vm826, %v2598, 0
      %v3859 = vsel %vm826, %v2600, 0
      %v3861 = vsel %vm826, %v2602, 0
      %v3863 = vsel %vm826, %v2605, 0
      %v3865 = vsel %vm826, %v2607, 0
      %v3867 = vsel %vm826, %v2609, 0
      %v3869 = vsel %vm826, %v2611, 0
      %v3871 = vsel %vm826, %v2614, 0
      %v3873 = vsel %vm826, %v2616, 0
      %v3875 = vsel %vm826, %v2618, 0
      %v3877 = vsel %vm826, %v2620, 0
      %v3879 = vsel %vm826, %v2623, 0
      %v3881 = vsel %vm826, %v2625, 0
      %v3883 = vsel %vm826, %v2627, 0
      %v3885 = vsel %vm826, %v2629, 0
      %v3887 = vsel %vm826, %v2632, 0
      %v3889 = vsel %vm826, %v2634, 0
      %v3891 = vsel %vm826, %v2636, 0
      %v3893 = vsel %vm826, %v2638, 0
      %v3895 = vsel %vm826, %v2641, 0
      %v3897 = vsel %vm826, %v2643, 0
      %v3899 = vsel %vm826, %v2645, 0
      %v3901 = vsel %vm826, %v2647, 0
      %v3903 = vsel %vm826, %v2650, 0
      %v3905 = vsel %vm826, %v2652, 0
      %v3907 = vsel %vm826, %v2654, 0
      %v3909 = vsel %vm826, %v2656, 0
      %v3911 = vsel %vm826, %v2659, 0
      %v3913 = vsel %vm826, %v2661, 0
      %v3915 = vsel %vm826, %v2663, 0
      %v3917 = vsel %vm826, %v2665, 0
      %v3919 = vsel %vm826, %v2668, 0
      %v3921 = vsel %vm826, %v2670, 0
      %v3923 = vsel %vm826, %v2672, 0
      %v3925 = vsel %vm826, %v2674, 0
      %v3927 = vsel %vm826, %v2677, 0
      %v3929 = vsel %vm826, %v2679, 0
      %v3931 = vsel %vm826, %v2681, 0
      %v3933 = vsel %vm826, %v2683, 0
      %v3935 = vsel %vm826, %v2686, 0
      %v3937 = vsel %vm826, %v2688, 0
      %v3939 = vsel %vm826, %v2690, 0
      %v3941 = vsel %vm826, %v2692, 0
      %v3943 = vsel %vm826, %v2695, 0
      %v3945 = vsel %vm826, %v2697, 0
      %v3947 = vsel %vm826, %v2699, 0
      %v3949 = vsel %vm826, %v2701, 0
      %v3951 = vsel %vm826, %v2704, 0
      %v3953 = vsel %vm826, %v2706, 0
      %v3955 = vsel %vm826, %v2708, 0
      %v3957 = vsel %vm826, %v2710, 0
      %v3959 = vsel %vm826, %v2713, 0
      %v3961 = vsel %vm826, %v2715, 0
      %v3963 = vsel %vm826, %v2717, 0
      %v3965 = vsel %vm826, %v2719, 0
      %v3967 = vsel %vm826, %v2722, 0
      %v3969 = vsel %vm826, %v2724, 0
      %v3971 = vsel %vm826, %v2726, 0
      %v3973 = vsel %vm826, %v2728, 0
      %v3975 = vsel %vm826, %v2731, 0
      %v3977 = vsel %vm826, %v2733, 0
      %v3979 = vsel %vm826, %v2735, 0
      %v3981 = vsel %vm826, %v2737, 0
      %v3983 = vsel %vm826, %v2740, 0
      %v3985 = vsel %vm826, %v2742, 0
      %v3987 = vsel %vm826, %v2744, 0
      %v3989 = vsel %vm826, %v2746, 0
      %v3991 = vsel %vm826, %v2749, 0
      %v3993 = vsel %vm826, %v2751, 0
      %v3995 = vsel %vm826, %v2753, 0
      %v3997 = vsel %vm826, %v2755, 0
      %v3999 = vsel %vm826, %v2758, 0
      %v4001 = vsel %vm826, %v2760, 0
      %v4003 = vsel %vm826, %v2762, 0
      %v4005 = vsel %vm826, %v2764, 0
      %v4007 = vsel %vm826, %v2767, 0
      %v4009 = vsel %vm826, %v2769, 0
      %v4011 = vsel %vm826, %v2771, 0
      %v4013 = vsel %vm826, %v2773, 0
      %v4015 = vsel %vm826, %v2776, 0
      %v4017 = vsel %vm826, %v2778, 0
      %v4019 = vsel %vm826, %v2780, 0
      %v4021 = vsel %vm826, %v2782, 0
      %v4023 = vsel %vm826, %v2785, 0
      %v4025 = vsel %vm826, %v2787, 0
      %v4027 = vsel %vm826, %v2789, 0
      %v4029 = vsel %vm826, %v2791, 0
      %v4031 = vsel %vm826, %v2794, 0
      %v4033 = vsel %vm826, %v2796, 0
      %v4035 = vsel %vm826, %v2798, 0
      %v4037 = vsel %vm826, %v2800, 0
      %v4039 = vsel %vm826, %v2803, 0
      %v4041 = vsel %vm826, %v2805, 0
      %v4043 = vsel %vm826, %v2807, 0
      %v4045 = vsel %vm826, %v2809, 0
      %v4047 = vsel %vm826, %v2812, 0
      %v4049 = vsel %vm826, %v2814, 0
      %v4051 = vsel %vm826, %v2816, 0
      %v4053 = vsel %vm826, %v2818, 0
      %v4055 = vsel %vm826, %v2821, 0
      %v4057 = vsel %vm826, %v2823, 0
      %v4059 = vsel %vm826, %v2825, 0
      %v4061 = vsel %vm826, %v2827, 0
      %v4063 = vsel %vm826, %v2830, 0
      %v4065 = vsel %vm826, %v2832, 0
      %v4067 = vsel %vm826, %v2834, 0
      %v4069 = vsel %vm826, %v2836, 0
      %v4071 = vsel %vm826, %v2839, 0
      %v4073 = vsel %vm826, %v2841, 0
      %v4075 = vsel %vm826, %v2843, 0
      %v4077 = vsel %vm826, %v2845, 0
      %4079 = vmatpush.msra.mxu0 0.0
      %4080 = vmatpush.msra.mxu0 0.0
      %4081 = vmatpush.msra.mxu0 0.0
      %4082 = vmatpush.msra.mxu0 0.0
      %4083 = vmatpush.msra.mxu0 0.0
      %4084 = vmatpush.msra.mxu0 0.0
      %4085 = vmatpush.msra.mxu0 0.0
      %4086 = vmatpush.msra.mxu0 0.0
      %4087 = vmatpush.msra.mxu0 0.0
      %4088 = vmatpush.msra.mxu0 0.0
      %4089 = vmatpush.msra.mxu0 0.0
      %4090 = vmatpush.msra.mxu0 0.0
      %4091 = vmatpush.msra.mxu0 0.0
      %4092 = vmatpush.msra.mxu0 0.0
      %4093 = vmatpush.msra.mxu0 0.0
      %4094 = vmatpush.msra.mxu0 %v809
      %4095 = vmatmul.f32.gmra.mxu0 %v3823
      %v4096 = vpop.f32.mrf.mxu0
      %v4097 = vadd.f32 %v3440, %v4096
      %4098 = vmatmul.f32.gmra.mxu0 %v3825
      %v4099 = vpop.f32.mrf.mxu0
      %v4100 = vadd.f32 %v3443, %v4099
      %4101 = vmatmul.f32.gmra.mxu0 %v3827
      %v4102 = vpop.f32.mrf.mxu0
      %v4103 = vadd.f32 %v3446, %v4102
      %4104 = vmatmul.f32.gmra.mxu0 %v3829
      %v4105 = vpop.f32.mrf.mxu0
      %v4106 = vadd.f32 %v3449, %v4105
      %4107 = vmatmul.f32.gmra.mxu0 %v3831
      %v4108 = vpop.f32.mrf.mxu0
      %v4109 = vadd.f32 %v3452, %v4108
      %4110 = vmatmul.f32.gmra.mxu0 %v3833
      %v4111 = vpop.f32.mrf.mxu0
      %v4112 = vadd.f32 %v3455, %v4111
      %4113 = vmatmul.f32.gmra.mxu0 %v3835
      %v4114 = vpop.f32.mrf.mxu0
      %v4115 = vadd.f32 %v3458, %v4114
      %4116 = vmatmul.f32.gmra.mxu0 %v3837
      %v4117 = vpop.f32.mrf.mxu0
      %v4118 = vadd.f32 %v3461, %v4117
      %4119 = vmatmul.f32.gmra.mxu0 %v3839
      %v4120 = vpop.f32.mrf.mxu0
      %v4121 = vadd.f32 %v3464, %v4120
      %4122 = vmatmul.f32.gmra.mxu0 %v3841
      %v4123 = vpop.f32.mrf.mxu0
      %v4124 = vadd.f32 %v3467, %v4123
      %4125 = vmatmul.f32.gmra.mxu0 %v3843
      %v4126 = vpop.f32.mrf.mxu0
      %v4127 = vadd.f32 %v3470, %v4126
      %4128 = vmatmul.f32.gmra.mxu0 %v3845
      %v4129 = vpop.f32.mrf.mxu0
      %v4130 = vadd.f32 %v3473, %v4129
      %4131 = vmatmul.f32.gmra.mxu0 %v3847
      %v4132 = vpop.f32.mrf.mxu0
      %v4133 = vadd.f32 %v3476, %v4132
      %4134 = vmatmul.f32.gmra.mxu0 %v3849
      %v4135 = vpop.f32.mrf.mxu0
      %v4136 = vadd.f32 %v3479, %v4135
      %4137 = vmatmul.f32.gmra.mxu0 %v3851
      %v4138 = vpop.f32.mrf.mxu0
      %v4139 = vadd.f32 %v3482, %v4138
      %4140 = vmatmul.f32.gmra.mxu0 %v3853
      %v4141 = vpop.f32.mrf.mxu0
      %v4142 = vadd.f32 %v3485, %v4141
      %4143 = vmatmul.f32.gmra.mxu0 %v3855
      %v4144 = vpop.f32.mrf.mxu0
      %v4145 = vadd.f32 %v3488, %v4144
      %4146 = vmatmul.f32.gmra.mxu0 %v3857
      %v4147 = vpop.f32.mrf.mxu0
      %v4148 = vadd.f32 %v3491, %v4147
      %4149 = vmatmul.f32.gmra.mxu0 %v3859
      %v4150 = vpop.f32.mrf.mxu0
      %v4151 = vadd.f32 %v3494, %v4150
      %4152 = vmatmul.f32.gmra.mxu0 %v3861
      %v4153 = vpop.f32.mrf.mxu0
      %v4154 = vadd.f32 %v3497, %v4153
      %4155 = vmatmul.f32.gmra.mxu0 %v3863
      %v4156 = vpop.f32.mrf.mxu0
      %v4157 = vadd.f32 %v3500, %v4156
      %4158 = vmatmul.f32.gmra.mxu0 %v3865
      %v4159 = vpop.f32.mrf.mxu0
      %v4160 = vadd.f32 %v3503, %v4159
      %4161 = vmatmul.f32.gmra.mxu0 %v3867
      %v4162 = vpop.f32.mrf.mxu0
      %v4163 = vadd.f32 %v3506, %v4162
      %4164 = vmatmul.f32.gmra.mxu0 %v3869
      %v4165 = vpop.f32.mrf.mxu0
      %v4166 = vadd.f32 %v3509, %v4165
      %4167 = vmatmul.f32.gmra.mxu0 %v3871
      %v4168 = vpop.f32.mrf.mxu0
      %v4169 = vadd.f32 %v3512, %v4168
      %4170 = vmatmul.f32.gmra.mxu0 %v3873
      %v4171 = vpop.f32.mrf.mxu0
      %v4172 = vadd.f32 %v3515, %v4171
      %4173 = vmatmul.f32.gmra.mxu0 %v3875
      %v4174 = vpop.f32.mrf.mxu0
      %v4175 = vadd.f32 %v3518, %v4174
      %4176 = vmatmul.f32.gmra.mxu0 %v3877
      %v4177 = vpop.f32.mrf.mxu0
      %v4178 = vadd.f32 %v3521, %v4177
      %4179 = vmatmul.f32.gmra.mxu0 %v3879
      %v4180 = vpop.f32.mrf.mxu0
      %v4181 = vadd.f32 %v3524, %v4180
      %4182 = vmatmul.f32.gmra.mxu0 %v3881
      %v4183 = vpop.f32.mrf.mxu0
      %v4184 = vadd.f32 %v3527, %v4183
      %4185 = vmatmul.f32.gmra.mxu0 %v3883
      %v4186 = vpop.f32.mrf.mxu0
      %v4187 = vadd.f32 %v3530, %v4186
      %4188 = vmatmul.f32.gmra.mxu0 %v3885
      %v4189 = vpop.f32.mrf.mxu0
      %v4190 = vadd.f32 %v3533, %v4189
      %4191 = vmatmul.f32.gmra.mxu0 %v3887
      %v4192 = vpop.f32.mrf.mxu0
      %v4193 = vadd.f32 %v3536, %v4192
      %4194 = vmatmul.f32.gmra.mxu0 %v3889
      %v4195 = vpop.f32.mrf.mxu0
      %v4196 = vadd.f32 %v3539, %v4195
      %4197 = vmatmul.f32.gmra.mxu0 %v3891
      %v4198 = vpop.f32.mrf.mxu0
      %v4199 = vadd.f32 %v3542, %v4198
      %4200 = vmatmul.f32.gmra.mxu0 %v3893
      %v4201 = vpop.f32.mrf.mxu0
      %v4202 = vadd.f32 %v3545, %v4201
      %4203 = vmatmul.f32.gmra.mxu0 %v3895
      %v4204 = vpop.f32.mrf.mxu0
      %v4205 = vadd.f32 %v3548, %v4204
      %4206 = vmatmul.f32.gmra.mxu0 %v3897
      %v4207 = vpop.f32.mrf.mxu0
      %v4208 = vadd.f32 %v3551, %v4207
      %4209 = vmatmul.f32.gmra.mxu0 %v3899
      %v4210 = vpop.f32.mrf.mxu0
      %v4211 = vadd.f32 %v3554, %v4210
      %4212 = vmatmul.f32.gmra.mxu0 %v3901
      %v4213 = vpop.f32.mrf.mxu0
      %v4214 = vadd.f32 %v3557, %v4213
      %4215 = vmatmul.f32.gmra.mxu0 %v3903
      %v4216 = vpop.f32.mrf.mxu0
      %v4217 = vadd.f32 %v3560, %v4216
      %4218 = vmatmul.f32.gmra.mxu0 %v3905
      %v4219 = vpop.f32.mrf.mxu0
      %v4220 = vadd.f32 %v3563, %v4219
      %4221 = vmatmul.f32.gmra.mxu0 %v3907
      %v4222 = vpop.f32.mrf.mxu0
      %v4223 = vadd.f32 %v3566, %v4222
      %4224 = vmatmul.f32.gmra.mxu0 %v3909
      %v4225 = vpop.f32.mrf.mxu0
      %v4226 = vadd.f32 %v3569, %v4225
      %4227 = vmatmul.f32.gmra.mxu0 %v3911
      %v4228 = vpop.f32.mrf.mxu0
      %v4229 = vadd.f32 %v3572, %v4228
      %4230 = vmatmul.f32.gmra.mxu0 %v3913
      %v4231 = vpop.f32.mrf.mxu0
      %v4232 = vadd.f32 %v3575, %v4231
      %4233 = vmatmul.f32.gmra.mxu0 %v3915
      %v4234 = vpop.f32.mrf.mxu0
      %v4235 = vadd.f32 %v3578, %v4234
      %4236 = vmatmul.f32.gmra.mxu0 %v3917
      %v4237 = vpop.f32.mrf.mxu0
      %v4238 = vadd.f32 %v3581, %v4237
      %4239 = vmatmul.f32.gmra.mxu0 %v3919
      %v4240 = vpop.f32.mrf.mxu0
      %v4241 = vadd.f32 %v3584, %v4240
      %4242 = vmatmul.f32.gmra.mxu0 %v3921
      %v4243 = vpop.f32.mrf.mxu0
      %v4244 = vadd.f32 %v3587, %v4243
      %4245 = vmatmul.f32.gmra.mxu0 %v3923
      %v4246 = vpop.f32.mrf.mxu0
      %v4247 = vadd.f32 %v3590, %v4246
      %4248 = vmatmul.f32.gmra.mxu0 %v3925
      %v4249 = vpop.f32.mrf.mxu0
      %v4250 = vadd.f32 %v3593, %v4249
      %4251 = vmatmul.f32.gmra.mxu0 %v3927
      %v4252 = vpop.f32.mrf.mxu0
      %v4253 = vadd.f32 %v3596, %v4252
      %4254 = vmatmul.f32.gmra.mxu0 %v3929
      %v4255 = vpop.f32.mrf.mxu0
      %v4256 = vadd.f32 %v3599, %v4255
      %4257 = vmatmul.f32.gmra.mxu0 %v3931
      %v4258 = vpop.f32.mrf.mxu0
      %v4259 = vadd.f32 %v3602, %v4258
      %4260 = vmatmul.f32.gmra.mxu0 %v3933
      %v4261 = vpop.f32.mrf.mxu0
      %v4262 = vadd.f32 %v3605, %v4261
      %4263 = vmatmul.f32.gmra.mxu0 %v3935
      %v4264 = vpop.f32.mrf.mxu0
      %v4265 = vadd.f32 %v3608, %v4264
      %4266 = vmatmul.f32.gmra.mxu0 %v3937
      %v4267 = vpop.f32.mrf.mxu0
      %v4268 = vadd.f32 %v3611, %v4267
      %4269 = vmatmul.f32.gmra.mxu0 %v3939
      %v4270 = vpop.f32.mrf.mxu0
      %v4271 = vadd.f32 %v3614, %v4270
      %4272 = vmatmul.f32.gmra.mxu0 %v3941
      %v4273 = vpop.f32.mrf.mxu0
      %v4274 = vadd.f32 %v3617, %v4273
      %4275 = vmatmul.f32.gmra.mxu0 %v3943
      %v4276 = vpop.f32.mrf.mxu0
      %v4277 = vadd.f32 %v3620, %v4276
      %4278 = vmatmul.f32.gmra.mxu0 %v3945
      %v4279 = vpop.f32.mrf.mxu0
      %v4280 = vadd.f32 %v3623, %v4279
      %4281 = vmatmul.f32.gmra.mxu0 %v3947
      %v4282 = vpop.f32.mrf.mxu0
      %v4283 = vadd.f32 %v3626, %v4282
      %4284 = vmatmul.f32.gmra.mxu0 %v3949
      %v4285 = vpop.f32.mrf.mxu0
      %v4286 = vadd.f32 %v3629, %v4285
      %4287 = vmatmul.f32.gmra.mxu0 %v3951
      %v4288 = vpop.f32.mrf.mxu0
      %v4289 = vadd.f32 %v3632, %v4288
      %4290 = vmatmul.f32.gmra.mxu0 %v3953
      %v4291 = vpop.f32.mrf.mxu0
      %v4292 = vadd.f32 %v3635, %v4291
      %4293 = vmatmul.f32.gmra.mxu0 %v3955
      %v4294 = vpop.f32.mrf.mxu0
      %v4295 = vadd.f32 %v3638, %v4294
      %4296 = vmatmul.f32.gmra.mxu0 %v3957
      %v4297 = vpop.f32.mrf.mxu0
      %v4298 = vadd.f32 %v3641, %v4297
      %4299 = vmatmul.f32.gmra.mxu0 %v3959
      %v4300 = vpop.f32.mrf.mxu0
      %v4301 = vadd.f32 %v3644, %v4300
      %4302 = vmatmul.f32.gmra.mxu0 %v3961
      %v4303 = vpop.f32.mrf.mxu0
      %v4304 = vadd.f32 %v3647, %v4303
      %4305 = vmatmul.f32.gmra.mxu0 %v3963
      %v4306 = vpop.f32.mrf.mxu0
      %v4307 = vadd.f32 %v3650, %v4306
      %4308 = vmatmul.f32.gmra.mxu0 %v3965
      %v4309 = vpop.f32.mrf.mxu0
      %v4310 = vadd.f32 %v3653, %v4309
      %4311 = vmatmul.f32.gmra.mxu0 %v3967
      %v4312 = vpop.f32.mrf.mxu0
      %v4313 = vadd.f32 %v3656, %v4312
      %4314 = vmatmul.f32.gmra.mxu0 %v3969
      %v4315 = vpop.f32.mrf.mxu0
      %v4316 = vadd.f32 %v3659, %v4315
      %4317 = vmatmul.f32.gmra.mxu0 %v3971
      %v4318 = vpop.f32.mrf.mxu0
      %v4319 = vadd.f32 %v3662, %v4318
      %4320 = vmatmul.f32.gmra.mxu0 %v3973
      %v4321 = vpop.f32.mrf.mxu0
      %v4322 = vadd.f32 %v3665, %v4321
      %4323 = vmatmul.f32.gmra.mxu0 %v3975
      %v4324 = vpop.f32.mrf.mxu0
      %v4325 = vadd.f32 %v3668, %v4324
      %4326 = vmatmul.f32.gmra.mxu0 %v3977
      %v4327 = vpop.f32.mrf.mxu0
      %v4328 = vadd.f32 %v3671, %v4327
      %4329 = vmatmul.f32.gmra.mxu0 %v3979
      %v4330 = vpop.f32.mrf.mxu0
      %v4331 = vadd.f32 %v3674, %v4330
      %4332 = vmatmul.f32.gmra.mxu0 %v3981
      %v4333 = vpop.f32.mrf.mxu0
      %v4334 = vadd.f32 %v3677, %v4333
      %4335 = vmatmul.f32.gmra.mxu0 %v3983
      %v4336 = vpop.f32.mrf.mxu0
      %v4337 = vadd.f32 %v3680, %v4336
      %4338 = vmatmul.f32.gmra.mxu0 %v3985
      %v4339 = vpop.f32.mrf.mxu0
      %v4340 = vadd.f32 %v3683, %v4339
      %4341 = vmatmul.f32.gmra.mxu0 %v3987
      %v4342 = vpop.f32.mrf.mxu0
      %v4343 = vadd.f32 %v3686, %v4342
      %4344 = vmatmul.f32.gmra.mxu0 %v3989
      %v4345 = vpop.f32.mrf.mxu0
      %v4346 = vadd.f32 %v3689, %v4345
      %4347 = vmatmul.f32.gmra.mxu0 %v3991
      %v4348 = vpop.f32.mrf.mxu0
      %v4349 = vadd.f32 %v3692, %v4348
      %4350 = vmatmul.f32.gmra.mxu0 %v3993
      %v4351 = vpop.f32.mrf.mxu0
      %v4352 = vadd.f32 %v3695, %v4351
      %4353 = vmatmul.f32.gmra.mxu0 %v3995
      %v4354 = vpop.f32.mrf.mxu0
      %v4355 = vadd.f32 %v3698, %v4354
      %4356 = vmatmul.f32.gmra.mxu0 %v3997
      %v4357 = vpop.f32.mrf.mxu0
      %v4358 = vadd.f32 %v3701, %v4357
      %4359 = vmatmul.f32.gmra.mxu0 %v3999
      %v4360 = vpop.f32.mrf.mxu0
      %v4361 = vadd.f32 %v3704, %v4360
      %4362 = vmatmul.f32.gmra.mxu0 %v4001
      %v4363 = vpop.f32.mrf.mxu0
      %v4364 = vadd.f32 %v3707, %v4363
      %4365 = vmatmul.f32.gmra.mxu0 %v4003
      %v4366 = vpop.f32.mrf.mxu0
      %v4367 = vadd.f32 %v3710, %v4366
      %4368 = vmatmul.f32.gmra.mxu0 %v4005
      %v4369 = vpop.f32.mrf.mxu0
      %v4370 = vadd.f32 %v3713, %v4369
      %4371 = vmatmul.f32.gmra.mxu0 %v4007
      %v4372 = vpop.f32.mrf.mxu0
      %v4373 = vadd.f32 %v3716, %v4372
      %4374 = vmatmul.f32.gmra.mxu0 %v4009
      %v4375 = vpop.f32.mrf.mxu0
      %v4376 = vadd.f32 %v3719, %v4375
      %4377 = vmatmul.f32.gmra.mxu0 %v4011
      %v4378 = vpop.f32.mrf.mxu0
      %v4379 = vadd.f32 %v3722, %v4378
      %4380 = vmatmul.f32.gmra.mxu0 %v4013
      %v4381 = vpop.f32.mrf.mxu0
      %v4382 = vadd.f32 %v3725, %v4381
      %4383 = vmatmul.f32.gmra.mxu0 %v4015
      %v4384 = vpop.f32.mrf.mxu0
      %v4385 = vadd.f32 %v3728, %v4384
      %4386 = vmatmul.f32.gmra.mxu0 %v4017
      %v4387 = vpop.f32.mrf.mxu0
      %v4388 = vadd.f32 %v3731, %v4387
      %4389 = vmatmul.f32.gmra.mxu0 %v4019
      %v4390 = vpop.f32.mrf.mxu0
      %v4391 = vadd.f32 %v3734, %v4390
      %4392 = vmatmul.f32.gmra.mxu0 %v4021
      %v4393 = vpop.f32.mrf.mxu0
      %v4394 = vadd.f32 %v3737, %v4393
      %4395 = vmatmul.f32.gmra.mxu0 %v4023
      %v4396 = vpop.f32.mrf.mxu0
      %v4397 = vadd.f32 %v3740, %v4396
      %4398 = vmatmul.f32.gmra.mxu0 %v4025
      %v4399 = vpop.f32.mrf.mxu0
      %v4400 = vadd.f32 %v3743, %v4399
      %4401 = vmatmul.f32.gmra.mxu0 %v4027
      %v4402 = vpop.f32.mrf.mxu0
      %v4403 = vadd.f32 %v3746, %v4402
      %4404 = vmatmul.f32.gmra.mxu0 %v4029
      %v4405 = vpop.f32.mrf.mxu0
      %v4406 = vadd.f32 %v3749, %v4405
      %4407 = vmatmul.f32.gmra.mxu0 %v4031
      %v4408 = vpop.f32.mrf.mxu0
      %v4409 = vadd.f32 %v3752, %v4408
      %4410 = vmatmul.f32.gmra.mxu0 %v4033
      %v4411 = vpop.f32.mrf.mxu0
      %v4412 = vadd.f32 %v3755, %v4411
      %4413 = vmatmul.f32.gmra.mxu0 %v4035
      %v4414 = vpop.f32.mrf.mxu0
      %v4415 = vadd.f32 %v3758, %v4414
      %4416 = vmatmul.f32.gmra.mxu0 %v4037
      %v4417 = vpop.f32.mrf.mxu0
      %v4418 = vadd.f32 %v3761, %v4417
      %4419 = vmatmul.f32.gmra.mxu0 %v4039
      %v4420 = vpop.f32.mrf.mxu0
      %v4421 = vadd.f32 %v3764, %v4420
      %4422 = vmatmul.f32.gmra.mxu0 %v4041
      %v4423 = vpop.f32.mrf.mxu0
      %v4424 = vadd.f32 %v3767, %v4423
      %4425 = vmatmul.f32.gmra.mxu0 %v4043
      %v4426 = vpop.f32.mrf.mxu0
      %v4427 = vadd.f32 %v3770, %v4426
      %4428 = vmatmul.f32.gmra.mxu0 %v4045
      %v4429 = vpop.f32.mrf.mxu0
      %v4430 = vadd.f32 %v3773, %v4429
      %4431 = vmatmul.f32.gmra.mxu0 %v4047
      %v4432 = vpop.f32.mrf.mxu0
      %v4433 = vadd.f32 %v3776, %v4432
      %4434 = vmatmul.f32.gmra.mxu0 %v4049
      %v4435 = vpop.f32.mrf.mxu0
      %v4436 = vadd.f32 %v3779, %v4435
      %4437 = vmatmul.f32.gmra.mxu0 %v4051
      %v4438 = vpop.f32.mrf.mxu0
      %v4439 = vadd.f32 %v3782, %v4438
      %4440 = vmatmul.f32.gmra.mxu0 %v4053
      %v4441 = vpop.f32.mrf.mxu0
      %v4442 = vadd.f32 %v3785, %v4441
      %4443 = vmatmul.f32.gmra.mxu0 %v4055
      %v4444 = vpop.f32.mrf.mxu0
      %v4445 = vadd.f32 %v3788, %v4444
      %4446 = vmatmul.f32.gmra.mxu0 %v4057
      %v4447 = vpop.f32.mrf.mxu0
      %v4448 = vadd.f32 %v3791, %v4447
      %4449 = vmatmul.f32.gmra.mxu0 %v4059
      %v4450 = vpop.f32.mrf.mxu0
      %v4451 = vadd.f32 %v3794, %v4450
      %4452 = vmatmul.f32.gmra.mxu0 %v4061
      %v4453 = vpop.f32.mrf.mxu0
      %v4454 = vadd.f32 %v3797, %v4453
      %4455 = vmatmul.f32.gmra.mxu0 %v4063
      %v4456 = vpop.f32.mrf.mxu0
      %v4457 = vadd.f32 %v3800, %v4456
      %4458 = vmatmul.f32.gmra.mxu0 %v4065
      %v4459 = vpop.f32.mrf.mxu0
      %v4460 = vadd.f32 %v3803, %v4459
      %4461 = vmatmul.f32.gmra.mxu0 %v4067
      %v4462 = vpop.f32.mrf.mxu0
      %v4463 = vadd.f32 %v3806, %v4462
      %4464 = vmatmul.f32.gmra.mxu0 %v4069
      %v4465 = vpop.f32.mrf.mxu0
      %v4466 = vadd.f32 %v3809, %v4465
      %4467 = vmatmul.f32.gmra.mxu0 %v4071
      %v4468 = vpop.f32.mrf.mxu0
      %v4469 = vadd.f32 %v3812, %v4468
      %4470 = vmatmul.f32.gmra.mxu0 %v4073
      %v4471 = vpop.f32.mrf.mxu0
      %v4472 = vadd.f32 %v3815, %v4471
      %4473 = vmatmul.f32.gmra.mxu0 %v4075
      %v4474 = vpop.f32.mrf.mxu0
      %v4475 = vadd.f32 %v3818, %v4474
      %4476 = vmatmul.f32.gmra.mxu0 %v4077
      %v4477 = vpop.f32.mrf.mxu0
      %v4478 = vadd.f32 %v3821, %v4477
      %4479 = vdwg.mxu0
      %v4480 = vadd.f32 %v2397, %v4097
      %v4481 = vadd.f32 %v2398, %v4100
      %v4482 = vadd.f32 %v2399, %v4103
      %v4483 = vadd.f32 %v2400, %v4106
      %v4484 = vadd.f32 %v2401, %v4109
      %v4485 = vadd.f32 %v2402, %v4112
      %v4486 = vadd.f32 %v2403, %v4115
      %v4487 = vadd.f32 %v2404, %v4118
      %v4488 = vadd.f32 %v2405, %v4121
      %v4489 = vadd.f32 %v2406, %v4124
      %v4490 = vadd.f32 %v2407, %v4127
      %v4491 = vadd.f32 %v2408, %v4130
      %v4492 = vadd.f32 %v2409, %v4133
      %v4493 = vadd.f32 %v2410, %v4136
      %v4494 = vadd.f32 %v2411, %v4139
      %v4495 = vadd.f32 %v2412, %v4142
      %v4496 = vadd.f32 %v2413, %v4145
      %v4497 = vadd.f32 %v2414, %v4148
      %v4498 = vadd.f32 %v2415, %v4151
      %v4499 = vadd.f32 %v2416, %v4154
      %v4500 = vadd.f32 %v2417, %v4157
      %v4501 = vadd.f32 %v2418, %v4160
      %v4502 = vadd.f32 %v2419, %v4163
      %v4503 = vadd.f32 %v2420, %v4166
      %v4504 = vadd.f32 %v2421, %v4169
      %v4505 = vadd.f32 %v2422, %v4172
      %v4506 = vadd.f32 %v2423, %v4175
      %v4507 = vadd.f32 %v2424, %v4178
      %v4508 = vadd.f32 %v2425, %v4181
      %v4509 = vadd.f32 %v2426, %v4184
      %v4510 = vadd.f32 %v2427, %v4187
      %v4511 = vadd.f32 %v2428, %v4190
      %v4512 = vadd.f32 %v2429, %v4193
      %v4513 = vadd.f32 %v2430, %v4196
      %v4514 = vadd.f32 %v2431, %v4199
      %v4515 = vadd.f32 %v2432, %v4202
      %v4516 = vadd.f32 %v2433, %v4205
      %v4517 = vadd.f32 %v2434, %v4208
      %v4518 = vadd.f32 %v2435, %v4211
      %v4519 = vadd.f32 %v2436, %v4214
      %v4520 = vadd.f32 %v2437, %v4217
      %v4521 = vadd.f32 %v2438, %v4220
      %v4522 = vadd.f32 %v2439, %v4223
      %v4523 = vadd.f32 %v2440, %v4226
      %v4524 = vadd.f32 %v2441, %v4229
      %v4525 = vadd.f32 %v2442, %v4232
      %v4526 = vadd.f32 %v2443, %v4235
      %v4527 = vadd.f32 %v2444, %v4238
      %v4528 = vadd.f32 %v2445, %v4241
      %v4529 = vadd.f32 %v2446, %v4244
      %v4530 = vadd.f32 %v2447, %v4247
      %v4531 = vadd.f32 %v2448, %v4250
      %v4532 = vadd.f32 %v2449, %v4253
      %v4533 = vadd.f32 %v2450, %v4256
      %v4534 = vadd.f32 %v2451, %v4259
      %v4535 = vadd.f32 %v2452, %v4262
      %v4536 = vadd.f32 %v2453, %v4265
      %v4537 = vadd.f32 %v2454, %v4268
      %v4538 = vadd.f32 %v2455, %v4271
      %v4539 = vadd.f32 %v2456, %v4274
      %v4540 = vadd.f32 %v2457, %v4277
      %v4541 = vadd.f32 %v2458, %v4280
      %v4542 = vadd.f32 %v2459, %v4283
      %v4543 = vadd.f32 %v2460, %v4286
      %v4544 = vadd.f32 %v2461, %v4289
      %v4545 = vadd.f32 %v2462, %v4292
      %v4546 = vadd.f32 %v2463, %v4295
      %v4547 = vadd.f32 %v2464, %v4298
      %v4548 = vadd.f32 %v2465, %v4301
      %v4549 = vadd.f32 %v2466, %v4304
      %v4550 = vadd.f32 %v2467, %v4307
      %v4551 = vadd.f32 %v2468, %v4310
      %v4552 = vadd.f32 %v2469, %v4313
      %v4553 = vadd.f32 %v2470, %v4316
      %v4554 = vadd.f32 %v2471, %v4319
      %v4555 = vadd.f32 %v2472, %v4322
      %v4556 = vadd.f32 %v2473, %v4325
      %v4557 = vadd.f32 %v2474, %v4328
      %v4558 = vadd.f32 %v2475, %v4331
      %v4559 = vadd.f32 %v2476, %v4334
      %v4560 = vadd.f32 %v2477, %v4337
      %v4561 = vadd.f32 %v2478, %v4340
      %v4562 = vadd.f32 %v2479, %v4343
      %v4563 = vadd.f32 %v2480, %v4346
      %v4564 = vadd.f32 %v2481, %v4349
      %v4565 = vadd.f32 %v2482, %v4352
      %v4566 = vadd.f32 %v2483, %v4355
      %v4567 = vadd.f32 %v2484, %v4358
      %v4568 = vadd.f32 %v2485, %v4361
      %v4569 = vadd.f32 %v2486, %v4364
      %v4570 = vadd.f32 %v2487, %v4367
      %v4571 = vadd.f32 %v2488, %v4370
      %v4572 = vadd.f32 %v2489, %v4373
      %v4573 = vadd.f32 %v2490, %v4376
      %v4574 = vadd.f32 %v2491, %v4379
      %v4575 = vadd.f32 %v2492, %v4382
      %v4576 = vadd.f32 %v2493, %v4385
      %v4577 = vadd.f32 %v2494, %v4388
      %v4578 = vadd.f32 %v2495, %v4391
      %v4579 = vadd.f32 %v2496, %v4394
      %v4580 = vadd.f32 %v2497, %v4397
      %v4581 = vadd.f32 %v2498, %v4400
      %v4582 = vadd.f32 %v2499, %v4403
      %v4583 = vadd.f32 %v2500, %v4406
      %v4584 = vadd.f32 %v2501, %v4409
      %v4585 = vadd.f32 %v2502, %v4412
      %v4586 = vadd.f32 %v2503, %v4415
      %v4587 = vadd.f32 %v2504, %v4418
      %v4588 = vadd.f32 %v2505, %v4421
      %v4589 = vadd.f32 %v2506, %v4424
      %v4590 = vadd.f32 %v2507, %v4427
      %v4591 = vadd.f32 %v2508, %v4430
      %v4592 = vadd.f32 %v2509, %v4433
      %v4593 = vadd.f32 %v2510, %v4436
      %v4594 = vadd.f32 %v2511, %v4439
      %v4595 = vadd.f32 %v2512, %v4442
      %v4596 = vadd.f32 %v2513, %v4445
      %v4597 = vadd.f32 %v2514, %v4448
      %v4598 = vadd.f32 %v2515, %v4451
      %v4599 = vadd.f32 %v2516, %v4454
      %v4600 = vadd.f32 %v2517, %v4457
      %v4601 = vadd.f32 %v2518, %v4460
      %v4602 = vadd.f32 %v2519, %v4463
      %v4603 = vadd.f32 %v2520, %v4466
      %v4604 = vadd.f32 %v2521, %v4469
      %v4605 = vadd.f32 %v2522, %v4472
      %v4606 = vadd.f32 %v2523, %v4475
      %v4607 = vadd.f32 %v2524, %v4478
      %vm4608 = vcmask 1045504
      %v4609 = vrot.slane %v468, 2
      %v4610 = vrot.slane %v469, 2
      %v4611 = vsel %vm4608, %v4609, %v4610
      %v4612 = vrot.slane %v470, 2
      %v4613 = vsel %vm4608, %v4610, %v4612
      %v4614 = vrot.slane %v471, 2
      %v4615 = vsel %vm4608, %v4612, %v4614
      %v4616 = vrot.slane %v472, 2
      %v4617 = vsel %vm4608, %v4614, %v4616
      %v4618 = vrot.slane %v473, 2
      %v4619 = vrot.slane %v474, 2
      %v4620 = vsel %vm4608, %v4618, %v4619
      %v4621 = vrot.slane %v475, 2
      %v4622 = vsel %vm4608, %v4619, %v4621
      %v4623 = vrot.slane %v476, 2
      %v4624 = vsel %vm4608, %v4621, %v4623
      %v4625 = vrot.slane %v477, 2
      %v4626 = vsel %vm4608, %v4623, %v4625
      %v4627 = vrot.slane %v478, 2
      %v4628 = vrot.slane %v479, 2
      %v4629 = vsel %vm4608, %v4627, %v4628
      %v4630 = vrot.slane %v480, 2
      %v4631 = vsel %vm4608, %v4628, %v4630
      %v4632 = vrot.slane %v481, 2
      %v4633 = vsel %vm4608, %v4630, %v4632
      %v4634 = vrot.slane %v482, 2
      %v4635 = vsel %vm4608, %v4632, %v4634
      %v4636 = vrot.slane %v483, 2
      %v4637 = vrot.slane %v484, 2
      %v4638 = vsel %vm4608, %v4636, %v4637
      %v4639 = vrot.slane %v485, 2
      %v4640 = vsel %vm4608, %v4637, %v4639
      %v4641 = vrot.slane %v486, 2
      %v4642 = vsel %vm4608, %v4639, %v4641
      %v4643 = vrot.slane %v487, 2
      %v4644 = vsel %vm4608, %v4641, %v4643
      %v4645 = vrot.slane %v488, 2
      %v4646 = vrot.slane %v489, 2
      %v4647 = vsel %vm4608, %v4645, %v4646
      %v4648 = vrot.slane %v490, 2
      %v4649 = vsel %vm4608, %v4646, %v4648
      %v4650 = vrot.slane %v491, 2
      %v4651 = vsel %vm4608, %v4648, %v4650
      %v4652 = vrot.slane %v492, 2
      %v4653 = vsel %vm4608, %v4650, %v4652
      %v4654 = vrot.slane %v493, 2
      %v4655 = vrot.slane %v494, 2
      %v4656 = vsel %vm4608, %v4654, %v4655
      %v4657 = vrot.slane %v495, 2
      %v4658 = vsel %vm4608, %v4655, %v4657
      %v4659 = vrot.slane %v496, 2
      %v4660 = vsel %vm4608, %v4657, %v4659
      %v4661 = vrot.slane %v497, 2
      %v4662 = vsel %vm4608, %v4659, %v4661
      %v4663 = vrot.slane %v498, 2
      %v4664 = vrot.slane %v499, 2
      %v4665 = vsel %vm4608, %v4663, %v4664
      %v4666 = vrot.slane %v500, 2
      %v4667 = vsel %vm4608, %v4664, %v4666
      %v4668 = vrot.slane %v501, 2
      %v4669 = vsel %vm4608, %v4666, %v4668
      %v4670 = vrot.slane %v502, 2
      %v4671 = vsel %vm4608, %v4668, %v4670
      %v4672 = vrot.slane %v503, 2
      %v4673 = vrot.slane %v504, 2
      %v4674 = vsel %vm4608, %v4672, %v4673
      %v4675 = vrot.slane %v505, 2
      %v4676 = vsel %vm4608, %v4673, %v4675
      %v4677 = vrot.slane %v506, 2
      %v4678 = vsel %vm4608, %v4675, %v4677
      %v4679 = vrot.slane %v507, 2
      %v4680 = vsel %vm4608, %v4677, %v4679
      %v4681 = vrot.slane %v508, 2
      %v4682 = vrot.slane %v509, 2
      %v4683 = vsel %vm4608, %v4681, %v4682
      %v4684 = vrot.slane %v510, 2
      %v4685 = vsel %vm4608, %v4682, %v4684
      %v4686 = vrot.slane %v511, 2
      %v4687 = vsel %vm4608, %v4684, %v4686
      %v4688 = vrot.slane %v512, 2
      %v4689 = vsel %vm4608, %v4686, %v4688
      %v4690 = vrot.slane %v513, 2
      %v4691 = vrot.slane %v514, 2
      %v4692 = vsel %vm4608, %v4690, %v4691
      %v4693 = vrot.slane %v515, 2
      %v4694 = vsel %vm4608, %v4691, %v4693
      %v4695 = vrot.slane %v516, 2
      %v4696 = vsel %vm4608, %v4693, %v4695
      %v4697 = vrot.slane %v517, 2
      %v4698 = vsel %vm4608, %v4695, %v4697
      %v4699 = vrot.slane %v518, 2
      %v4700 = vrot.slane %v519, 2
      %v4701 = vsel %vm4608, %v4699, %v4700
      %v4702 = vrot.slane %v520, 2
      %v4703 = vsel %vm4608, %v4700, %v4702
      %v4704 = vrot.slane %v521, 2
      %v4705 = vsel %vm4608, %v4702, %v4704
      %v4706 = vrot.slane %v522, 2
      %v4707 = vsel %vm4608, %v4704, %v4706
      %v4708 = vrot.slane %v523, 2
      %v4709 = vrot.slane %v524, 2
      %v4710 = vsel %vm4608, %v4708, %v4709
      %v4711 = vrot.slane %v525, 2
      %v4712 = vsel %vm4608, %v4709, %v4711
      %v4713 = vrot.slane %v526, 2
      %v4714 = vsel %vm4608, %v4711, %v4713
      %v4715 = vrot.slane %v527, 2
      %v4716 = vsel %vm4608, %v4713, %v4715
      %v4717 = vrot.slane %v528, 2
      %v4718 = vrot.slane %v529, 2
      %v4719 = vsel %vm4608, %v4717, %v4718
      %v4720 = vrot.slane %v530, 2
      %v4721 = vsel %vm4608, %v4718, %v4720
      %v4722 = vrot.slane %v531, 2
      %v4723 = vsel %vm4608, %v4720, %v4722
      %v4724 = vrot.slane %v532, 2
      %v4725 = vsel %vm4608, %v4722, %v4724
      %v4726 = vrot.slane %v533, 2
      %v4727 = vrot.slane %v534, 2
      %v4728 = vsel %vm4608, %v4726, %v4727
      %v4729 = vrot.slane %v535, 2
      %v4730 = vsel %vm4608, %v4727, %v4729
      %v4731 = vrot.slane %v536, 2
      %v4732 = vsel %vm4608, %v4729, %v4731
      %v4733 = vrot.slane %v537, 2
      %v4734 = vsel %vm4608, %v4731, %v4733
      %v4735 = vrot.slane %v538, 2
      %v4736 = vrot.slane %v539, 2
      %v4737 = vsel %vm4608, %v4735, %v4736
      %v4738 = vrot.slane %v540, 2
      %v4739 = vsel %vm4608, %v4736, %v4738
      %v4740 = vrot.slane %v541, 2
      %v4741 = vsel %vm4608, %v4738, %v4740
      %v4742 = vrot.slane %v542, 2
      %v4743 = vsel %vm4608, %v4740, %v4742
      %v4744 = vrot.slane %v543, 2
      %v4745 = vrot.slane %v544, 2
      %v4746 = vsel %vm4608, %v4744, %v4745
      %v4747 = vrot.slane %v545, 2
      %v4748 = vsel %vm4608, %v4745, %v4747
      %v4749 = vrot.slane %v546, 2
      %v4750 = vsel %vm4608, %v4747, %v4749
      %v4751 = vrot.slane %v547, 2
      %v4752 = vsel %vm4608, %v4749, %v4751
      %v4753 = vrot.slane %v548, 2
      %v4754 = vrot.slane %v549, 2
      %v4755 = vsel %vm4608, %v4753, %v4754
      %v4756 = vrot.slane %v550, 2
      %v4757 = vsel %vm4608, %v4754, %v4756
      %v4758 = vrot.slane %v551, 2
      %v4759 = vsel %vm4608, %v4756, %v4758
      %v4760 = vrot.slane %v552, 2
      %v4761 = vsel %vm4608, %v4758, %v4760
      %v4762 = vrot.slane %v553, 2
      %v4763 = vrot.slane %v554, 2
      %v4764 = vsel %vm4608, %v4762, %v4763
      %v4765 = vrot.slane %v555, 2
      %v4766 = vsel %vm4608, %v4763, %v4765
      %v4767 = vrot.slane %v556, 2
      %v4768 = vsel %vm4608, %v4765, %v4767
      %v4769 = vrot.slane %v557, 2
      %v4770 = vsel %vm4608, %v4767, %v4769
      %v4771 = vrot.slane %v558, 2
      %v4772 = vrot.slane %v559, 2
      %v4773 = vsel %vm4608, %v4771, %v4772
      %v4774 = vrot.slane %v560, 2
      %v4775 = vsel %vm4608, %v4772, %v4774
      %v4776 = vrot.slane %v561, 2
      %v4777 = vsel %vm4608, %v4774, %v4776
      %v4778 = vrot.slane %v562, 2
      %v4779 = vsel %vm4608, %v4776, %v4778
      %v4780 = vrot.slane %v563, 2
      %v4781 = vrot.slane %v564, 2
      %v4782 = vsel %vm4608, %v4780, %v4781
      %v4783 = vrot.slane %v565, 2
      %v4784 = vsel %vm4608, %v4781, %v4783
      %v4785 = vrot.slane %v566, 2
      %v4786 = vsel %vm4608, %v4783, %v4785
      %v4787 = vrot.slane %v567, 2
      %v4788 = vsel %vm4608, %v4785, %v4787
      %v4789 = vrot.slane %v568, 2
      %v4790 = vrot.slane %v569, 2
      %v4791 = vsel %vm4608, %v4789, %v4790
      %v4792 = vrot.slane %v570, 2
      %v4793 = vsel %vm4608, %v4790, %v4792
      %v4794 = vrot.slane %v571, 2
      %v4795 = vsel %vm4608, %v4792, %v4794
      %v4796 = vrot.slane %v572, 2
      %v4797 = vsel %vm4608, %v4794, %v4796
      %v4798 = vrot.slane %v573, 2
      %v4799 = vrot.slane %v574, 2
      %v4800 = vsel %vm4608, %v4798, %v4799
      %v4801 = vrot.slane %v575, 2
      %v4802 = vsel %vm4608, %v4799, %v4801
      %v4803 = vrot.slane %v576, 2
      %v4804 = vsel %vm4608, %v4801, %v4803
      %v4805 = vrot.slane %v577, 2
      %v4806 = vsel %vm4608, %v4803, %v4805
      %v4807 = vrot.slane %v578, 2
      %v4808 = vrot.slane %v579, 2
      %v4809 = vsel %vm4608, %v4807, %v4808
      %v4810 = vrot.slane %v580, 2
      %v4811 = vsel %vm4608, %v4808, %v4810
      %v4812 = vrot.slane %v581, 2
      %v4813 = vsel %vm4608, %v4810, %v4812
      %v4814 = vrot.slane %v582, 2
      %v4815 = vsel %vm4608, %v4812, %v4814
      %v4816 = vrot.slane %v583, 2
      %v4817 = vrot.slane %v584, 2
      %v4818 = vsel %vm4608, %v4816, %v4817
      %v4819 = vrot.slane %v585, 2
      %v4820 = vsel %vm4608, %v4817, %v4819
      %v4821 = vrot.slane %v586, 2
      %v4822 = vsel %vm4608, %v4819, %v4821
      %v4823 = vrot.slane %v587, 2
      %v4824 = vsel %vm4608, %v4821, %v4823
      %v4825 = vrot.slane %v588, 2
      %v4826 = vrot.slane %v589, 2
      %v4827 = vsel %vm4608, %v4825, %v4826
      %v4828 = vrot.slane %v590, 2
      %v4829 = vsel %vm4608, %v4826, %v4828
      %v4830 = vrot.slane %v591, 2
      %v4831 = vsel %vm4608, %v4828, %v4830
      %v4832 = vrot.slane %v592, 2
      %v4833 = vsel %vm4608, %v4830, %v4832
      %v4834 = vrot.slane %v593, 2
      %v4835 = vrot.slane %v594, 2
      %v4836 = vsel %vm4608, %v4834, %v4835
      %v4837 = vrot.slane %v595, 2
      %v4838 = vsel %vm4608, %v4835, %v4837
      %v4839 = vrot.slane %v596, 2
      %v4840 = vsel %vm4608, %v4837, %v4839
      %v4841 = vrot.slane %v597, 2
      %v4842 = vsel %vm4608, %v4839, %v4841
      %v4843 = vrot.slane %v598, 2
      %v4844 = vrot.slane %v599, 2
      %v4845 = vsel %vm4608, %v4843, %v4844
      %v4846 = vrot.slane %v600, 2
      %v4847 = vsel %vm4608, %v4844, %v4846
      %v4848 = vrot.slane %v601, 2
      %v4849 = vsel %vm4608, %v4846, %v4848
      %v4850 = vrot.slane %v602, 2
      %v4851 = vsel %vm4608, %v4848, %v4850
      %v4852 = vrot.slane %v603, 2
      %v4853 = vrot.slane %v604, 2
      %v4854 = vsel %vm4608, %v4852, %v4853
      %v4855 = vrot.slane %v605, 2
      %v4856 = vsel %vm4608, %v4853, %v4855
      %v4857 = vrot.slane %v606, 2
      %v4858 = vsel %vm4608, %v4855, %v4857
      %v4859 = vrot.slane %v607, 2
      %v4860 = vsel %vm4608, %v4857, %v4859
      %v4861 = vrot.slane %v608, 2
      %v4862 = vrot.slane %v609, 2
      %v4863 = vsel %vm4608, %v4861, %v4862
      %v4864 = vrot.slane %v610, 2
      %v4865 = vsel %vm4608, %v4862, %v4864
      %v4866 = vrot.slane %v611, 2
      %v4867 = vsel %vm4608, %v4864, %v4866
      %v4868 = vrot.slane %v612, 2
      %v4869 = vsel %vm4608, %v4866, %v4868
      %v4870 = vrot.slane %v613, 2
      %v4871 = vrot.slane %v614, 2
      %v4872 = vsel %vm4608, %v4870, %v4871
      %v4873 = vrot.slane %v615, 2
      %v4874 = vsel %vm4608, %v4871, %v4873
      %v4875 = vrot.slane %v616, 2
      %v4876 = vsel %vm4608, %v4873, %v4875
      %v4877 = vrot.slane %v617, 2
      %v4878 = vsel %vm4608, %v4875, %v4877
      %v4879 = vrot.slane %v618, 2
      %v4880 = vrot.slane %v619, 2
      %v4881 = vsel %vm4608, %v4879, %v4880
      %v4882 = vrot.slane %v620, 2
      %v4883 = vsel %vm4608, %v4880, %v4882
      %v4884 = vrot.slane %v621, 2
      %v4885 = vsel %vm4608, %v4882, %v4884
      %v4886 = vrot.slane %v622, 2
      %v4887 = vsel %vm4608, %v4884, %v4886
      %v4888 = vrot.slane %v623, 2
      %v4889 = vrot.slane %v624, 2
      %v4890 = vsel %vm4608, %v4888, %v4889
      %v4891 = vrot.slane %v625, 2
      %v4892 = vsel %vm4608, %v4889, %v4891
      %v4893 = vrot.slane %v626, 2
      %v4894 = vsel %vm4608, %v4891, %v4893
      %v4895 = vrot.slane %v627, 2
      %v4896 = vsel %vm4608, %v4893, %v4895
      %v4897 = vrot.slane %v638, 2
      %v4898 = vrot.slane %v639, 2
      %v4899 = vsel %vm4608, %v4897, %v4898
      %v4900 = vrot.slane %v640, 2
      %v4901 = vsel %vm4608, %v4898, %v4900
      %v4902 = vrot.slane %v641, 2
      %v4903 = vsel %vm4608, %v4900, %v4902
      %v4904 = vrot.slane %v642, 2
      %v4905 = vsel %vm4608, %v4902, %v4904
      %v4906 = vrot.slane %v643, 2
      %v4907 = vrot.slane %v644, 2
      %v4908 = vsel %vm4608, %v4906, %v4907
      %v4909 = vrot.slane %v645, 2
      %v4910 = vsel %vm4608, %v4907, %v4909
      %v4911 = vrot.slane %v646, 2
      %v4912 = vsel %vm4608, %v4909, %v4911
      %v4913 = vrot.slane %v647, 2
      %v4914 = vsel %vm4608, %v4911, %v4913
      %v4915 = vrot.slane %v648, 2
      %v4916 = vrot.slane %v649, 2
      %v4917 = vsel %vm4608, %v4915, %v4916
      %v4918 = vrot.slane %v650, 2
      %v4919 = vsel %vm4608, %v4916, %v4918
      %v4920 = vrot.slane %v651, 2
      %v4921 = vsel %vm4608, %v4918, %v4920
      %v4922 = vrot.slane %v652, 2
      %v4923 = vsel %vm4608, %v4920, %v4922
      %v4924 = vrot.slane %v653, 2
      %v4925 = vrot.slane %v654, 2
      %v4926 = vsel %vm4608, %v4924, %v4925
      %v4927 = vrot.slane %v655, 2
      %v4928 = vsel %vm4608, %v4925, %v4927
      %v4929 = vrot.slane %v656, 2
      %v4930 = vsel %vm4608, %v4927, %v4929
      %v4931 = vrot.slane %v657, 2
      %v4932 = vsel %vm4608, %v4929, %v4931
      %v4933 = vrot.slane %v658, 2
      %v4934 = vrot.slane %v659, 2
      %v4935 = vsel %vm4608, %v4933, %v4934
      %v4936 = vrot.slane %v660, 2
      %v4937 = vsel %vm4608, %v4934, %v4936
      %v4938 = vrot.slane %v661, 2
      %v4939 = vsel %vm4608, %v4936, %v4938
      %v4940 = vrot.slane %v662, 2
      %v4941 = vsel %vm4608, %v4938, %v4940
      %v4942 = vrot.slane %v663, 2
      %v4943 = vrot.slane %v664, 2
      %v4944 = vsel %vm4608, %v4942, %v4943
      %v4945 = vrot.slane %v665, 2
      %v4946 = vsel %vm4608, %v4943, %v4945
      %v4947 = vrot.slane %v666, 2
      %v4948 = vsel %vm4608, %v4945, %v4947
      %v4949 = vrot.slane %v667, 2
      %v4950 = vsel %vm4608, %v4947, %v4949
      %v4951 = vrot.slane %v668, 2
      %v4952 = vrot.slane %v669, 2
      %v4953 = vsel %vm4608, %v4951, %v4952
      %v4954 = vrot.slane %v670, 2
      %v4955 = vsel %vm4608, %v4952, %v4954
      %v4956 = vrot.slane %v671, 2
      %v4957 = vsel %vm4608, %v4954, %v4956
      %v4958 = vrot.slane %v672, 2
      %v4959 = vsel %vm4608, %v4956, %v4958
      %v4960 = vrot.slane %v673, 2
      %v4961 = vrot.slane %v674, 2
      %v4962 = vsel %vm4608, %v4960, %v4961
      %v4963 = vrot.slane %v675, 2
      %v4964 = vsel %vm4608, %v4961, %v4963
      %v4965 = vrot.slane %v676, 2
      %v4966 = vsel %vm4608, %v4963, %v4965
      %v4967 = vrot.slane %v677, 2
      %v4968 = vsel %vm4608, %v4965, %v4967
      %v4969 = vrot.slane %v678, 2
      %v4970 = vrot.slane %v679, 2
      %v4971 = vsel %vm4608, %v4969, %v4970
      %v4972 = vrot.slane %v680, 2
      %v4973 = vsel %vm4608, %v4970, %v4972
      %v4974 = vrot.slane %v681, 2
      %v4975 = vsel %vm4608, %v4972, %v4974
      %v4976 = vrot.slane %v682, 2
      %v4977 = vsel %vm4608, %v4974, %v4976
      %v4978 = vrot.slane %v683, 2
      %v4979 = vrot.slane %v684, 2
      %v4980 = vsel %vm4608, %v4978, %v4979
      %v4981 = vrot.slane %v685, 2
      %v4982 = vsel %vm4608, %v4979, %v4981
      %v4983 = vrot.slane %v686, 2
      %v4984 = vsel %vm4608, %v4981, %v4983
      %v4985 = vrot.slane %v687, 2
      %v4986 = vsel %vm4608, %v4983, %v4985
      %v4987 = vrot.slane %v688, 2
      %v4988 = vrot.slane %v689, 2
      %v4989 = vsel %vm4608, %v4987, %v4988
      %v4990 = vrot.slane %v690, 2
      %v4991 = vsel %vm4608, %v4988, %v4990
      %v4992 = vrot.slane %v691, 2
      %v4993 = vsel %vm4608, %v4990, %v4992
      %v4994 = vrot.slane %v692, 2
      %v4995 = vsel %vm4608, %v4992, %v4994
      %v4996 = vrot.slane %v693, 2
      %v4997 = vrot.slane %v694, 2
      %v4998 = vsel %vm4608, %v4996, %v4997
      %v4999 = vrot.slane %v695, 2
      %v5000 = vsel %vm4608, %v4997, %v4999
      %v5001 = vrot.slane %v696, 2
      %v5002 = vsel %vm4608, %v4999, %v5001
      %v5003 = vrot.slane %v697, 2
      %v5004 = vsel %vm4608, %v5001, %v5003
      %v5005 = vrot.slane %v698, 2
      %v5006 = vrot.slane %v699, 2
      %v5007 = vsel %vm4608, %v5005, %v5006
      %v5008 = vrot.slane %v700, 2
      %v5009 = vsel %vm4608, %v5006, %v5008
      %v5010 = vrot.slane %v701, 2
      %v5011 = vsel %vm4608, %v5008, %v5010
      %v5012 = vrot.slane %v702, 2
      %v5013 = vsel %vm4608, %v5010, %v5012
      %v5014 = vrot.slane %v703, 2
      %v5015 = vrot.slane %v704, 2
      %v5016 = vsel %vm4608, %v5014, %v5015
      %v5017 = vrot.slane %v705, 2
      %v5018 = vsel %vm4608, %v5015, %v5017
      %v5019 = vrot.slane %v706, 2
      %v5020 = vsel %vm4608, %v5017, %v5019
      %v5021 = vrot.slane %v707, 2
      %v5022 = vsel %vm4608, %v5019, %v5021
      %v5023 = vrot.slane %v708, 2
      %v5024 = vrot.slane %v709, 2
      %v5025 = vsel %vm4608, %v5023, %v5024
      %v5026 = vrot.slane %v710, 2
      %v5027 = vsel %vm4608, %v5024, %v5026
      %v5028 = vrot.slane %v711, 2
      %v5029 = vsel %vm4608, %v5026, %v5028
      %v5030 = vrot.slane %v712, 2
      %v5031 = vsel %vm4608, %v5028, %v5030
      %v5032 = vrot.slane %v713, 2
      %v5033 = vrot.slane %v714, 2
      %v5034 = vsel %vm4608, %v5032, %v5033
      %v5035 = vrot.slane %v715, 2
      %v5036 = vsel %vm4608, %v5033, %v5035
      %v5037 = vrot.slane %v716, 2
      %v5038 = vsel %vm4608, %v5035, %v5037
      %v5039 = vrot.slane %v717, 2
      %v5040 = vsel %vm4608, %v5037, %v5039
      %v5041 = vrot.slane %v718, 2
      %v5042 = vrot.slane %v719, 2
      %v5043 = vsel %vm4608, %v5041, %v5042
      %v5044 = vrot.slane %v720, 2
      %v5045 = vsel %vm4608, %v5042, %v5044
      %v5046 = vrot.slane %v721, 2
      %v5047 = vsel %vm4608, %v5044, %v5046
      %v5048 = vrot.slane %v722, 2
      %v5049 = vsel %vm4608, %v5046, %v5048
      %v5050 = vrot.slane %v723, 2
      %v5051 = vrot.slane %v724, 2
      %v5052 = vsel %vm4608, %v5050, %v5051
      %v5053 = vrot.slane %v725, 2
      %v5054 = vsel %vm4608, %v5051, %v5053
      %v5055 = vrot.slane %v726, 2
      %v5056 = vsel %vm4608, %v5053, %v5055
      %v5057 = vrot.slane %v727, 2
      %v5058 = vsel %vm4608, %v5055, %v5057
      %v5059 = vrot.slane %v728, 2
      %v5060 = vrot.slane %v729, 2
      %v5061 = vsel %vm4608, %v5059, %v5060
      %v5062 = vrot.slane %v730, 2
      %v5063 = vsel %vm4608, %v5060, %v5062
      %v5064 = vrot.slane %v731, 2
      %v5065 = vsel %vm4608, %v5062, %v5064
      %v5066 = vrot.slane %v732, 2
      %v5067 = vsel %vm4608, %v5064, %v5066
      %v5068 = vrot.slane %v733, 2
      %v5069 = vrot.slane %v734, 2
      %v5070 = vsel %vm4608, %v5068, %v5069
      %v5071 = vrot.slane %v735, 2
      %v5072 = vsel %vm4608, %v5069, %v5071
      %v5073 = vrot.slane %v736, 2
      %v5074 = vsel %vm4608, %v5071, %v5073
      %v5075 = vrot.slane %v737, 2
      %v5076 = vsel %vm4608, %v5073, %v5075
      %v5077 = vrot.slane %v738, 2
      %v5078 = vrot.slane %v739, 2
      %v5079 = vsel %vm4608, %v5077, %v5078
      %v5080 = vrot.slane %v740, 2
      %v5081 = vsel %vm4608, %v5078, %v5080
      %v5082 = vrot.slane %v741, 2
      %v5083 = vsel %vm4608, %v5080, %v5082
      %v5084 = vrot.slane %v742, 2
      %v5085 = vsel %vm4608, %v5082, %v5084
      %v5086 = vrot.slane %v743, 2
      %v5087 = vrot.slane %v744, 2
      %v5088 = vsel %vm4608, %v5086, %v5087
      %v5089 = vrot.slane %v745, 2
      %v5090 = vsel %vm4608, %v5087, %v5089
      %v5091 = vrot.slane %v746, 2
      %v5092 = vsel %vm4608, %v5089, %v5091
      %v5093 = vrot.slane %v747, 2
      %v5094 = vsel %vm4608, %v5091, %v5093
      %v5095 = vrot.slane %v748, 2
      %v5096 = vrot.slane %v749, 2
      %v5097 = vsel %vm4608, %v5095, %v5096
      %v5098 = vrot.slane %v750, 2
      %v5099 = vsel %vm4608, %v5096, %v5098
      %v5100 = vrot.slane %v751, 2
      %v5101 = vsel %vm4608, %v5098, %v5100
      %v5102 = vrot.slane %v752, 2
      %v5103 = vsel %vm4608, %v5100, %v5102
      %v5104 = vrot.slane %v753, 2
      %v5105 = vrot.slane %v754, 2
      %v5106 = vsel %vm4608, %v5104, %v5105
      %v5107 = vrot.slane %v755, 2
      %v5108 = vsel %vm4608, %v5105, %v5107
      %v5109 = vrot.slane %v756, 2
      %v5110 = vsel %vm4608, %v5107, %v5109
      %v5111 = vrot.slane %v757, 2
      %v5112 = vsel %vm4608, %v5109, %v5111
      %v5113 = vrot.slane %v758, 2
      %v5114 = vrot.slane %v759, 2
      %v5115 = vsel %vm4608, %v5113, %v5114
      %v5116 = vrot.slane %v760, 2
      %v5117 = vsel %vm4608, %v5114, %v5116
      %v5118 = vrot.slane %v761, 2
      %v5119 = vsel %vm4608, %v5116, %v5118
      %v5120 = vrot.slane %v762, 2
      %v5121 = vsel %vm4608, %v5118, %v5120
      %v5122 = vrot.slane %v763, 2
      %v5123 = vrot.slane %v764, 2
      %v5124 = vsel %vm4608, %v5122, %v5123
      %v5125 = vrot.slane %v765, 2
      %v5126 = vsel %vm4608, %v5123, %v5125
      %v5127 = vrot.slane %v766, 2
      %v5128 = vsel %vm4608, %v5125, %v5127
      %v5129 = vrot.slane %v767, 2
      %v5130 = vsel %vm4608, %v5127, %v5129
      %v5131 = vrot.slane %v768, 2
      %v5132 = vrot.slane %v769, 2
      %v5133 = vsel %vm4608, %v5131, %v5132
      %v5134 = vrot.slane %v770, 2
      %v5135 = vsel %vm4608, %v5132, %v5134
      %v5136 = vrot.slane %v771, 2
      %v5137 = vsel %vm4608, %v5134, %v5136
      %v5138 = vrot.slane %v772, 2
      %v5139 = vsel %vm4608, %v5136, %v5138
      %v5140 = vrot.slane %v773, 2
      %v5141 = vrot.slane %v774, 2
      %v5142 = vsel %vm4608, %v5140, %v5141
      %v5143 = vrot.slane %v775, 2
      %v5144 = vsel %vm4608, %v5141, %v5143
      %v5145 = vrot.slane %v776, 2
      %v5146 = vsel %vm4608, %v5143, %v5145
      %v5147 = vrot.slane %v777, 2
      %v5148 = vsel %vm4608, %v5145, %v5147
      %v5149 = vrot.slane %v778, 2
      %v5150 = vrot.slane %v779, 2
      %v5151 = vsel %vm4608, %v5149, %v5150
      %v5152 = vrot.slane %v780, 2
      %v5153 = vsel %vm4608, %v5150, %v5152
      %v5154 = vrot.slane %v781, 2
      %v5155 = vsel %vm4608, %v5152, %v5154
      %v5156 = vrot.slane %v782, 2
      %v5157 = vsel %vm4608, %v5154, %v5156
      %v5158 = vrot.slane %v783, 2
      %v5159 = vrot.slane %v784, 2
      %v5160 = vsel %vm4608, %v5158, %v5159
      %v5161 = vrot.slane %v785, 2
      %v5162 = vsel %vm4608, %v5159, %v5161
      %v5163 = vrot.slane %v786, 2
      %v5164 = vsel %vm4608, %v5161, %v5163
      %v5165 = vrot.slane %v787, 2
      %v5166 = vsel %vm4608, %v5163, %v5165
      %v5167 = vrot.slane %v788, 2
      %v5168 = vrot.slane %v789, 2
      %v5169 = vsel %vm4608, %v5167, %v5168
      %v5170 = vrot.slane %v790, 2
      %v5171 = vsel %vm4608, %v5168, %v5170
      %v5172 = vrot.slane %v791, 2
      %v5173 = vsel %vm4608, %v5170, %v5172
      %v5174 = vrot.slane %v792, 2
      %v5175 = vsel %vm4608, %v5172, %v5174
      %v5176 = vrot.slane %v793, 2
      %v5177 = vrot.slane %v794, 2
      %v5178 = vsel %vm4608, %v5176, %v5177
      %v5179 = vrot.slane %v795, 2
      %v5180 = vsel %vm4608, %v5177, %v5179
      %v5181 = vrot.slane %v796, 2
      %v5182 = vsel %vm4608, %v5179, %v5181
      %v5183 = vrot.slane %v797, 2
      %v5184 = vsel %vm4608, %v5181, %v5183
      %v5185 = vsel %vm826, %v4899, 0
      %v5187 = vsel %vm826, %v4901, 0
      %v5189 = vsel %vm826, %v4903, 0
      %v5191 = vsel %vm826, %v4905, 0
      %v5193 = vsel %vm826, %v4908, 0
      %v5195 = vsel %vm826, %v4910, 0
      %v5197 = vsel %vm826, %v4912, 0
      %v5199 = vsel %vm826, %v4914, 0
      %v5201 = vsel %vm826, %v4917, 0
      %v5203 = vsel %vm826, %v4919, 0
      %v5205 = vsel %vm826, %v4921, 0
      %v5207 = vsel %vm826, %v4923, 0
      %v5209 = vsel %vm826, %v4926, 0
      %v5211 = vsel %vm826, %v4928, 0
      %v5213 = vsel %vm826, %v4930, 0
      %v5215 = vsel %vm826, %v4932, 0
      %v5217 = vsel %vm826, %v4935, 0
      %v5219 = vsel %vm826, %v4937, 0
      %v5221 = vsel %vm826, %v4939, 0
      %v5223 = vsel %vm826, %v4941, 0
      %v5225 = vsel %vm826, %v4944, 0
      %v5227 = vsel %vm826, %v4946, 0
      %v5229 = vsel %vm826, %v4948, 0
      %v5231 = vsel %vm826, %v4950, 0
      %v5233 = vsel %vm826, %v4953, 0
      %v5235 = vsel %vm826, %v4955, 0
      %v5237 = vsel %vm826, %v4957, 0
      %v5239 = vsel %vm826, %v4959, 0
      %v5241 = vsel %vm826, %v4962, 0
      %v5243 = vsel %vm826, %v4964, 0
      %v5245 = vsel %vm826, %v4966, 0
      %v5247 = vsel %vm826, %v4968, 0
      %v5249 = vsel %vm826, %v4971, 0
      %v5251 = vsel %vm826, %v4973, 0
      %v5253 = vsel %vm826, %v4975, 0
      %v5255 = vsel %vm826, %v4977, 0
      %v5257 = vsel %vm826, %v4980, 0
      %v5259 = vsel %vm826, %v4982, 0
      %v5261 = vsel %vm826, %v4984, 0
      %v5263 = vsel %vm826, %v4986, 0
      %v5265 = vsel %vm826, %v4989, 0
      %v5267 = vsel %vm826, %v4991, 0
      %v5269 = vsel %vm826, %v4993, 0
      %v5271 = vsel %vm826, %v4995, 0
      %v5273 = vsel %vm826, %v4998, 0
      %v5275 = vsel %vm826, %v5000, 0
      %v5277 = vsel %vm826, %v5002, 0
      %v5279 = vsel %vm826, %v5004, 0
      %v5281 = vsel %vm826, %v5007, 0
      %v5283 = vsel %vm826, %v5009, 0
      %v5285 = vsel %vm826, %v5011, 0
      %v5287 = vsel %vm826, %v5013, 0
      %v5289 = vsel %vm826, %v5016, 0
      %v5291 = vsel %vm826, %v5018, 0
      %v5293 = vsel %vm826, %v5020, 0
      %v5295 = vsel %vm826, %v5022, 0
      %v5297 = vsel %vm826, %v5025, 0
      %v5299 = vsel %vm826, %v5027, 0
      %v5301 = vsel %vm826, %v5029, 0
      %v5303 = vsel %vm826, %v5031, 0
      %v5305 = vsel %vm826, %v5034, 0
      %v5307 = vsel %vm826, %v5036, 0
      %v5309 = vsel %vm826, %v5038, 0
      %v5311 = vsel %vm826, %v5040, 0
      %v5313 = vsel %vm826, %v5043, 0
      %v5315 = vsel %vm826, %v5045, 0
      %v5317 = vsel %vm826, %v5047, 0
      %v5319 = vsel %vm826, %v5049, 0
      %v5321 = vsel %vm826, %v5052, 0
      %v5323 = vsel %vm826, %v5054, 0
      %v5325 = vsel %vm826, %v5056, 0
      %v5327 = vsel %vm826, %v5058, 0
      %v5329 = vsel %vm826, %v5061, 0
      %v5331 = vsel %vm826, %v5063, 0
      %v5333 = vsel %vm826, %v5065, 0
      %v5335 = vsel %vm826, %v5067, 0
      %v5337 = vsel %vm826, %v5070, 0
      %v5339 = vsel %vm826, %v5072, 0
      %v5341 = vsel %vm826, %v5074, 0
      %v5343 = vsel %vm826, %v5076, 0
      %v5345 = vsel %vm826, %v5079, 0
      %v5347 = vsel %vm826, %v5081, 0
      %v5349 = vsel %vm826, %v5083, 0
      %v5351 = vsel %vm826, %v5085, 0
      %v5353 = vsel %vm826, %v5088, 0
      %v5355 = vsel %vm826, %v5090, 0
      %v5357 = vsel %vm826, %v5092, 0
      %v5359 = vsel %vm826, %v5094, 0
      %v5361 = vsel %vm826, %v5097, 0
      %v5363 = vsel %vm826, %v5099, 0
      %v5365 = vsel %vm826, %v5101, 0
      %v5367 = vsel %vm826, %v5103, 0
      %v5369 = vsel %vm826, %v5106, 0
      %v5371 = vsel %vm826, %v5108, 0
      %v5373 = vsel %vm826, %v5110, 0
      %v5375 = vsel %vm826, %v5112, 0
      %v5377 = vsel %vm826, %v5115, 0
      %v5379 = vsel %vm826, %v5117, 0
      %v5381 = vsel %vm826, %v5119, 0
      %v5383 = vsel %vm826, %v5121, 0
      %v5385 = vsel %vm826, %v5124, 0
      %v5387 = vsel %vm826, %v5126, 0
      %v5389 = vsel %vm826, %v5128, 0
      %v5391 = vsel %vm826, %v5130, 0
      %v5393 = vsel %vm826, %v5133, 0
      %v5395 = vsel %vm826, %v5135, 0
      %v5397 = vsel %vm826, %v5137, 0
      %v5399 = vsel %vm826, %v5139, 0
      %v5401 = vsel %vm826, %v5142, 0
      %v5403 = vsel %vm826, %v5144, 0
      %v5405 = vsel %vm826, %v5146, 0
      %v5407 = vsel %vm826, %v5148, 0
      %v5409 = vsel %vm826, %v5151, 0
      %v5411 = vsel %vm826, %v5153, 0
      %v5413 = vsel %vm826, %v5155, 0
      %v5415 = vsel %vm826, %v5157, 0
      %v5417 = vsel %vm826, %v5160, 0
      %v5419 = vsel %vm826, %v5162, 0
      %v5421 = vsel %vm826, %v5164, 0
      %v5423 = vsel %vm826, %v5166, 0
      %v5425 = vsel %vm826, %v5169, 0
      %v5427 = vsel %vm826, %v5171, 0
      %v5429 = vsel %vm826, %v5173, 0
      %v5431 = vsel %vm826, %v5175, 0
      %v5433 = vsel %vm826, %v5178, 0
      %v5435 = vsel %vm826, %v5180, 0
      %v5437 = vsel %vm826, %v5182, 0
      %v5439 = vsel %vm826, %v5184, 0
      %5441 = vmatpush.msra.mxu0 0.0
      %5442 = vmatpush.msra.mxu0 0.0
      %5443 = vmatpush.msra.mxu0 0.0
      %5444 = vmatpush.msra.mxu0 0.0
      %5445 = vmatpush.msra.mxu0 0.0
      %5446 = vmatpush.msra.mxu0 0.0
      %5447 = vmatpush.msra.mxu0 0.0
      %5448 = vmatpush.msra.mxu0 0.0
      %5449 = vmatpush.msra.mxu0 0.0
      %5450 = vmatpush.msra.mxu0 0.0
      %5451 = vmatpush.msra.mxu0 0.0
      %5452 = vmatpush.msra.mxu0 0.0
      %5453 = vmatpush.msra.mxu0 0.0
      %5454 = vmatpush.msra.mxu0 0.0
      %5455 = vmatpush.msra.mxu0 0.0
      %5456 = vmatpush.msra.mxu0 %v819
      %5457 = vmatmul.f32.gmra.mxu0 %v5185
      %v5458 = vpop.f32.mrf.mxu0
      %v5459 = vadd.f32 0.0, %v5458
      %5460 = vmatmul.f32.gmra.mxu0 %v5187
      %v5461 = vpop.f32.mrf.mxu0
      %v5462 = vadd.f32 0.0, %v5461
      %5463 = vmatmul.f32.gmra.mxu0 %v5189
      %v5464 = vpop.f32.mrf.mxu0
      %v5465 = vadd.f32 0.0, %v5464
      %5466 = vmatmul.f32.gmra.mxu0 %v5191
      %v5467 = vpop.f32.mrf.mxu0
      %v5468 = vadd.f32 0.0, %v5467
      %5469 = vmatmul.f32.gmra.mxu0 %v5193
      %v5470 = vpop.f32.mrf.mxu0
      %v5471 = vadd.f32 0.0, %v5470
      %5472 = vmatmul.f32.gmra.mxu0 %v5195
      %v5473 = vpop.f32.mrf.mxu0
      %v5474 = vadd.f32 0.0, %v5473
      %5475 = vmatmul.f32.gmra.mxu0 %v5197
      %v5476 = vpop.f32.mrf.mxu0
      %v5477 = vadd.f32 0.0, %v5476
      %5478 = vmatmul.f32.gmra.mxu0 %v5199
      %v5479 = vpop.f32.mrf.mxu0
      %v5480 = vadd.f32 0.0, %v5479
      %5481 = vmatmul.f32.gmra.mxu0 %v5201
      %v5482 = vpop.f32.mrf.mxu0
      %v5483 = vadd.f32 0.0, %v5482
      %5484 = vmatmul.f32.gmra.mxu0 %v5203
      %v5485 = vpop.f32.mrf.mxu0
      %v5486 = vadd.f32 0.0, %v5485
      %5487 = vmatmul.f32.gmra.mxu0 %v5205
      %v5488 = vpop.f32.mrf.mxu0
      %v5489 = vadd.f32 0.0, %v5488
      %5490 = vmatmul.f32.gmra.mxu0 %v5207
      %v5491 = vpop.f32.mrf.mxu0
      %v5492 = vadd.f32 0.0, %v5491
      %5493 = vmatmul.f32.gmra.mxu0 %v5209
      %v5494 = vpop.f32.mrf.mxu0
      %v5495 = vadd.f32 0.0, %v5494
      %5496 = vmatmul.f32.gmra.mxu0 %v5211
      %v5497 = vpop.f32.mrf.mxu0
      %v5498 = vadd.f32 0.0, %v5497
      %5499 = vmatmul.f32.gmra.mxu0 %v5213
      %v5500 = vpop.f32.mrf.mxu0
      %v5501 = vadd.f32 0.0, %v5500
      %5502 = vmatmul.f32.gmra.mxu0 %v5215
      %v5503 = vpop.f32.mrf.mxu0
      %v5504 = vadd.f32 0.0, %v5503
      %5505 = vmatmul.f32.gmra.mxu0 %v5217
      %v5506 = vpop.f32.mrf.mxu0
      %v5507 = vadd.f32 0.0, %v5506
      %5508 = vmatmul.f32.gmra.mxu0 %v5219
      %v5509 = vpop.f32.mrf.mxu0
      %v5510 = vadd.f32 0.0, %v5509
      %5511 = vmatmul.f32.gmra.mxu0 %v5221
      %v5512 = vpop.f32.mrf.mxu0
      %v5513 = vadd.f32 0.0, %v5512
      %5514 = vmatmul.f32.gmra.mxu0 %v5223
      %v5515 = vpop.f32.mrf.mxu0
      %v5516 = vadd.f32 0.0, %v5515
      %5517 = vmatmul.f32.gmra.mxu0 %v5225
      %v5518 = vpop.f32.mrf.mxu0
      %v5519 = vadd.f32 0.0, %v5518
      %5520 = vmatmul.f32.gmra.mxu0 %v5227
      %v5521 = vpop.f32.mrf.mxu0
      %v5522 = vadd.f32 0.0, %v5521
      %5523 = vmatmul.f32.gmra.mxu0 %v5229
      %v5524 = vpop.f32.mrf.mxu0
      %v5525 = vadd.f32 0.0, %v5524
      %5526 = vmatmul.f32.gmra.mxu0 %v5231
      %v5527 = vpop.f32.mrf.mxu0
      %v5528 = vadd.f32 0.0, %v5527
      %5529 = vmatmul.f32.gmra.mxu0 %v5233
      %v5530 = vpop.f32.mrf.mxu0
      %v5531 = vadd.f32 0.0, %v5530
      %5532 = vmatmul.f32.gmra.mxu0 %v5235
      %v5533 = vpop.f32.mrf.mxu0
      %v5534 = vadd.f32 0.0, %v5533
      %5535 = vmatmul.f32.gmra.mxu0 %v5237
      %v5536 = vpop.f32.mrf.mxu0
      %v5537 = vadd.f32 0.0, %v5536
      %5538 = vmatmul.f32.gmra.mxu0 %v5239
      %v5539 = vpop.f32.mrf.mxu0
      %v5540 = vadd.f32 0.0, %v5539
      %5541 = vmatmul.f32.gmra.mxu0 %v5241
      %v5542 = vpop.f32.mrf.mxu0
      %v5543 = vadd.f32 0.0, %v5542
      %5544 = vmatmul.f32.gmra.mxu0 %v5243
      %v5545 = vpop.f32.mrf.mxu0
      %v5546 = vadd.f32 0.0, %v5545
      %5547 = vmatmul.f32.gmra.mxu0 %v5245
      %v5548 = vpop.f32.mrf.mxu0
      %v5549 = vadd.f32 0.0, %v5548
      %5550 = vmatmul.f32.gmra.mxu0 %v5247
      %v5551 = vpop.f32.mrf.mxu0
      %v5552 = vadd.f32 0.0, %v5551
      %5553 = vmatmul.f32.gmra.mxu0 %v5249
      %v5554 = vpop.f32.mrf.mxu0
      %v5555 = vadd.f32 0.0, %v5554
      %5556 = vmatmul.f32.gmra.mxu0 %v5251
      %v5557 = vpop.f32.mrf.mxu0
      %v5558 = vadd.f32 0.0, %v5557
      %5559 = vmatmul.f32.gmra.mxu0 %v5253
      %v5560 = vpop.f32.mrf.mxu0
      %v5561 = vadd.f32 0.0, %v5560
      %5562 = vmatmul.f32.gmra.mxu0 %v5255
      %v5563 = vpop.f32.mrf.mxu0
      %v5564 = vadd.f32 0.0, %v5563
      %5565 = vmatmul.f32.gmra.mxu0 %v5257
      %v5566 = vpop.f32.mrf.mxu0
      %v5567 = vadd.f32 0.0, %v5566
      %5568 = vmatmul.f32.gmra.mxu0 %v5259
      %v5569 = vpop.f32.mrf.mxu0
      %v5570 = vadd.f32 0.0, %v5569
      %5571 = vmatmul.f32.gmra.mxu0 %v5261
      %v5572 = vpop.f32.mrf.mxu0
      %v5573 = vadd.f32 0.0, %v5572
      %5574 = vmatmul.f32.gmra.mxu0 %v5263
      %v5575 = vpop.f32.mrf.mxu0
      %v5576 = vadd.f32 0.0, %v5575
      %5577 = vmatmul.f32.gmra.mxu0 %v5265
      %v5578 = vpop.f32.mrf.mxu0
      %v5579 = vadd.f32 0.0, %v5578
      %5580 = vmatmul.f32.gmra.mxu0 %v5267
      %v5581 = vpop.f32.mrf.mxu0
      %v5582 = vadd.f32 0.0, %v5581
      %5583 = vmatmul.f32.gmra.mxu0 %v5269
      %v5584 = vpop.f32.mrf.mxu0
      %v5585 = vadd.f32 0.0, %v5584
      %5586 = vmatmul.f32.gmra.mxu0 %v5271
      %v5587 = vpop.f32.mrf.mxu0
      %v5588 = vadd.f32 0.0, %v5587
      %5589 = vmatmul.f32.gmra.mxu0 %v5273
      %v5590 = vpop.f32.mrf.mxu0
      %v5591 = vadd.f32 0.0, %v5590
      %5592 = vmatmul.f32.gmra.mxu0 %v5275
      %v5593 = vpop.f32.mrf.mxu0
      %v5594 = vadd.f32 0.0, %v5593
      %5595 = vmatmul.f32.gmra.mxu0 %v5277
      %v5596 = vpop.f32.mrf.mxu0
      %v5597 = vadd.f32 0.0, %v5596
      %5598 = vmatmul.f32.gmra.mxu0 %v5279
      %v5599 = vpop.f32.mrf.mxu0
      %v5600 = vadd.f32 0.0, %v5599
      %5601 = vmatmul.f32.gmra.mxu0 %v5281
      %v5602 = vpop.f32.mrf.mxu0
      %v5603 = vadd.f32 0.0, %v5602
      %5604 = vmatmul.f32.gmra.mxu0 %v5283
      %v5605 = vpop.f32.mrf.mxu0
      %v5606 = vadd.f32 0.0, %v5605
      %5607 = vmatmul.f32.gmra.mxu0 %v5285
      %v5608 = vpop.f32.mrf.mxu0
      %v5609 = vadd.f32 0.0, %v5608
      %5610 = vmatmul.f32.gmra.mxu0 %v5287
      %v5611 = vpop.f32.mrf.mxu0
      %v5612 = vadd.f32 0.0, %v5611
      %5613 = vmatmul.f32.gmra.mxu0 %v5289
      %v5614 = vpop.f32.mrf.mxu0
      %v5615 = vadd.f32 0.0, %v5614
      %5616 = vmatmul.f32.gmra.mxu0 %v5291
      %v5617 = vpop.f32.mrf.mxu0
      %v5618 = vadd.f32 0.0, %v5617
      %5619 = vmatmul.f32.gmra.mxu0 %v5293
      %v5620 = vpop.f32.mrf.mxu0
      %v5621 = vadd.f32 0.0, %v5620
      %5622 = vmatmul.f32.gmra.mxu0 %v5295
      %v5623 = vpop.f32.mrf.mxu0
      %v5624 = vadd.f32 0.0, %v5623
      %5625 = vmatmul.f32.gmra.mxu0 %v5297
      %v5626 = vpop.f32.mrf.mxu0
      %v5627 = vadd.f32 0.0, %v5626
      %5628 = vmatmul.f32.gmra.mxu0 %v5299
      %v5629 = vpop.f32.mrf.mxu0
      %v5630 = vadd.f32 0.0, %v5629
      %5631 = vmatmul.f32.gmra.mxu0 %v5301
      %v5632 = vpop.f32.mrf.mxu0
      %v5633 = vadd.f32 0.0, %v5632
      %5634 = vmatmul.f32.gmra.mxu0 %v5303
      %v5635 = vpop.f32.mrf.mxu0
      %v5636 = vadd.f32 0.0, %v5635
      %5637 = vmatmul.f32.gmra.mxu0 %v5305
      %v5638 = vpop.f32.mrf.mxu0
      %v5639 = vadd.f32 0.0, %v5638
      %5640 = vmatmul.f32.gmra.mxu0 %v5307
      %v5641 = vpop.f32.mrf.mxu0
      %v5642 = vadd.f32 0.0, %v5641
      %5643 = vmatmul.f32.gmra.mxu0 %v5309
      %v5644 = vpop.f32.mrf.mxu0
      %v5645 = vadd.f32 0.0, %v5644
      %5646 = vmatmul.f32.gmra.mxu0 %v5311
      %v5647 = vpop.f32.mrf.mxu0
      %v5648 = vadd.f32 0.0, %v5647
      %5649 = vmatmul.f32.gmra.mxu0 %v5313
      %v5650 = vpop.f32.mrf.mxu0
      %v5651 = vadd.f32 0.0, %v5650
      %5652 = vmatmul.f32.gmra.mxu0 %v5315
      %v5653 = vpop.f32.mrf.mxu0
      %v5654 = vadd.f32 0.0, %v5653
      %5655 = vmatmul.f32.gmra.mxu0 %v5317
      %v5656 = vpop.f32.mrf.mxu0
      %v5657 = vadd.f32 0.0, %v5656
      %5658 = vmatmul.f32.gmra.mxu0 %v5319
      %v5659 = vpop.f32.mrf.mxu0
      %v5660 = vadd.f32 0.0, %v5659
      %5661 = vmatmul.f32.gmra.mxu0 %v5321
      %v5662 = vpop.f32.mrf.mxu0
      %v5663 = vadd.f32 0.0, %v5662
      %5664 = vmatmul.f32.gmra.mxu0 %v5323
      %v5665 = vpop.f32.mrf.mxu0
      %v5666 = vadd.f32 0.0, %v5665
      %5667 = vmatmul.f32.gmra.mxu0 %v5325
      %v5668 = vpop.f32.mrf.mxu0
      %v5669 = vadd.f32 0.0, %v5668
      %5670 = vmatmul.f32.gmra.mxu0 %v5327
      %v5671 = vpop.f32.mrf.mxu0
      %v5672 = vadd.f32 0.0, %v5671
      %5673 = vmatmul.f32.gmra.mxu0 %v5329
      %v5674 = vpop.f32.mrf.mxu0
      %v5675 = vadd.f32 0.0, %v5674
      %5676 = vmatmul.f32.gmra.mxu0 %v5331
      %v5677 = vpop.f32.mrf.mxu0
      %v5678 = vadd.f32 0.0, %v5677
      %5679 = vmatmul.f32.gmra.mxu0 %v5333
      %v5680 = vpop.f32.mrf.mxu0
      %v5681 = vadd.f32 0.0, %v5680
      %5682 = vmatmul.f32.gmra.mxu0 %v5335
      %v5683 = vpop.f32.mrf.mxu0
      %v5684 = vadd.f32 0.0, %v5683
      %5685 = vmatmul.f32.gmra.mxu0 %v5337
      %v5686 = vpop.f32.mrf.mxu0
      %v5687 = vadd.f32 0.0, %v5686
      %5688 = vmatmul.f32.gmra.mxu0 %v5339
      %v5689 = vpop.f32.mrf.mxu0
      %v5690 = vadd.f32 0.0, %v5689
      %5691 = vmatmul.f32.gmra.mxu0 %v5341
      %v5692 = vpop.f32.mrf.mxu0
      %v5693 = vadd.f32 0.0, %v5692
      %5694 = vmatmul.f32.gmra.mxu0 %v5343
      %v5695 = vpop.f32.mrf.mxu0
      %v5696 = vadd.f32 0.0, %v5695
      %5697 = vmatmul.f32.gmra.mxu0 %v5345
      %v5698 = vpop.f32.mrf.mxu0
      %v5699 = vadd.f32 0.0, %v5698
      %5700 = vmatmul.f32.gmra.mxu0 %v5347
      %v5701 = vpop.f32.mrf.mxu0
      %v5702 = vadd.f32 0.0, %v5701
      %5703 = vmatmul.f32.gmra.mxu0 %v5349
      %v5704 = vpop.f32.mrf.mxu0
      %v5705 = vadd.f32 0.0, %v5704
      %5706 = vmatmul.f32.gmra.mxu0 %v5351
      %v5707 = vpop.f32.mrf.mxu0
      %v5708 = vadd.f32 0.0, %v5707
      %5709 = vmatmul.f32.gmra.mxu0 %v5353
      %v5710 = vpop.f32.mrf.mxu0
      %v5711 = vadd.f32 0.0, %v5710
      %5712 = vmatmul.f32.gmra.mxu0 %v5355
      %v5713 = vpop.f32.mrf.mxu0
      %v5714 = vadd.f32 0.0, %v5713
      %5715 = vmatmul.f32.gmra.mxu0 %v5357
      %v5716 = vpop.f32.mrf.mxu0
      %v5717 = vadd.f32 0.0, %v5716
      %5718 = vmatmul.f32.gmra.mxu0 %v5359
      %v5719 = vpop.f32.mrf.mxu0
      %v5720 = vadd.f32 0.0, %v5719
      %5721 = vmatmul.f32.gmra.mxu0 %v5361
      %v5722 = vpop.f32.mrf.mxu0
      %v5723 = vadd.f32 0.0, %v5722
      %5724 = vmatmul.f32.gmra.mxu0 %v5363
      %v5725 = vpop.f32.mrf.mxu0
      %v5726 = vadd.f32 0.0, %v5725
      %5727 = vmatmul.f32.gmra.mxu0 %v5365
      %v5728 = vpop.f32.mrf.mxu0
      %v5729 = vadd.f32 0.0, %v5728
      %5730 = vmatmul.f32.gmra.mxu0 %v5367
      %v5731 = vpop.f32.mrf.mxu0
      %v5732 = vadd.f32 0.0, %v5731
      %5733 = vmatmul.f32.gmra.mxu0 %v5369
      %v5734 = vpop.f32.mrf.mxu0
      %v5735 = vadd.f32 0.0, %v5734
      %5736 = vmatmul.f32.gmra.mxu0 %v5371
      %v5737 = vpop.f32.mrf.mxu0
      %v5738 = vadd.f32 0.0, %v5737
      %5739 = vmatmul.f32.gmra.mxu0 %v5373
      %v5740 = vpop.f32.mrf.mxu0
      %v5741 = vadd.f32 0.0, %v5740
      %5742 = vmatmul.f32.gmra.mxu0 %v5375
      %v5743 = vpop.f32.mrf.mxu0
      %v5744 = vadd.f32 0.0, %v5743
      %5745 = vmatmul.f32.gmra.mxu0 %v5377
      %v5746 = vpop.f32.mrf.mxu0
      %v5747 = vadd.f32 0.0, %v5746
      %5748 = vmatmul.f32.gmra.mxu0 %v5379
      %v5749 = vpop.f32.mrf.mxu0
      %v5750 = vadd.f32 0.0, %v5749
      %5751 = vmatmul.f32.gmra.mxu0 %v5381
      %v5752 = vpop.f32.mrf.mxu0
      %v5753 = vadd.f32 0.0, %v5752
      %5754 = vmatmul.f32.gmra.mxu0 %v5383
      %v5755 = vpop.f32.mrf.mxu0
      %v5756 = vadd.f32 0.0, %v5755
      %5757 = vmatmul.f32.gmra.mxu0 %v5385
      %v5758 = vpop.f32.mrf.mxu0
      %v5759 = vadd.f32 0.0, %v5758
      %5760 = vmatmul.f32.gmra.mxu0 %v5387
      %v5761 = vpop.f32.mrf.mxu0
      %v5762 = vadd.f32 0.0, %v5761
      %5763 = vmatmul.f32.gmra.mxu0 %v5389
      %v5764 = vpop.f32.mrf.mxu0
      %v5765 = vadd.f32 0.0, %v5764
      %5766 = vmatmul.f32.gmra.mxu0 %v5391
      %v5767 = vpop.f32.mrf.mxu0
      %v5768 = vadd.f32 0.0, %v5767
      %5769 = vmatmul.f32.gmra.mxu0 %v5393
      %v5770 = vpop.f32.mrf.mxu0
      %v5771 = vadd.f32 0.0, %v5770
      %5772 = vmatmul.f32.gmra.mxu0 %v5395
      %v5773 = vpop.f32.mrf.mxu0
      %v5774 = vadd.f32 0.0, %v5773
      %5775 = vmatmul.f32.gmra.mxu0 %v5397
      %v5776 = vpop.f32.mrf.mxu0
      %v5777 = vadd.f32 0.0, %v5776
      %5778 = vmatmul.f32.gmra.mxu0 %v5399
      %v5779 = vpop.f32.mrf.mxu0
      %v5780 = vadd.f32 0.0, %v5779
      %5781 = vmatmul.f32.gmra.mxu0 %v5401
      %v5782 = vpop.f32.mrf.mxu0
      %v5783 = vadd.f32 0.0, %v5782
      %5784 = vmatmul.f32.gmra.mxu0 %v5403
      %v5785 = vpop.f32.mrf.mxu0
      %v5786 = vadd.f32 0.0, %v5785
      %5787 = vmatmul.f32.gmra.mxu0 %v5405
      %v5788 = vpop.f32.mrf.mxu0
      %v5789 = vadd.f32 0.0, %v5788
      %5790 = vmatmul.f32.gmra.mxu0 %v5407
      %v5791 = vpop.f32.mrf.mxu0
      %v5792 = vadd.f32 0.0, %v5791
      %5793 = vmatmul.f32.gmra.mxu0 %v5409
      %v5794 = vpop.f32.mrf.mxu0
      %v5795 = vadd.f32 0.0, %v5794
      %5796 = vmatmul.f32.gmra.mxu0 %v5411
      %v5797 = vpop.f32.mrf.mxu0
      %v5798 = vadd.f32 0.0, %v5797
      %5799 = vmatmul.f32.gmra.mxu0 %v5413
      %v5800 = vpop.f32.mrf.mxu0
      %v5801 = vadd.f32 0.0, %v5800
      %5802 = vmatmul.f32.gmra.mxu0 %v5415
      %v5803 = vpop.f32.mrf.mxu0
      %v5804 = vadd.f32 0.0, %v5803
      %5805 = vmatmul.f32.gmra.mxu0 %v5417
      %v5806 = vpop.f32.mrf.mxu0
      %v5807 = vadd.f32 0.0, %v5806
      %5808 = vmatmul.f32.gmra.mxu0 %v5419
      %v5809 = vpop.f32.mrf.mxu0
      %v5810 = vadd.f32 0.0, %v5809
      %5811 = vmatmul.f32.gmra.mxu0 %v5421
      %v5812 = vpop.f32.mrf.mxu0
      %v5813 = vadd.f32 0.0, %v5812
      %5814 = vmatmul.f32.gmra.mxu0 %v5423
      %v5815 = vpop.f32.mrf.mxu0
      %v5816 = vadd.f32 0.0, %v5815
      %5817 = vmatmul.f32.gmra.mxu0 %v5425
      %v5818 = vpop.f32.mrf.mxu0
      %v5819 = vadd.f32 0.0, %v5818
      %5820 = vmatmul.f32.gmra.mxu0 %v5427
      %v5821 = vpop.f32.mrf.mxu0
      %v5822 = vadd.f32 0.0, %v5821
      %5823 = vmatmul.f32.gmra.mxu0 %v5429
      %v5824 = vpop.f32.mrf.mxu0
      %v5825 = vadd.f32 0.0, %v5824
      %5826 = vmatmul.f32.gmra.mxu0 %v5431
      %v5827 = vpop.f32.mrf.mxu0
      %v5828 = vadd.f32 0.0, %v5827
      %5829 = vmatmul.f32.gmra.mxu0 %v5433
      %v5830 = vpop.f32.mrf.mxu0
      %v5831 = vadd.f32 0.0, %v5830
      %5832 = vmatmul.f32.gmra.mxu0 %v5435
      %v5833 = vpop.f32.mrf.mxu0
      %v5834 = vadd.f32 0.0, %v5833
      %5835 = vmatmul.f32.gmra.mxu0 %v5437
      %v5836 = vpop.f32.mrf.mxu0
      %v5837 = vadd.f32 0.0, %v5836
      %5838 = vmatmul.f32.gmra.mxu0 %v5439
      %v5839 = vpop.f32.mrf.mxu0
      %v5840 = vadd.f32 0.0, %v5839
      %5841 = vdwg.mxu0
      %v5842 = vsel %vm826, %v4611, 0
      %v5844 = vsel %vm826, %v4613, 0
      %v5846 = vsel %vm826, %v4615, 0
      %v5848 = vsel %vm826, %v4617, 0
      %v5850 = vsel %vm826, %v4620, 0
      %v5852 = vsel %vm826, %v4622, 0
      %v5854 = vsel %vm826, %v4624, 0
      %v5856 = vsel %vm826, %v4626, 0
      %v5858 = vsel %vm826, %v4629, 0
      %v5860 = vsel %vm826, %v4631, 0
      %v5862 = vsel %vm826, %v4633, 0
      %v5864 = vsel %vm826, %v4635, 0
      %v5866 = vsel %vm826, %v4638, 0
      %v5868 = vsel %vm826, %v4640, 0
      %v5870 = vsel %vm826, %v4642, 0
      %v5872 = vsel %vm826, %v4644, 0
      %v5874 = vsel %vm826, %v4647, 0
      %v5876 = vsel %vm826, %v4649, 0
      %v5878 = vsel %vm826, %v4651, 0
      %v5880 = vsel %vm826, %v4653, 0
      %v5882 = vsel %vm826, %v4656, 0
      %v5884 = vsel %vm826, %v4658, 0
      %v5886 = vsel %vm826, %v4660, 0
      %v5888 = vsel %vm826, %v4662, 0
      %v5890 = vsel %vm826, %v4665, 0
      %v5892 = vsel %vm826, %v4667, 0
      %v5894 = vsel %vm826, %v4669, 0
      %v5896 = vsel %vm826, %v4671, 0
      %v5898 = vsel %vm826, %v4674, 0
      %v5900 = vsel %vm826, %v4676, 0
      %v5902 = vsel %vm826, %v4678, 0
      %v5904 = vsel %vm826, %v4680, 0
      %v5906 = vsel %vm826, %v4683, 0
      %v5908 = vsel %vm826, %v4685, 0
      %v5910 = vsel %vm826, %v4687, 0
      %v5912 = vsel %vm826, %v4689, 0
      %v5914 = vsel %vm826, %v4692, 0
      %v5916 = vsel %vm826, %v4694, 0
      %v5918 = vsel %vm826, %v4696, 0
      %v5920 = vsel %vm826, %v4698, 0
      %v5922 = vsel %vm826, %v4701, 0
      %v5924 = vsel %vm826, %v4703, 0
      %v5926 = vsel %vm826, %v4705, 0
      %v5928 = vsel %vm826, %v4707, 0
      %v5930 = vsel %vm826, %v4710, 0
      %v5932 = vsel %vm826, %v4712, 0
      %v5934 = vsel %vm826, %v4714, 0
      %v5936 = vsel %vm826, %v4716, 0
      %v5938 = vsel %vm826, %v4719, 0
      %v5940 = vsel %vm826, %v4721, 0
      %v5942 = vsel %vm826, %v4723, 0
      %v5944 = vsel %vm826, %v4725, 0
      %v5946 = vsel %vm826, %v4728, 0
      %v5948 = vsel %vm826, %v4730, 0
      %v5950 = vsel %vm826, %v4732, 0
      %v5952 = vsel %vm826, %v4734, 0
      %v5954 = vsel %vm826, %v4737, 0
      %v5956 = vsel %vm826, %v4739, 0
      %v5958 = vsel %vm826, %v4741, 0
      %v5960 = vsel %vm826, %v4743, 0
      %v5962 = vsel %vm826, %v4746, 0
      %v5964 = vsel %vm826, %v4748, 0
      %v5966 = vsel %vm826, %v4750, 0
      %v5968 = vsel %vm826, %v4752, 0
      %v5970 = vsel %vm826, %v4755, 0
      %v5972 = vsel %vm826, %v4757, 0
      %v5974 = vsel %vm826, %v4759, 0
      %v5976 = vsel %vm826, %v4761, 0
      %v5978 = vsel %vm826, %v4764, 0
      %v5980 = vsel %vm826, %v4766, 0
      %v5982 = vsel %vm826, %v4768, 0
      %v5984 = vsel %vm826, %v4770, 0
      %v5986 = vsel %vm826, %v4773, 0
      %v5988 = vsel %vm826, %v4775, 0
      %v5990 = vsel %vm826, %v4777, 0
      %v5992 = vsel %vm826, %v4779, 0
      %v5994 = vsel %vm826, %v4782, 0
      %v5996 = vsel %vm826, %v4784, 0
      %v5998 = vsel %vm826, %v4786, 0
      %v6000 = vsel %vm826, %v4788, 0
      %v6002 = vsel %vm826, %v4791, 0
      %v6004 = vsel %vm826, %v4793, 0
      %v6006 = vsel %vm826, %v4795, 0
      %v6008 = vsel %vm826, %v4797, 0
      %v6010 = vsel %vm826, %v4800, 0
      %v6012 = vsel %vm826, %v4802, 0
      %v6014 = vsel %vm826, %v4804, 0
      %v6016 = vsel %vm826, %v4806, 0
      %v6018 = vsel %vm826, %v4809, 0
      %v6020 = vsel %vm826, %v4811, 0
      %v6022 = vsel %vm826, %v4813, 0
      %v6024 = vsel %vm826, %v4815, 0
      %v6026 = vsel %vm826, %v4818, 0
      %v6028 = vsel %vm826, %v4820, 0
      %v6030 = vsel %vm826, %v4822, 0
      %v6032 = vsel %vm826, %v4824, 0
      %v6034 = vsel %vm826, %v4827, 0
      %v6036 = vsel %vm826, %v4829, 0
      %v6038 = vsel %vm826, %v4831, 0
      %v6040 = vsel %vm826, %v4833, 0
      %v6042 = vsel %vm826, %v4836, 0
      %v6044 = vsel %vm826, %v4838, 0
      %v6046 = vsel %vm826, %v4840, 0
      %v6048 = vsel %vm826, %v4842, 0
      %v6050 = vsel %vm826, %v4845, 0
      %v6052 = vsel %vm826, %v4847, 0
      %v6054 = vsel %vm826, %v4849, 0
      %v6056 = vsel %vm826, %v4851, 0
      %v6058 = vsel %vm826, %v4854, 0
      %v6060 = vsel %vm826, %v4856, 0
      %v6062 = vsel %vm826, %v4858, 0
      %v6064 = vsel %vm826, %v4860, 0
      %v6066 = vsel %vm826, %v4863, 0
      %v6068 = vsel %vm826, %v4865, 0
      %v6070 = vsel %vm826, %v4867, 0
      %v6072 = vsel %vm826, %v4869, 0
      %v6074 = vsel %vm826, %v4872, 0
      %v6076 = vsel %vm826, %v4874, 0
      %v6078 = vsel %vm826, %v4876, 0
      %v6080 = vsel %vm826, %v4878, 0
      %v6082 = vsel %vm826, %v4881, 0
      %v6084 = vsel %vm826, %v4883, 0
      %v6086 = vsel %vm826, %v4885, 0
      %v6088 = vsel %vm826, %v4887, 0
      %v6090 = vsel %vm826, %v4890, 0
      %v6092 = vsel %vm826, %v4892, 0
      %v6094 = vsel %vm826, %v4894, 0
      %v6096 = vsel %vm826, %v4896, 0
      %6098 = vmatpush.msra.mxu0 0.0
      %6099 = vmatpush.msra.mxu0 0.0
      %6100 = vmatpush.msra.mxu0 0.0
      %6101 = vmatpush.msra.mxu0 0.0
      %6102 = vmatpush.msra.mxu0 0.0
      %6103 = vmatpush.msra.mxu0 0.0
      %6104 = vmatpush.msra.mxu0 0.0
      %6105 = vmatpush.msra.mxu0 0.0
      %6106 = vmatpush.msra.mxu0 0.0
      %6107 = vmatpush.msra.mxu0 0.0
      %6108 = vmatpush.msra.mxu0 0.0
      %6109 = vmatpush.msra.mxu0 0.0
      %6110 = vmatpush.msra.mxu0 0.0
      %6111 = vmatpush.msra.mxu0 0.0
      %6112 = vmatpush.msra.mxu0 0.0
      %6113 = vmatpush.msra.mxu0 %v810
      %6114 = vmatmul.f32.gmra.mxu0 %v5842
      %v6115 = vpop.f32.mrf.mxu0
      %v6116 = vadd.f32 %v5459, %v6115
      %6117 = vmatmul.f32.gmra.mxu0 %v5844
      %v6118 = vpop.f32.mrf.mxu0
      %v6119 = vadd.f32 %v5462, %v6118
      %6120 = vmatmul.f32.gmra.mxu0 %v5846
      %v6121 = vpop.f32.mrf.mxu0
      %v6122 = vadd.f32 %v5465, %v6121
      %6123 = vmatmul.f32.gmra.mxu0 %v5848
      %v6124 = vpop.f32.mrf.mxu0
      %v6125 = vadd.f32 %v5468, %v6124
      %6126 = vmatmul.f32.gmra.mxu0 %v5850
      %v6127 = vpop.f32.mrf.mxu0
      %v6128 = vadd.f32 %v5471, %v6127
      %6129 = vmatmul.f32.gmra.mxu0 %v5852
      %v6130 = vpop.f32.mrf.mxu0
      %v6131 = vadd.f32 %v5474, %v6130
      %6132 = vmatmul.f32.gmra.mxu0 %v5854
      %v6133 = vpop.f32.mrf.mxu0
      %v6134 = vadd.f32 %v5477, %v6133
      %6135 = vmatmul.f32.gmra.mxu0 %v5856
      %v6136 = vpop.f32.mrf.mxu0
      %v6137 = vadd.f32 %v5480, %v6136
      %6138 = vmatmul.f32.gmra.mxu0 %v5858
      %v6139 = vpop.f32.mrf.mxu0
      %v6140 = vadd.f32 %v5483, %v6139
      %6141 = vmatmul.f32.gmra.mxu0 %v5860
      %v6142 = vpop.f32.mrf.mxu0
      %v6143 = vadd.f32 %v5486, %v6142
      %6144 = vmatmul.f32.gmra.mxu0 %v5862
      %v6145 = vpop.f32.mrf.mxu0
      %v6146 = vadd.f32 %v5489, %v6145
      %6147 = vmatmul.f32.gmra.mxu0 %v5864
      %v6148 = vpop.f32.mrf.mxu0
      %v6149 = vadd.f32 %v5492, %v6148
      %6150 = vmatmul.f32.gmra.mxu0 %v5866
      %v6151 = vpop.f32.mrf.mxu0
      %v6152 = vadd.f32 %v5495, %v6151
      %6153 = vmatmul.f32.gmra.mxu0 %v5868
      %v6154 = vpop.f32.mrf.mxu0
      %v6155 = vadd.f32 %v5498, %v6154
      %6156 = vmatmul.f32.gmra.mxu0 %v5870
      %v6157 = vpop.f32.mrf.mxu0
      %v6158 = vadd.f32 %v5501, %v6157
      %6159 = vmatmul.f32.gmra.mxu0 %v5872
      %v6160 = vpop.f32.mrf.mxu0
      %v6161 = vadd.f32 %v5504, %v6160
      %6162 = vmatmul.f32.gmra.mxu0 %v5874
      %v6163 = vpop.f32.mrf.mxu0
      %v6164 = vadd.f32 %v5507, %v6163
      %6165 = vmatmul.f32.gmra.mxu0 %v5876
      %v6166 = vpop.f32.mrf.mxu0
      %v6167 = vadd.f32 %v5510, %v6166
      %6168 = vmatmul.f32.gmra.mxu0 %v5878
      %v6169 = vpop.f32.mrf.mxu0
      %v6170 = vadd.f32 %v5513, %v6169
      %6171 = vmatmul.f32.gmra.mxu0 %v5880
      %v6172 = vpop.f32.mrf.mxu0
      %v6173 = vadd.f32 %v5516, %v6172
      %6174 = vmatmul.f32.gmra.mxu0 %v5882
      %v6175 = vpop.f32.mrf.mxu0
      %v6176 = vadd.f32 %v5519, %v6175
      %6177 = vmatmul.f32.gmra.mxu0 %v5884
      %v6178 = vpop.f32.mrf.mxu0
      %v6179 = vadd.f32 %v5522, %v6178
      %6180 = vmatmul.f32.gmra.mxu0 %v5886
      %v6181 = vpop.f32.mrf.mxu0
      %v6182 = vadd.f32 %v5525, %v6181
      %6183 = vmatmul.f32.gmra.mxu0 %v5888
      %v6184 = vpop.f32.mrf.mxu0
      %v6185 = vadd.f32 %v5528, %v6184
      %6186 = vmatmul.f32.gmra.mxu0 %v5890
      %v6187 = vpop.f32.mrf.mxu0
      %v6188 = vadd.f32 %v5531, %v6187
      %6189 = vmatmul.f32.gmra.mxu0 %v5892
      %v6190 = vpop.f32.mrf.mxu0
      %v6191 = vadd.f32 %v5534, %v6190
      %6192 = vmatmul.f32.gmra.mxu0 %v5894
      %v6193 = vpop.f32.mrf.mxu0
      %v6194 = vadd.f32 %v5537, %v6193
      %6195 = vmatmul.f32.gmra.mxu0 %v5896
      %v6196 = vpop.f32.mrf.mxu0
      %v6197 = vadd.f32 %v5540, %v6196
      %6198 = vmatmul.f32.gmra.mxu0 %v5898
      %v6199 = vpop.f32.mrf.mxu0
      %v6200 = vadd.f32 %v5543, %v6199
      %6201 = vmatmul.f32.gmra.mxu0 %v5900
      %v6202 = vpop.f32.mrf.mxu0
      %v6203 = vadd.f32 %v5546, %v6202
      %6204 = vmatmul.f32.gmra.mxu0 %v5902
      %v6205 = vpop.f32.mrf.mxu0
      %v6206 = vadd.f32 %v5549, %v6205
      %6207 = vmatmul.f32.gmra.mxu0 %v5904
      %v6208 = vpop.f32.mrf.mxu0
      %v6209 = vadd.f32 %v5552, %v6208
      %6210 = vmatmul.f32.gmra.mxu0 %v5906
      %v6211 = vpop.f32.mrf.mxu0
      %v6212 = vadd.f32 %v5555, %v6211
      %6213 = vmatmul.f32.gmra.mxu0 %v5908
      %v6214 = vpop.f32.mrf.mxu0
      %v6215 = vadd.f32 %v5558, %v6214
      %6216 = vmatmul.f32.gmra.mxu0 %v5910
      %v6217 = vpop.f32.mrf.mxu0
      %v6218 = vadd.f32 %v5561, %v6217
      %6219 = vmatmul.f32.gmra.mxu0 %v5912
      %v6220 = vpop.f32.mrf.mxu0
      %v6221 = vadd.f32 %v5564, %v6220
      %6222 = vmatmul.f32.gmra.mxu0 %v5914
      %v6223 = vpop.f32.mrf.mxu0
      %v6224 = vadd.f32 %v5567, %v6223
      %6225 = vmatmul.f32.gmra.mxu0 %v5916
      %v6226 = vpop.f32.mrf.mxu0
      %v6227 = vadd.f32 %v5570, %v6226
      %6228 = vmatmul.f32.gmra.mxu0 %v5918
      %v6229 = vpop.f32.mrf.mxu0
      %v6230 = vadd.f32 %v5573, %v6229
      %6231 = vmatmul.f32.gmra.mxu0 %v5920
      %v6232 = vpop.f32.mrf.mxu0
      %v6233 = vadd.f32 %v5576, %v6232
      %6234 = vmatmul.f32.gmra.mxu0 %v5922
      %v6235 = vpop.f32.mrf.mxu0
      %v6236 = vadd.f32 %v5579, %v6235
      %6237 = vmatmul.f32.gmra.mxu0 %v5924
      %v6238 = vpop.f32.mrf.mxu0
      %v6239 = vadd.f32 %v5582, %v6238
      %6240 = vmatmul.f32.gmra.mxu0 %v5926
      %v6241 = vpop.f32.mrf.mxu0
      %v6242 = vadd.f32 %v5585, %v6241
      %6243 = vmatmul.f32.gmra.mxu0 %v5928
      %v6244 = vpop.f32.mrf.mxu0
      %v6245 = vadd.f32 %v5588, %v6244
      %6246 = vmatmul.f32.gmra.mxu0 %v5930
      %v6247 = vpop.f32.mrf.mxu0
      %v6248 = vadd.f32 %v5591, %v6247
      %6249 = vmatmul.f32.gmra.mxu0 %v5932
      %v6250 = vpop.f32.mrf.mxu0
      %v6251 = vadd.f32 %v5594, %v6250
      %6252 = vmatmul.f32.gmra.mxu0 %v5934
      %v6253 = vpop.f32.mrf.mxu0
      %v6254 = vadd.f32 %v5597, %v6253
      %6255 = vmatmul.f32.gmra.mxu0 %v5936
      %v6256 = vpop.f32.mrf.mxu0
      %v6257 = vadd.f32 %v5600, %v6256
      %6258 = vmatmul.f32.gmra.mxu0 %v5938
      %v6259 = vpop.f32.mrf.mxu0
      %v6260 = vadd.f32 %v5603, %v6259
      %6261 = vmatmul.f32.gmra.mxu0 %v5940
      %v6262 = vpop.f32.mrf.mxu0
      %v6263 = vadd.f32 %v5606, %v6262
      %6264 = vmatmul.f32.gmra.mxu0 %v5942
      %v6265 = vpop.f32.mrf.mxu0
      %v6266 = vadd.f32 %v5609, %v6265
      %6267 = vmatmul.f32.gmra.mxu0 %v5944
      %v6268 = vpop.f32.mrf.mxu0
      %v6269 = vadd.f32 %v5612, %v6268
      %6270 = vmatmul.f32.gmra.mxu0 %v5946
      %v6271 = vpop.f32.mrf.mxu0
      %v6272 = vadd.f32 %v5615, %v6271
      %6273 = vmatmul.f32.gmra.mxu0 %v5948
      %v6274 = vpop.f32.mrf.mxu0
      %v6275 = vadd.f32 %v5618, %v6274
      %6276 = vmatmul.f32.gmra.mxu0 %v5950
      %v6277 = vpop.f32.mrf.mxu0
      %v6278 = vadd.f32 %v5621, %v6277
      %6279 = vmatmul.f32.gmra.mxu0 %v5952
      %v6280 = vpop.f32.mrf.mxu0
      %v6281 = vadd.f32 %v5624, %v6280
      %6282 = vmatmul.f32.gmra.mxu0 %v5954
      %v6283 = vpop.f32.mrf.mxu0
      %v6284 = vadd.f32 %v5627, %v6283
      %6285 = vmatmul.f32.gmra.mxu0 %v5956
      %v6286 = vpop.f32.mrf.mxu0
      %v6287 = vadd.f32 %v5630, %v6286
      %6288 = vmatmul.f32.gmra.mxu0 %v5958
      %v6289 = vpop.f32.mrf.mxu0
      %v6290 = vadd.f32 %v5633, %v6289
      %6291 = vmatmul.f32.gmra.mxu0 %v5960
      %v6292 = vpop.f32.mrf.mxu0
      %v6293 = vadd.f32 %v5636, %v6292
      %6294 = vmatmul.f32.gmra.mxu0 %v5962
      %v6295 = vpop.f32.mrf.mxu0
      %v6296 = vadd.f32 %v5639, %v6295
      %6297 = vmatmul.f32.gmra.mxu0 %v5964
      %v6298 = vpop.f32.mrf.mxu0
      %v6299 = vadd.f32 %v5642, %v6298
      %6300 = vmatmul.f32.gmra.mxu0 %v5966
      %v6301 = vpop.f32.mrf.mxu0
      %v6302 = vadd.f32 %v5645, %v6301
      %6303 = vmatmul.f32.gmra.mxu0 %v5968
      %v6304 = vpop.f32.mrf.mxu0
      %v6305 = vadd.f32 %v5648, %v6304
      %6306 = vmatmul.f32.gmra.mxu0 %v5970
      %v6307 = vpop.f32.mrf.mxu0
      %v6308 = vadd.f32 %v5651, %v6307
      %6309 = vmatmul.f32.gmra.mxu0 %v5972
      %v6310 = vpop.f32.mrf.mxu0
      %v6311 = vadd.f32 %v5654, %v6310
      %6312 = vmatmul.f32.gmra.mxu0 %v5974
      %v6313 = vpop.f32.mrf.mxu0
      %v6314 = vadd.f32 %v5657, %v6313
      %6315 = vmatmul.f32.gmra.mxu0 %v5976
      %v6316 = vpop.f32.mrf.mxu0
      %v6317 = vadd.f32 %v5660, %v6316
      %6318 = vmatmul.f32.gmra.mxu0 %v5978
      %v6319 = vpop.f32.mrf.mxu0
      %v6320 = vadd.f32 %v5663, %v6319
      %6321 = vmatmul.f32.gmra.mxu0 %v5980
      %v6322 = vpop.f32.mrf.mxu0
      %v6323 = vadd.f32 %v5666, %v6322
      %6324 = vmatmul.f32.gmra.mxu0 %v5982
      %v6325 = vpop.f32.mrf.mxu0
      %v6326 = vadd.f32 %v5669, %v6325
      %6327 = vmatmul.f32.gmra.mxu0 %v5984
      %v6328 = vpop.f32.mrf.mxu0
      %v6329 = vadd.f32 %v5672, %v6328
      %6330 = vmatmul.f32.gmra.mxu0 %v5986
      %v6331 = vpop.f32.mrf.mxu0
      %v6332 = vadd.f32 %v5675, %v6331
      %6333 = vmatmul.f32.gmra.mxu0 %v5988
      %v6334 = vpop.f32.mrf.mxu0
      %v6335 = vadd.f32 %v5678, %v6334
      %6336 = vmatmul.f32.gmra.mxu0 %v5990
      %v6337 = vpop.f32.mrf.mxu0
      %v6338 = vadd.f32 %v5681, %v6337
      %6339 = vmatmul.f32.gmra.mxu0 %v5992
      %v6340 = vpop.f32.mrf.mxu0
      %v6341 = vadd.f32 %v5684, %v6340
      %6342 = vmatmul.f32.gmra.mxu0 %v5994
      %v6343 = vpop.f32.mrf.mxu0
      %v6344 = vadd.f32 %v5687, %v6343
      %6345 = vmatmul.f32.gmra.mxu0 %v5996
      %v6346 = vpop.f32.mrf.mxu0
      %v6347 = vadd.f32 %v5690, %v6346
      %6348 = vmatmul.f32.gmra.mxu0 %v5998
      %v6349 = vpop.f32.mrf.mxu0
      %v6350 = vadd.f32 %v5693, %v6349
      %6351 = vmatmul.f32.gmra.mxu0 %v6000
      %v6352 = vpop.f32.mrf.mxu0
      %v6353 = vadd.f32 %v5696, %v6352
      %6354 = vmatmul.f32.gmra.mxu0 %v6002
      %v6355 = vpop.f32.mrf.mxu0
      %v6356 = vadd.f32 %v5699, %v6355
      %6357 = vmatmul.f32.gmra.mxu0 %v6004
      %v6358 = vpop.f32.mrf.mxu0
      %v6359 = vadd.f32 %v5702, %v6358
      %6360 = vmatmul.f32.gmra.mxu0 %v6006
      %v6361 = vpop.f32.mrf.mxu0
      %v6362 = vadd.f32 %v5705, %v6361
      %6363 = vmatmul.f32.gmra.mxu0 %v6008
      %v6364 = vpop.f32.mrf.mxu0
      %v6365 = vadd.f32 %v5708, %v6364
      %6366 = vmatmul.f32.gmra.mxu0 %v6010
      %v6367 = vpop.f32.mrf.mxu0
      %v6368 = vadd.f32 %v5711, %v6367
      %6369 = vmatmul.f32.gmra.mxu0 %v6012
      %v6370 = vpop.f32.mrf.mxu0
      %v6371 = vadd.f32 %v5714, %v6370
      %6372 = vmatmul.f32.gmra.mxu0 %v6014
      %v6373 = vpop.f32.mrf.mxu0
      %v6374 = vadd.f32 %v5717, %v6373
      %6375 = vmatmul.f32.gmra.mxu0 %v6016
      %v6376 = vpop.f32.mrf.mxu0
      %v6377 = vadd.f32 %v5720, %v6376
      %6378 = vmatmul.f32.gmra.mxu0 %v6018
      %v6379 = vpop.f32.mrf.mxu0
      %v6380 = vadd.f32 %v5723, %v6379
      %6381 = vmatmul.f32.gmra.mxu0 %v6020
      %v6382 = vpop.f32.mrf.mxu0
      %v6383 = vadd.f32 %v5726, %v6382
      %6384 = vmatmul.f32.gmra.mxu0 %v6022
      %v6385 = vpop.f32.mrf.mxu0
      %v6386 = vadd.f32 %v5729, %v6385
      %6387 = vmatmul.f32.gmra.mxu0 %v6024
      %v6388 = vpop.f32.mrf.mxu0
      %v6389 = vadd.f32 %v5732, %v6388
      %6390 = vmatmul.f32.gmra.mxu0 %v6026
      %v6391 = vpop.f32.mrf.mxu0
      %v6392 = vadd.f32 %v5735, %v6391
      %6393 = vmatmul.f32.gmra.mxu0 %v6028
      %v6394 = vpop.f32.mrf.mxu0
      %v6395 = vadd.f32 %v5738, %v6394
      %6396 = vmatmul.f32.gmra.mxu0 %v6030
      %v6397 = vpop.f32.mrf.mxu0
      %v6398 = vadd.f32 %v5741, %v6397
      %6399 = vmatmul.f32.gmra.mxu0 %v6032
      %v6400 = vpop.f32.mrf.mxu0
      %v6401 = vadd.f32 %v5744, %v6400
      %6402 = vmatmul.f32.gmra.mxu0 %v6034
      %v6403 = vpop.f32.mrf.mxu0
      %v6404 = vadd.f32 %v5747, %v6403
      %6405 = vmatmul.f32.gmra.mxu0 %v6036
      %v6406 = vpop.f32.mrf.mxu0
      %v6407 = vadd.f32 %v5750, %v6406
      %6408 = vmatmul.f32.gmra.mxu0 %v6038
      %v6409 = vpop.f32.mrf.mxu0
      %v6410 = vadd.f32 %v5753, %v6409
      %6411 = vmatmul.f32.gmra.mxu0 %v6040
      %v6412 = vpop.f32.mrf.mxu0
      %v6413 = vadd.f32 %v5756, %v6412
      %6414 = vmatmul.f32.gmra.mxu0 %v6042
      %v6415 = vpop.f32.mrf.mxu0
      %v6416 = vadd.f32 %v5759, %v6415
      %6417 = vmatmul.f32.gmra.mxu0 %v6044
      %v6418 = vpop.f32.mrf.mxu0
      %v6419 = vadd.f32 %v5762, %v6418
      %6420 = vmatmul.f32.gmra.mxu0 %v6046
      %v6421 = vpop.f32.mrf.mxu0
      %v6422 = vadd.f32 %v5765, %v6421
      %6423 = vmatmul.f32.gmra.mxu0 %v6048
      %v6424 = vpop.f32.mrf.mxu0
      %v6425 = vadd.f32 %v5768, %v6424
      %6426 = vmatmul.f32.gmra.mxu0 %v6050
      %v6427 = vpop.f32.mrf.mxu0
      %v6428 = vadd.f32 %v5771, %v6427
      %6429 = vmatmul.f32.gmra.mxu0 %v6052
      %v6430 = vpop.f32.mrf.mxu0
      %v6431 = vadd.f32 %v5774, %v6430
      %6432 = vmatmul.f32.gmra.mxu0 %v6054
      %v6433 = vpop.f32.mrf.mxu0
      %v6434 = vadd.f32 %v5777, %v6433
      %6435 = vmatmul.f32.gmra.mxu0 %v6056
      %v6436 = vpop.f32.mrf.mxu0
      %v6437 = vadd.f32 %v5780, %v6436
      %6438 = vmatmul.f32.gmra.mxu0 %v6058
      %v6439 = vpop.f32.mrf.mxu0
      %v6440 = vadd.f32 %v5783, %v6439
      %6441 = vmatmul.f32.gmra.mxu0 %v6060
      %v6442 = vpop.f32.mrf.mxu0
      %v6443 = vadd.f32 %v5786, %v6442
      %6444 = vmatmul.f32.gmra.mxu0 %v6062
      %v6445 = vpop.f32.mrf.mxu0
      %v6446 = vadd.f32 %v5789, %v6445
      %6447 = vmatmul.f32.gmra.mxu0 %v6064
      %v6448 = vpop.f32.mrf.mxu0
      %v6449 = vadd.f32 %v5792, %v6448
      %6450 = vmatmul.f32.gmra.mxu0 %v6066
      %v6451 = vpop.f32.mrf.mxu0
      %v6452 = vadd.f32 %v5795, %v6451
      %6453 = vmatmul.f32.gmra.mxu0 %v6068
      %v6454 = vpop.f32.mrf.mxu0
      %v6455 = vadd.f32 %v5798, %v6454
      %6456 = vmatmul.f32.gmra.mxu0 %v6070
      %v6457 = vpop.f32.mrf.mxu0
      %v6458 = vadd.f32 %v5801, %v6457
      %6459 = vmatmul.f32.gmra.mxu0 %v6072
      %v6460 = vpop.f32.mrf.mxu0
      %v6461 = vadd.f32 %v5804, %v6460
      %6462 = vmatmul.f32.gmra.mxu0 %v6074
      %v6463 = vpop.f32.mrf.mxu0
      %v6464 = vadd.f32 %v5807, %v6463
      %6465 = vmatmul.f32.gmra.mxu0 %v6076
      %v6466 = vpop.f32.mrf.mxu0
      %v6467 = vadd.f32 %v5810, %v6466
      %6468 = vmatmul.f32.gmra.mxu0 %v6078
      %v6469 = vpop.f32.mrf.mxu0
      %v6470 = vadd.f32 %v5813, %v6469
      %6471 = vmatmul.f32.gmra.mxu0 %v6080
      %v6472 = vpop.f32.mrf.mxu0
      %v6473 = vadd.f32 %v5816, %v6472
      %6474 = vmatmul.f32.gmra.mxu0 %v6082
      %v6475 = vpop.f32.mrf.mxu0
      %v6476 = vadd.f32 %v5819, %v6475
      %6477 = vmatmul.f32.gmra.mxu0 %v6084
      %v6478 = vpop.f32.mrf.mxu0
      %v6479 = vadd.f32 %v5822, %v6478
      %6480 = vmatmul.f32.gmra.mxu0 %v6086
      %v6481 = vpop.f32.mrf.mxu0
      %v6482 = vadd.f32 %v5825, %v6481
      %6483 = vmatmul.f32.gmra.mxu0 %v6088
      %v6484 = vpop.f32.mrf.mxu0
      %v6485 = vadd.f32 %v5828, %v6484
      %6486 = vmatmul.f32.gmra.mxu0 %v6090
      %v6487 = vpop.f32.mrf.mxu0
      %v6488 = vadd.f32 %v5831, %v6487
      %6489 = vmatmul.f32.gmra.mxu0 %v6092
      %v6490 = vpop.f32.mrf.mxu0
      %v6491 = vadd.f32 %v5834, %v6490
      %6492 = vmatmul.f32.gmra.mxu0 %v6094
      %v6493 = vpop.f32.mrf.mxu0
      %v6494 = vadd.f32 %v5837, %v6493
      %6495 = vmatmul.f32.gmra.mxu0 %v6096
      %v6496 = vpop.f32.mrf.mxu0
      %v6497 = vadd.f32 %v5840, %v6496
      %6498 = vdwg.mxu0
      %v6499 = vadd.f32 %v4480, %v6116
      %v6500 = vadd.f32 %v4481, %v6119
      %v6501 = vadd.f32 %v4482, %v6122
      %v6502 = vadd.f32 %v4483, %v6125
      %v6503 = vadd.f32 %v4484, %v6128
      %v6504 = vadd.f32 %v4485, %v6131
      %v6505 = vadd.f32 %v4486, %v6134
      %v6506 = vadd.f32 %v4487, %v6137
      %v6507 = vadd.f32 %v4488, %v6140
      %v6508 = vadd.f32 %v4489, %v6143
      %v6509 = vadd.f32 %v4490, %v6146
      %v6510 = vadd.f32 %v4491, %v6149
      %v6511 = vadd.f32 %v4492, %v6152
      %v6512 = vadd.f32 %v4493, %v6155
      %v6513 = vadd.f32 %v4494, %v6158
      %v6514 = vadd.f32 %v4495, %v6161
      %v6515 = vadd.f32 %v4496, %v6164
      %v6516 = vadd.f32 %v4497, %v6167
      %v6517 = vadd.f32 %v4498, %v6170
      %v6518 = vadd.f32 %v4499, %v6173
      %v6519 = vadd.f32 %v4500, %v6176
      %v6520 = vadd.f32 %v4501, %v6179
      %v6521 = vadd.f32 %v4502, %v6182
      %v6522 = vadd.f32 %v4503, %v6185
      %v6523 = vadd.f32 %v4504, %v6188
      %v6524 = vadd.f32 %v4505, %v6191
      %v6525 = vadd.f32 %v4506, %v6194
      %v6526 = vadd.f32 %v4507, %v6197
      %v6527 = vadd.f32 %v4508, %v6200
      %v6528 = vadd.f32 %v4509, %v6203
      %v6529 = vadd.f32 %v4510, %v6206
      %v6530 = vadd.f32 %v4511, %v6209
      %v6531 = vadd.f32 %v4512, %v6212
      %v6532 = vadd.f32 %v4513, %v6215
      %v6533 = vadd.f32 %v4514, %v6218
      %v6534 = vadd.f32 %v4515, %v6221
      %v6535 = vadd.f32 %v4516, %v6224
      %v6536 = vadd.f32 %v4517, %v6227
      %v6537 = vadd.f32 %v4518, %v6230
      %v6538 = vadd.f32 %v4519, %v6233
      %v6539 = vadd.f32 %v4520, %v6236
      %v6540 = vadd.f32 %v4521, %v6239
      %v6541 = vadd.f32 %v4522, %v6242
      %v6542 = vadd.f32 %v4523, %v6245
      %v6543 = vadd.f32 %v4524, %v6248
      %v6544 = vadd.f32 %v4525, %v6251
      %v6545 = vadd.f32 %v4526, %v6254
      %v6546 = vadd.f32 %v4527, %v6257
      %v6547 = vadd.f32 %v4528, %v6260
      %v6548 = vadd.f32 %v4529, %v6263
      %v6549 = vadd.f32 %v4530, %v6266
      %v6550 = vadd.f32 %v4531, %v6269
      %v6551 = vadd.f32 %v4532, %v6272
      %v6552 = vadd.f32 %v4533, %v6275
      %v6553 = vadd.f32 %v4534, %v6278
      %v6554 = vadd.f32 %v4535, %v6281
      %v6555 = vadd.f32 %v4536, %v6284
      %v6556 = vadd.f32 %v4537, %v6287
      %v6557 = vadd.f32 %v4538, %v6290
      %v6558 = vadd.f32 %v4539, %v6293
      %v6559 = vadd.f32 %v4540, %v6296
      %v6560 = vadd.f32 %v4541, %v6299
      %v6561 = vadd.f32 %v4542, %v6302
      %v6562 = vadd.f32 %v4543, %v6305
      %v6563 = vadd.f32 %v4544, %v6308
      %v6564 = vadd.f32 %v4545, %v6311
      %v6565 = vadd.f32 %v4546, %v6314
      %v6566 = vadd.f32 %v4547, %v6317
      %v6567 = vadd.f32 %v4548, %v6320
      %v6568 = vadd.f32 %v4549, %v6323
      %v6569 = vadd.f32 %v4550, %v6326
      %v6570 = vadd.f32 %v4551, %v6329
      %v6571 = vadd.f32 %v4552, %v6332
      %v6572 = vadd.f32 %v4553, %v6335
      %v6573 = vadd.f32 %v4554, %v6338
      %v6574 = vadd.f32 %v4555, %v6341
      %v6575 = vadd.f32 %v4556, %v6344
      %v6576 = vadd.f32 %v4557, %v6347
      %v6577 = vadd.f32 %v4558, %v6350
      %v6578 = vadd.f32 %v4559, %v6353
      %v6579 = vadd.f32 %v4560, %v6356
      %v6580 = vadd.f32 %v4561, %v6359
      %v6581 = vadd.f32 %v4562, %v6362
      %v6582 = vadd.f32 %v4563, %v6365
      %v6583 = vadd.f32 %v4564, %v6368
      %v6584 = vadd.f32 %v4565, %v6371
      %v6585 = vadd.f32 %v4566, %v6374
      %v6586 = vadd.f32 %v4567, %v6377
      %v6587 = vadd.f32 %v4568, %v6380
      %v6588 = vadd.f32 %v4569, %v6383
      %v6589 = vadd.f32 %v4570, %v6386
      %v6590 = vadd.f32 %v4571, %v6389
      %v6591 = vadd.f32 %v4572, %v6392
      %v6592 = vadd.f32 %v4573, %v6395
      %v6593 = vadd.f32 %v4574, %v6398
      %v6594 = vadd.f32 %v4575, %v6401
      %v6595 = vadd.f32 %v4576, %v6404
      %v6596 = vadd.f32 %v4577, %v6407
      %v6597 = vadd.f32 %v4578, %v6410
      %v6598 = vadd.f32 %v4579, %v6413
      %v6599 = vadd.f32 %v4580, %v6416
      %v6600 = vadd.f32 %v4581, %v6419
      %v6601 = vadd.f32 %v4582, %v6422
      %v6602 = vadd.f32 %v4583, %v6425
      %v6603 = vadd.f32 %v4584, %v6428
      %v6604 = vadd.f32 %v4585, %v6431
      %v6605 = vadd.f32 %v4586, %v6434
      %v6606 = vadd.f32 %v4587, %v6437
      %v6607 = vadd.f32 %v4588, %v6440
      %v6608 = vadd.f32 %v4589, %v6443
      %v6609 = vadd.f32 %v4590, %v6446
      %v6610 = vadd.f32 %v4591, %v6449
      %v6611 = vadd.f32 %v4592, %v6452
      %v6612 = vadd.f32 %v4593, %v6455
      %v6613 = vadd.f32 %v4594, %v6458
      %v6614 = vadd.f32 %v4595, %v6461
      %v6615 = vadd.f32 %v4596, %v6464
      %v6616 = vadd.f32 %v4597, %v6467
      %v6617 = vadd.f32 %v4598, %v6470
      %v6618 = vadd.f32 %v4599, %v6473
      %v6619 = vadd.f32 %v4600, %v6476
      %v6620 = vadd.f32 %v4601, %v6479
      %v6621 = vadd.f32 %v4602, %v6482
      %v6622 = vadd.f32 %v4603, %v6485
      %v6623 = vadd.f32 %v4604, %v6488
      %v6624 = vadd.f32 %v4605, %v6491
      %v6625 = vadd.f32 %v4606, %v6494
      %v6626 = vadd.f32 %v4607, %v6497
      %v6628 = vsel %vm826, %v798, 0
      %v6631 = vsel %vm826, %v799, 0
      %v6634 = vsel %vm826, %v800, 0
      %v6637 = vsel %vm826, %v801, 0
      %6639 = vmatpush.msra.mxu0 0.0
      %6640 = vmatpush.msra.mxu0 0.0
      %6641 = vmatpush.msra.mxu0 0.0
      %6642 = vmatpush.msra.mxu0 0.0
      %6643 = vmatpush.msra.mxu0 0.0
      %6644 = vmatpush.msra.mxu0 0.0
      %6645 = vmatpush.msra.mxu0 0.0
      %6646 = vmatpush.msra.mxu0 0.0
      %6647 = vmatpush.msra.mxu0 0.0
      %6648 = vmatpush.msra.mxu0 0.0
      %6649 = vmatpush.msra.mxu0 0.0
      %6650 = vmatpush.msra.mxu0 0.0
      %6651 = vmatpush.msra.mxu0 0.0
      %6652 = vmatpush.msra.mxu0 0.0
      %6653 = vmatpush.msra.mxu0 0.0
      %6654 = vmatpush.msra.mxu0 %v820
      %6655 = vmatmul.f32.gmra.mxu0 %v840
      %v6656 = vpop.f32.mrf.mxu0
      %v6657 = vadd.f32 0.0, %v6656
      %6658 = vmatmul.f32.gmra.mxu0 %v843
      %v6659 = vpop.f32.mrf.mxu0
      %v6660 = vadd.f32 0.0, %v6659
      %6661 = vmatmul.f32.gmra.mxu0 %v846
      %v6662 = vpop.f32.mrf.mxu0
      %v6663 = vadd.f32 0.0, %v6662
      %6664 = vmatmul.f32.gmra.mxu0 %v849
      %v6665 = vpop.f32.mrf.mxu0
      %v6666 = vadd.f32 0.0, %v6665
      %6667 = vmatmul.f32.gmra.mxu0 %v852
      %v6668 = vpop.f32.mrf.mxu0
      %v6669 = vadd.f32 0.0, %v6668
      %6670 = vmatmul.f32.gmra.mxu0 %v855
      %v6671 = vpop.f32.mrf.mxu0
      %v6672 = vadd.f32 0.0, %v6671
      %6673 = vmatmul.f32.gmra.mxu0 %v858
      %v6674 = vpop.f32.mrf.mxu0
      %v6675 = vadd.f32 0.0, %v6674
      %6676 = vmatmul.f32.gmra.mxu0 %v861
      %v6677 = vpop.f32.mrf.mxu0
      %v6678 = vadd.f32 0.0, %v6677
      %6679 = vmatmul.f32.gmra.mxu0 %v864
      %v6680 = vpop.f32.mrf.mxu0
      %v6681 = vadd.f32 0.0, %v6680
      %6682 = vmatmul.f32.gmra.mxu0 %v867
      %v6683 = vpop.f32.mrf.mxu0
      %v6684 = vadd.f32 0.0, %v6683
      %6685 = vmatmul.f32.gmra.mxu0 %v870
      %v6686 = vpop.f32.mrf.mxu0
      %v6687 = vadd.f32 0.0, %v6686
      %6688 = vmatmul.f32.gmra.mxu0 %v873
      %v6689 = vpop.f32.mrf.mxu0
      %v6690 = vadd.f32 0.0, %v6689
      %6691 = vmatmul.f32.gmra.mxu0 %v876
      %v6692 = vpop.f32.mrf.mxu0
      %v6693 = vadd.f32 0.0, %v6692
      %6694 = vmatmul.f32.gmra.mxu0 %v879
      %v6695 = vpop.f32.mrf.mxu0
      %v6696 = vadd.f32 0.0, %v6695
      %6697 = vmatmul.f32.gmra.mxu0 %v882
      %v6698 = vpop.f32.mrf.mxu0
      %v6699 = vadd.f32 0.0, %v6698
      %6700 = vmatmul.f32.gmra.mxu0 %v885
      %v6701 = vpop.f32.mrf.mxu0
      %v6702 = vadd.f32 0.0, %v6701
      %6703 = vmatmul.f32.gmra.mxu0 %v888
      %v6704 = vpop.f32.mrf.mxu0
      %v6705 = vadd.f32 0.0, %v6704
      %6706 = vmatmul.f32.gmra.mxu0 %v891
      %v6707 = vpop.f32.mrf.mxu0
      %v6708 = vadd.f32 0.0, %v6707
      %6709 = vmatmul.f32.gmra.mxu0 %v894
      %v6710 = vpop.f32.mrf.mxu0
      %v6711 = vadd.f32 0.0, %v6710
      %6712 = vmatmul.f32.gmra.mxu0 %v897
      %v6713 = vpop.f32.mrf.mxu0
      %v6714 = vadd.f32 0.0, %v6713
      %6715 = vmatmul.f32.gmra.mxu0 %v900
      %v6716 = vpop.f32.mrf.mxu0
      %v6717 = vadd.f32 0.0, %v6716
      %6718 = vmatmul.f32.gmra.mxu0 %v903
      %v6719 = vpop.f32.mrf.mxu0
      %v6720 = vadd.f32 0.0, %v6719
      %6721 = vmatmul.f32.gmra.mxu0 %v906
      %v6722 = vpop.f32.mrf.mxu0
      %v6723 = vadd.f32 0.0, %v6722
      %6724 = vmatmul.f32.gmra.mxu0 %v909
      %v6725 = vpop.f32.mrf.mxu0
      %v6726 = vadd.f32 0.0, %v6725
      %6727 = vmatmul.f32.gmra.mxu0 %v912
      %v6728 = vpop.f32.mrf.mxu0
      %v6729 = vadd.f32 0.0, %v6728
      %6730 = vmatmul.f32.gmra.mxu0 %v915
      %v6731 = vpop.f32.mrf.mxu0
      %v6732 = vadd.f32 0.0, %v6731
      %6733 = vmatmul.f32.gmra.mxu0 %v918
      %v6734 = vpop.f32.mrf.mxu0
      %v6735 = vadd.f32 0.0, %v6734
      %6736 = vmatmul.f32.gmra.mxu0 %v921
      %v6737 = vpop.f32.mrf.mxu0
      %v6738 = vadd.f32 0.0, %v6737
      %6739 = vmatmul.f32.gmra.mxu0 %v924
      %v6740 = vpop.f32.mrf.mxu0
      %v6741 = vadd.f32 0.0, %v6740
      %6742 = vmatmul.f32.gmra.mxu0 %v927
      %v6743 = vpop.f32.mrf.mxu0
      %v6744 = vadd.f32 0.0, %v6743
      %6745 = vmatmul.f32.gmra.mxu0 %v930
      %v6746 = vpop.f32.mrf.mxu0
      %v6747 = vadd.f32 0.0, %v6746
      %6748 = vmatmul.f32.gmra.mxu0 %v933
      %v6749 = vpop.f32.mrf.mxu0
      %v6750 = vadd.f32 0.0, %v6749
      %6751 = vmatmul.f32.gmra.mxu0 %v936
      %v6752 = vpop.f32.mrf.mxu0
      %v6753 = vadd.f32 0.0, %v6752
      %6754 = vmatmul.f32.gmra.mxu0 %v939
      %v6755 = vpop.f32.mrf.mxu0
      %v6756 = vadd.f32 0.0, %v6755
      %6757 = vmatmul.f32.gmra.mxu0 %v942
      %v6758 = vpop.f32.mrf.mxu0
      %v6759 = vadd.f32 0.0, %v6758
      %6760 = vmatmul.f32.gmra.mxu0 %v945
      %v6761 = vpop.f32.mrf.mxu0
      %v6762 = vadd.f32 0.0, %v6761
      %6763 = vmatmul.f32.gmra.mxu0 %v948
      %v6764 = vpop.f32.mrf.mxu0
      %v6765 = vadd.f32 0.0, %v6764
      %6766 = vmatmul.f32.gmra.mxu0 %v951
      %v6767 = vpop.f32.mrf.mxu0
      %v6768 = vadd.f32 0.0, %v6767
      %6769 = vmatmul.f32.gmra.mxu0 %v954
      %v6770 = vpop.f32.mrf.mxu0
      %v6771 = vadd.f32 0.0, %v6770
      %6772 = vmatmul.f32.gmra.mxu0 %v957
      %v6773 = vpop.f32.mrf.mxu0
      %v6774 = vadd.f32 0.0, %v6773
      %6775 = vmatmul.f32.gmra.mxu0 %v960
      %v6776 = vpop.f32.mrf.mxu0
      %v6777 = vadd.f32 0.0, %v6776
      %6778 = vmatmul.f32.gmra.mxu0 %v963
      %v6779 = vpop.f32.mrf.mxu0
      %v6780 = vadd.f32 0.0, %v6779
      %6781 = vmatmul.f32.gmra.mxu0 %v966
      %v6782 = vpop.f32.mrf.mxu0
      %v6783 = vadd.f32 0.0, %v6782
      %6784 = vmatmul.f32.gmra.mxu0 %v969
      %v6785 = vpop.f32.mrf.mxu0
      %v6786 = vadd.f32 0.0, %v6785
      %6787 = vmatmul.f32.gmra.mxu0 %v972
      %v6788 = vpop.f32.mrf.mxu0
      %v6789 = vadd.f32 0.0, %v6788
      %6790 = vmatmul.f32.gmra.mxu0 %v975
      %v6791 = vpop.f32.mrf.mxu0
      %v6792 = vadd.f32 0.0, %v6791
      %6793 = vmatmul.f32.gmra.mxu0 %v978
      %v6794 = vpop.f32.mrf.mxu0
      %v6795 = vadd.f32 0.0, %v6794
      %6796 = vmatmul.f32.gmra.mxu0 %v981
      %v6797 = vpop.f32.mrf.mxu0
      %v6798 = vadd.f32 0.0, %v6797
      %6799 = vmatmul.f32.gmra.mxu0 %v984
      %v6800 = vpop.f32.mrf.mxu0
      %v6801 = vadd.f32 0.0, %v6800
      %6802 = vmatmul.f32.gmra.mxu0 %v987
      %v6803 = vpop.f32.mrf.mxu0
      %v6804 = vadd.f32 0.0, %v6803
      %6805 = vmatmul.f32.gmra.mxu0 %v990
      %v6806 = vpop.f32.mrf.mxu0
      %v6807 = vadd.f32 0.0, %v6806
      %6808 = vmatmul.f32.gmra.mxu0 %v993
      %v6809 = vpop.f32.mrf.mxu0
      %v6810 = vadd.f32 0.0, %v6809
      %6811 = vmatmul.f32.gmra.mxu0 %v996
      %v6812 = vpop.f32.mrf.mxu0
      %v6813 = vadd.f32 0.0, %v6812
      %6814 = vmatmul.f32.gmra.mxu0 %v999
      %v6815 = vpop.f32.mrf.mxu0
      %v6816 = vadd.f32 0.0, %v6815
      %6817 = vmatmul.f32.gmra.mxu0 %v1002
      %v6818 = vpop.f32.mrf.mxu0
      %v6819 = vadd.f32 0.0, %v6818
      %6820 = vmatmul.f32.gmra.mxu0 %v1005
      %v6821 = vpop.f32.mrf.mxu0
      %v6822 = vadd.f32 0.0, %v6821
      %6823 = vmatmul.f32.gmra.mxu0 %v1008
      %v6824 = vpop.f32.mrf.mxu0
      %v6825 = vadd.f32 0.0, %v6824
      %6826 = vmatmul.f32.gmra.mxu0 %v1011
      %v6827 = vpop.f32.mrf.mxu0
      %v6828 = vadd.f32 0.0, %v6827
      %6829 = vmatmul.f32.gmra.mxu0 %v1014
      %v6830 = vpop.f32.mrf.mxu0
      %v6831 = vadd.f32 0.0, %v6830
      %6832 = vmatmul.f32.gmra.mxu0 %v1017
      %v6833 = vpop.f32.mrf.mxu0
      %v6834 = vadd.f32 0.0, %v6833
      %6835 = vmatmul.f32.gmra.mxu0 %v1020
      %v6836 = vpop.f32.mrf.mxu0
      %v6837 = vadd.f32 0.0, %v6836
      %6838 = vmatmul.f32.gmra.mxu0 %v1023
      %v6839 = vpop.f32.mrf.mxu0
      %v6840 = vadd.f32 0.0, %v6839
      %6841 = vmatmul.f32.gmra.mxu0 %v1026
      %v6842 = vpop.f32.mrf.mxu0
      %v6843 = vadd.f32 0.0, %v6842
      %6844 = vmatmul.f32.gmra.mxu0 %v1029
      %v6845 = vpop.f32.mrf.mxu0
      %v6846 = vadd.f32 0.0, %v6845
      %6847 = vmatmul.f32.gmra.mxu0 %v1032
      %v6848 = vpop.f32.mrf.mxu0
      %v6849 = vadd.f32 0.0, %v6848
      %6850 = vmatmul.f32.gmra.mxu0 %v1035
      %v6851 = vpop.f32.mrf.mxu0
      %v6852 = vadd.f32 0.0, %v6851
      %6853 = vmatmul.f32.gmra.mxu0 %v1038
      %v6854 = vpop.f32.mrf.mxu0
      %v6855 = vadd.f32 0.0, %v6854
      %6856 = vmatmul.f32.gmra.mxu0 %v1041
      %v6857 = vpop.f32.mrf.mxu0
      %v6858 = vadd.f32 0.0, %v6857
      %6859 = vmatmul.f32.gmra.mxu0 %v1044
      %v6860 = vpop.f32.mrf.mxu0
      %v6861 = vadd.f32 0.0, %v6860
      %6862 = vmatmul.f32.gmra.mxu0 %v1047
      %v6863 = vpop.f32.mrf.mxu0
      %v6864 = vadd.f32 0.0, %v6863
      %6865 = vmatmul.f32.gmra.mxu0 %v1050
      %v6866 = vpop.f32.mrf.mxu0
      %v6867 = vadd.f32 0.0, %v6866
      %6868 = vmatmul.f32.gmra.mxu0 %v1053
      %v6869 = vpop.f32.mrf.mxu0
      %v6870 = vadd.f32 0.0, %v6869
      %6871 = vmatmul.f32.gmra.mxu0 %v1056
      %v6872 = vpop.f32.mrf.mxu0
      %v6873 = vadd.f32 0.0, %v6872
      %6874 = vmatmul.f32.gmra.mxu0 %v1059
      %v6875 = vpop.f32.mrf.mxu0
      %v6876 = vadd.f32 0.0, %v6875
      %6877 = vmatmul.f32.gmra.mxu0 %v1062
      %v6878 = vpop.f32.mrf.mxu0
      %v6879 = vadd.f32 0.0, %v6878
      %6880 = vmatmul.f32.gmra.mxu0 %v1065
      %v6881 = vpop.f32.mrf.mxu0
      %v6882 = vadd.f32 0.0, %v6881
      %6883 = vmatmul.f32.gmra.mxu0 %v1068
      %v6884 = vpop.f32.mrf.mxu0
      %v6885 = vadd.f32 0.0, %v6884
      %6886 = vmatmul.f32.gmra.mxu0 %v1071
      %v6887 = vpop.f32.mrf.mxu0
      %v6888 = vadd.f32 0.0, %v6887
      %6889 = vmatmul.f32.gmra.mxu0 %v1074
      %v6890 = vpop.f32.mrf.mxu0
      %v6891 = vadd.f32 0.0, %v6890
      %6892 = vmatmul.f32.gmra.mxu0 %v1077
      %v6893 = vpop.f32.mrf.mxu0
      %v6894 = vadd.f32 0.0, %v6893
      %6895 = vmatmul.f32.gmra.mxu0 %v1080
      %v6896 = vpop.f32.mrf.mxu0
      %v6897 = vadd.f32 0.0, %v6896
      %6898 = vmatmul.f32.gmra.mxu0 %v1083
      %v6899 = vpop.f32.mrf.mxu0
      %v6900 = vadd.f32 0.0, %v6899
      %6901 = vmatmul.f32.gmra.mxu0 %v1086
      %v6902 = vpop.f32.mrf.mxu0
      %v6903 = vadd.f32 0.0, %v6902
      %6904 = vmatmul.f32.gmra.mxu0 %v1089
      %v6905 = vpop.f32.mrf.mxu0
      %v6906 = vadd.f32 0.0, %v6905
      %6907 = vmatmul.f32.gmra.mxu0 %v1092
      %v6908 = vpop.f32.mrf.mxu0
      %v6909 = vadd.f32 0.0, %v6908
      %6910 = vmatmul.f32.gmra.mxu0 %v1095
      %v6911 = vpop.f32.mrf.mxu0
      %v6912 = vadd.f32 0.0, %v6911
      %6913 = vmatmul.f32.gmra.mxu0 %v1098
      %v6914 = vpop.f32.mrf.mxu0
      %v6915 = vadd.f32 0.0, %v6914
      %6916 = vmatmul.f32.gmra.mxu0 %v1101
      %v6917 = vpop.f32.mrf.mxu0
      %v6918 = vadd.f32 0.0, %v6917
      %6919 = vmatmul.f32.gmra.mxu0 %v1104
      %v6920 = vpop.f32.mrf.mxu0
      %v6921 = vadd.f32 0.0, %v6920
      %6922 = vmatmul.f32.gmra.mxu0 %v1107
      %v6923 = vpop.f32.mrf.mxu0
      %v6924 = vadd.f32 0.0, %v6923
      %6925 = vmatmul.f32.gmra.mxu0 %v1110
      %v6926 = vpop.f32.mrf.mxu0
      %v6927 = vadd.f32 0.0, %v6926
      %6928 = vmatmul.f32.gmra.mxu0 %v1113
      %v6929 = vpop.f32.mrf.mxu0
      %v6930 = vadd.f32 0.0, %v6929
      %6931 = vmatmul.f32.gmra.mxu0 %v1116
      %v6932 = vpop.f32.mrf.mxu0
      %v6933 = vadd.f32 0.0, %v6932
      %6934 = vmatmul.f32.gmra.mxu0 %v1119
      %v6935 = vpop.f32.mrf.mxu0
      %v6936 = vadd.f32 0.0, %v6935
      %6937 = vmatmul.f32.gmra.mxu0 %v1122
      %v6938 = vpop.f32.mrf.mxu0
      %v6939 = vadd.f32 0.0, %v6938
      %6940 = vmatmul.f32.gmra.mxu0 %v1125
      %v6941 = vpop.f32.mrf.mxu0
      %v6942 = vadd.f32 0.0, %v6941
      %6943 = vmatmul.f32.gmra.mxu0 %v1128
      %v6944 = vpop.f32.mrf.mxu0
      %v6945 = vadd.f32 0.0, %v6944
      %6946 = vmatmul.f32.gmra.mxu0 %v1131
      %v6947 = vpop.f32.mrf.mxu0
      %v6948 = vadd.f32 0.0, %v6947
      %6949 = vmatmul.f32.gmra.mxu0 %v1134
      %v6950 = vpop.f32.mrf.mxu0
      %v6951 = vadd.f32 0.0, %v6950
      %6952 = vmatmul.f32.gmra.mxu0 %v1137
      %v6953 = vpop.f32.mrf.mxu0
      %v6954 = vadd.f32 0.0, %v6953
      %6955 = vmatmul.f32.gmra.mxu0 %v1140
      %v6956 = vpop.f32.mrf.mxu0
      %v6957 = vadd.f32 0.0, %v6956
      %6958 = vmatmul.f32.gmra.mxu0 %v1143
      %v6959 = vpop.f32.mrf.mxu0
      %v6960 = vadd.f32 0.0, %v6959
      %6961 = vmatmul.f32.gmra.mxu0 %v1146
      %v6962 = vpop.f32.mrf.mxu0
      %v6963 = vadd.f32 0.0, %v6962
      %6964 = vmatmul.f32.gmra.mxu0 %v1149
      %v6965 = vpop.f32.mrf.mxu0
      %v6966 = vadd.f32 0.0, %v6965
      %6967 = vmatmul.f32.gmra.mxu0 %v1152
      %v6968 = vpop.f32.mrf.mxu0
      %v6969 = vadd.f32 0.0, %v6968
      %6970 = vmatmul.f32.gmra.mxu0 %v1155
      %v6971 = vpop.f32.mrf.mxu0
      %v6972 = vadd.f32 0.0, %v6971
      %6973 = vmatmul.f32.gmra.mxu0 %v1158
      %v6974 = vpop.f32.mrf.mxu0
      %v6975 = vadd.f32 0.0, %v6974
      %6976 = vmatmul.f32.gmra.mxu0 %v1161
      %v6977 = vpop.f32.mrf.mxu0
      %v6978 = vadd.f32 0.0, %v6977
      %6979 = vmatmul.f32.gmra.mxu0 %v1164
      %v6980 = vpop.f32.mrf.mxu0
      %v6981 = vadd.f32 0.0, %v6980
      %6982 = vmatmul.f32.gmra.mxu0 %v1167
      %v6983 = vpop.f32.mrf.mxu0
      %v6984 = vadd.f32 0.0, %v6983
      %6985 = vmatmul.f32.gmra.mxu0 %v1170
      %v6986 = vpop.f32.mrf.mxu0
      %v6987 = vadd.f32 0.0, %v6986
      %6988 = vmatmul.f32.gmra.mxu0 %v1173
      %v6989 = vpop.f32.mrf.mxu0
      %v6990 = vadd.f32 0.0, %v6989
      %6991 = vmatmul.f32.gmra.mxu0 %v1176
      %v6992 = vpop.f32.mrf.mxu0
      %v6993 = vadd.f32 0.0, %v6992
      %6994 = vmatmul.f32.gmra.mxu0 %v1179
      %v6995 = vpop.f32.mrf.mxu0
      %v6996 = vadd.f32 0.0, %v6995
      %6997 = vmatmul.f32.gmra.mxu0 %v1182
      %v6998 = vpop.f32.mrf.mxu0
      %v6999 = vadd.f32 0.0, %v6998
      %7000 = vmatmul.f32.gmra.mxu0 %v1185
      %v7001 = vpop.f32.mrf.mxu0
      %v7002 = vadd.f32 0.0, %v7001
      %7003 = vmatmul.f32.gmra.mxu0 %v1188
      %v7004 = vpop.f32.mrf.mxu0
      %v7005 = vadd.f32 0.0, %v7004
      %7006 = vmatmul.f32.gmra.mxu0 %v1191
      %v7007 = vpop.f32.mrf.mxu0
      %v7008 = vadd.f32 0.0, %v7007
      %7009 = vmatmul.f32.gmra.mxu0 %v1194
      %v7010 = vpop.f32.mrf.mxu0
      %v7011 = vadd.f32 0.0, %v7010
      %7012 = vmatmul.f32.gmra.mxu0 %v1197
      %v7013 = vpop.f32.mrf.mxu0
      %v7014 = vadd.f32 0.0, %v7013
      %7015 = vmatmul.f32.gmra.mxu0 %v1200
      %v7016 = vpop.f32.mrf.mxu0
      %v7017 = vadd.f32 0.0, %v7016
      %7018 = vmatmul.f32.gmra.mxu0 %v1203
      %v7019 = vpop.f32.mrf.mxu0
      %v7020 = vadd.f32 0.0, %v7019
      %7021 = vmatmul.f32.gmra.mxu0 %v1206
      %v7022 = vpop.f32.mrf.mxu0
      %v7023 = vadd.f32 0.0, %v7022
      %7024 = vmatmul.f32.gmra.mxu0 %v1209
      %v7025 = vpop.f32.mrf.mxu0
      %v7026 = vadd.f32 0.0, %v7025
      %7027 = vmatmul.f32.gmra.mxu0 %v6628
      %v7028 = vpop.f32.mrf.mxu0
      %v7029 = vadd.f32 0.0, %v7028
      %7030 = vmatmul.f32.gmra.mxu0 %v6631
      %v7031 = vpop.f32.mrf.mxu0
      %v7032 = vadd.f32 0.0, %v7031
      %7033 = vmatmul.f32.gmra.mxu0 %v6634
      %v7034 = vpop.f32.mrf.mxu0
      %v7035 = vadd.f32 0.0, %v7034
      %7036 = vmatmul.f32.gmra.mxu0 %v6637
      %v7037 = vpop.f32.mrf.mxu0
      %v7038 = vadd.f32 0.0, %v7037
      %7039 = vdwg.mxu0
      %v7041 = vsel %vm826, %v628, 0
      %v7044 = vsel %vm826, %v629, 0
      %v7047 = vsel %vm826, %v630, 0
      %v7050 = vsel %vm826, %v631, 0
      %7052 = vmatpush.msra.mxu0 0.0
      %7053 = vmatpush.msra.mxu0 0.0
      %7054 = vmatpush.msra.mxu0 0.0
      %7055 = vmatpush.msra.mxu0 0.0
      %7056 = vmatpush.msra.mxu0 0.0
      %7057 = vmatpush.msra.mxu0 0.0
      %7058 = vmatpush.msra.mxu0 0.0
      %7059 = vmatpush.msra.mxu0 0.0
      %7060 = vmatpush.msra.mxu0 0.0
      %7061 = vmatpush.msra.mxu0 0.0
      %7062 = vmatpush.msra.mxu0 0.0
      %7063 = vmatpush.msra.mxu0 0.0
      %7064 = vmatpush.msra.mxu0 0.0
      %7065 = vmatpush.msra.mxu0 0.0
      %7066 = vmatpush.msra.mxu0 0.0
      %7067 = vmatpush.msra.mxu0 %v811
      %7068 = vmatmul.f32.gmra.mxu0 %v1625
      %v7069 = vpop.f32.mrf.mxu0
      %v7070 = vadd.f32 %v6657, %v7069
      %7071 = vmatmul.f32.gmra.mxu0 %v1628
      %v7072 = vpop.f32.mrf.mxu0
      %v7073 = vadd.f32 %v6660, %v7072
      %7074 = vmatmul.f32.gmra.mxu0 %v1631
      %v7075 = vpop.f32.mrf.mxu0
      %v7076 = vadd.f32 %v6663, %v7075
      %7077 = vmatmul.f32.gmra.mxu0 %v1634
      %v7078 = vpop.f32.mrf.mxu0
      %v7079 = vadd.f32 %v6666, %v7078
      %7080 = vmatmul.f32.gmra.mxu0 %v1637
      %v7081 = vpop.f32.mrf.mxu0
      %v7082 = vadd.f32 %v6669, %v7081
      %7083 = vmatmul.f32.gmra.mxu0 %v1640
      %v7084 = vpop.f32.mrf.mxu0
      %v7085 = vadd.f32 %v6672, %v7084
      %7086 = vmatmul.f32.gmra.mxu0 %v1643
      %v7087 = vpop.f32.mrf.mxu0
      %v7088 = vadd.f32 %v6675, %v7087
      %7089 = vmatmul.f32.gmra.mxu0 %v1646
      %v7090 = vpop.f32.mrf.mxu0
      %v7091 = vadd.f32 %v6678, %v7090
      %7092 = vmatmul.f32.gmra.mxu0 %v1649
      %v7093 = vpop.f32.mrf.mxu0
      %v7094 = vadd.f32 %v6681, %v7093
      %7095 = vmatmul.f32.gmra.mxu0 %v1652
      %v7096 = vpop.f32.mrf.mxu0
      %v7097 = vadd.f32 %v6684, %v7096
      %7098 = vmatmul.f32.gmra.mxu0 %v1655
      %v7099 = vpop.f32.mrf.mxu0
      %v7100 = vadd.f32 %v6687, %v7099
      %7101 = vmatmul.f32.gmra.mxu0 %v1658
      %v7102 = vpop.f32.mrf.mxu0
      %v7103 = vadd.f32 %v6690, %v7102
      %7104 = vmatmul.f32.gmra.mxu0 %v1661
      %v7105 = vpop.f32.mrf.mxu0
      %v7106 = vadd.f32 %v6693, %v7105
      %7107 = vmatmul.f32.gmra.mxu0 %v1664
      %v7108 = vpop.f32.mrf.mxu0
      %v7109 = vadd.f32 %v6696, %v7108
      %7110 = vmatmul.f32.gmra.mxu0 %v1667
      %v7111 = vpop.f32.mrf.mxu0
      %v7112 = vadd.f32 %v6699, %v7111
      %7113 = vmatmul.f32.gmra.mxu0 %v1670
      %v7114 = vpop.f32.mrf.mxu0
      %v7115 = vadd.f32 %v6702, %v7114
      %7116 = vmatmul.f32.gmra.mxu0 %v1673
      %v7117 = vpop.f32.mrf.mxu0
      %v7118 = vadd.f32 %v6705, %v7117
      %7119 = vmatmul.f32.gmra.mxu0 %v1676
      %v7120 = vpop.f32.mrf.mxu0
      %v7121 = vadd.f32 %v6708, %v7120
      %7122 = vmatmul.f32.gmra.mxu0 %v1679
      %v7123 = vpop.f32.mrf.mxu0
      %v7124 = vadd.f32 %v6711, %v7123
      %7125 = vmatmul.f32.gmra.mxu0 %v1682
      %v7126 = vpop.f32.mrf.mxu0
      %v7127 = vadd.f32 %v6714, %v7126
      %7128 = vmatmul.f32.gmra.mxu0 %v1685
      %v7129 = vpop.f32.mrf.mxu0
      %v7130 = vadd.f32 %v6717, %v7129
      %7131 = vmatmul.f32.gmra.mxu0 %v1688
      %v7132 = vpop.f32.mrf.mxu0
      %v7133 = vadd.f32 %v6720, %v7132
      %7134 = vmatmul.f32.gmra.mxu0 %v1691
      %v7135 = vpop.f32.mrf.mxu0
      %v7136 = vadd.f32 %v6723, %v7135
      %7137 = vmatmul.f32.gmra.mxu0 %v1694
      %v7138 = vpop.f32.mrf.mxu0
      %v7139 = vadd.f32 %v6726, %v7138
      %7140 = vmatmul.f32.gmra.mxu0 %v1697
      %v7141 = vpop.f32.mrf.mxu0
      %v7142 = vadd.f32 %v6729, %v7141
      %7143 = vmatmul.f32.gmra.mxu0 %v1700
      %v7144 = vpop.f32.mrf.mxu0
      %v7145 = vadd.f32 %v6732, %v7144
      %7146 = vmatmul.f32.gmra.mxu0 %v1703
      %v7147 = vpop.f32.mrf.mxu0
      %v7148 = vadd.f32 %v6735, %v7147
      %7149 = vmatmul.f32.gmra.mxu0 %v1706
      %v7150 = vpop.f32.mrf.mxu0
      %v7151 = vadd.f32 %v6738, %v7150
      %7152 = vmatmul.f32.gmra.mxu0 %v1709
      %v7153 = vpop.f32.mrf.mxu0
      %v7154 = vadd.f32 %v6741, %v7153
      %7155 = vmatmul.f32.gmra.mxu0 %v1712
      %v7156 = vpop.f32.mrf.mxu0
      %v7157 = vadd.f32 %v6744, %v7156
      %7158 = vmatmul.f32.gmra.mxu0 %v1715
      %v7159 = vpop.f32.mrf.mxu0
      %v7160 = vadd.f32 %v6747, %v7159
      %7161 = vmatmul.f32.gmra.mxu0 %v1718
      %v7162 = vpop.f32.mrf.mxu0
      %v7163 = vadd.f32 %v6750, %v7162
      %7164 = vmatmul.f32.gmra.mxu0 %v1721
      %v7165 = vpop.f32.mrf.mxu0
      %v7166 = vadd.f32 %v6753, %v7165
      %7167 = vmatmul.f32.gmra.mxu0 %v1724
      %v7168 = vpop.f32.mrf.mxu0
      %v7169 = vadd.f32 %v6756, %v7168
      %7170 = vmatmul.f32.gmra.mxu0 %v1727
      %v7171 = vpop.f32.mrf.mxu0
      %v7172 = vadd.f32 %v6759, %v7171
      %7173 = vmatmul.f32.gmra.mxu0 %v1730
      %v7174 = vpop.f32.mrf.mxu0
      %v7175 = vadd.f32 %v6762, %v7174
      %7176 = vmatmul.f32.gmra.mxu0 %v1733
      %v7177 = vpop.f32.mrf.mxu0
      %v7178 = vadd.f32 %v6765, %v7177
      %7179 = vmatmul.f32.gmra.mxu0 %v1736
      %v7180 = vpop.f32.mrf.mxu0
      %v7181 = vadd.f32 %v6768, %v7180
      %7182 = vmatmul.f32.gmra.mxu0 %v1739
      %v7183 = vpop.f32.mrf.mxu0
      %v7184 = vadd.f32 %v6771, %v7183
      %7185 = vmatmul.f32.gmra.mxu0 %v1742
      %v7186 = vpop.f32.mrf.mxu0
      %v7187 = vadd.f32 %v6774, %v7186
      %7188 = vmatmul.f32.gmra.mxu0 %v1745
      %v7189 = vpop.f32.mrf.mxu0
      %v7190 = vadd.f32 %v6777, %v7189
      %7191 = vmatmul.f32.gmra.mxu0 %v1748
      %v7192 = vpop.f32.mrf.mxu0
      %v7193 = vadd.f32 %v6780, %v7192
      %7194 = vmatmul.f32.gmra.mxu0 %v1751
      %v7195 = vpop.f32.mrf.mxu0
      %v7196 = vadd.f32 %v6783, %v7195
      %7197 = vmatmul.f32.gmra.mxu0 %v1754
      %v7198 = vpop.f32.mrf.mxu0
      %v7199 = vadd.f32 %v6786, %v7198
      %7200 = vmatmul.f32.gmra.mxu0 %v1757
      %v7201 = vpop.f32.mrf.mxu0
      %v7202 = vadd.f32 %v6789, %v7201
      %7203 = vmatmul.f32.gmra.mxu0 %v1760
      %v7204 = vpop.f32.mrf.mxu0
      %v7205 = vadd.f32 %v6792, %v7204
      %7206 = vmatmul.f32.gmra.mxu0 %v1763
      %v7207 = vpop.f32.mrf.mxu0
      %v7208 = vadd.f32 %v6795, %v7207
      %7209 = vmatmul.f32.gmra.mxu0 %v1766
      %v7210 = vpop.f32.mrf.mxu0
      %v7211 = vadd.f32 %v6798, %v7210
      %7212 = vmatmul.f32.gmra.mxu0 %v1769
      %v7213 = vpop.f32.mrf.mxu0
      %v7214 = vadd.f32 %v6801, %v7213
      %7215 = vmatmul.f32.gmra.mxu0 %v1772
      %v7216 = vpop.f32.mrf.mxu0
      %v7217 = vadd.f32 %v6804, %v7216
      %7218 = vmatmul.f32.gmra.mxu0 %v1775
      %v7219 = vpop.f32.mrf.mxu0
      %v7220 = vadd.f32 %v6807, %v7219
      %7221 = vmatmul.f32.gmra.mxu0 %v1778
      %v7222 = vpop.f32.mrf.mxu0
      %v7223 = vadd.f32 %v6810, %v7222
      %7224 = vmatmul.f32.gmra.mxu0 %v1781
      %v7225 = vpop.f32.mrf.mxu0
      %v7226 = vadd.f32 %v6813, %v7225
      %7227 = vmatmul.f32.gmra.mxu0 %v1784
      %v7228 = vpop.f32.mrf.mxu0
      %v7229 = vadd.f32 %v6816, %v7228
      %7230 = vmatmul.f32.gmra.mxu0 %v1787
      %v7231 = vpop.f32.mrf.mxu0
      %v7232 = vadd.f32 %v6819, %v7231
      %7233 = vmatmul.f32.gmra.mxu0 %v1790
      %v7234 = vpop.f32.mrf.mxu0
      %v7235 = vadd.f32 %v6822, %v7234
      %7236 = vmatmul.f32.gmra.mxu0 %v1793
      %v7237 = vpop.f32.mrf.mxu0
      %v7238 = vadd.f32 %v6825, %v7237
      %7239 = vmatmul.f32.gmra.mxu0 %v1796
      %v7240 = vpop.f32.mrf.mxu0
      %v7241 = vadd.f32 %v6828, %v7240
      %7242 = vmatmul.f32.gmra.mxu0 %v1799
      %v7243 = vpop.f32.mrf.mxu0
      %v7244 = vadd.f32 %v6831, %v7243
      %7245 = vmatmul.f32.gmra.mxu0 %v1802
      %v7246 = vpop.f32.mrf.mxu0
      %v7247 = vadd.f32 %v6834, %v7246
      %7248 = vmatmul.f32.gmra.mxu0 %v1805
      %v7249 = vpop.f32.mrf.mxu0
      %v7250 = vadd.f32 %v6837, %v7249
      %7251 = vmatmul.f32.gmra.mxu0 %v1808
      %v7252 = vpop.f32.mrf.mxu0
      %v7253 = vadd.f32 %v6840, %v7252
      %7254 = vmatmul.f32.gmra.mxu0 %v1811
      %v7255 = vpop.f32.mrf.mxu0
      %v7256 = vadd.f32 %v6843, %v7255
      %7257 = vmatmul.f32.gmra.mxu0 %v1814
      %v7258 = vpop.f32.mrf.mxu0
      %v7259 = vadd.f32 %v6846, %v7258
      %7260 = vmatmul.f32.gmra.mxu0 %v1817
      %v7261 = vpop.f32.mrf.mxu0
      %v7262 = vadd.f32 %v6849, %v7261
      %7263 = vmatmul.f32.gmra.mxu0 %v1820
      %v7264 = vpop.f32.mrf.mxu0
      %v7265 = vadd.f32 %v6852, %v7264
      %7266 = vmatmul.f32.gmra.mxu0 %v1823
      %v7267 = vpop.f32.mrf.mxu0
      %v7268 = vadd.f32 %v6855, %v7267
      %7269 = vmatmul.f32.gmra.mxu0 %v1826
      %v7270 = vpop.f32.mrf.mxu0
      %v7271 = vadd.f32 %v6858, %v7270
      %7272 = vmatmul.f32.gmra.mxu0 %v1829
      %v7273 = vpop.f32.mrf.mxu0
      %v7274 = vadd.f32 %v6861, %v7273
      %7275 = vmatmul.f32.gmra.mxu0 %v1832
      %v7276 = vpop.f32.mrf.mxu0
      %v7277 = vadd.f32 %v6864, %v7276
      %7278 = vmatmul.f32.gmra.mxu0 %v1835
      %v7279 = vpop.f32.mrf.mxu0
      %v7280 = vadd.f32 %v6867, %v7279
      %7281 = vmatmul.f32.gmra.mxu0 %v1838
      %v7282 = vpop.f32.mrf.mxu0
      %v7283 = vadd.f32 %v6870, %v7282
      %7284 = vmatmul.f32.gmra.mxu0 %v1841
      %v7285 = vpop.f32.mrf.mxu0
      %v7286 = vadd.f32 %v6873, %v7285
      %7287 = vmatmul.f32.gmra.mxu0 %v1844
      %v7288 = vpop.f32.mrf.mxu0
      %v7289 = vadd.f32 %v6876, %v7288
      %7290 = vmatmul.f32.gmra.mxu0 %v1847
      %v7291 = vpop.f32.mrf.mxu0
      %v7292 = vadd.f32 %v6879, %v7291
      %7293 = vmatmul.f32.gmra.mxu0 %v1850
      %v7294 = vpop.f32.mrf.mxu0
      %v7295 = vadd.f32 %v6882, %v7294
      %7296 = vmatmul.f32.gmra.mxu0 %v1853
      %v7297 = vpop.f32.mrf.mxu0
      %v7298 = vadd.f32 %v6885, %v7297
      %7299 = vmatmul.f32.gmra.mxu0 %v1856
      %v7300 = vpop.f32.mrf.mxu0
      %v7301 = vadd.f32 %v6888, %v7300
      %7302 = vmatmul.f32.gmra.mxu0 %v1859
      %v7303 = vpop.f32.mrf.mxu0
      %v7304 = vadd.f32 %v6891, %v7303
      %7305 = vmatmul.f32.gmra.mxu0 %v1862
      %v7306 = vpop.f32.mrf.mxu0
      %v7307 = vadd.f32 %v6894, %v7306
      %7308 = vmatmul.f32.gmra.mxu0 %v1865
      %v7309 = vpop.f32.mrf.mxu0
      %v7310 = vadd.f32 %v6897, %v7309
      %7311 = vmatmul.f32.gmra.mxu0 %v1868
      %v7312 = vpop.f32.mrf.mxu0
      %v7313 = vadd.f32 %v6900, %v7312
      %7314 = vmatmul.f32.gmra.mxu0 %v1871
      %v7315 = vpop.f32.mrf.mxu0
      %v7316 = vadd.f32 %v6903, %v7315
      %7317 = vmatmul.f32.gmra.mxu0 %v1874
      %v7318 = vpop.f32.mrf.mxu0
      %v7319 = vadd.f32 %v6906, %v7318
      %7320 = vmatmul.f32.gmra.mxu0 %v1877
      %v7321 = vpop.f32.mrf.mxu0
      %v7322 = vadd.f32 %v6909, %v7321
      %7323 = vmatmul.f32.gmra.mxu0 %v1880
      %v7324 = vpop.f32.mrf.mxu0
      %v7325 = vadd.f32 %v6912, %v7324
      %7326 = vmatmul.f32.gmra.mxu0 %v1883
      %v7327 = vpop.f32.mrf.mxu0
      %v7328 = vadd.f32 %v6915, %v7327
      %7329 = vmatmul.f32.gmra.mxu0 %v1886
      %v7330 = vpop.f32.mrf.mxu0
      %v7331 = vadd.f32 %v6918, %v7330
      %7332 = vmatmul.f32.gmra.mxu0 %v1889
      %v7333 = vpop.f32.mrf.mxu0
      %v7334 = vadd.f32 %v6921, %v7333
      %7335 = vmatmul.f32.gmra.mxu0 %v1892
      %v7336 = vpop.f32.mrf.mxu0
      %v7337 = vadd.f32 %v6924, %v7336
      %7338 = vmatmul.f32.gmra.mxu0 %v1895
      %v7339 = vpop.f32.mrf.mxu0
      %v7340 = vadd.f32 %v6927, %v7339
      %7341 = vmatmul.f32.gmra.mxu0 %v1898
      %v7342 = vpop.f32.mrf.mxu0
      %v7343 = vadd.f32 %v6930, %v7342
      %7344 = vmatmul.f32.gmra.mxu0 %v1901
      %v7345 = vpop.f32.mrf.mxu0
      %v7346 = vadd.f32 %v6933, %v7345
      %7347 = vmatmul.f32.gmra.mxu0 %v1904
      %v7348 = vpop.f32.mrf.mxu0
      %v7349 = vadd.f32 %v6936, %v7348
      %7350 = vmatmul.f32.gmra.mxu0 %v1907
      %v7351 = vpop.f32.mrf.mxu0
      %v7352 = vadd.f32 %v6939, %v7351
      %7353 = vmatmul.f32.gmra.mxu0 %v1910
      %v7354 = vpop.f32.mrf.mxu0
      %v7355 = vadd.f32 %v6942, %v7354
      %7356 = vmatmul.f32.gmra.mxu0 %v1913
      %v7357 = vpop.f32.mrf.mxu0
      %v7358 = vadd.f32 %v6945, %v7357
      %7359 = vmatmul.f32.gmra.mxu0 %v1916
      %v7360 = vpop.f32.mrf.mxu0
      %v7361 = vadd.f32 %v6948, %v7360
      %7362 = vmatmul.f32.gmra.mxu0 %v1919
      %v7363 = vpop.f32.mrf.mxu0
      %v7364 = vadd.f32 %v6951, %v7363
      %7365 = vmatmul.f32.gmra.mxu0 %v1922
      %v7366 = vpop.f32.mrf.mxu0
      %v7367 = vadd.f32 %v6954, %v7366
      %7368 = vmatmul.f32.gmra.mxu0 %v1925
      %v7369 = vpop.f32.mrf.mxu0
      %v7370 = vadd.f32 %v6957, %v7369
      %7371 = vmatmul.f32.gmra.mxu0 %v1928
      %v7372 = vpop.f32.mrf.mxu0
      %v7373 = vadd.f32 %v6960, %v7372
      %7374 = vmatmul.f32.gmra.mxu0 %v1931
      %v7375 = vpop.f32.mrf.mxu0
      %v7376 = vadd.f32 %v6963, %v7375
      %7377 = vmatmul.f32.gmra.mxu0 %v1934
      %v7378 = vpop.f32.mrf.mxu0
      %v7379 = vadd.f32 %v6966, %v7378
      %7380 = vmatmul.f32.gmra.mxu0 %v1937
      %v7381 = vpop.f32.mrf.mxu0
      %v7382 = vadd.f32 %v6969, %v7381
      %7383 = vmatmul.f32.gmra.mxu0 %v1940
      %v7384 = vpop.f32.mrf.mxu0
      %v7385 = vadd.f32 %v6972, %v7384
      %7386 = vmatmul.f32.gmra.mxu0 %v1943
      %v7387 = vpop.f32.mrf.mxu0
      %v7388 = vadd.f32 %v6975, %v7387
      %7389 = vmatmul.f32.gmra.mxu0 %v1946
      %v7390 = vpop.f32.mrf.mxu0
      %v7391 = vadd.f32 %v6978, %v7390
      %7392 = vmatmul.f32.gmra.mxu0 %v1949
      %v7393 = vpop.f32.mrf.mxu0
      %v7394 = vadd.f32 %v6981, %v7393
      %7395 = vmatmul.f32.gmra.mxu0 %v1952
      %v7396 = vpop.f32.mrf.mxu0
      %v7397 = vadd.f32 %v6984, %v7396
      %7398 = vmatmul.f32.gmra.mxu0 %v1955
      %v7399 = vpop.f32.mrf.mxu0
      %v7400 = vadd.f32 %v6987, %v7399
      %7401 = vmatmul.f32.gmra.mxu0 %v1958
      %v7402 = vpop.f32.mrf.mxu0
      %v7403 = vadd.f32 %v6990, %v7402
      %7404 = vmatmul.f32.gmra.mxu0 %v1961
      %v7405 = vpop.f32.mrf.mxu0
      %v7406 = vadd.f32 %v6993, %v7405
      %7407 = vmatmul.f32.gmra.mxu0 %v1964
      %v7408 = vpop.f32.mrf.mxu0
      %v7409 = vadd.f32 %v6996, %v7408
      %7410 = vmatmul.f32.gmra.mxu0 %v1967
      %v7411 = vpop.f32.mrf.mxu0
      %v7412 = vadd.f32 %v6999, %v7411
      %7413 = vmatmul.f32.gmra.mxu0 %v1970
      %v7414 = vpop.f32.mrf.mxu0
      %v7415 = vadd.f32 %v7002, %v7414
      %7416 = vmatmul.f32.gmra.mxu0 %v1973
      %v7417 = vpop.f32.mrf.mxu0
      %v7418 = vadd.f32 %v7005, %v7417
      %7419 = vmatmul.f32.gmra.mxu0 %v1976
      %v7420 = vpop.f32.mrf.mxu0
      %v7421 = vadd.f32 %v7008, %v7420
      %7422 = vmatmul.f32.gmra.mxu0 %v1979
      %v7423 = vpop.f32.mrf.mxu0
      %v7424 = vadd.f32 %v7011, %v7423
      %7425 = vmatmul.f32.gmra.mxu0 %v1982
      %v7426 = vpop.f32.mrf.mxu0
      %v7427 = vadd.f32 %v7014, %v7426
      %7428 = vmatmul.f32.gmra.mxu0 %v1985
      %v7429 = vpop.f32.mrf.mxu0
      %v7430 = vadd.f32 %v7017, %v7429
      %7431 = vmatmul.f32.gmra.mxu0 %v1988
      %v7432 = vpop.f32.mrf.mxu0
      %v7433 = vadd.f32 %v7020, %v7432
      %7434 = vmatmul.f32.gmra.mxu0 %v1991
      %v7435 = vpop.f32.mrf.mxu0
      %v7436 = vadd.f32 %v7023, %v7435
      %7437 = vmatmul.f32.gmra.mxu0 %v1994
      %v7438 = vpop.f32.mrf.mxu0
      %v7439 = vadd.f32 %v7026, %v7438
      %7440 = vmatmul.f32.gmra.mxu0 %v7041
      %v7441 = vpop.f32.mrf.mxu0
      %v7442 = vadd.f32 %v7029, %v7441
      %7443 = vmatmul.f32.gmra.mxu0 %v7044
      %v7444 = vpop.f32.mrf.mxu0
      %v7445 = vadd.f32 %v7032, %v7444
      %7446 = vmatmul.f32.gmra.mxu0 %v7047
      %v7447 = vpop.f32.mrf.mxu0
      %v7448 = vadd.f32 %v7035, %v7447
      %7449 = vmatmul.f32.gmra.mxu0 %v7050
      %v7450 = vpop.f32.mrf.mxu0
      %v7451 = vadd.f32 %v7038, %v7450
      %7452 = vdwg.mxu0
      %v7453 = vadd.f32 %v6499, %v7070
      %v7454 = vadd.f32 %v6500, %v7073
      %v7455 = vadd.f32 %v6501, %v7076
      %v7456 = vadd.f32 %v6502, %v7079
      %v7457 = vadd.f32 %v6503, %v7082
      %v7458 = vadd.f32 %v6504, %v7085
      %v7459 = vadd.f32 %v6505, %v7088
      %v7460 = vadd.f32 %v6506, %v7091
      %v7461 = vadd.f32 %v6507, %v7094
      %v7462 = vadd.f32 %v6508, %v7097
      %v7463 = vadd.f32 %v6509, %v7100
      %v7464 = vadd.f32 %v6510, %v7103
      %v7465 = vadd.f32 %v6511, %v7106
      %v7466 = vadd.f32 %v6512, %v7109
      %v7467 = vadd.f32 %v6513, %v7112
      %v7468 = vadd.f32 %v6514, %v7115
      %v7469 = vadd.f32 %v6515, %v7118
      %v7470 = vadd.f32 %v6516, %v7121
      %v7471 = vadd.f32 %v6517, %v7124
      %v7472 = vadd.f32 %v6518, %v7127
      %v7473 = vadd.f32 %v6519, %v7130
      %v7474 = vadd.f32 %v6520, %v7133
      %v7475 = vadd.f32 %v6521, %v7136
      %v7476 = vadd.f32 %v6522, %v7139
      %v7477 = vadd.f32 %v6523, %v7142
      %v7478 = vadd.f32 %v6524, %v7145
      %v7479 = vadd.f32 %v6525, %v7148
      %v7480 = vadd.f32 %v6526, %v7151
      %v7481 = vadd.f32 %v6527, %v7154
      %v7482 = vadd.f32 %v6528, %v7157
      %v7483 = vadd.f32 %v6529, %v7160
      %v7484 = vadd.f32 %v6530, %v7163
      %v7485 = vadd.f32 %v6531, %v7166
      %v7486 = vadd.f32 %v6532, %v7169
      %v7487 = vadd.f32 %v6533, %v7172
      %v7488 = vadd.f32 %v6534, %v7175
      %v7489 = vadd.f32 %v6535, %v7178
      %v7490 = vadd.f32 %v6536, %v7181
      %v7491 = vadd.f32 %v6537, %v7184
      %v7492 = vadd.f32 %v6538, %v7187
      %v7493 = vadd.f32 %v6539, %v7190
      %v7494 = vadd.f32 %v6540, %v7193
      %v7495 = vadd.f32 %v6541, %v7196
      %v7496 = vadd.f32 %v6542, %v7199
      %v7497 = vadd.f32 %v6543, %v7202
      %v7498 = vadd.f32 %v6544, %v7205
      %v7499 = vadd.f32 %v6545, %v7208
      %v7500 = vadd.f32 %v6546, %v7211
      %v7501 = vadd.f32 %v6547, %v7214
      %v7502 = vadd.f32 %v6548, %v7217
      %v7503 = vadd.f32 %v6549, %v7220
      %v7504 = vadd.f32 %v6550, %v7223
      %v7505 = vadd.f32 %v6551, %v7226
      %v7506 = vadd.f32 %v6552, %v7229
      %v7507 = vadd.f32 %v6553, %v7232
      %v7508 = vadd.f32 %v6554, %v7235
      %v7509 = vadd.f32 %v6555, %v7238
      %v7510 = vadd.f32 %v6556, %v7241
      %v7511 = vadd.f32 %v6557, %v7244
      %v7512 = vadd.f32 %v6558, %v7247
      %v7513 = vadd.f32 %v6559, %v7250
      %v7514 = vadd.f32 %v6560, %v7253
      %v7515 = vadd.f32 %v6561, %v7256
      %v7516 = vadd.f32 %v6562, %v7259
      %v7517 = vadd.f32 %v6563, %v7262
      %v7518 = vadd.f32 %v6564, %v7265
      %v7519 = vadd.f32 %v6565, %v7268
      %v7520 = vadd.f32 %v6566, %v7271
      %v7521 = vadd.f32 %v6567, %v7274
      %v7522 = vadd.f32 %v6568, %v7277
      %v7523 = vadd.f32 %v6569, %v7280
      %v7524 = vadd.f32 %v6570, %v7283
      %v7525 = vadd.f32 %v6571, %v7286
      %v7526 = vadd.f32 %v6572, %v7289
      %v7527 = vadd.f32 %v6573, %v7292
      %v7528 = vadd.f32 %v6574, %v7295
      %v7529 = vadd.f32 %v6575, %v7298
      %v7530 = vadd.f32 %v6576, %v7301
      %v7531 = vadd.f32 %v6577, %v7304
      %v7532 = vadd.f32 %v6578, %v7307
      %v7533 = vadd.f32 %v6579, %v7310
      %v7534 = vadd.f32 %v6580, %v7313
      %v7535 = vadd.f32 %v6581, %v7316
      %v7536 = vadd.f32 %v6582, %v7319
      %v7537 = vadd.f32 %v6583, %v7322
      %v7538 = vadd.f32 %v6584, %v7325
      %v7539 = vadd.f32 %v6585, %v7328
      %v7540 = vadd.f32 %v6586, %v7331
      %v7541 = vadd.f32 %v6587, %v7334
      %v7542 = vadd.f32 %v6588, %v7337
      %v7543 = vadd.f32 %v6589, %v7340
      %v7544 = vadd.f32 %v6590, %v7343
      %v7545 = vadd.f32 %v6591, %v7346
      %v7546 = vadd.f32 %v6592, %v7349
      %v7547 = vadd.f32 %v6593, %v7352
      %v7548 = vadd.f32 %v6594, %v7355
      %v7549 = vadd.f32 %v6595, %v7358
      %v7550 = vadd.f32 %v6596, %v7361
      %v7551 = vadd.f32 %v6597, %v7364
      %v7552 = vadd.f32 %v6598, %v7367
      %v7553 = vadd.f32 %v6599, %v7370
      %v7554 = vadd.f32 %v6600, %v7373
      %v7555 = vadd.f32 %v6601, %v7376
      %v7556 = vadd.f32 %v6602, %v7379
      %v7557 = vadd.f32 %v6603, %v7382
      %v7558 = vadd.f32 %v6604, %v7385
      %v7559 = vadd.f32 %v6605, %v7388
      %v7560 = vadd.f32 %v6606, %v7391
      %v7561 = vadd.f32 %v6607, %v7394
      %v7562 = vadd.f32 %v6608, %v7397
      %v7563 = vadd.f32 %v6609, %v7400
      %v7564 = vadd.f32 %v6610, %v7403
      %v7565 = vadd.f32 %v6611, %v7406
      %v7566 = vadd.f32 %v6612, %v7409
      %v7567 = vadd.f32 %v6613, %v7412
      %v7568 = vadd.f32 %v6614, %v7415
      %v7569 = vadd.f32 %v6615, %v7418
      %v7570 = vadd.f32 %v6616, %v7421
      %v7571 = vadd.f32 %v6617, %v7424
      %v7572 = vadd.f32 %v6618, %v7427
      %v7573 = vadd.f32 %v6619, %v7430
      %v7574 = vadd.f32 %v6620, %v7433
      %v7575 = vadd.f32 %v6621, %v7436
      %v7576 = vadd.f32 %v6622, %v7439
      %v7577 = vadd.f32 %v6623, %v7442
      %v7578 = vadd.f32 %v6624, %v7445
      %v7579 = vadd.f32 %v6625, %v7448
      %v7580 = vadd.f32 %v6626, %v7451
      %v7582 = vrot.slane %v628, 1
      %v7583 = vrot.slane %v629, 1
      %v7584 = vsel %vm2557, %v7582, %v7583
      %v7585 = vrot.slane %v630, 1
      %v7586 = vsel %vm2557, %v7583, %v7585
      %v7587 = vrot.slane %v631, 1
      %v7588 = vsel %vm2557, %v7585, %v7587
      %v7589 = vrot.slane %v632, 1
      %v7590 = vsel %vm2557, %v7587, %v7589
      %v7592 = vrot.slane %v798, 1
      %v7593 = vrot.slane %v799, 1
      %v7594 = vsel %vm2557, %v7592, %v7593
      %v7595 = vrot.slane %v800, 1
      %v7596 = vsel %vm2557, %v7593, %v7595
      %v7597 = vrot.slane %v801, 1
      %v7598 = vsel %vm2557, %v7595, %v7597
      %v7599 = vrot.slane %v802, 1
      %v7600 = vsel %vm2557, %v7597, %v7599
      %v7601 = vsel %vm826, %v7594, 0
      %v7603 = vsel %vm826, %v7596, 0
      %v7605 = vsel %vm826, %v7598, 0
      %v7607 = vsel %vm826, %v7600, 0
      %7609 = vmatpush.msra.mxu0 0.0
      %7610 = vmatpush.msra.mxu0 0.0
      %7611 = vmatpush.msra.mxu0 0.0
      %7612 = vmatpush.msra.mxu0 0.0
      %7613 = vmatpush.msra.mxu0 0.0
      %7614 = vmatpush.msra.mxu0 0.0
      %7615 = vmatpush.msra.mxu0 0.0
      %7616 = vmatpush.msra.mxu0 0.0
      %7617 = vmatpush.msra.mxu0 0.0
      %7618 = vmatpush.msra.mxu0 0.0
      %7619 = vmatpush.msra.mxu0 0.0
      %7620 = vmatpush.msra.mxu0 0.0
      %7621 = vmatpush.msra.mxu0 0.0
      %7622 = vmatpush.msra.mxu0 0.0
      %7623 = vmatpush.msra.mxu0 0.0
      %7624 = vmatpush.msra.mxu0 %v821
      %7625 = vmatmul.f32.gmra.mxu0 %v3174
      %v7626 = vpop.f32.mrf.mxu0
      %v7627 = vadd.f32 0.0, %v7626
      %7628 = vmatmul.f32.gmra.mxu0 %v3176
      %v7629 = vpop.f32.mrf.mxu0
      %v7630 = vadd.f32 0.0, %v7629
      %7631 = vmatmul.f32.gmra.mxu0 %v3178
      %v7632 = vpop.f32.mrf.mxu0
      %v7633 = vadd.f32 0.0, %v7632
      %7634 = vmatmul.f32.gmra.mxu0 %v3180
      %v7635 = vpop.f32.mrf.mxu0
      %v7636 = vadd.f32 0.0, %v7635
      %7637 = vmatmul.f32.gmra.mxu0 %v3182
      %v7638 = vpop.f32.mrf.mxu0
      %v7639 = vadd.f32 0.0, %v7638
      %7640 = vmatmul.f32.gmra.mxu0 %v3184
      %v7641 = vpop.f32.mrf.mxu0
      %v7642 = vadd.f32 0.0, %v7641
      %7643 = vmatmul.f32.gmra.mxu0 %v3186
      %v7644 = vpop.f32.mrf.mxu0
      %v7645 = vadd.f32 0.0, %v7644
      %7646 = vmatmul.f32.gmra.mxu0 %v3188
      %v7647 = vpop.f32.mrf.mxu0
      %v7648 = vadd.f32 0.0, %v7647
      %7649 = vmatmul.f32.gmra.mxu0 %v3190
      %v7650 = vpop.f32.mrf.mxu0
      %v7651 = vadd.f32 0.0, %v7650
      %7652 = vmatmul.f32.gmra.mxu0 %v3192
      %v7653 = vpop.f32.mrf.mxu0
      %v7654 = vadd.f32 0.0, %v7653
      %7655 = vmatmul.f32.gmra.mxu0 %v3194
      %v7656 = vpop.f32.mrf.mxu0
      %v7657 = vadd.f32 0.0, %v7656
      %7658 = vmatmul.f32.gmra.mxu0 %v3196
      %v7659 = vpop.f32.mrf.mxu0
      %v7660 = vadd.f32 0.0, %v7659
      %7661 = vmatmul.f32.gmra.mxu0 %v3198
      %v7662 = vpop.f32.mrf.mxu0
      %v7663 = vadd.f32 0.0, %v7662
      %7664 = vmatmul.f32.gmra.mxu0 %v3200
      %v7665 = vpop.f32.mrf.mxu0
      %v7666 = vadd.f32 0.0, %v7665
      %7667 = vmatmul.f32.gmra.mxu0 %v3202
      %v7668 = vpop.f32.mrf.mxu0
      %v7669 = vadd.f32 0.0, %v7668
      %7670 = vmatmul.f32.gmra.mxu0 %v3204
      %v7671 = vpop.f32.mrf.mxu0
      %v7672 = vadd.f32 0.0, %v7671
      %7673 = vmatmul.f32.gmra.mxu0 %v3206
      %v7674 = vpop.f32.mrf.mxu0
      %v7675 = vadd.f32 0.0, %v7674
      %7676 = vmatmul.f32.gmra.mxu0 %v3208
      %v7677 = vpop.f32.mrf.mxu0
      %v7678 = vadd.f32 0.0, %v7677
      %7679 = vmatmul.f32.gmra.mxu0 %v3210
      %v7680 = vpop.f32.mrf.mxu0
      %v7681 = vadd.f32 0.0, %v7680
      %7682 = vmatmul.f32.gmra.mxu0 %v3212
      %v7683 = vpop.f32.mrf.mxu0
      %v7684 = vadd.f32 0.0, %v7683
      %7685 = vmatmul.f32.gmra.mxu0 %v3214
      %v7686 = vpop.f32.mrf.mxu0
      %v7687 = vadd.f32 0.0, %v7686
      %7688 = vmatmul.f32.gmra.mxu0 %v3216
      %v7689 = vpop.f32.mrf.mxu0
      %v7690 = vadd.f32 0.0, %v7689
      %7691 = vmatmul.f32.gmra.mxu0 %v3218
      %v7692 = vpop.f32.mrf.mxu0
      %v7693 = vadd.f32 0.0, %v7692
      %7694 = vmatmul.f32.gmra.mxu0 %v3220
      %v7695 = vpop.f32.mrf.mxu0
      %v7696 = vadd.f32 0.0, %v7695
      %7697 = vmatmul.f32.gmra.mxu0 %v3222
      %v7698 = vpop.f32.mrf.mxu0
      %v7699 = vadd.f32 0.0, %v7698
      %7700 = vmatmul.f32.gmra.mxu0 %v3224
      %v7701 = vpop.f32.mrf.mxu0
      %v7702 = vadd.f32 0.0, %v7701
      %7703 = vmatmul.f32.gmra.mxu0 %v3226
      %v7704 = vpop.f32.mrf.mxu0
      %v7705 = vadd.f32 0.0, %v7704
      %7706 = vmatmul.f32.gmra.mxu0 %v3228
      %v7707 = vpop.f32.mrf.mxu0
      %v7708 = vadd.f32 0.0, %v7707
      %7709 = vmatmul.f32.gmra.mxu0 %v3230
      %v7710 = vpop.f32.mrf.mxu0
      %v7711 = vadd.f32 0.0, %v7710
      %7712 = vmatmul.f32.gmra.mxu0 %v3232
      %v7713 = vpop.f32.mrf.mxu0
      %v7714 = vadd.f32 0.0, %v7713
      %7715 = vmatmul.f32.gmra.mxu0 %v3234
      %v7716 = vpop.f32.mrf.mxu0
      %v7717 = vadd.f32 0.0, %v7716
      %7718 = vmatmul.f32.gmra.mxu0 %v3236
      %v7719 = vpop.f32.mrf.mxu0
      %v7720 = vadd.f32 0.0, %v7719
      %7721 = vmatmul.f32.gmra.mxu0 %v3238
      %v7722 = vpop.f32.mrf.mxu0
      %v7723 = vadd.f32 0.0, %v7722
      %7724 = vmatmul.f32.gmra.mxu0 %v3240
      %v7725 = vpop.f32.mrf.mxu0
      %v7726 = vadd.f32 0.0, %v7725
      %7727 = vmatmul.f32.gmra.mxu0 %v3242
      %v7728 = vpop.f32.mrf.mxu0
      %v7729 = vadd.f32 0.0, %v7728
      %7730 = vmatmul.f32.gmra.mxu0 %v3244
      %v7731 = vpop.f32.mrf.mxu0
      %v7732 = vadd.f32 0.0, %v7731
      %7733 = vmatmul.f32.gmra.mxu0 %v3246
      %v7734 = vpop.f32.mrf.mxu0
      %v7735 = vadd.f32 0.0, %v7734
      %7736 = vmatmul.f32.gmra.mxu0 %v3248
      %v7737 = vpop.f32.mrf.mxu0
      %v7738 = vadd.f32 0.0, %v7737
      %7739 = vmatmul.f32.gmra.mxu0 %v3250
      %v7740 = vpop.f32.mrf.mxu0
      %v7741 = vadd.f32 0.0, %v7740
      %7742 = vmatmul.f32.gmra.mxu0 %v3252
      %v7743 = vpop.f32.mrf.mxu0
      %v7744 = vadd.f32 0.0, %v7743
      %7745 = vmatmul.f32.gmra.mxu0 %v3254
      %v7746 = vpop.f32.mrf.mxu0
      %v7747 = vadd.f32 0.0, %v7746
      %7748 = vmatmul.f32.gmra.mxu0 %v3256
      %v7749 = vpop.f32.mrf.mxu0
      %v7750 = vadd.f32 0.0, %v7749
      %7751 = vmatmul.f32.gmra.mxu0 %v3258
      %v7752 = vpop.f32.mrf.mxu0
      %v7753 = vadd.f32 0.0, %v7752
      %7754 = vmatmul.f32.gmra.mxu0 %v3260
      %v7755 = vpop.f32.mrf.mxu0
      %v7756 = vadd.f32 0.0, %v7755
      %7757 = vmatmul.f32.gmra.mxu0 %v3262
      %v7758 = vpop.f32.mrf.mxu0
      %v7759 = vadd.f32 0.0, %v7758
      %7760 = vmatmul.f32.gmra.mxu0 %v3264
      %v7761 = vpop.f32.mrf.mxu0
      %v7762 = vadd.f32 0.0, %v7761
      %7763 = vmatmul.f32.gmra.mxu0 %v3266
      %v7764 = vpop.f32.mrf.mxu0
      %v7765 = vadd.f32 0.0, %v7764
      %7766 = vmatmul.f32.gmra.mxu0 %v3268
      %v7767 = vpop.f32.mrf.mxu0
      %v7768 = vadd.f32 0.0, %v7767
      %7769 = vmatmul.f32.gmra.mxu0 %v3270
      %v7770 = vpop.f32.mrf.mxu0
      %v7771 = vadd.f32 0.0, %v7770
      %7772 = vmatmul.f32.gmra.mxu0 %v3272
      %v7773 = vpop.f32.mrf.mxu0
      %v7774 = vadd.f32 0.0, %v7773
      %7775 = vmatmul.f32.gmra.mxu0 %v3274
      %v7776 = vpop.f32.mrf.mxu0
      %v7777 = vadd.f32 0.0, %v7776
      %7778 = vmatmul.f32.gmra.mxu0 %v3276
      %v7779 = vpop.f32.mrf.mxu0
      %v7780 = vadd.f32 0.0, %v7779
      %7781 = vmatmul.f32.gmra.mxu0 %v3278
      %v7782 = vpop.f32.mrf.mxu0
      %v7783 = vadd.f32 0.0, %v7782
      %7784 = vmatmul.f32.gmra.mxu0 %v3280
      %v7785 = vpop.f32.mrf.mxu0
      %v7786 = vadd.f32 0.0, %v7785
      %7787 = vmatmul.f32.gmra.mxu0 %v3282
      %v7788 = vpop.f32.mrf.mxu0
      %v7789 = vadd.f32 0.0, %v7788
      %7790 = vmatmul.f32.gmra.mxu0 %v3284
      %v7791 = vpop.f32.mrf.mxu0
      %v7792 = vadd.f32 0.0, %v7791
      %7793 = vmatmul.f32.gmra.mxu0 %v3286
      %v7794 = vpop.f32.mrf.mxu0
      %v7795 = vadd.f32 0.0, %v7794
      %7796 = vmatmul.f32.gmra.mxu0 %v3288
      %v7797 = vpop.f32.mrf.mxu0
      %v7798 = vadd.f32 0.0, %v7797
      %7799 = vmatmul.f32.gmra.mxu0 %v3290
      %v7800 = vpop.f32.mrf.mxu0
      %v7801 = vadd.f32 0.0, %v7800
      %7802 = vmatmul.f32.gmra.mxu0 %v3292
      %v7803 = vpop.f32.mrf.mxu0
      %v7804 = vadd.f32 0.0, %v7803
      %7805 = vmatmul.f32.gmra.mxu0 %v3294
      %v7806 = vpop.f32.mrf.mxu0
      %v7807 = vadd.f32 0.0, %v7806
      %7808 = vmatmul.f32.gmra.mxu0 %v3296
      %v7809 = vpop.f32.mrf.mxu0
      %v7810 = vadd.f32 0.0, %v7809
      %7811 = vmatmul.f32.gmra.mxu0 %v3298
      %v7812 = vpop.f32.mrf.mxu0
      %v7813 = vadd.f32 0.0, %v7812
      %7814 = vmatmul.f32.gmra.mxu0 %v3300
      %v7815 = vpop.f32.mrf.mxu0
      %v7816 = vadd.f32 0.0, %v7815
      %7817 = vmatmul.f32.gmra.mxu0 %v3302
      %v7818 = vpop.f32.mrf.mxu0
      %v7819 = vadd.f32 0.0, %v7818
      %7820 = vmatmul.f32.gmra.mxu0 %v3304
      %v7821 = vpop.f32.mrf.mxu0
      %v7822 = vadd.f32 0.0, %v7821
      %7823 = vmatmul.f32.gmra.mxu0 %v3306
      %v7824 = vpop.f32.mrf.mxu0
      %v7825 = vadd.f32 0.0, %v7824
      %7826 = vmatmul.f32.gmra.mxu0 %v3308
      %v7827 = vpop.f32.mrf.mxu0
      %v7828 = vadd.f32 0.0, %v7827
      %7829 = vmatmul.f32.gmra.mxu0 %v3310
      %v7830 = vpop.f32.mrf.mxu0
      %v7831 = vadd.f32 0.0, %v7830
      %7832 = vmatmul.f32.gmra.mxu0 %v3312
      %v7833 = vpop.f32.mrf.mxu0
      %v7834 = vadd.f32 0.0, %v7833
      %7835 = vmatmul.f32.gmra.mxu0 %v3314
      %v7836 = vpop.f32.mrf.mxu0
      %v7837 = vadd.f32 0.0, %v7836
      %7838 = vmatmul.f32.gmra.mxu0 %v3316
      %v7839 = vpop.f32.mrf.mxu0
      %v7840 = vadd.f32 0.0, %v7839
      %7841 = vmatmul.f32.gmra.mxu0 %v3318
      %v7842 = vpop.f32.mrf.mxu0
      %v7843 = vadd.f32 0.0, %v7842
      %7844 = vmatmul.f32.gmra.mxu0 %v3320
      %v7845 = vpop.f32.mrf.mxu0
      %v7846 = vadd.f32 0.0, %v7845
      %7847 = vmatmul.f32.gmra.mxu0 %v3322
      %v7848 = vpop.f32.mrf.mxu0
      %v7849 = vadd.f32 0.0, %v7848
      %7850 = vmatmul.f32.gmra.mxu0 %v3324
      %v7851 = vpop.f32.mrf.mxu0
      %v7852 = vadd.f32 0.0, %v7851
      %7853 = vmatmul.f32.gmra.mxu0 %v3326
      %v7854 = vpop.f32.mrf.mxu0
      %v7855 = vadd.f32 0.0, %v7854
      %7856 = vmatmul.f32.gmra.mxu0 %v3328
      %v7857 = vpop.f32.mrf.mxu0
      %v7858 = vadd.f32 0.0, %v7857
      %7859 = vmatmul.f32.gmra.mxu0 %v3330
      %v7860 = vpop.f32.mrf.mxu0
      %v7861 = vadd.f32 0.0, %v7860
      %7862 = vmatmul.f32.gmra.mxu0 %v3332
      %v7863 = vpop.f32.mrf.mxu0
      %v7864 = vadd.f32 0.0, %v7863
      %7865 = vmatmul.f32.gmra.mxu0 %v3334
      %v7866 = vpop.f32.mrf.mxu0
      %v7867 = vadd.f32 0.0, %v7866
      %7868 = vmatmul.f32.gmra.mxu0 %v3336
      %v7869 = vpop.f32.mrf.mxu0
      %v7870 = vadd.f32 0.0, %v7869
      %7871 = vmatmul.f32.gmra.mxu0 %v3338
      %v7872 = vpop.f32.mrf.mxu0
      %v7873 = vadd.f32 0.0, %v7872
      %7874 = vmatmul.f32.gmra.mxu0 %v3340
      %v7875 = vpop.f32.mrf.mxu0
      %v7876 = vadd.f32 0.0, %v7875
      %7877 = vmatmul.f32.gmra.mxu0 %v3342
      %v7878 = vpop.f32.mrf.mxu0
      %v7879 = vadd.f32 0.0, %v7878
      %7880 = vmatmul.f32.gmra.mxu0 %v3344
      %v7881 = vpop.f32.mrf.mxu0
      %v7882 = vadd.f32 0.0, %v7881
      %7883 = vmatmul.f32.gmra.mxu0 %v3346
      %v7884 = vpop.f32.mrf.mxu0
      %v7885 = vadd.f32 0.0, %v7884
      %7886 = vmatmul.f32.gmra.mxu0 %v3348
      %v7887 = vpop.f32.mrf.mxu0
      %v7888 = vadd.f32 0.0, %v7887
      %7889 = vmatmul.f32.gmra.mxu0 %v3350
      %v7890 = vpop.f32.mrf.mxu0
      %v7891 = vadd.f32 0.0, %v7890
      %7892 = vmatmul.f32.gmra.mxu0 %v3352
      %v7893 = vpop.f32.mrf.mxu0
      %v7894 = vadd.f32 0.0, %v7893
      %7895 = vmatmul.f32.gmra.mxu0 %v3354
      %v7896 = vpop.f32.mrf.mxu0
      %v7897 = vadd.f32 0.0, %v7896
      %7898 = vmatmul.f32.gmra.mxu0 %v3356
      %v7899 = vpop.f32.mrf.mxu0
      %v7900 = vadd.f32 0.0, %v7899
      %7901 = vmatmul.f32.gmra.mxu0 %v3358
      %v7902 = vpop.f32.mrf.mxu0
      %v7903 = vadd.f32 0.0, %v7902
      %7904 = vmatmul.f32.gmra.mxu0 %v3360
      %v7905 = vpop.f32.mrf.mxu0
      %v7906 = vadd.f32 0.0, %v7905
      %7907 = vmatmul.f32.gmra.mxu0 %v3362
      %v7908 = vpop.f32.mrf.mxu0
      %v7909 = vadd.f32 0.0, %v7908
      %7910 = vmatmul.f32.gmra.mxu0 %v3364
      %v7911 = vpop.f32.mrf.mxu0
      %v7912 = vadd.f32 0.0, %v7911
      %7913 = vmatmul.f32.gmra.mxu0 %v3366
      %v7914 = vpop.f32.mrf.mxu0
      %v7915 = vadd.f32 0.0, %v7914
      %7916 = vmatmul.f32.gmra.mxu0 %v3368
      %v7917 = vpop.f32.mrf.mxu0
      %v7918 = vadd.f32 0.0, %v7917
      %7919 = vmatmul.f32.gmra.mxu0 %v3370
      %v7920 = vpop.f32.mrf.mxu0
      %v7921 = vadd.f32 0.0, %v7920
      %7922 = vmatmul.f32.gmra.mxu0 %v3372
      %v7923 = vpop.f32.mrf.mxu0
      %v7924 = vadd.f32 0.0, %v7923
      %7925 = vmatmul.f32.gmra.mxu0 %v3374
      %v7926 = vpop.f32.mrf.mxu0
      %v7927 = vadd.f32 0.0, %v7926
      %7928 = vmatmul.f32.gmra.mxu0 %v3376
      %v7929 = vpop.f32.mrf.mxu0
      %v7930 = vadd.f32 0.0, %v7929
      %7931 = vmatmul.f32.gmra.mxu0 %v3378
      %v7932 = vpop.f32.mrf.mxu0
      %v7933 = vadd.f32 0.0, %v7932
      %7934 = vmatmul.f32.gmra.mxu0 %v3380
      %v7935 = vpop.f32.mrf.mxu0
      %v7936 = vadd.f32 0.0, %v7935
      %7937 = vmatmul.f32.gmra.mxu0 %v3382
      %v7938 = vpop.f32.mrf.mxu0
      %v7939 = vadd.f32 0.0, %v7938
      %7940 = vmatmul.f32.gmra.mxu0 %v3384
      %v7941 = vpop.f32.mrf.mxu0
      %v7942 = vadd.f32 0.0, %v7941
      %7943 = vmatmul.f32.gmra.mxu0 %v3386
      %v7944 = vpop.f32.mrf.mxu0
      %v7945 = vadd.f32 0.0, %v7944
      %7946 = vmatmul.f32.gmra.mxu0 %v3388
      %v7947 = vpop.f32.mrf.mxu0
      %v7948 = vadd.f32 0.0, %v7947
      %7949 = vmatmul.f32.gmra.mxu0 %v3390
      %v7950 = vpop.f32.mrf.mxu0
      %v7951 = vadd.f32 0.0, %v7950
      %7952 = vmatmul.f32.gmra.mxu0 %v3392
      %v7953 = vpop.f32.mrf.mxu0
      %v7954 = vadd.f32 0.0, %v7953
      %7955 = vmatmul.f32.gmra.mxu0 %v3394
      %v7956 = vpop.f32.mrf.mxu0
      %v7957 = vadd.f32 0.0, %v7956
      %7958 = vmatmul.f32.gmra.mxu0 %v3396
      %v7959 = vpop.f32.mrf.mxu0
      %v7960 = vadd.f32 0.0, %v7959
      %7961 = vmatmul.f32.gmra.mxu0 %v3398
      %v7962 = vpop.f32.mrf.mxu0
      %v7963 = vadd.f32 0.0, %v7962
      %7964 = vmatmul.f32.gmra.mxu0 %v3400
      %v7965 = vpop.f32.mrf.mxu0
      %v7966 = vadd.f32 0.0, %v7965
      %7967 = vmatmul.f32.gmra.mxu0 %v3402
      %v7968 = vpop.f32.mrf.mxu0
      %v7969 = vadd.f32 0.0, %v7968
      %7970 = vmatmul.f32.gmra.mxu0 %v3404
      %v7971 = vpop.f32.mrf.mxu0
      %v7972 = vadd.f32 0.0, %v7971
      %7973 = vmatmul.f32.gmra.mxu0 %v3406
      %v7974 = vpop.f32.mrf.mxu0
      %v7975 = vadd.f32 0.0, %v7974
      %7976 = vmatmul.f32.gmra.mxu0 %v3408
      %v7977 = vpop.f32.mrf.mxu0
      %v7978 = vadd.f32 0.0, %v7977
      %7979 = vmatmul.f32.gmra.mxu0 %v3410
      %v7980 = vpop.f32.mrf.mxu0
      %v7981 = vadd.f32 0.0, %v7980
      %7982 = vmatmul.f32.gmra.mxu0 %v3412
      %v7983 = vpop.f32.mrf.mxu0
      %v7984 = vadd.f32 0.0, %v7983
      %7985 = vmatmul.f32.gmra.mxu0 %v3414
      %v7986 = vpop.f32.mrf.mxu0
      %v7987 = vadd.f32 0.0, %v7986
      %7988 = vmatmul.f32.gmra.mxu0 %v3416
      %v7989 = vpop.f32.mrf.mxu0
      %v7990 = vadd.f32 0.0, %v7989
      %7991 = vmatmul.f32.gmra.mxu0 %v3418
      %v7992 = vpop.f32.mrf.mxu0
      %v7993 = vadd.f32 0.0, %v7992
      %7994 = vmatmul.f32.gmra.mxu0 %v3420
      %v7995 = vpop.f32.mrf.mxu0
      %v7996 = vadd.f32 0.0, %v7995
      %7997 = vmatmul.f32.gmra.mxu0 %v7601
      %v7998 = vpop.f32.mrf.mxu0
      %v7999 = vadd.f32 0.0, %v7998
      %8000 = vmatmul.f32.gmra.mxu0 %v7603
      %v8001 = vpop.f32.mrf.mxu0
      %v8002 = vadd.f32 0.0, %v8001
      %8003 = vmatmul.f32.gmra.mxu0 %v7605
      %v8004 = vpop.f32.mrf.mxu0
      %v8005 = vadd.f32 0.0, %v8004
      %8006 = vmatmul.f32.gmra.mxu0 %v7607
      %v8007 = vpop.f32.mrf.mxu0
      %v8008 = vadd.f32 0.0, %v8007
      %8009 = vdwg.mxu0
      %v8010 = vsel %vm826, %v7584, 0
      %v8012 = vsel %vm826, %v7586, 0
      %v8014 = vsel %vm826, %v7588, 0
      %v8016 = vsel %vm826, %v7590, 0
      %8018 = vmatpush.msra.mxu0 0.0
      %8019 = vmatpush.msra.mxu0 0.0
      %8020 = vmatpush.msra.mxu0 0.0
      %8021 = vmatpush.msra.mxu0 0.0
      %8022 = vmatpush.msra.mxu0 0.0
      %8023 = vmatpush.msra.mxu0 0.0
      %8024 = vmatpush.msra.mxu0 0.0
      %8025 = vmatpush.msra.mxu0 0.0
      %8026 = vmatpush.msra.mxu0 0.0
      %8027 = vmatpush.msra.mxu0 0.0
      %8028 = vmatpush.msra.mxu0 0.0
      %8029 = vmatpush.msra.mxu0 0.0
      %8030 = vmatpush.msra.mxu0 0.0
      %8031 = vmatpush.msra.mxu0 0.0
      %8032 = vmatpush.msra.mxu0 0.0
      %8033 = vmatpush.msra.mxu0 %v812
      %8034 = vmatmul.f32.gmra.mxu0 %v3831
      %v8035 = vpop.f32.mrf.mxu0
      %v8036 = vadd.f32 %v7627, %v8035
      %8037 = vmatmul.f32.gmra.mxu0 %v3833
      %v8038 = vpop.f32.mrf.mxu0
      %v8039 = vadd.f32 %v7630, %v8038
      %8040 = vmatmul.f32.gmra.mxu0 %v3835
      %v8041 = vpop.f32.mrf.mxu0
      %v8042 = vadd.f32 %v7633, %v8041
      %8043 = vmatmul.f32.gmra.mxu0 %v3837
      %v8044 = vpop.f32.mrf.mxu0
      %v8045 = vadd.f32 %v7636, %v8044
      %8046 = vmatmul.f32.gmra.mxu0 %v3839
      %v8047 = vpop.f32.mrf.mxu0
      %v8048 = vadd.f32 %v7639, %v8047
      %8049 = vmatmul.f32.gmra.mxu0 %v3841
      %v8050 = vpop.f32.mrf.mxu0
      %v8051 = vadd.f32 %v7642, %v8050
      %8052 = vmatmul.f32.gmra.mxu0 %v3843
      %v8053 = vpop.f32.mrf.mxu0
      %v8054 = vadd.f32 %v7645, %v8053
      %8055 = vmatmul.f32.gmra.mxu0 %v3845
      %v8056 = vpop.f32.mrf.mxu0
      %v8057 = vadd.f32 %v7648, %v8056
      %8058 = vmatmul.f32.gmra.mxu0 %v3847
      %v8059 = vpop.f32.mrf.mxu0
      %v8060 = vadd.f32 %v7651, %v8059
      %8061 = vmatmul.f32.gmra.mxu0 %v3849
      %v8062 = vpop.f32.mrf.mxu0
      %v8063 = vadd.f32 %v7654, %v8062
      %8064 = vmatmul.f32.gmra.mxu0 %v3851
      %v8065 = vpop.f32.mrf.mxu0
      %v8066 = vadd.f32 %v7657, %v8065
      %8067 = vmatmul.f32.gmra.mxu0 %v3853
      %v8068 = vpop.f32.mrf.mxu0
      %v8069 = vadd.f32 %v7660, %v8068
      %8070 = vmatmul.f32.gmra.mxu0 %v3855
      %v8071 = vpop.f32.mrf.mxu0
      %v8072 = vadd.f32 %v7663, %v8071
      %8073 = vmatmul.f32.gmra.mxu0 %v3857
      %v8074 = vpop.f32.mrf.mxu0
      %v8075 = vadd.f32 %v7666, %v8074
      %8076 = vmatmul.f32.gmra.mxu0 %v3859
      %v8077 = vpop.f32.mrf.mxu0
      %v8078 = vadd.f32 %v7669, %v8077
      %8079 = vmatmul.f32.gmra.mxu0 %v3861
      %v8080 = vpop.f32.mrf.mxu0
      %v8081 = vadd.f32 %v7672, %v8080
      %8082 = vmatmul.f32.gmra.mxu0 %v3863
      %v8083 = vpop.f32.mrf.mxu0
      %v8084 = vadd.f32 %v7675, %v8083
      %8085 = vmatmul.f32.gmra.mxu0 %v3865
      %v8086 = vpop.f32.mrf.mxu0
      %v8087 = vadd.f32 %v7678, %v8086
      %8088 = vmatmul.f32.gmra.mxu0 %v3867
      %v8089 = vpop.f32.mrf.mxu0
      %v8090 = vadd.f32 %v7681, %v8089
      %8091 = vmatmul.f32.gmra.mxu0 %v3869
      %v8092 = vpop.f32.mrf.mxu0
      %v8093 = vadd.f32 %v7684, %v8092
      %8094 = vmatmul.f32.gmra.mxu0 %v3871
      %v8095 = vpop.f32.mrf.mxu0
      %v8096 = vadd.f32 %v7687, %v8095
      %8097 = vmatmul.f32.gmra.mxu0 %v3873
      %v8098 = vpop.f32.mrf.mxu0
      %v8099 = vadd.f32 %v7690, %v8098
      %8100 = vmatmul.f32.gmra.mxu0 %v3875
      %v8101 = vpop.f32.mrf.mxu0
      %v8102 = vadd.f32 %v7693, %v8101
      %8103 = vmatmul.f32.gmra.mxu0 %v3877
      %v8104 = vpop.f32.mrf.mxu0
      %v8105 = vadd.f32 %v7696, %v8104
      %8106 = vmatmul.f32.gmra.mxu0 %v3879
      %v8107 = vpop.f32.mrf.mxu0
      %v8108 = vadd.f32 %v7699, %v8107
      %8109 = vmatmul.f32.gmra.mxu0 %v3881
      %v8110 = vpop.f32.mrf.mxu0
      %v8111 = vadd.f32 %v7702, %v8110
      %8112 = vmatmul.f32.gmra.mxu0 %v3883
      %v8113 = vpop.f32.mrf.mxu0
      %v8114 = vadd.f32 %v7705, %v8113
      %8115 = vmatmul.f32.gmra.mxu0 %v3885
      %v8116 = vpop.f32.mrf.mxu0
      %v8117 = vadd.f32 %v7708, %v8116
      %8118 = vmatmul.f32.gmra.mxu0 %v3887
      %v8119 = vpop.f32.mrf.mxu0
      %v8120 = vadd.f32 %v7711, %v8119
      %8121 = vmatmul.f32.gmra.mxu0 %v3889
      %v8122 = vpop.f32.mrf.mxu0
      %v8123 = vadd.f32 %v7714, %v8122
      %8124 = vmatmul.f32.gmra.mxu0 %v3891
      %v8125 = vpop.f32.mrf.mxu0
      %v8126 = vadd.f32 %v7717, %v8125
      %8127 = vmatmul.f32.gmra.mxu0 %v3893
      %v8128 = vpop.f32.mrf.mxu0
      %v8129 = vadd.f32 %v7720, %v8128
      %8130 = vmatmul.f32.gmra.mxu0 %v3895
      %v8131 = vpop.f32.mrf.mxu0
      %v8132 = vadd.f32 %v7723, %v8131
      %8133 = vmatmul.f32.gmra.mxu0 %v3897
      %v8134 = vpop.f32.mrf.mxu0
      %v8135 = vadd.f32 %v7726, %v8134
      %8136 = vmatmul.f32.gmra.mxu0 %v3899
      %v8137 = vpop.f32.mrf.mxu0
      %v8138 = vadd.f32 %v7729, %v8137
      %8139 = vmatmul.f32.gmra.mxu0 %v3901
      %v8140 = vpop.f32.mrf.mxu0
      %v8141 = vadd.f32 %v7732, %v8140
      %8142 = vmatmul.f32.gmra.mxu0 %v3903
      %v8143 = vpop.f32.mrf.mxu0
      %v8144 = vadd.f32 %v7735, %v8143
      %8145 = vmatmul.f32.gmra.mxu0 %v3905
      %v8146 = vpop.f32.mrf.mxu0
      %v8147 = vadd.f32 %v7738, %v8146
      %8148 = vmatmul.f32.gmra.mxu0 %v3907
      %v8149 = vpop.f32.mrf.mxu0
      %v8150 = vadd.f32 %v7741, %v8149
      %8151 = vmatmul.f32.gmra.mxu0 %v3909
      %v8152 = vpop.f32.mrf.mxu0
      %v8153 = vadd.f32 %v7744, %v8152
      %8154 = vmatmul.f32.gmra.mxu0 %v3911
      %v8155 = vpop.f32.mrf.mxu0
      %v8156 = vadd.f32 %v7747, %v8155
      %8157 = vmatmul.f32.gmra.mxu0 %v3913
      %v8158 = vpop.f32.mrf.mxu0
      %v8159 = vadd.f32 %v7750, %v8158
      %8160 = vmatmul.f32.gmra.mxu0 %v3915
      %v8161 = vpop.f32.mrf.mxu0
      %v8162 = vadd.f32 %v7753, %v8161
      %8163 = vmatmul.f32.gmra.mxu0 %v3917
      %v8164 = vpop.f32.mrf.mxu0
      %v8165 = vadd.f32 %v7756, %v8164
      %8166 = vmatmul.f32.gmra.mxu0 %v3919
      %v8167 = vpop.f32.mrf.mxu0
      %v8168 = vadd.f32 %v7759, %v8167
      %8169 = vmatmul.f32.gmra.mxu0 %v3921
      %v8170 = vpop.f32.mrf.mxu0
      %v8171 = vadd.f32 %v7762, %v8170
      %8172 = vmatmul.f32.gmra.mxu0 %v3923
      %v8173 = vpop.f32.mrf.mxu0
      %v8174 = vadd.f32 %v7765, %v8173
      %8175 = vmatmul.f32.gmra.mxu0 %v3925
      %v8176 = vpop.f32.mrf.mxu0
      %v8177 = vadd.f32 %v7768, %v8176
      %8178 = vmatmul.f32.gmra.mxu0 %v3927
      %v8179 = vpop.f32.mrf.mxu0
      %v8180 = vadd.f32 %v7771, %v8179
      %8181 = vmatmul.f32.gmra.mxu0 %v3929
      %v8182 = vpop.f32.mrf.mxu0
      %v8183 = vadd.f32 %v7774, %v8182
      %8184 = vmatmul.f32.gmra.mxu0 %v3931
      %v8185 = vpop.f32.mrf.mxu0
      %v8186 = vadd.f32 %v7777, %v8185
      %8187 = vmatmul.f32.gmra.mxu0 %v3933
      %v8188 = vpop.f32.mrf.mxu0
      %v8189 = vadd.f32 %v7780, %v8188
      %8190 = vmatmul.f32.gmra.mxu0 %v3935
      %v8191 = vpop.f32.mrf.mxu0
      %v8192 = vadd.f32 %v7783, %v8191
      %8193 = vmatmul.f32.gmra.mxu0 %v3937
      %v8194 = vpop.f32.mrf.mxu0
      %v8195 = vadd.f32 %v7786, %v8194
      %8196 = vmatmul.f32.gmra.mxu0 %v3939
      %v8197 = vpop.f32.mrf.mxu0
      %v8198 = vadd.f32 %v7789, %v8197
      %8199 = vmatmul.f32.gmra.mxu0 %v3941
      %v8200 = vpop.f32.mrf.mxu0
      %v8201 = vadd.f32 %v7792, %v8200
      %8202 = vmatmul.f32.gmra.mxu0 %v3943
      %v8203 = vpop.f32.mrf.mxu0
      %v8204 = vadd.f32 %v7795, %v8203
      %8205 = vmatmul.f32.gmra.mxu0 %v3945
      %v8206 = vpop.f32.mrf.mxu0
      %v8207 = vadd.f32 %v7798, %v8206
      %8208 = vmatmul.f32.gmra.mxu0 %v3947
      %v8209 = vpop.f32.mrf.mxu0
      %v8210 = vadd.f32 %v7801, %v8209
      %8211 = vmatmul.f32.gmra.mxu0 %v3949
      %v8212 = vpop.f32.mrf.mxu0
      %v8213 = vadd.f32 %v7804, %v8212
      %8214 = vmatmul.f32.gmra.mxu0 %v3951
      %v8215 = vpop.f32.mrf.mxu0
      %v8216 = vadd.f32 %v7807, %v8215
      %8217 = vmatmul.f32.gmra.mxu0 %v3953
      %v8218 = vpop.f32.mrf.mxu0
      %v8219 = vadd.f32 %v7810, %v8218
      %8220 = vmatmul.f32.gmra.mxu0 %v3955
      %v8221 = vpop.f32.mrf.mxu0
      %v8222 = vadd.f32 %v7813, %v8221
      %8223 = vmatmul.f32.gmra.mxu0 %v3957
      %v8224 = vpop.f32.mrf.mxu0
      %v8225 = vadd.f32 %v7816, %v8224
      %8226 = vmatmul.f32.gmra.mxu0 %v3959
      %v8227 = vpop.f32.mrf.mxu0
      %v8228 = vadd.f32 %v7819, %v8227
      %8229 = vmatmul.f32.gmra.mxu0 %v3961
      %v8230 = vpop.f32.mrf.mxu0
      %v8231 = vadd.f32 %v7822, %v8230
      %8232 = vmatmul.f32.gmra.mxu0 %v3963
      %v8233 = vpop.f32.mrf.mxu0
      %v8234 = vadd.f32 %v7825, %v8233
      %8235 = vmatmul.f32.gmra.mxu0 %v3965
      %v8236 = vpop.f32.mrf.mxu0
      %v8237 = vadd.f32 %v7828, %v8236
      %8238 = vmatmul.f32.gmra.mxu0 %v3967
      %v8239 = vpop.f32.mrf.mxu0
      %v8240 = vadd.f32 %v7831, %v8239
      %8241 = vmatmul.f32.gmra.mxu0 %v3969
      %v8242 = vpop.f32.mrf.mxu0
      %v8243 = vadd.f32 %v7834, %v8242
      %8244 = vmatmul.f32.gmra.mxu0 %v3971
      %v8245 = vpop.f32.mrf.mxu0
      %v8246 = vadd.f32 %v7837, %v8245
      %8247 = vmatmul.f32.gmra.mxu0 %v3973
      %v8248 = vpop.f32.mrf.mxu0
      %v8249 = vadd.f32 %v7840, %v8248
      %8250 = vmatmul.f32.gmra.mxu0 %v3975
      %v8251 = vpop.f32.mrf.mxu0
      %v8252 = vadd.f32 %v7843, %v8251
      %8253 = vmatmul.f32.gmra.mxu0 %v3977
      %v8254 = vpop.f32.mrf.mxu0
      %v8255 = vadd.f32 %v7846, %v8254
      %8256 = vmatmul.f32.gmra.mxu0 %v3979
      %v8257 = vpop.f32.mrf.mxu0
      %v8258 = vadd.f32 %v7849, %v8257
      %8259 = vmatmul.f32.gmra.mxu0 %v3981
      %v8260 = vpop.f32.mrf.mxu0
      %v8261 = vadd.f32 %v7852, %v8260
      %8262 = vmatmul.f32.gmra.mxu0 %v3983
      %v8263 = vpop.f32.mrf.mxu0
      %v8264 = vadd.f32 %v7855, %v8263
      %8265 = vmatmul.f32.gmra.mxu0 %v3985
      %v8266 = vpop.f32.mrf.mxu0
      %v8267 = vadd.f32 %v7858, %v8266
      %8268 = vmatmul.f32.gmra.mxu0 %v3987
      %v8269 = vpop.f32.mrf.mxu0
      %v8270 = vadd.f32 %v7861, %v8269
      %8271 = vmatmul.f32.gmra.mxu0 %v3989
      %v8272 = vpop.f32.mrf.mxu0
      %v8273 = vadd.f32 %v7864, %v8272
      %8274 = vmatmul.f32.gmra.mxu0 %v3991
      %v8275 = vpop.f32.mrf.mxu0
      %v8276 = vadd.f32 %v7867, %v8275
      %8277 = vmatmul.f32.gmra.mxu0 %v3993
      %v8278 = vpop.f32.mrf.mxu0
      %v8279 = vadd.f32 %v7870, %v8278
      %8280 = vmatmul.f32.gmra.mxu0 %v3995
      %v8281 = vpop.f32.mrf.mxu0
      %v8282 = vadd.f32 %v7873, %v8281
      %8283 = vmatmul.f32.gmra.mxu0 %v3997
      %v8284 = vpop.f32.mrf.mxu0
      %v8285 = vadd.f32 %v7876, %v8284
      %8286 = vmatmul.f32.gmra.mxu0 %v3999
      %v8287 = vpop.f32.mrf.mxu0
      %v8288 = vadd.f32 %v7879, %v8287
      %8289 = vmatmul.f32.gmra.mxu0 %v4001
      %v8290 = vpop.f32.mrf.mxu0
      %v8291 = vadd.f32 %v7882, %v8290
      %8292 = vmatmul.f32.gmra.mxu0 %v4003
      %v8293 = vpop.f32.mrf.mxu0
      %v8294 = vadd.f32 %v7885, %v8293
      %8295 = vmatmul.f32.gmra.mxu0 %v4005
      %v8296 = vpop.f32.mrf.mxu0
      %v8297 = vadd.f32 %v7888, %v8296
      %8298 = vmatmul.f32.gmra.mxu0 %v4007
      %v8299 = vpop.f32.mrf.mxu0
      %v8300 = vadd.f32 %v7891, %v8299
      %8301 = vmatmul.f32.gmra.mxu0 %v4009
      %v8302 = vpop.f32.mrf.mxu0
      %v8303 = vadd.f32 %v7894, %v8302
      %8304 = vmatmul.f32.gmra.mxu0 %v4011
      %v8305 = vpop.f32.mrf.mxu0
      %v8306 = vadd.f32 %v7897, %v8305
      %8307 = vmatmul.f32.gmra.mxu0 %v4013
      %v8308 = vpop.f32.mrf.mxu0
      %v8309 = vadd.f32 %v7900, %v8308
      %8310 = vmatmul.f32.gmra.mxu0 %v4015
      %v8311 = vpop.f32.mrf.mxu0
      %v8312 = vadd.f32 %v7903, %v8311
      %8313 = vmatmul.f32.gmra.mxu0 %v4017
      %v8314 = vpop.f32.mrf.mxu0
      %v8315 = vadd.f32 %v7906, %v8314
      %8316 = vmatmul.f32.gmra.mxu0 %v4019
      %v8317 = vpop.f32.mrf.mxu0
      %v8318 = vadd.f32 %v7909, %v8317
      %8319 = vmatmul.f32.gmra.mxu0 %v4021
      %v8320 = vpop.f32.mrf.mxu0
      %v8321 = vadd.f32 %v7912, %v8320
      %8322 = vmatmul.f32.gmra.mxu0 %v4023
      %v8323 = vpop.f32.mrf.mxu0
      %v8324 = vadd.f32 %v7915, %v8323
      %8325 = vmatmul.f32.gmra.mxu0 %v4025
      %v8326 = vpop.f32.mrf.mxu0
      %v8327 = vadd.f32 %v7918, %v8326
      %8328 = vmatmul.f32.gmra.mxu0 %v4027
      %v8329 = vpop.f32.mrf.mxu0
      %v8330 = vadd.f32 %v7921, %v8329
      %8331 = vmatmul.f32.gmra.mxu0 %v4029
      %v8332 = vpop.f32.mrf.mxu0
      %v8333 = vadd.f32 %v7924, %v8332
      %8334 = vmatmul.f32.gmra.mxu0 %v4031
      %v8335 = vpop.f32.mrf.mxu0
      %v8336 = vadd.f32 %v7927, %v8335
      %8337 = vmatmul.f32.gmra.mxu0 %v4033
      %v8338 = vpop.f32.mrf.mxu0
      %v8339 = vadd.f32 %v7930, %v8338
      %8340 = vmatmul.f32.gmra.mxu0 %v4035
      %v8341 = vpop.f32.mrf.mxu0
      %v8342 = vadd.f32 %v7933, %v8341
      %8343 = vmatmul.f32.gmra.mxu0 %v4037
      %v8344 = vpop.f32.mrf.mxu0
      %v8345 = vadd.f32 %v7936, %v8344
      %8346 = vmatmul.f32.gmra.mxu0 %v4039
      %v8347 = vpop.f32.mrf.mxu0
      %v8348 = vadd.f32 %v7939, %v8347
      %8349 = vmatmul.f32.gmra.mxu0 %v4041
      %v8350 = vpop.f32.mrf.mxu0
      %v8351 = vadd.f32 %v7942, %v8350
      %8352 = vmatmul.f32.gmra.mxu0 %v4043
      %v8353 = vpop.f32.mrf.mxu0
      %v8354 = vadd.f32 %v7945, %v8353
      %8355 = vmatmul.f32.gmra.mxu0 %v4045
      %v8356 = vpop.f32.mrf.mxu0
      %v8357 = vadd.f32 %v7948, %v8356
      %8358 = vmatmul.f32.gmra.mxu0 %v4047
      %v8359 = vpop.f32.mrf.mxu0
      %v8360 = vadd.f32 %v7951, %v8359
      %8361 = vmatmul.f32.gmra.mxu0 %v4049
      %v8362 = vpop.f32.mrf.mxu0
      %v8363 = vadd.f32 %v7954, %v8362
      %8364 = vmatmul.f32.gmra.mxu0 %v4051
      %v8365 = vpop.f32.mrf.mxu0
      %v8366 = vadd.f32 %v7957, %v8365
      %8367 = vmatmul.f32.gmra.mxu0 %v4053
      %v8368 = vpop.f32.mrf.mxu0
      %v8369 = vadd.f32 %v7960, %v8368
      %8370 = vmatmul.f32.gmra.mxu0 %v4055
      %v8371 = vpop.f32.mrf.mxu0
      %v8372 = vadd.f32 %v7963, %v8371
      %8373 = vmatmul.f32.gmra.mxu0 %v4057
      %v8374 = vpop.f32.mrf.mxu0
      %v8375 = vadd.f32 %v7966, %v8374
      %8376 = vmatmul.f32.gmra.mxu0 %v4059
      %v8377 = vpop.f32.mrf.mxu0
      %v8378 = vadd.f32 %v7969, %v8377
      %8379 = vmatmul.f32.gmra.mxu0 %v4061
      %v8380 = vpop.f32.mrf.mxu0
      %v8381 = vadd.f32 %v7972, %v8380
      %8382 = vmatmul.f32.gmra.mxu0 %v4063
      %v8383 = vpop.f32.mrf.mxu0
      %v8384 = vadd.f32 %v7975, %v8383
      %8385 = vmatmul.f32.gmra.mxu0 %v4065
      %v8386 = vpop.f32.mrf.mxu0
      %v8387 = vadd.f32 %v7978, %v8386
      %8388 = vmatmul.f32.gmra.mxu0 %v4067
      %v8389 = vpop.f32.mrf.mxu0
      %v8390 = vadd.f32 %v7981, %v8389
      %8391 = vmatmul.f32.gmra.mxu0 %v4069
      %v8392 = vpop.f32.mrf.mxu0
      %v8393 = vadd.f32 %v7984, %v8392
      %8394 = vmatmul.f32.gmra.mxu0 %v4071
      %v8395 = vpop.f32.mrf.mxu0
      %v8396 = vadd.f32 %v7987, %v8395
      %8397 = vmatmul.f32.gmra.mxu0 %v4073
      %v8398 = vpop.f32.mrf.mxu0
      %v8399 = vadd.f32 %v7990, %v8398
      %8400 = vmatmul.f32.gmra.mxu0 %v4075
      %v8401 = vpop.f32.mrf.mxu0
      %v8402 = vadd.f32 %v7993, %v8401
      %8403 = vmatmul.f32.gmra.mxu0 %v4077
      %v8404 = vpop.f32.mrf.mxu0
      %v8405 = vadd.f32 %v7996, %v8404
      %8406 = vmatmul.f32.gmra.mxu0 %v8010
      %v8407 = vpop.f32.mrf.mxu0
      %v8408 = vadd.f32 %v7999, %v8407
      %8409 = vmatmul.f32.gmra.mxu0 %v8012
      %v8410 = vpop.f32.mrf.mxu0
      %v8411 = vadd.f32 %v8002, %v8410
      %8412 = vmatmul.f32.gmra.mxu0 %v8014
      %v8413 = vpop.f32.mrf.mxu0
      %v8414 = vadd.f32 %v8005, %v8413
      %8415 = vmatmul.f32.gmra.mxu0 %v8016
      %v8416 = vpop.f32.mrf.mxu0
      %v8417 = vadd.f32 %v8008, %v8416
      %8418 = vdwg.mxu0
      %v8419 = vadd.f32 %v7453, %v8036
      %v8420 = vadd.f32 %v7454, %v8039
      %v8421 = vadd.f32 %v7455, %v8042
      %v8422 = vadd.f32 %v7456, %v8045
      %v8423 = vadd.f32 %v7457, %v8048
      %v8424 = vadd.f32 %v7458, %v8051
      %v8425 = vadd.f32 %v7459, %v8054
      %v8426 = vadd.f32 %v7460, %v8057
      %v8427 = vadd.f32 %v7461, %v8060
      %v8428 = vadd.f32 %v7462, %v8063
      %v8429 = vadd.f32 %v7463, %v8066
      %v8430 = vadd.f32 %v7464, %v8069
      %v8431 = vadd.f32 %v7465, %v8072
      %v8432 = vadd.f32 %v7466, %v8075
      %v8433 = vadd.f32 %v7467, %v8078
      %v8434 = vadd.f32 %v7468, %v8081
      %v8435 = vadd.f32 %v7469, %v8084
      %v8436 = vadd.f32 %v7470, %v8087
      %v8437 = vadd.f32 %v7471, %v8090
      %v8438 = vadd.f32 %v7472, %v8093
      %v8439 = vadd.f32 %v7473, %v8096
      %v8440 = vadd.f32 %v7474, %v8099
      %v8441 = vadd.f32 %v7475, %v8102
      %v8442 = vadd.f32 %v7476, %v8105
      %v8443 = vadd.f32 %v7477, %v8108
      %v8444 = vadd.f32 %v7478, %v8111
      %v8445 = vadd.f32 %v7479, %v8114
      %v8446 = vadd.f32 %v7480, %v8117
      %v8447 = vadd.f32 %v7481, %v8120
      %v8448 = vadd.f32 %v7482, %v8123
      %v8449 = vadd.f32 %v7483, %v8126
      %v8450 = vadd.f32 %v7484, %v8129
      %v8451 = vadd.f32 %v7485, %v8132
      %v8452 = vadd.f32 %v7486, %v8135
      %v8453 = vadd.f32 %v7487, %v8138
      %v8454 = vadd.f32 %v7488, %v8141
      %v8455 = vadd.f32 %v7489, %v8144
      %v8456 = vadd.f32 %v7490, %v8147
      %v8457 = vadd.f32 %v7491, %v8150
      %v8458 = vadd.f32 %v7492, %v8153
      %v8459 = vadd.f32 %v7493, %v8156
      %v8460 = vadd.f32 %v7494, %v8159
      %v8461 = vadd.f32 %v7495, %v8162
      %v8462 = vadd.f32 %v7496, %v8165
      %v8463 = vadd.f32 %v7497, %v8168
      %v8464 = vadd.f32 %v7498, %v8171
      %v8465 = vadd.f32 %v7499, %v8174
      %v8466 = vadd.f32 %v7500, %v8177
      %v8467 = vadd.f32 %v7501, %v8180
      %v8468 = vadd.f32 %v7502, %v8183
      %v8469 = vadd.f32 %v7503, %v8186
      %v8470 = vadd.f32 %v7504, %v8189
      %v8471 = vadd.f32 %v7505, %v8192
      %v8472 = vadd.f32 %v7506, %v8195
      %v8473 = vadd.f32 %v7507, %v8198
      %v8474 = vadd.f32 %v7508, %v8201
      %v8475 = vadd.f32 %v7509, %v8204
      %v8476 = vadd.f32 %v7510, %v8207
      %v8477 = vadd.f32 %v7511, %v8210
      %v8478 = vadd.f32 %v7512, %v8213
      %v8479 = vadd.f32 %v7513, %v8216
      %v8480 = vadd.f32 %v7514, %v8219
      %v8481 = vadd.f32 %v7515, %v8222
      %v8482 = vadd.f32 %v7516, %v8225
      %v8483 = vadd.f32 %v7517, %v8228
      %v8484 = vadd.f32 %v7518, %v8231
      %v8485 = vadd.f32 %v7519, %v8234
      %v8486 = vadd.f32 %v7520, %v8237
      %v8487 = vadd.f32 %v7521, %v8240
      %v8488 = vadd.f32 %v7522, %v8243
      %v8489 = vadd.f32 %v7523, %v8246
      %v8490 = vadd.f32 %v7524, %v8249
      %v8491 = vadd.f32 %v7525, %v8252
      %v8492 = vadd.f32 %v7526, %v8255
      %v8493 = vadd.f32 %v7527, %v8258
      %v8494 = vadd.f32 %v7528, %v8261
      %v8495 = vadd.f32 %v7529, %v8264
      %v8496 = vadd.f32 %v7530, %v8267
      %v8497 = vadd.f32 %v7531, %v8270
      %v8498 = vadd.f32 %v7532, %v8273
      %v8499 = vadd.f32 %v7533, %v8276
      %v8500 = vadd.f32 %v7534, %v8279
      %v8501 = vadd.f32 %v7535, %v8282
      %v8502 = vadd.f32 %v7536, %v8285
      %v8503 = vadd.f32 %v7537, %v8288
      %v8504 = vadd.f32 %v7538, %v8291
      %v8505 = vadd.f32 %v7539, %v8294
      %v8506 = vadd.f32 %v7540, %v8297
      %v8507 = vadd.f32 %v7541, %v8300
      %v8508 = vadd.f32 %v7542, %v8303
      %v8509 = vadd.f32 %v7543, %v8306
      %v8510 = vadd.f32 %v7544, %v8309
      %v8511 = vadd.f32 %v7545, %v8312
      %v8512 = vadd.f32 %v7546, %v8315
      %v8513 = vadd.f32 %v7547, %v8318
      %v8514 = vadd.f32 %v7548, %v8321
      %v8515 = vadd.f32 %v7549, %v8324
      %v8516 = vadd.f32 %v7550, %v8327
      %v8517 = vadd.f32 %v7551, %v8330
      %v8518 = vadd.f32 %v7552, %v8333
      %v8519 = vadd.f32 %v7553, %v8336
      %v8520 = vadd.f32 %v7554, %v8339
      %v8521 = vadd.f32 %v7555, %v8342
      %v8522 = vadd.f32 %v7556, %v8345
      %v8523 = vadd.f32 %v7557, %v8348
      %v8524 = vadd.f32 %v7558, %v8351
      %v8525 = vadd.f32 %v7559, %v8354
      %v8526 = vadd.f32 %v7560, %v8357
      %v8527 = vadd.f32 %v7561, %v8360
      %v8528 = vadd.f32 %v7562, %v8363
      %v8529 = vadd.f32 %v7563, %v8366
      %v8530 = vadd.f32 %v7564, %v8369
      %v8531 = vadd.f32 %v7565, %v8372
      %v8532 = vadd.f32 %v7566, %v8375
      %v8533 = vadd.f32 %v7567, %v8378
      %v8534 = vadd.f32 %v7568, %v8381
      %v8535 = vadd.f32 %v7569, %v8384
      %v8536 = vadd.f32 %v7570, %v8387
      %v8537 = vadd.f32 %v7571, %v8390
      %v8538 = vadd.f32 %v7572, %v8393
      %v8539 = vadd.f32 %v7573, %v8396
      %v8540 = vadd.f32 %v7574, %v8399
      %v8541 = vadd.f32 %v7575, %v8402
      %v8542 = vadd.f32 %v7576, %v8405
      %v8543 = vadd.f32 %v7577, %v8408
      %v8544 = vadd.f32 %v7578, %v8411
      %v8545 = vadd.f32 %v7579, %v8414
      %v8546 = vadd.f32 %v7580, %v8417
      %v8547 = vrot.slane %v628, 2
      %v8548 = vrot.slane %v629, 2
      %v8549 = vsel %vm4608, %v8547, %v8548
      %v8550 = vrot.slane %v630, 2
      %v8551 = vsel %vm4608, %v8548, %v8550
      %v8552 = vrot.slane %v631, 2
      %v8553 = vsel %vm4608, %v8550, %v8552
      %v8554 = vrot.slane %v632, 2
      %v8555 = vsel %vm4608, %v8552, %v8554
      %v8556 = vrot.slane %v798, 2
      %v8557 = vrot.slane %v799, 2
      %v8558 = vsel %vm4608, %v8556, %v8557
      %v8559 = vrot.slane %v800, 2
      %v8560 = vsel %vm4608, %v8557, %v8559
      %v8561 = vrot.slane %v801, 2
      %v8562 = vsel %vm4608, %v8559, %v8561
      %v8563 = vrot.slane %v802, 2
      %v8564 = vsel %vm4608, %v8561, %v8563
      %v8565 = vsel %vm826, %v8558, 0
      %v8567 = vsel %vm826, %v8560, 0
      %v8569 = vsel %vm826, %v8562, 0
      %v8571 = vsel %vm826, %v8564, 0
      %8573 = vmatpush.msra.mxu0 0.0
      %8574 = vmatpush.msra.mxu0 0.0
      %8575 = vmatpush.msra.mxu0 0.0
      %8576 = vmatpush.msra.mxu0 0.0
      %8577 = vmatpush.msra.mxu0 0.0
      %8578 = vmatpush.msra.mxu0 0.0
      %8579 = vmatpush.msra.mxu0 0.0
      %8580 = vmatpush.msra.mxu0 0.0
      %8581 = vmatpush.msra.mxu0 0.0
      %8582 = vmatpush.msra.mxu0 0.0
      %8583 = vmatpush.msra.mxu0 0.0
      %8584 = vmatpush.msra.mxu0 0.0
      %8585 = vmatpush.msra.mxu0 0.0
      %8586 = vmatpush.msra.mxu0 0.0
      %8587 = vmatpush.msra.mxu0 0.0
      %8588 = vmatpush.msra.mxu0 %v822
      %8589 = vmatmul.f32.gmra.mxu0 %v5193
      %v8590 = vpop.f32.mrf.mxu0
      %v8591 = vadd.f32 0.0, %v8590
      %8592 = vmatmul.f32.gmra.mxu0 %v5195
      %v8593 = vpop.f32.mrf.mxu0
      %v8594 = vadd.f32 0.0, %v8593
      %8595 = vmatmul.f32.gmra.mxu0 %v5197
      %v8596 = vpop.f32.mrf.mxu0
      %v8597 = vadd.f32 0.0, %v8596
      %8598 = vmatmul.f32.gmra.mxu0 %v5199
      %v8599 = vpop.f32.mrf.mxu0
      %v8600 = vadd.f32 0.0, %v8599
      %8601 = vmatmul.f32.gmra.mxu0 %v5201
      %v8602 = vpop.f32.mrf.mxu0
      %v8603 = vadd.f32 0.0, %v8602
      %8604 = vmatmul.f32.gmra.mxu0 %v5203
      %v8605 = vpop.f32.mrf.mxu0
      %v8606 = vadd.f32 0.0, %v8605
      %8607 = vmatmul.f32.gmra.mxu0 %v5205
      %v8608 = vpop.f32.mrf.mxu0
      %v8609 = vadd.f32 0.0, %v8608
      %8610 = vmatmul.f32.gmra.mxu0 %v5207
      %v8611 = vpop.f32.mrf.mxu0
      %v8612 = vadd.f32 0.0, %v8611
      %8613 = vmatmul.f32.gmra.mxu0 %v5209
      %v8614 = vpop.f32.mrf.mxu0
      %v8615 = vadd.f32 0.0, %v8614
      %8616 = vmatmul.f32.gmra.mxu0 %v5211
      %v8617 = vpop.f32.mrf.mxu0
      %v8618 = vadd.f32 0.0, %v8617
      %8619 = vmatmul.f32.gmra.mxu0 %v5213
      %v8620 = vpop.f32.mrf.mxu0
      %v8621 = vadd.f32 0.0, %v8620
      %8622 = vmatmul.f32.gmra.mxu0 %v5215
      %v8623 = vpop.f32.mrf.mxu0
      %v8624 = vadd.f32 0.0, %v8623
      %8625 = vmatmul.f32.gmra.mxu0 %v5217
      %v8626 = vpop.f32.mrf.mxu0
      %v8627 = vadd.f32 0.0, %v8626
      %8628 = vmatmul.f32.gmra.mxu0 %v5219
      %v8629 = vpop.f32.mrf.mxu0
      %v8630 = vadd.f32 0.0, %v8629
      %8631 = vmatmul.f32.gmra.mxu0 %v5221
      %v8632 = vpop.f32.mrf.mxu0
      %v8633 = vadd.f32 0.0, %v8632
      %8634 = vmatmul.f32.gmra.mxu0 %v5223
      %v8635 = vpop.f32.mrf.mxu0
      %v8636 = vadd.f32 0.0, %v8635
      %8637 = vmatmul.f32.gmra.mxu0 %v5225
      %v8638 = vpop.f32.mrf.mxu0
      %v8639 = vadd.f32 0.0, %v8638
      %8640 = vmatmul.f32.gmra.mxu0 %v5227
      %v8641 = vpop.f32.mrf.mxu0
      %v8642 = vadd.f32 0.0, %v8641
      %8643 = vmatmul.f32.gmra.mxu0 %v5229
      %v8644 = vpop.f32.mrf.mxu0
      %v8645 = vadd.f32 0.0, %v8644
      %8646 = vmatmul.f32.gmra.mxu0 %v5231
      %v8647 = vpop.f32.mrf.mxu0
      %v8648 = vadd.f32 0.0, %v8647
      %8649 = vmatmul.f32.gmra.mxu0 %v5233
      %v8650 = vpop.f32.mrf.mxu0
      %v8651 = vadd.f32 0.0, %v8650
      %8652 = vmatmul.f32.gmra.mxu0 %v5235
      %v8653 = vpop.f32.mrf.mxu0
      %v8654 = vadd.f32 0.0, %v8653
      %8655 = vmatmul.f32.gmra.mxu0 %v5237
      %v8656 = vpop.f32.mrf.mxu0
      %v8657 = vadd.f32 0.0, %v8656
      %8658 = vmatmul.f32.gmra.mxu0 %v5239
      %v8659 = vpop.f32.mrf.mxu0
      %v8660 = vadd.f32 0.0, %v8659
      %8661 = vmatmul.f32.gmra.mxu0 %v5241
      %v8662 = vpop.f32.mrf.mxu0
      %v8663 = vadd.f32 0.0, %v8662
      %8664 = vmatmul.f32.gmra.mxu0 %v5243
      %v8665 = vpop.f32.mrf.mxu0
      %v8666 = vadd.f32 0.0, %v8665
      %8667 = vmatmul.f32.gmra.mxu0 %v5245
      %v8668 = vpop.f32.mrf.mxu0
      %v8669 = vadd.f32 0.0, %v8668
      %8670 = vmatmul.f32.gmra.mxu0 %v5247
      %v8671 = vpop.f32.mrf.mxu0
      %v8672 = vadd.f32 0.0, %v8671
      %8673 = vmatmul.f32.gmra.mxu0 %v5249
      %v8674 = vpop.f32.mrf.mxu0
      %v8675 = vadd.f32 0.0, %v8674
      %8676 = vmatmul.f32.gmra.mxu0 %v5251
      %v8677 = vpop.f32.mrf.mxu0
      %v8678 = vadd.f32 0.0, %v8677
      %8679 = vmatmul.f32.gmra.mxu0 %v5253
      %v8680 = vpop.f32.mrf.mxu0
      %v8681 = vadd.f32 0.0, %v8680
      %8682 = vmatmul.f32.gmra.mxu0 %v5255
      %v8683 = vpop.f32.mrf.mxu0
      %v8684 = vadd.f32 0.0, %v8683
      %8685 = vmatmul.f32.gmra.mxu0 %v5257
      %v8686 = vpop.f32.mrf.mxu0
      %v8687 = vadd.f32 0.0, %v8686
      %8688 = vmatmul.f32.gmra.mxu0 %v5259
      %v8689 = vpop.f32.mrf.mxu0
      %v8690 = vadd.f32 0.0, %v8689
      %8691 = vmatmul.f32.gmra.mxu0 %v5261
      %v8692 = vpop.f32.mrf.mxu0
      %v8693 = vadd.f32 0.0, %v8692
      %8694 = vmatmul.f32.gmra.mxu0 %v5263
      %v8695 = vpop.f32.mrf.mxu0
      %v8696 = vadd.f32 0.0, %v8695
      %8697 = vmatmul.f32.gmra.mxu0 %v5265
      %v8698 = vpop.f32.mrf.mxu0
      %v8699 = vadd.f32 0.0, %v8698
      %8700 = vmatmul.f32.gmra.mxu0 %v5267
      %v8701 = vpop.f32.mrf.mxu0
      %v8702 = vadd.f32 0.0, %v8701
      %8703 = vmatmul.f32.gmra.mxu0 %v5269
      %v8704 = vpop.f32.mrf.mxu0
      %v8705 = vadd.f32 0.0, %v8704
      %8706 = vmatmul.f32.gmra.mxu0 %v5271
      %v8707 = vpop.f32.mrf.mxu0
      %v8708 = vadd.f32 0.0, %v8707
      %8709 = vmatmul.f32.gmra.mxu0 %v5273
      %v8710 = vpop.f32.mrf.mxu0
      %v8711 = vadd.f32 0.0, %v8710
      %8712 = vmatmul.f32.gmra.mxu0 %v5275
      %v8713 = vpop.f32.mrf.mxu0
      %v8714 = vadd.f32 0.0, %v8713
      %8715 = vmatmul.f32.gmra.mxu0 %v5277
      %v8716 = vpop.f32.mrf.mxu0
      %v8717 = vadd.f32 0.0, %v8716
      %8718 = vmatmul.f32.gmra.mxu0 %v5279
      %v8719 = vpop.f32.mrf.mxu0
      %v8720 = vadd.f32 0.0, %v8719
      %8721 = vmatmul.f32.gmra.mxu0 %v5281
      %v8722 = vpop.f32.mrf.mxu0
      %v8723 = vadd.f32 0.0, %v8722
      %8724 = vmatmul.f32.gmra.mxu0 %v5283
      %v8725 = vpop.f32.mrf.mxu0
      %v8726 = vadd.f32 0.0, %v8725
      %8727 = vmatmul.f32.gmra.mxu0 %v5285
      %v8728 = vpop.f32.mrf.mxu0
      %v8729 = vadd.f32 0.0, %v8728
      %8730 = vmatmul.f32.gmra.mxu0 %v5287
      %v8731 = vpop.f32.mrf.mxu0
      %v8732 = vadd.f32 0.0, %v8731
      %8733 = vmatmul.f32.gmra.mxu0 %v5289
      %v8734 = vpop.f32.mrf.mxu0
      %v8735 = vadd.f32 0.0, %v8734
      %8736 = vmatmul.f32.gmra.mxu0 %v5291
      %v8737 = vpop.f32.mrf.mxu0
      %v8738 = vadd.f32 0.0, %v8737
      %8739 = vmatmul.f32.gmra.mxu0 %v5293
      %v8740 = vpop.f32.mrf.mxu0
      %v8741 = vadd.f32 0.0, %v8740
      %8742 = vmatmul.f32.gmra.mxu0 %v5295
      %v8743 = vpop.f32.mrf.mxu0
      %v8744 = vadd.f32 0.0, %v8743
      %8745 = vmatmul.f32.gmra.mxu0 %v5297
      %v8746 = vpop.f32.mrf.mxu0
      %v8747 = vadd.f32 0.0, %v8746
      %8748 = vmatmul.f32.gmra.mxu0 %v5299
      %v8749 = vpop.f32.mrf.mxu0
      %v8750 = vadd.f32 0.0, %v8749
      %8751 = vmatmul.f32.gmra.mxu0 %v5301
      %v8752 = vpop.f32.mrf.mxu0
      %v8753 = vadd.f32 0.0, %v8752
      %8754 = vmatmul.f32.gmra.mxu0 %v5303
      %v8755 = vpop.f32.mrf.mxu0
      %v8756 = vadd.f32 0.0, %v8755
      %8757 = vmatmul.f32.gmra.mxu0 %v5305
      %v8758 = vpop.f32.mrf.mxu0
      %v8759 = vadd.f32 0.0, %v8758
      %8760 = vmatmul.f32.gmra.mxu0 %v5307
      %v8761 = vpop.f32.mrf.mxu0
      %v8762 = vadd.f32 0.0, %v8761
      %8763 = vmatmul.f32.gmra.mxu0 %v5309
      %v8764 = vpop.f32.mrf.mxu0
      %v8765 = vadd.f32 0.0, %v8764
      %8766 = vmatmul.f32.gmra.mxu0 %v5311
      %v8767 = vpop.f32.mrf.mxu0
      %v8768 = vadd.f32 0.0, %v8767
      %8769 = vmatmul.f32.gmra.mxu0 %v5313
      %v8770 = vpop.f32.mrf.mxu0
      %v8771 = vadd.f32 0.0, %v8770
      %8772 = vmatmul.f32.gmra.mxu0 %v5315
      %v8773 = vpop.f32.mrf.mxu0
      %v8774 = vadd.f32 0.0, %v8773
      %8775 = vmatmul.f32.gmra.mxu0 %v5317
      %v8776 = vpop.f32.mrf.mxu0
      %v8777 = vadd.f32 0.0, %v8776
      %8778 = vmatmul.f32.gmra.mxu0 %v5319
      %v8779 = vpop.f32.mrf.mxu0
      %v8780 = vadd.f32 0.0, %v8779
      %8781 = vmatmul.f32.gmra.mxu0 %v5321
      %v8782 = vpop.f32.mrf.mxu0
      %v8783 = vadd.f32 0.0, %v8782
      %8784 = vmatmul.f32.gmra.mxu0 %v5323
      %v8785 = vpop.f32.mrf.mxu0
      %v8786 = vadd.f32 0.0, %v8785
      %8787 = vmatmul.f32.gmra.mxu0 %v5325
      %v8788 = vpop.f32.mrf.mxu0
      %v8789 = vadd.f32 0.0, %v8788
      %8790 = vmatmul.f32.gmra.mxu0 %v5327
      %v8791 = vpop.f32.mrf.mxu0
      %v8792 = vadd.f32 0.0, %v8791
      %8793 = vmatmul.f32.gmra.mxu0 %v5329
      %v8794 = vpop.f32.mrf.mxu0
      %v8795 = vadd.f32 0.0, %v8794
      %8796 = vmatmul.f32.gmra.mxu0 %v5331
      %v8797 = vpop.f32.mrf.mxu0
      %v8798 = vadd.f32 0.0, %v8797
      %8799 = vmatmul.f32.gmra.mxu0 %v5333
      %v8800 = vpop.f32.mrf.mxu0
      %v8801 = vadd.f32 0.0, %v8800
      %8802 = vmatmul.f32.gmra.mxu0 %v5335
      %v8803 = vpop.f32.mrf.mxu0
      %v8804 = vadd.f32 0.0, %v8803
      %8805 = vmatmul.f32.gmra.mxu0 %v5337
      %v8806 = vpop.f32.mrf.mxu0
      %v8807 = vadd.f32 0.0, %v8806
      %8808 = vmatmul.f32.gmra.mxu0 %v5339
      %v8809 = vpop.f32.mrf.mxu0
      %v8810 = vadd.f32 0.0, %v8809
      %8811 = vmatmul.f32.gmra.mxu0 %v5341
      %v8812 = vpop.f32.mrf.mxu0
      %v8813 = vadd.f32 0.0, %v8812
      %8814 = vmatmul.f32.gmra.mxu0 %v5343
      %v8815 = vpop.f32.mrf.mxu0
      %v8816 = vadd.f32 0.0, %v8815
      %8817 = vmatmul.f32.gmra.mxu0 %v5345
      %v8818 = vpop.f32.mrf.mxu0
      %v8819 = vadd.f32 0.0, %v8818
      %8820 = vmatmul.f32.gmra.mxu0 %v5347
      %v8821 = vpop.f32.mrf.mxu0
      %v8822 = vadd.f32 0.0, %v8821
      %8823 = vmatmul.f32.gmra.mxu0 %v5349
      %v8824 = vpop.f32.mrf.mxu0
      %v8825 = vadd.f32 0.0, %v8824
      %8826 = vmatmul.f32.gmra.mxu0 %v5351
      %v8827 = vpop.f32.mrf.mxu0
      %v8828 = vadd.f32 0.0, %v8827
      %8829 = vmatmul.f32.gmra.mxu0 %v5353
      %v8830 = vpop.f32.mrf.mxu0
      %v8831 = vadd.f32 0.0, %v8830
      %8832 = vmatmul.f32.gmra.mxu0 %v5355
      %v8833 = vpop.f32.mrf.mxu0
      %v8834 = vadd.f32 0.0, %v8833
      %8835 = vmatmul.f32.gmra.mxu0 %v5357
      %v8836 = vpop.f32.mrf.mxu0
      %v8837 = vadd.f32 0.0, %v8836
      %8838 = vmatmul.f32.gmra.mxu0 %v5359
      %v8839 = vpop.f32.mrf.mxu0
      %v8840 = vadd.f32 0.0, %v8839
      %8841 = vmatmul.f32.gmra.mxu0 %v5361
      %v8842 = vpop.f32.mrf.mxu0
      %v8843 = vadd.f32 0.0, %v8842
      %8844 = vmatmul.f32.gmra.mxu0 %v5363
      %v8845 = vpop.f32.mrf.mxu0
      %v8846 = vadd.f32 0.0, %v8845
      %8847 = vmatmul.f32.gmra.mxu0 %v5365
      %v8848 = vpop.f32.mrf.mxu0
      %v8849 = vadd.f32 0.0, %v8848
      %8850 = vmatmul.f32.gmra.mxu0 %v5367
      %v8851 = vpop.f32.mrf.mxu0
      %v8852 = vadd.f32 0.0, %v8851
      %8853 = vmatmul.f32.gmra.mxu0 %v5369
      %v8854 = vpop.f32.mrf.mxu0
      %v8855 = vadd.f32 0.0, %v8854
      %8856 = vmatmul.f32.gmra.mxu0 %v5371
      %v8857 = vpop.f32.mrf.mxu0
      %v8858 = vadd.f32 0.0, %v8857
      %8859 = vmatmul.f32.gmra.mxu0 %v5373
      %v8860 = vpop.f32.mrf.mxu0
      %v8861 = vadd.f32 0.0, %v8860
      %8862 = vmatmul.f32.gmra.mxu0 %v5375
      %v8863 = vpop.f32.mrf.mxu0
      %v8864 = vadd.f32 0.0, %v8863
      %8865 = vmatmul.f32.gmra.mxu0 %v5377
      %v8866 = vpop.f32.mrf.mxu0
      %v8867 = vadd.f32 0.0, %v8866
      %8868 = vmatmul.f32.gmra.mxu0 %v5379
      %v8869 = vpop.f32.mrf.mxu0
      %v8870 = vadd.f32 0.0, %v8869
      %8871 = vmatmul.f32.gmra.mxu0 %v5381
      %v8872 = vpop.f32.mrf.mxu0
      %v8873 = vadd.f32 0.0, %v8872
      %8874 = vmatmul.f32.gmra.mxu0 %v5383
      %v8875 = vpop.f32.mrf.mxu0
      %v8876 = vadd.f32 0.0, %v8875
      %8877 = vmatmul.f32.gmra.mxu0 %v5385
      %v8878 = vpop.f32.mrf.mxu0
      %v8879 = vadd.f32 0.0, %v8878
      %8880 = vmatmul.f32.gmra.mxu0 %v5387
      %v8881 = vpop.f32.mrf.mxu0
      %v8882 = vadd.f32 0.0, %v8881
      %8883 = vmatmul.f32.gmra.mxu0 %v5389
      %v8884 = vpop.f32.mrf.mxu0
      %v8885 = vadd.f32 0.0, %v8884
      %8886 = vmatmul.f32.gmra.mxu0 %v5391
      %v8887 = vpop.f32.mrf.mxu0
      %v8888 = vadd.f32 0.0, %v8887
      %8889 = vmatmul.f32.gmra.mxu0 %v5393
      %v8890 = vpop.f32.mrf.mxu0
      %v8891 = vadd.f32 0.0, %v8890
      %8892 = vmatmul.f32.gmra.mxu0 %v5395
      %v8893 = vpop.f32.mrf.mxu0
      %v8894 = vadd.f32 0.0, %v8893
      %8895 = vmatmul.f32.gmra.mxu0 %v5397
      %v8896 = vpop.f32.mrf.mxu0
      %v8897 = vadd.f32 0.0, %v8896
      %8898 = vmatmul.f32.gmra.mxu0 %v5399
      %v8899 = vpop.f32.mrf.mxu0
      %v8900 = vadd.f32 0.0, %v8899
      %8901 = vmatmul.f32.gmra.mxu0 %v5401
      %v8902 = vpop.f32.mrf.mxu0
      %v8903 = vadd.f32 0.0, %v8902
      %8904 = vmatmul.f32.gmra.mxu0 %v5403
      %v8905 = vpop.f32.mrf.mxu0
      %v8906 = vadd.f32 0.0, %v8905
      %8907 = vmatmul.f32.gmra.mxu0 %v5405
      %v8908 = vpop.f32.mrf.mxu0
      %v8909 = vadd.f32 0.0, %v8908
      %8910 = vmatmul.f32.gmra.mxu0 %v5407
      %v8911 = vpop.f32.mrf.mxu0
      %v8912 = vadd.f32 0.0, %v8911
      %8913 = vmatmul.f32.gmra.mxu0 %v5409
      %v8914 = vpop.f32.mrf.mxu0
      %v8915 = vadd.f32 0.0, %v8914
      %8916 = vmatmul.f32.gmra.mxu0 %v5411
      %v8917 = vpop.f32.mrf.mxu0
      %v8918 = vadd.f32 0.0, %v8917
      %8919 = vmatmul.f32.gmra.mxu0 %v5413
      %v8920 = vpop.f32.mrf.mxu0
      %v8921 = vadd.f32 0.0, %v8920
      %8922 = vmatmul.f32.gmra.mxu0 %v5415
      %v8923 = vpop.f32.mrf.mxu0
      %v8924 = vadd.f32 0.0, %v8923
      %8925 = vmatmul.f32.gmra.mxu0 %v5417
      %v8926 = vpop.f32.mrf.mxu0
      %v8927 = vadd.f32 0.0, %v8926
      %8928 = vmatmul.f32.gmra.mxu0 %v5419
      %v8929 = vpop.f32.mrf.mxu0
      %v8930 = vadd.f32 0.0, %v8929
      %8931 = vmatmul.f32.gmra.mxu0 %v5421
      %v8932 = vpop.f32.mrf.mxu0
      %v8933 = vadd.f32 0.0, %v8932
      %8934 = vmatmul.f32.gmra.mxu0 %v5423
      %v8935 = vpop.f32.mrf.mxu0
      %v8936 = vadd.f32 0.0, %v8935
      %8937 = vmatmul.f32.gmra.mxu0 %v5425
      %v8938 = vpop.f32.mrf.mxu0
      %v8939 = vadd.f32 0.0, %v8938
      %8940 = vmatmul.f32.gmra.mxu0 %v5427
      %v8941 = vpop.f32.mrf.mxu0
      %v8942 = vadd.f32 0.0, %v8941
      %8943 = vmatmul.f32.gmra.mxu0 %v5429
      %v8944 = vpop.f32.mrf.mxu0
      %v8945 = vadd.f32 0.0, %v8944
      %8946 = vmatmul.f32.gmra.mxu0 %v5431
      %v8947 = vpop.f32.mrf.mxu0
      %v8948 = vadd.f32 0.0, %v8947
      %8949 = vmatmul.f32.gmra.mxu0 %v5433
      %v8950 = vpop.f32.mrf.mxu0
      %v8951 = vadd.f32 0.0, %v8950
      %8952 = vmatmul.f32.gmra.mxu0 %v5435
      %v8953 = vpop.f32.mrf.mxu0
      %v8954 = vadd.f32 0.0, %v8953
      %8955 = vmatmul.f32.gmra.mxu0 %v5437
      %v8956 = vpop.f32.mrf.mxu0
      %v8957 = vadd.f32 0.0, %v8956
      %8958 = vmatmul.f32.gmra.mxu0 %v5439
      %v8959 = vpop.f32.mrf.mxu0
      %v8960 = vadd.f32 0.0, %v8959
      %8961 = vmatmul.f32.gmra.mxu0 %v8565
      %v8962 = vpop.f32.mrf.mxu0
      %v8963 = vadd.f32 0.0, %v8962
      %8964 = vmatmul.f32.gmra.mxu0 %v8567
      %v8965 = vpop.f32.mrf.mxu0
      %v8966 = vadd.f32 0.0, %v8965
      %8967 = vmatmul.f32.gmra.mxu0 %v8569
      %v8968 = vpop.f32.mrf.mxu0
      %v8969 = vadd.f32 0.0, %v8968
      %8970 = vmatmul.f32.gmra.mxu0 %v8571
      %v8971 = vpop.f32.mrf.mxu0
      %v8972 = vadd.f32 0.0, %v8971
      %8973 = vdwg.mxu0
      %v8974 = vsel %vm826, %v8549, 0
      %v8976 = vsel %vm826, %v8551, 0
      %v8978 = vsel %vm826, %v8553, 0
      %v8980 = vsel %vm826, %v8555, 0
      %8982 = vmatpush.msra.mxu0 0.0
      %8983 = vmatpush.msra.mxu0 0.0
      %8984 = vmatpush.msra.mxu0 0.0
      %8985 = vmatpush.msra.mxu0 0.0
      %8986 = vmatpush.msra.mxu0 0.0
      %8987 = vmatpush.msra.mxu0 0.0
      %8988 = vmatpush.msra.mxu0 0.0
      %8989 = vmatpush.msra.mxu0 0.0
      %8990 = vmatpush.msra.mxu0 0.0
      %8991 = vmatpush.msra.mxu0 0.0
      %8992 = vmatpush.msra.mxu0 0.0
      %8993 = vmatpush.msra.mxu0 0.0
      %8994 = vmatpush.msra.mxu0 0.0
      %8995 = vmatpush.msra.mxu0 0.0
      %8996 = vmatpush.msra.mxu0 0.0
      %8997 = vmatpush.msra.mxu0 %v813
      %8998 = vmatmul.f32.gmra.mxu0 %v5850
      %v8999 = vpop.f32.mrf.mxu0
      %v9000 = vadd.f32 %v8591, %v8999
      %9001 = vmatmul.f32.gmra.mxu0 %v5852
      %v9002 = vpop.f32.mrf.mxu0
      %v9003 = vadd.f32 %v8594, %v9002
      %9004 = vmatmul.f32.gmra.mxu0 %v5854
      %v9005 = vpop.f32.mrf.mxu0
      %v9006 = vadd.f32 %v8597, %v9005
      %9007 = vmatmul.f32.gmra.mxu0 %v5856
      %v9008 = vpop.f32.mrf.mxu0
      %v9009 = vadd.f32 %v8600, %v9008
      %9010 = vmatmul.f32.gmra.mxu0 %v5858
      %v9011 = vpop.f32.mrf.mxu0
      %v9012 = vadd.f32 %v8603, %v9011
      %9013 = vmatmul.f32.gmra.mxu0 %v5860
      %v9014 = vpop.f32.mrf.mxu0
      %v9015 = vadd.f32 %v8606, %v9014
      %9016 = vmatmul.f32.gmra.mxu0 %v5862
      %v9017 = vpop.f32.mrf.mxu0
      %v9018 = vadd.f32 %v8609, %v9017
      %9019 = vmatmul.f32.gmra.mxu0 %v5864
      %v9020 = vpop.f32.mrf.mxu0
      %v9021 = vadd.f32 %v8612, %v9020
      %9022 = vmatmul.f32.gmra.mxu0 %v5866
      %v9023 = vpop.f32.mrf.mxu0
      %v9024 = vadd.f32 %v8615, %v9023
      %9025 = vmatmul.f32.gmra.mxu0 %v5868
      %v9026 = vpop.f32.mrf.mxu0
      %v9027 = vadd.f32 %v8618, %v9026
      %9028 = vmatmul.f32.gmra.mxu0 %v5870
      %v9029 = vpop.f32.mrf.mxu0
      %v9030 = vadd.f32 %v8621, %v9029
      %9031 = vmatmul.f32.gmra.mxu0 %v5872
      %v9032 = vpop.f32.mrf.mxu0
      %v9033 = vadd.f32 %v8624, %v9032
      %9034 = vmatmul.f32.gmra.mxu0 %v5874
      %v9035 = vpop.f32.mrf.mxu0
      %v9036 = vadd.f32 %v8627, %v9035
      %9037 = vmatmul.f32.gmra.mxu0 %v5876
      %v9038 = vpop.f32.mrf.mxu0
      %v9039 = vadd.f32 %v8630, %v9038
      %9040 = vmatmul.f32.gmra.mxu0 %v5878
      %v9041 = vpop.f32.mrf.mxu0
      %v9042 = vadd.f32 %v8633, %v9041
      %9043 = vmatmul.f32.gmra.mxu0 %v5880
      %v9044 = vpop.f32.mrf.mxu0
      %v9045 = vadd.f32 %v8636, %v9044
      %9046 = vmatmul.f32.gmra.mxu0 %v5882
      %v9047 = vpop.f32.mrf.mxu0
      %v9048 = vadd.f32 %v8639, %v9047
      %9049 = vmatmul.f32.gmra.mxu0 %v5884
      %v9050 = vpop.f32.mrf.mxu0
      %v9051 = vadd.f32 %v8642, %v9050
      %9052 = vmatmul.f32.gmra.mxu0 %v5886
      %v9053 = vpop.f32.mrf.mxu0
      %v9054 = vadd.f32 %v8645, %v9053
      %9055 = vmatmul.f32.gmra.mxu0 %v5888
      %v9056 = vpop.f32.mrf.mxu0
      %v9057 = vadd.f32 %v8648, %v9056
      %9058 = vmatmul.f32.gmra.mxu0 %v5890
      %v9059 = vpop.f32.mrf.mxu0
      %v9060 = vadd.f32 %v8651, %v9059
      %9061 = vmatmul.f32.gmra.mxu0 %v5892
      %v9062 = vpop.f32.mrf.mxu0
      %v9063 = vadd.f32 %v8654, %v9062
      %9064 = vmatmul.f32.gmra.mxu0 %v5894
      %v9065 = vpop.f32.mrf.mxu0
      %v9066 = vadd.f32 %v8657, %v9065
      %9067 = vmatmul.f32.gmra.mxu0 %v5896
      %v9068 = vpop.f32.mrf.mxu0
      %v9069 = vadd.f32 %v8660, %v9068
      %9070 = vmatmul.f32.gmra.mxu0 %v5898
      %v9071 = vpop.f32.mrf.mxu0
      %v9072 = vadd.f32 %v8663, %v9071
      %9073 = vmatmul.f32.gmra.mxu0 %v5900
      %v9074 = vpop.f32.mrf.mxu0
      %v9075 = vadd.f32 %v8666, %v9074
      %9076 = vmatmul.f32.gmra.mxu0 %v5902
      %v9077 = vpop.f32.mrf.mxu0
      %v9078 = vadd.f32 %v8669, %v9077
      %9079 = vmatmul.f32.gmra.mxu0 %v5904
      %v9080 = vpop.f32.mrf.mxu0
      %v9081 = vadd.f32 %v8672, %v9080
      %9082 = vmatmul.f32.gmra.mxu0 %v5906
      %v9083 = vpop.f32.mrf.mxu0
      %v9084 = vadd.f32 %v8675, %v9083
      %9085 = vmatmul.f32.gmra.mxu0 %v5908
      %v9086 = vpop.f32.mrf.mxu0
      %v9087 = vadd.f32 %v8678, %v9086
      %9088 = vmatmul.f32.gmra.mxu0 %v5910
      %v9089 = vpop.f32.mrf.mxu0
      %v9090 = vadd.f32 %v8681, %v9089
      %9091 = vmatmul.f32.gmra.mxu0 %v5912
      %v9092 = vpop.f32.mrf.mxu0
      %v9093 = vadd.f32 %v8684, %v9092
      %9094 = vmatmul.f32.gmra.mxu0 %v5914
      %v9095 = vpop.f32.mrf.mxu0
      %v9096 = vadd.f32 %v8687, %v9095
      %9097 = vmatmul.f32.gmra.mxu0 %v5916
      %v9098 = vpop.f32.mrf.mxu0
      %v9099 = vadd.f32 %v8690, %v9098
      %9100 = vmatmul.f32.gmra.mxu0 %v5918
      %v9101 = vpop.f32.mrf.mxu0
      %v9102 = vadd.f32 %v8693, %v9101
      %9103 = vmatmul.f32.gmra.mxu0 %v5920
      %v9104 = vpop.f32.mrf.mxu0
      %v9105 = vadd.f32 %v8696, %v9104
      %9106 = vmatmul.f32.gmra.mxu0 %v5922
      %v9107 = vpop.f32.mrf.mxu0
      %v9108 = vadd.f32 %v8699, %v9107
      %9109 = vmatmul.f32.gmra.mxu0 %v5924
      %v9110 = vpop.f32.mrf.mxu0
      %v9111 = vadd.f32 %v8702, %v9110
      %9112 = vmatmul.f32.gmra.mxu0 %v5926
      %v9113 = vpop.f32.mrf.mxu0
      %v9114 = vadd.f32 %v8705, %v9113
      %9115 = vmatmul.f32.gmra.mxu0 %v5928
      %v9116 = vpop.f32.mrf.mxu0
      %v9117 = vadd.f32 %v8708, %v9116
      %9118 = vmatmul.f32.gmra.mxu0 %v5930
      %v9119 = vpop.f32.mrf.mxu0
      %v9120 = vadd.f32 %v8711, %v9119
      %9121 = vmatmul.f32.gmra.mxu0 %v5932
      %v9122 = vpop.f32.mrf.mxu0
      %v9123 = vadd.f32 %v8714, %v9122
      %9124 = vmatmul.f32.gmra.mxu0 %v5934
      %v9125 = vpop.f32.mrf.mxu0
      %v9126 = vadd.f32 %v8717, %v9125
      %9127 = vmatmul.f32.gmra.mxu0 %v5936
      %v9128 = vpop.f32.mrf.mxu0
      %v9129 = vadd.f32 %v8720, %v9128
      %9130 = vmatmul.f32.gmra.mxu0 %v5938
      %v9131 = vpop.f32.mrf.mxu0
      %v9132 = vadd.f32 %v8723, %v9131
      %9133 = vmatmul.f32.gmra.mxu0 %v5940
      %v9134 = vpop.f32.mrf.mxu0
      %v9135 = vadd.f32 %v8726, %v9134
      %9136 = vmatmul.f32.gmra.mxu0 %v5942
      %v9137 = vpop.f32.mrf.mxu0
      %v9138 = vadd.f32 %v8729, %v9137
      %9139 = vmatmul.f32.gmra.mxu0 %v5944
      %v9140 = vpop.f32.mrf.mxu0
      %v9141 = vadd.f32 %v8732, %v9140
      %9142 = vmatmul.f32.gmra.mxu0 %v5946
      %v9143 = vpop.f32.mrf.mxu0
      %v9144 = vadd.f32 %v8735, %v9143
      %9145 = vmatmul.f32.gmra.mxu0 %v5948
      %v9146 = vpop.f32.mrf.mxu0
      %v9147 = vadd.f32 %v8738, %v9146
      %9148 = vmatmul.f32.gmra.mxu0 %v5950
      %v9149 = vpop.f32.mrf.mxu0
      %v9150 = vadd.f32 %v8741, %v9149
      %9151 = vmatmul.f32.gmra.mxu0 %v5952
      %v9152 = vpop.f32.mrf.mxu0
      %v9153 = vadd.f32 %v8744, %v9152
      %9154 = vmatmul.f32.gmra.mxu0 %v5954
      %v9155 = vpop.f32.mrf.mxu0
      %v9156 = vadd.f32 %v8747, %v9155
      %9157 = vmatmul.f32.gmra.mxu0 %v5956
      %v9158 = vpop.f32.mrf.mxu0
      %v9159 = vadd.f32 %v8750, %v9158
      %9160 = vmatmul.f32.gmra.mxu0 %v5958
      %v9161 = vpop.f32.mrf.mxu0
      %v9162 = vadd.f32 %v8753, %v9161
      %9163 = vmatmul.f32.gmra.mxu0 %v5960
      %v9164 = vpop.f32.mrf.mxu0
      %v9165 = vadd.f32 %v8756, %v9164
      %9166 = vmatmul.f32.gmra.mxu0 %v5962
      %v9167 = vpop.f32.mrf.mxu0
      %v9168 = vadd.f32 %v8759, %v9167
      %9169 = vmatmul.f32.gmra.mxu0 %v5964
      %v9170 = vpop.f32.mrf.mxu0
      %v9171 = vadd.f32 %v8762, %v9170
      %9172 = vmatmul.f32.gmra.mxu0 %v5966
      %v9173 = vpop.f32.mrf.mxu0
      %v9174 = vadd.f32 %v8765, %v9173
      %9175 = vmatmul.f32.gmra.mxu0 %v5968
      %v9176 = vpop.f32.mrf.mxu0
      %v9177 = vadd.f32 %v8768, %v9176
      %9178 = vmatmul.f32.gmra.mxu0 %v5970
      %v9179 = vpop.f32.mrf.mxu0
      %v9180 = vadd.f32 %v8771, %v9179
      %9181 = vmatmul.f32.gmra.mxu0 %v5972
      %v9182 = vpop.f32.mrf.mxu0
      %v9183 = vadd.f32 %v8774, %v9182
      %9184 = vmatmul.f32.gmra.mxu0 %v5974
      %v9185 = vpop.f32.mrf.mxu0
      %v9186 = vadd.f32 %v8777, %v9185
      %9187 = vmatmul.f32.gmra.mxu0 %v5976
      %v9188 = vpop.f32.mrf.mxu0
      %v9189 = vadd.f32 %v8780, %v9188
      %9190 = vmatmul.f32.gmra.mxu0 %v5978
      %v9191 = vpop.f32.mrf.mxu0
      %v9192 = vadd.f32 %v8783, %v9191
      %9193 = vmatmul.f32.gmra.mxu0 %v5980
      %v9194 = vpop.f32.mrf.mxu0
      %v9195 = vadd.f32 %v8786, %v9194
      %9196 = vmatmul.f32.gmra.mxu0 %v5982
      %v9197 = vpop.f32.mrf.mxu0
      %v9198 = vadd.f32 %v8789, %v9197
      %9199 = vmatmul.f32.gmra.mxu0 %v5984
      %v9200 = vpop.f32.mrf.mxu0
      %v9201 = vadd.f32 %v8792, %v9200
      %9202 = vmatmul.f32.gmra.mxu0 %v5986
      %v9203 = vpop.f32.mrf.mxu0
      %v9204 = vadd.f32 %v8795, %v9203
      %9205 = vmatmul.f32.gmra.mxu0 %v5988
      %v9206 = vpop.f32.mrf.mxu0
      %v9207 = vadd.f32 %v8798, %v9206
      %9208 = vmatmul.f32.gmra.mxu0 %v5990
      %v9209 = vpop.f32.mrf.mxu0
      %v9210 = vadd.f32 %v8801, %v9209
      %9211 = vmatmul.f32.gmra.mxu0 %v5992
      %v9212 = vpop.f32.mrf.mxu0
      %v9213 = vadd.f32 %v8804, %v9212
      %9214 = vmatmul.f32.gmra.mxu0 %v5994
      %v9215 = vpop.f32.mrf.mxu0
      %v9216 = vadd.f32 %v8807, %v9215
      %9217 = vmatmul.f32.gmra.mxu0 %v5996
      %v9218 = vpop.f32.mrf.mxu0
      %v9219 = vadd.f32 %v8810, %v9218
      %9220 = vmatmul.f32.gmra.mxu0 %v5998
      %v9221 = vpop.f32.mrf.mxu0
      %v9222 = vadd.f32 %v8813, %v9221
      %9223 = vmatmul.f32.gmra.mxu0 %v6000
      %v9224 = vpop.f32.mrf.mxu0
      %v9225 = vadd.f32 %v8816, %v9224
      %9226 = vmatmul.f32.gmra.mxu0 %v6002
      %v9227 = vpop.f32.mrf.mxu0
      %v9228 = vadd.f32 %v8819, %v9227
      %9229 = vmatmul.f32.gmra.mxu0 %v6004
      %v9230 = vpop.f32.mrf.mxu0
      %v9231 = vadd.f32 %v8822, %v9230
      %9232 = vmatmul.f32.gmra.mxu0 %v6006
      %v9233 = vpop.f32.mrf.mxu0
      %v9234 = vadd.f32 %v8825, %v9233
      %9235 = vmatmul.f32.gmra.mxu0 %v6008
      %v9236 = vpop.f32.mrf.mxu0
      %v9237 = vadd.f32 %v8828, %v9236
      %9238 = vmatmul.f32.gmra.mxu0 %v6010
      %v9239 = vpop.f32.mrf.mxu0
      %v9240 = vadd.f32 %v8831, %v9239
      %9241 = vmatmul.f32.gmra.mxu0 %v6012
      %v9242 = vpop.f32.mrf.mxu0
      %v9243 = vadd.f32 %v8834, %v9242
      %9244 = vmatmul.f32.gmra.mxu0 %v6014
      %v9245 = vpop.f32.mrf.mxu0
      %v9246 = vadd.f32 %v8837, %v9245
      %9247 = vmatmul.f32.gmra.mxu0 %v6016
      %v9248 = vpop.f32.mrf.mxu0
      %v9249 = vadd.f32 %v8840, %v9248
      %9250 = vmatmul.f32.gmra.mxu0 %v6018
      %v9251 = vpop.f32.mrf.mxu0
      %v9252 = vadd.f32 %v8843, %v9251
      %9253 = vmatmul.f32.gmra.mxu0 %v6020
      %v9254 = vpop.f32.mrf.mxu0
      %v9255 = vadd.f32 %v8846, %v9254
      %9256 = vmatmul.f32.gmra.mxu0 %v6022
      %v9257 = vpop.f32.mrf.mxu0
      %v9258 = vadd.f32 %v8849, %v9257
      %9259 = vmatmul.f32.gmra.mxu0 %v6024
      %v9260 = vpop.f32.mrf.mxu0
      %v9261 = vadd.f32 %v8852, %v9260
      %9262 = vmatmul.f32.gmra.mxu0 %v6026
      %v9263 = vpop.f32.mrf.mxu0
      %v9264 = vadd.f32 %v8855, %v9263
      %9265 = vmatmul.f32.gmra.mxu0 %v6028
      %v9266 = vpop.f32.mrf.mxu0
      %v9267 = vadd.f32 %v8858, %v9266
      %9268 = vmatmul.f32.gmra.mxu0 %v6030
      %v9269 = vpop.f32.mrf.mxu0
      %v9270 = vadd.f32 %v8861, %v9269
      %9271 = vmatmul.f32.gmra.mxu0 %v6032
      %v9272 = vpop.f32.mrf.mxu0
      %v9273 = vadd.f32 %v8864, %v9272
      %9274 = vmatmul.f32.gmra.mxu0 %v6034
      %v9275 = vpop.f32.mrf.mxu0
      %v9276 = vadd.f32 %v8867, %v9275
      %9277 = vmatmul.f32.gmra.mxu0 %v6036
      %v9278 = vpop.f32.mrf.mxu0
      %v9279 = vadd.f32 %v8870, %v9278
      %9280 = vmatmul.f32.gmra.mxu0 %v6038
      %v9281 = vpop.f32.mrf.mxu0
      %v9282 = vadd.f32 %v8873, %v9281
      %9283 = vmatmul.f32.gmra.mxu0 %v6040
      %v9284 = vpop.f32.mrf.mxu0
      %v9285 = vadd.f32 %v8876, %v9284
      %9286 = vmatmul.f32.gmra.mxu0 %v6042
      %v9287 = vpop.f32.mrf.mxu0
      %v9288 = vadd.f32 %v8879, %v9287
      %9289 = vmatmul.f32.gmra.mxu0 %v6044
      %v9290 = vpop.f32.mrf.mxu0
      %v9291 = vadd.f32 %v8882, %v9290
      %9292 = vmatmul.f32.gmra.mxu0 %v6046
      %v9293 = vpop.f32.mrf.mxu0
      %v9294 = vadd.f32 %v8885, %v9293
      %9295 = vmatmul.f32.gmra.mxu0 %v6048
      %v9296 = vpop.f32.mrf.mxu0
      %v9297 = vadd.f32 %v8888, %v9296
      %9298 = vmatmul.f32.gmra.mxu0 %v6050
      %v9299 = vpop.f32.mrf.mxu0
      %v9300 = vadd.f32 %v8891, %v9299
      %9301 = vmatmul.f32.gmra.mxu0 %v6052
      %v9302 = vpop.f32.mrf.mxu0
      %v9303 = vadd.f32 %v8894, %v9302
      %9304 = vmatmul.f32.gmra.mxu0 %v6054
      %v9305 = vpop.f32.mrf.mxu0
      %v9306 = vadd.f32 %v8897, %v9305
      %9307 = vmatmul.f32.gmra.mxu0 %v6056
      %v9308 = vpop.f32.mrf.mxu0
      %v9309 = vadd.f32 %v8900, %v9308
      %9310 = vmatmul.f32.gmra.mxu0 %v6058
      %v9311 = vpop.f32.mrf.mxu0
      %v9312 = vadd.f32 %v8903, %v9311
      %9313 = vmatmul.f32.gmra.mxu0 %v6060
      %v9314 = vpop.f32.mrf.mxu0
      %v9315 = vadd.f32 %v8906, %v9314
      %9316 = vmatmul.f32.gmra.mxu0 %v6062
      %v9317 = vpop.f32.mrf.mxu0
      %v9318 = vadd.f32 %v8909, %v9317
      %9319 = vmatmul.f32.gmra.mxu0 %v6064
      %v9320 = vpop.f32.mrf.mxu0
      %v9321 = vadd.f32 %v8912, %v9320
      %9322 = vmatmul.f32.gmra.mxu0 %v6066
      %v9323 = vpop.f32.mrf.mxu0
      %v9324 = vadd.f32 %v8915, %v9323
      %9325 = vmatmul.f32.gmra.mxu0 %v6068
      %v9326 = vpop.f32.mrf.mxu0
      %v9327 = vadd.f32 %v8918, %v9326
      %9328 = vmatmul.f32.gmra.mxu0 %v6070
      %v9329 = vpop.f32.mrf.mxu0
      %v9330 = vadd.f32 %v8921, %v9329
      %9331 = vmatmul.f32.gmra.mxu0 %v6072
      %v9332 = vpop.f32.mrf.mxu0
      %v9333 = vadd.f32 %v8924, %v9332
      %9334 = vmatmul.f32.gmra.mxu0 %v6074
      %v9335 = vpop.f32.mrf.mxu0
      %v9336 = vadd.f32 %v8927, %v9335
      %9337 = vmatmul.f32.gmra.mxu0 %v6076
      %v9338 = vpop.f32.mrf.mxu0
      %v9339 = vadd.f32 %v8930, %v9338
      %9340 = vmatmul.f32.gmra.mxu0 %v6078
      %v9341 = vpop.f32.mrf.mxu0
      %v9342 = vadd.f32 %v8933, %v9341
      %9343 = vmatmul.f32.gmra.mxu0 %v6080
      %v9344 = vpop.f32.mrf.mxu0
      %v9345 = vadd.f32 %v8936, %v9344
      %9346 = vmatmul.f32.gmra.mxu0 %v6082
      %v9347 = vpop.f32.mrf.mxu0
      %v9348 = vadd.f32 %v8939, %v9347
      %9349 = vmatmul.f32.gmra.mxu0 %v6084
      %v9350 = vpop.f32.mrf.mxu0
      %v9351 = vadd.f32 %v8942, %v9350
      %9352 = vmatmul.f32.gmra.mxu0 %v6086
      %v9353 = vpop.f32.mrf.mxu0
      %v9354 = vadd.f32 %v8945, %v9353
      %9355 = vmatmul.f32.gmra.mxu0 %v6088
      %v9356 = vpop.f32.mrf.mxu0
      %v9357 = vadd.f32 %v8948, %v9356
      %9358 = vmatmul.f32.gmra.mxu0 %v6090
      %v9359 = vpop.f32.mrf.mxu0
      %v9360 = vadd.f32 %v8951, %v9359
      %9361 = vmatmul.f32.gmra.mxu0 %v6092
      %v9362 = vpop.f32.mrf.mxu0
      %v9363 = vadd.f32 %v8954, %v9362
      %9364 = vmatmul.f32.gmra.mxu0 %v6094
      %v9365 = vpop.f32.mrf.mxu0
      %v9366 = vadd.f32 %v8957, %v9365
      %9367 = vmatmul.f32.gmra.mxu0 %v6096
      %v9368 = vpop.f32.mrf.mxu0
      %v9369 = vadd.f32 %v8960, %v9368
      %9370 = vmatmul.f32.gmra.mxu0 %v8974
      %v9371 = vpop.f32.mrf.mxu0
      %v9372 = vadd.f32 %v8963, %v9371
      %9373 = vmatmul.f32.gmra.mxu0 %v8976
      %v9374 = vpop.f32.mrf.mxu0
      %v9375 = vadd.f32 %v8966, %v9374
      %9376 = vmatmul.f32.gmra.mxu0 %v8978
      %v9377 = vpop.f32.mrf.mxu0
      %v9378 = vadd.f32 %v8969, %v9377
      %9379 = vmatmul.f32.gmra.mxu0 %v8980
      %v9380 = vpop.f32.mrf.mxu0
      %v9381 = vadd.f32 %v8972, %v9380
      %9382 = vdwg.mxu0
      %v9383 = vadd.f32 %v8419, %v9000
      %v9384 = vadd.f32 %v8420, %v9003
      %v9385 = vadd.f32 %v8421, %v9006
      %v9386 = vadd.f32 %v8422, %v9009
      %v9387 = vadd.f32 %v8423, %v9012
      %v9388 = vadd.f32 %v8424, %v9015
      %v9389 = vadd.f32 %v8425, %v9018
      %v9390 = vadd.f32 %v8426, %v9021
      %v9391 = vadd.f32 %v8427, %v9024
      %v9392 = vadd.f32 %v8428, %v9027
      %v9393 = vadd.f32 %v8429, %v9030
      %v9394 = vadd.f32 %v8430, %v9033
      %v9395 = vadd.f32 %v8431, %v9036
      %v9396 = vadd.f32 %v8432, %v9039
      %v9397 = vadd.f32 %v8433, %v9042
      %v9398 = vadd.f32 %v8434, %v9045
      %v9399 = vadd.f32 %v8435, %v9048
      %v9400 = vadd.f32 %v8436, %v9051
      %v9401 = vadd.f32 %v8437, %v9054
      %v9402 = vadd.f32 %v8438, %v9057
      %v9403 = vadd.f32 %v8439, %v9060
      %v9404 = vadd.f32 %v8440, %v9063
      %v9405 = vadd.f32 %v8441, %v9066
      %v9406 = vadd.f32 %v8442, %v9069
      %v9407 = vadd.f32 %v8443, %v9072
      %v9408 = vadd.f32 %v8444, %v9075
      %v9409 = vadd.f32 %v8445, %v9078
      %v9410 = vadd.f32 %v8446, %v9081
      %v9411 = vadd.f32 %v8447, %v9084
      %v9412 = vadd.f32 %v8448, %v9087
      %v9413 = vadd.f32 %v8449, %v9090
      %v9414 = vadd.f32 %v8450, %v9093
      %v9415 = vadd.f32 %v8451, %v9096
      %v9416 = vadd.f32 %v8452, %v9099
      %v9417 = vadd.f32 %v8453, %v9102
      %v9418 = vadd.f32 %v8454, %v9105
      %v9419 = vadd.f32 %v8455, %v9108
      %v9420 = vadd.f32 %v8456, %v9111
      %v9421 = vadd.f32 %v8457, %v9114
      %v9422 = vadd.f32 %v8458, %v9117
      %v9423 = vadd.f32 %v8459, %v9120
      %v9424 = vadd.f32 %v8460, %v9123
      %v9425 = vadd.f32 %v8461, %v9126
      %v9426 = vadd.f32 %v8462, %v9129
      %v9427 = vadd.f32 %v8463, %v9132
      %v9428 = vadd.f32 %v8464, %v9135
      %v9429 = vadd.f32 %v8465, %v9138
      %v9430 = vadd.f32 %v8466, %v9141
      %v9431 = vadd.f32 %v8467, %v9144
      %v9432 = vadd.f32 %v8468, %v9147
      %v9433 = vadd.f32 %v8469, %v9150
      %v9434 = vadd.f32 %v8470, %v9153
      %v9435 = vadd.f32 %v8471, %v9156
      %v9436 = vadd.f32 %v8472, %v9159
      %v9437 = vadd.f32 %v8473, %v9162
      %v9438 = vadd.f32 %v8474, %v9165
      %v9439 = vadd.f32 %v8475, %v9168
      %v9440 = vadd.f32 %v8476, %v9171
      %v9441 = vadd.f32 %v8477, %v9174
      %v9442 = vadd.f32 %v8478, %v9177
      %v9443 = vadd.f32 %v8479, %v9180
      %v9444 = vadd.f32 %v8480, %v9183
      %v9445 = vadd.f32 %v8481, %v9186
      %v9446 = vadd.f32 %v8482, %v9189
      %v9447 = vadd.f32 %v8483, %v9192
      %v9448 = vadd.f32 %v8484, %v9195
      %v9449 = vadd.f32 %v8485, %v9198
      %v9450 = vadd.f32 %v8486, %v9201
      %v9451 = vadd.f32 %v8487, %v9204
      %v9452 = vadd.f32 %v8488, %v9207
      %v9453 = vadd.f32 %v8489, %v9210
      %v9454 = vadd.f32 %v8490, %v9213
      %v9455 = vadd.f32 %v8491, %v9216
      %v9456 = vadd.f32 %v8492, %v9219
      %v9457 = vadd.f32 %v8493, %v9222
      %v9458 = vadd.f32 %v8494, %v9225
      %v9459 = vadd.f32 %v8495, %v9228
      %v9460 = vadd.f32 %v8496, %v9231
      %v9461 = vadd.f32 %v8497, %v9234
      %v9462 = vadd.f32 %v8498, %v9237
      %v9463 = vadd.f32 %v8499, %v9240
      %v9464 = vadd.f32 %v8500, %v9243
      %v9465 = vadd.f32 %v8501, %v9246
      %v9466 = vadd.f32 %v8502, %v9249
      %v9467 = vadd.f32 %v8503, %v9252
      %v9468 = vadd.f32 %v8504, %v9255
      %v9469 = vadd.f32 %v8505, %v9258
      %v9470 = vadd.f32 %v8506, %v9261
      %v9471 = vadd.f32 %v8507, %v9264
      %v9472 = vadd.f32 %v8508, %v9267
      %v9473 = vadd.f32 %v8509, %v9270
      %v9474 = vadd.f32 %v8510, %v9273
      %v9475 = vadd.f32 %v8511, %v9276
      %v9476 = vadd.f32 %v8512, %v9279
      %v9477 = vadd.f32 %v8513, %v9282
      %v9478 = vadd.f32 %v8514, %v9285
      %v9479 = vadd.f32 %v8515, %v9288
      %v9480 = vadd.f32 %v8516, %v9291
      %v9481 = vadd.f32 %v8517, %v9294
      %v9482 = vadd.f32 %v8518, %v9297
      %v9483 = vadd.f32 %v8519, %v9300
      %v9484 = vadd.f32 %v8520, %v9303
      %v9485 = vadd.f32 %v8521, %v9306
      %v9486 = vadd.f32 %v8522, %v9309
      %v9487 = vadd.f32 %v8523, %v9312
      %v9488 = vadd.f32 %v8524, %v9315
      %v9489 = vadd.f32 %v8525, %v9318
      %v9490 = vadd.f32 %v8526, %v9321
      %v9491 = vadd.f32 %v8527, %v9324
      %v9492 = vadd.f32 %v8528, %v9327
      %v9493 = vadd.f32 %v8529, %v9330
      %v9494 = vadd.f32 %v8530, %v9333
      %v9495 = vadd.f32 %v8531, %v9336
      %v9496 = vadd.f32 %v8532, %v9339
      %v9497 = vadd.f32 %v8533, %v9342
      %v9498 = vadd.f32 %v8534, %v9345
      %v9499 = vadd.f32 %v8535, %v9348
      %v9500 = vadd.f32 %v8536, %v9351
      %v9501 = vadd.f32 %v8537, %v9354
      %v9502 = vadd.f32 %v8538, %v9357
      %v9503 = vadd.f32 %v8539, %v9360
      %v9504 = vadd.f32 %v8540, %v9363
      %v9505 = vadd.f32 %v8541, %v9366
      %v9506 = vadd.f32 %v8542, %v9369
      %v9507 = vadd.f32 %v8543, %v9372
      %v9508 = vadd.f32 %v8544, %v9375
      %v9509 = vadd.f32 %v8545, %v9378
      %v9510 = vadd.f32 %v8546, %v9381
      %v9512 = vsel %vm826, %v803, 0
      %v9515 = vsel %vm826, %v804, 0
      %v9518 = vsel %vm826, %v805, 0
      %v9521 = vsel %vm826, %v806, 0
      %9523 = vmatpush.msra.mxu0 0.0
      %9524 = vmatpush.msra.mxu0 0.0
      %9525 = vmatpush.msra.mxu0 0.0
      %9526 = vmatpush.msra.mxu0 0.0
      %9527 = vmatpush.msra.mxu0 0.0
      %9528 = vmatpush.msra.mxu0 0.0
      %9529 = vmatpush.msra.mxu0 0.0
      %9530 = vmatpush.msra.mxu0 0.0
      %9531 = vmatpush.msra.mxu0 0.0
      %9532 = vmatpush.msra.mxu0 0.0
      %9533 = vmatpush.msra.mxu0 0.0
      %9534 = vmatpush.msra.mxu0 0.0
      %9535 = vmatpush.msra.mxu0 0.0
      %9536 = vmatpush.msra.mxu0 0.0
      %9537 = vmatpush.msra.mxu0 0.0
      %9538 = vmatpush.msra.mxu0 %v823
      %9539 = vmatmul.f32.gmra.mxu0 %v852
      %v9540 = vpop.f32.mrf.mxu0
      %v9541 = vadd.f32 0.0, %v9540
      %9542 = vmatmul.f32.gmra.mxu0 %v855
      %v9543 = vpop.f32.mrf.mxu0
      %v9544 = vadd.f32 0.0, %v9543
      %9545 = vmatmul.f32.gmra.mxu0 %v858
      %v9546 = vpop.f32.mrf.mxu0
      %v9547 = vadd.f32 0.0, %v9546
      %9548 = vmatmul.f32.gmra.mxu0 %v861
      %v9549 = vpop.f32.mrf.mxu0
      %v9550 = vadd.f32 0.0, %v9549
      %9551 = vmatmul.f32.gmra.mxu0 %v864
      %v9552 = vpop.f32.mrf.mxu0
      %v9553 = vadd.f32 0.0, %v9552
      %9554 = vmatmul.f32.gmra.mxu0 %v867
      %v9555 = vpop.f32.mrf.mxu0
      %v9556 = vadd.f32 0.0, %v9555
      %9557 = vmatmul.f32.gmra.mxu0 %v870
      %v9558 = vpop.f32.mrf.mxu0
      %v9559 = vadd.f32 0.0, %v9558
      %9560 = vmatmul.f32.gmra.mxu0 %v873
      %v9561 = vpop.f32.mrf.mxu0
      %v9562 = vadd.f32 0.0, %v9561
      %9563 = vmatmul.f32.gmra.mxu0 %v876
      %v9564 = vpop.f32.mrf.mxu0
      %v9565 = vadd.f32 0.0, %v9564
      %9566 = vmatmul.f32.gmra.mxu0 %v879
      %v9567 = vpop.f32.mrf.mxu0
      %v9568 = vadd.f32 0.0, %v9567
      %9569 = vmatmul.f32.gmra.mxu0 %v882
      %v9570 = vpop.f32.mrf.mxu0
      %v9571 = vadd.f32 0.0, %v9570
      %9572 = vmatmul.f32.gmra.mxu0 %v885
      %v9573 = vpop.f32.mrf.mxu0
      %v9574 = vadd.f32 0.0, %v9573
      %9575 = vmatmul.f32.gmra.mxu0 %v888
      %v9576 = vpop.f32.mrf.mxu0
      %v9577 = vadd.f32 0.0, %v9576
      %9578 = vmatmul.f32.gmra.mxu0 %v891
      %v9579 = vpop.f32.mrf.mxu0
      %v9580 = vadd.f32 0.0, %v9579
      %9581 = vmatmul.f32.gmra.mxu0 %v894
      %v9582 = vpop.f32.mrf.mxu0
      %v9583 = vadd.f32 0.0, %v9582
      %9584 = vmatmul.f32.gmra.mxu0 %v897
      %v9585 = vpop.f32.mrf.mxu0
      %v9586 = vadd.f32 0.0, %v9585
      %9587 = vmatmul.f32.gmra.mxu0 %v900
      %v9588 = vpop.f32.mrf.mxu0
      %v9589 = vadd.f32 0.0, %v9588
      %9590 = vmatmul.f32.gmra.mxu0 %v903
      %v9591 = vpop.f32.mrf.mxu0
      %v9592 = vadd.f32 0.0, %v9591
      %9593 = vmatmul.f32.gmra.mxu0 %v906
      %v9594 = vpop.f32.mrf.mxu0
      %v9595 = vadd.f32 0.0, %v9594
      %9596 = vmatmul.f32.gmra.mxu0 %v909
      %v9597 = vpop.f32.mrf.mxu0
      %v9598 = vadd.f32 0.0, %v9597
      %9599 = vmatmul.f32.gmra.mxu0 %v912
      %v9600 = vpop.f32.mrf.mxu0
      %v9601 = vadd.f32 0.0, %v9600
      %9602 = vmatmul.f32.gmra.mxu0 %v915
      %v9603 = vpop.f32.mrf.mxu0
      %v9604 = vadd.f32 0.0, %v9603
      %9605 = vmatmul.f32.gmra.mxu0 %v918
      %v9606 = vpop.f32.mrf.mxu0
      %v9607 = vadd.f32 0.0, %v9606
      %9608 = vmatmul.f32.gmra.mxu0 %v921
      %v9609 = vpop.f32.mrf.mxu0
      %v9610 = vadd.f32 0.0, %v9609
      %9611 = vmatmul.f32.gmra.mxu0 %v924
      %v9612 = vpop.f32.mrf.mxu0
      %v9613 = vadd.f32 0.0, %v9612
      %9614 = vmatmul.f32.gmra.mxu0 %v927
      %v9615 = vpop.f32.mrf.mxu0
      %v9616 = vadd.f32 0.0, %v9615
      %9617 = vmatmul.f32.gmra.mxu0 %v930
      %v9618 = vpop.f32.mrf.mxu0
      %v9619 = vadd.f32 0.0, %v9618
      %9620 = vmatmul.f32.gmra.mxu0 %v933
      %v9621 = vpop.f32.mrf.mxu0
      %v9622 = vadd.f32 0.0, %v9621
      %9623 = vmatmul.f32.gmra.mxu0 %v936
      %v9624 = vpop.f32.mrf.mxu0
      %v9625 = vadd.f32 0.0, %v9624
      %9626 = vmatmul.f32.gmra.mxu0 %v939
      %v9627 = vpop.f32.mrf.mxu0
      %v9628 = vadd.f32 0.0, %v9627
      %9629 = vmatmul.f32.gmra.mxu0 %v942
      %v9630 = vpop.f32.mrf.mxu0
      %v9631 = vadd.f32 0.0, %v9630
      %9632 = vmatmul.f32.gmra.mxu0 %v945
      %v9633 = vpop.f32.mrf.mxu0
      %v9634 = vadd.f32 0.0, %v9633
      %9635 = vmatmul.f32.gmra.mxu0 %v948
      %v9636 = vpop.f32.mrf.mxu0
      %v9637 = vadd.f32 0.0, %v9636
      %9638 = vmatmul.f32.gmra.mxu0 %v951
      %v9639 = vpop.f32.mrf.mxu0
      %v9640 = vadd.f32 0.0, %v9639
      %9641 = vmatmul.f32.gmra.mxu0 %v954
      %v9642 = vpop.f32.mrf.mxu0
      %v9643 = vadd.f32 0.0, %v9642
      %9644 = vmatmul.f32.gmra.mxu0 %v957
      %v9645 = vpop.f32.mrf.mxu0
      %v9646 = vadd.f32 0.0, %v9645
      %9647 = vmatmul.f32.gmra.mxu0 %v960
      %v9648 = vpop.f32.mrf.mxu0
      %v9649 = vadd.f32 0.0, %v9648
      %9650 = vmatmul.f32.gmra.mxu0 %v963
      %v9651 = vpop.f32.mrf.mxu0
      %v9652 = vadd.f32 0.0, %v9651
      %9653 = vmatmul.f32.gmra.mxu0 %v966
      %v9654 = vpop.f32.mrf.mxu0
      %v9655 = vadd.f32 0.0, %v9654
      %9656 = vmatmul.f32.gmra.mxu0 %v969
      %v9657 = vpop.f32.mrf.mxu0
      %v9658 = vadd.f32 0.0, %v9657
      %9659 = vmatmul.f32.gmra.mxu0 %v972
      %v9660 = vpop.f32.mrf.mxu0
      %v9661 = vadd.f32 0.0, %v9660
      %9662 = vmatmul.f32.gmra.mxu0 %v975
      %v9663 = vpop.f32.mrf.mxu0
      %v9664 = vadd.f32 0.0, %v9663
      %9665 = vmatmul.f32.gmra.mxu0 %v978
      %v9666 = vpop.f32.mrf.mxu0
      %v9667 = vadd.f32 0.0, %v9666
      %9668 = vmatmul.f32.gmra.mxu0 %v981
      %v9669 = vpop.f32.mrf.mxu0
      %v9670 = vadd.f32 0.0, %v9669
      %9671 = vmatmul.f32.gmra.mxu0 %v984
      %v9672 = vpop.f32.mrf.mxu0
      %v9673 = vadd.f32 0.0, %v9672
      %9674 = vmatmul.f32.gmra.mxu0 %v987
      %v9675 = vpop.f32.mrf.mxu0
      %v9676 = vadd.f32 0.0, %v9675
      %9677 = vmatmul.f32.gmra.mxu0 %v990
      %v9678 = vpop.f32.mrf.mxu0
      %v9679 = vadd.f32 0.0, %v9678
      %9680 = vmatmul.f32.gmra.mxu0 %v993
      %v9681 = vpop.f32.mrf.mxu0
      %v9682 = vadd.f32 0.0, %v9681
      %9683 = vmatmul.f32.gmra.mxu0 %v996
      %v9684 = vpop.f32.mrf.mxu0
      %v9685 = vadd.f32 0.0, %v9684
      %9686 = vmatmul.f32.gmra.mxu0 %v999
      %v9687 = vpop.f32.mrf.mxu0
      %v9688 = vadd.f32 0.0, %v9687
      %9689 = vmatmul.f32.gmra.mxu0 %v1002
      %v9690 = vpop.f32.mrf.mxu0
      %v9691 = vadd.f32 0.0, %v9690
      %9692 = vmatmul.f32.gmra.mxu0 %v1005
      %v9693 = vpop.f32.mrf.mxu0
      %v9694 = vadd.f32 0.0, %v9693
      %9695 = vmatmul.f32.gmra.mxu0 %v1008
      %v9696 = vpop.f32.mrf.mxu0
      %v9697 = vadd.f32 0.0, %v9696
      %9698 = vmatmul.f32.gmra.mxu0 %v1011
      %v9699 = vpop.f32.mrf.mxu0
      %v9700 = vadd.f32 0.0, %v9699
      %9701 = vmatmul.f32.gmra.mxu0 %v1014
      %v9702 = vpop.f32.mrf.mxu0
      %v9703 = vadd.f32 0.0, %v9702
      %9704 = vmatmul.f32.gmra.mxu0 %v1017
      %v9705 = vpop.f32.mrf.mxu0
      %v9706 = vadd.f32 0.0, %v9705
      %9707 = vmatmul.f32.gmra.mxu0 %v1020
      %v9708 = vpop.f32.mrf.mxu0
      %v9709 = vadd.f32 0.0, %v9708
      %9710 = vmatmul.f32.gmra.mxu0 %v1023
      %v9711 = vpop.f32.mrf.mxu0
      %v9712 = vadd.f32 0.0, %v9711
      %9713 = vmatmul.f32.gmra.mxu0 %v1026
      %v9714 = vpop.f32.mrf.mxu0
      %v9715 = vadd.f32 0.0, %v9714
      %9716 = vmatmul.f32.gmra.mxu0 %v1029
      %v9717 = vpop.f32.mrf.mxu0
      %v9718 = vadd.f32 0.0, %v9717
      %9719 = vmatmul.f32.gmra.mxu0 %v1032
      %v9720 = vpop.f32.mrf.mxu0
      %v9721 = vadd.f32 0.0, %v9720
      %9722 = vmatmul.f32.gmra.mxu0 %v1035
      %v9723 = vpop.f32.mrf.mxu0
      %v9724 = vadd.f32 0.0, %v9723
      %9725 = vmatmul.f32.gmra.mxu0 %v1038
      %v9726 = vpop.f32.mrf.mxu0
      %v9727 = vadd.f32 0.0, %v9726
      %9728 = vmatmul.f32.gmra.mxu0 %v1041
      %v9729 = vpop.f32.mrf.mxu0
      %v9730 = vadd.f32 0.0, %v9729
      %9731 = vmatmul.f32.gmra.mxu0 %v1044
      %v9732 = vpop.f32.mrf.mxu0
      %v9733 = vadd.f32 0.0, %v9732
      %9734 = vmatmul.f32.gmra.mxu0 %v1047
      %v9735 = vpop.f32.mrf.mxu0
      %v9736 = vadd.f32 0.0, %v9735
      %9737 = vmatmul.f32.gmra.mxu0 %v1050
      %v9738 = vpop.f32.mrf.mxu0
      %v9739 = vadd.f32 0.0, %v9738
      %9740 = vmatmul.f32.gmra.mxu0 %v1053
      %v9741 = vpop.f32.mrf.mxu0
      %v9742 = vadd.f32 0.0, %v9741
      %9743 = vmatmul.f32.gmra.mxu0 %v1056
      %v9744 = vpop.f32.mrf.mxu0
      %v9745 = vadd.f32 0.0, %v9744
      %9746 = vmatmul.f32.gmra.mxu0 %v1059
      %v9747 = vpop.f32.mrf.mxu0
      %v9748 = vadd.f32 0.0, %v9747
      %9749 = vmatmul.f32.gmra.mxu0 %v1062
      %v9750 = vpop.f32.mrf.mxu0
      %v9751 = vadd.f32 0.0, %v9750
      %9752 = vmatmul.f32.gmra.mxu0 %v1065
      %v9753 = vpop.f32.mrf.mxu0
      %v9754 = vadd.f32 0.0, %v9753
      %9755 = vmatmul.f32.gmra.mxu0 %v1068
      %v9756 = vpop.f32.mrf.mxu0
      %v9757 = vadd.f32 0.0, %v9756
      %9758 = vmatmul.f32.gmra.mxu0 %v1071
      %v9759 = vpop.f32.mrf.mxu0
      %v9760 = vadd.f32 0.0, %v9759
      %9761 = vmatmul.f32.gmra.mxu0 %v1074
      %v9762 = vpop.f32.mrf.mxu0
      %v9763 = vadd.f32 0.0, %v9762
      %9764 = vmatmul.f32.gmra.mxu0 %v1077
      %v9765 = vpop.f32.mrf.mxu0
      %v9766 = vadd.f32 0.0, %v9765
      %9767 = vmatmul.f32.gmra.mxu0 %v1080
      %v9768 = vpop.f32.mrf.mxu0
      %v9769 = vadd.f32 0.0, %v9768
      %9770 = vmatmul.f32.gmra.mxu0 %v1083
      %v9771 = vpop.f32.mrf.mxu0
      %v9772 = vadd.f32 0.0, %v9771
      %9773 = vmatmul.f32.gmra.mxu0 %v1086
      %v9774 = vpop.f32.mrf.mxu0
      %v9775 = vadd.f32 0.0, %v9774
      %9776 = vmatmul.f32.gmra.mxu0 %v1089
      %v9777 = vpop.f32.mrf.mxu0
      %v9778 = vadd.f32 0.0, %v9777
      %9779 = vmatmul.f32.gmra.mxu0 %v1092
      %v9780 = vpop.f32.mrf.mxu0
      %v9781 = vadd.f32 0.0, %v9780
      %9782 = vmatmul.f32.gmra.mxu0 %v1095
      %v9783 = vpop.f32.mrf.mxu0
      %v9784 = vadd.f32 0.0, %v9783
      %9785 = vmatmul.f32.gmra.mxu0 %v1098
      %v9786 = vpop.f32.mrf.mxu0
      %v9787 = vadd.f32 0.0, %v9786
      %9788 = vmatmul.f32.gmra.mxu0 %v1101
      %v9789 = vpop.f32.mrf.mxu0
      %v9790 = vadd.f32 0.0, %v9789
      %9791 = vmatmul.f32.gmra.mxu0 %v1104
      %v9792 = vpop.f32.mrf.mxu0
      %v9793 = vadd.f32 0.0, %v9792
      %9794 = vmatmul.f32.gmra.mxu0 %v1107
      %v9795 = vpop.f32.mrf.mxu0
      %v9796 = vadd.f32 0.0, %v9795
      %9797 = vmatmul.f32.gmra.mxu0 %v1110
      %v9798 = vpop.f32.mrf.mxu0
      %v9799 = vadd.f32 0.0, %v9798
      %9800 = vmatmul.f32.gmra.mxu0 %v1113
      %v9801 = vpop.f32.mrf.mxu0
      %v9802 = vadd.f32 0.0, %v9801
      %9803 = vmatmul.f32.gmra.mxu0 %v1116
      %v9804 = vpop.f32.mrf.mxu0
      %v9805 = vadd.f32 0.0, %v9804
      %9806 = vmatmul.f32.gmra.mxu0 %v1119
      %v9807 = vpop.f32.mrf.mxu0
      %v9808 = vadd.f32 0.0, %v9807
      %9809 = vmatmul.f32.gmra.mxu0 %v1122
      %v9810 = vpop.f32.mrf.mxu0
      %v9811 = vadd.f32 0.0, %v9810
      %9812 = vmatmul.f32.gmra.mxu0 %v1125
      %v9813 = vpop.f32.mrf.mxu0
      %v9814 = vadd.f32 0.0, %v9813
      %9815 = vmatmul.f32.gmra.mxu0 %v1128
      %v9816 = vpop.f32.mrf.mxu0
      %v9817 = vadd.f32 0.0, %v9816
      %9818 = vmatmul.f32.gmra.mxu0 %v1131
      %v9819 = vpop.f32.mrf.mxu0
      %v9820 = vadd.f32 0.0, %v9819
      %9821 = vmatmul.f32.gmra.mxu0 %v1134
      %v9822 = vpop.f32.mrf.mxu0
      %v9823 = vadd.f32 0.0, %v9822
      %9824 = vmatmul.f32.gmra.mxu0 %v1137
      %v9825 = vpop.f32.mrf.mxu0
      %v9826 = vadd.f32 0.0, %v9825
      %9827 = vmatmul.f32.gmra.mxu0 %v1140
      %v9828 = vpop.f32.mrf.mxu0
      %v9829 = vadd.f32 0.0, %v9828
      %9830 = vmatmul.f32.gmra.mxu0 %v1143
      %v9831 = vpop.f32.mrf.mxu0
      %v9832 = vadd.f32 0.0, %v9831
      %9833 = vmatmul.f32.gmra.mxu0 %v1146
      %v9834 = vpop.f32.mrf.mxu0
      %v9835 = vadd.f32 0.0, %v9834
      %9836 = vmatmul.f32.gmra.mxu0 %v1149
      %v9837 = vpop.f32.mrf.mxu0
      %v9838 = vadd.f32 0.0, %v9837
      %9839 = vmatmul.f32.gmra.mxu0 %v1152
      %v9840 = vpop.f32.mrf.mxu0
      %v9841 = vadd.f32 0.0, %v9840
      %9842 = vmatmul.f32.gmra.mxu0 %v1155
      %v9843 = vpop.f32.mrf.mxu0
      %v9844 = vadd.f32 0.0, %v9843
      %9845 = vmatmul.f32.gmra.mxu0 %v1158
      %v9846 = vpop.f32.mrf.mxu0
      %v9847 = vadd.f32 0.0, %v9846
      %9848 = vmatmul.f32.gmra.mxu0 %v1161
      %v9849 = vpop.f32.mrf.mxu0
      %v9850 = vadd.f32 0.0, %v9849
      %9851 = vmatmul.f32.gmra.mxu0 %v1164
      %v9852 = vpop.f32.mrf.mxu0
      %v9853 = vadd.f32 0.0, %v9852
      %9854 = vmatmul.f32.gmra.mxu0 %v1167
      %v9855 = vpop.f32.mrf.mxu0
      %v9856 = vadd.f32 0.0, %v9855
      %9857 = vmatmul.f32.gmra.mxu0 %v1170
      %v9858 = vpop.f32.mrf.mxu0
      %v9859 = vadd.f32 0.0, %v9858
      %9860 = vmatmul.f32.gmra.mxu0 %v1173
      %v9861 = vpop.f32.mrf.mxu0
      %v9862 = vadd.f32 0.0, %v9861
      %9863 = vmatmul.f32.gmra.mxu0 %v1176
      %v9864 = vpop.f32.mrf.mxu0
      %v9865 = vadd.f32 0.0, %v9864
      %9866 = vmatmul.f32.gmra.mxu0 %v1179
      %v9867 = vpop.f32.mrf.mxu0
      %v9868 = vadd.f32 0.0, %v9867
      %9869 = vmatmul.f32.gmra.mxu0 %v1182
      %v9870 = vpop.f32.mrf.mxu0
      %v9871 = vadd.f32 0.0, %v9870
      %9872 = vmatmul.f32.gmra.mxu0 %v1185
      %v9873 = vpop.f32.mrf.mxu0
      %v9874 = vadd.f32 0.0, %v9873
      %9875 = vmatmul.f32.gmra.mxu0 %v1188
      %v9876 = vpop.f32.mrf.mxu0
      %v9877 = vadd.f32 0.0, %v9876
      %9878 = vmatmul.f32.gmra.mxu0 %v1191
      %v9879 = vpop.f32.mrf.mxu0
      %v9880 = vadd.f32 0.0, %v9879
      %9881 = vmatmul.f32.gmra.mxu0 %v1194
      %v9882 = vpop.f32.mrf.mxu0
      %v9883 = vadd.f32 0.0, %v9882
      %9884 = vmatmul.f32.gmra.mxu0 %v1197
      %v9885 = vpop.f32.mrf.mxu0
      %v9886 = vadd.f32 0.0, %v9885
      %9887 = vmatmul.f32.gmra.mxu0 %v1200
      %v9888 = vpop.f32.mrf.mxu0
      %v9889 = vadd.f32 0.0, %v9888
      %9890 = vmatmul.f32.gmra.mxu0 %v1203
      %v9891 = vpop.f32.mrf.mxu0
      %v9892 = vadd.f32 0.0, %v9891
      %9893 = vmatmul.f32.gmra.mxu0 %v1206
      %v9894 = vpop.f32.mrf.mxu0
      %v9895 = vadd.f32 0.0, %v9894
      %9896 = vmatmul.f32.gmra.mxu0 %v1209
      %v9897 = vpop.f32.mrf.mxu0
      %v9898 = vadd.f32 0.0, %v9897
      %9899 = vmatmul.f32.gmra.mxu0 %v6628
      %v9900 = vpop.f32.mrf.mxu0
      %v9901 = vadd.f32 0.0, %v9900
      %9902 = vmatmul.f32.gmra.mxu0 %v6631
      %v9903 = vpop.f32.mrf.mxu0
      %v9904 = vadd.f32 0.0, %v9903
      %9905 = vmatmul.f32.gmra.mxu0 %v6634
      %v9906 = vpop.f32.mrf.mxu0
      %v9907 = vadd.f32 0.0, %v9906
      %9908 = vmatmul.f32.gmra.mxu0 %v6637
      %v9909 = vpop.f32.mrf.mxu0
      %v9910 = vadd.f32 0.0, %v9909
      %9911 = vmatmul.f32.gmra.mxu0 %v9512
      %v9912 = vpop.f32.mrf.mxu0
      %v9913 = vadd.f32 0.0, %v9912
      %9914 = vmatmul.f32.gmra.mxu0 %v9515
      %v9915 = vpop.f32.mrf.mxu0
      %v9916 = vadd.f32 0.0, %v9915
      %9917 = vmatmul.f32.gmra.mxu0 %v9518
      %v9918 = vpop.f32.mrf.mxu0
      %v9919 = vadd.f32 0.0, %v9918
      %9920 = vmatmul.f32.gmra.mxu0 %v9521
      %v9921 = vpop.f32.mrf.mxu0
      %v9922 = vadd.f32 0.0, %v9921
      %9923 = vdwg.mxu0
      %v9925 = vsel %vm826, %v633, 0
      %v9928 = vsel %vm826, %v634, 0
      %v9931 = vsel %vm826, %v635, 0
      %v9934 = vsel %vm826, %v636, 0
      %9936 = vmatpush.msra.mxu0 0.0
      %9937 = vmatpush.msra.mxu0 0.0
      %9938 = vmatpush.msra.mxu0 0.0
      %9939 = vmatpush.msra.mxu0 0.0
      %9940 = vmatpush.msra.mxu0 0.0
      %9941 = vmatpush.msra.mxu0 0.0
      %9942 = vmatpush.msra.mxu0 0.0
      %9943 = vmatpush.msra.mxu0 0.0
      %9944 = vmatpush.msra.mxu0 0.0
      %9945 = vmatpush.msra.mxu0 0.0
      %9946 = vmatpush.msra.mxu0 0.0
      %9947 = vmatpush.msra.mxu0 0.0
      %9948 = vmatpush.msra.mxu0 0.0
      %9949 = vmatpush.msra.mxu0 0.0
      %9950 = vmatpush.msra.mxu0 0.0
      %9951 = vmatpush.msra.mxu0 %v814
      %9952 = vmatmul.f32.gmra.mxu0 %v1637
      %v9953 = vpop.f32.mrf.mxu0
      %v9954 = vadd.f32 %v9541, %v9953
      %9955 = vmatmul.f32.gmra.mxu0 %v1640
      %v9956 = vpop.f32.mrf.mxu0
      %v9957 = vadd.f32 %v9544, %v9956
      %9958 = vmatmul.f32.gmra.mxu0 %v1643
      %v9959 = vpop.f32.mrf.mxu0
      %v9960 = vadd.f32 %v9547, %v9959
      %9961 = vmatmul.f32.gmra.mxu0 %v1646
      %v9962 = vpop.f32.mrf.mxu0
      %v9963 = vadd.f32 %v9550, %v9962
      %9964 = vmatmul.f32.gmra.mxu0 %v1649
      %v9965 = vpop.f32.mrf.mxu0
      %v9966 = vadd.f32 %v9553, %v9965
      %9967 = vmatmul.f32.gmra.mxu0 %v1652
      %v9968 = vpop.f32.mrf.mxu0
      %v9969 = vadd.f32 %v9556, %v9968
      %9970 = vmatmul.f32.gmra.mxu0 %v1655
      %v9971 = vpop.f32.mrf.mxu0
      %v9972 = vadd.f32 %v9559, %v9971
      %9973 = vmatmul.f32.gmra.mxu0 %v1658
      %v9974 = vpop.f32.mrf.mxu0
      %v9975 = vadd.f32 %v9562, %v9974
      %9976 = vmatmul.f32.gmra.mxu0 %v1661
      %v9977 = vpop.f32.mrf.mxu0
      %v9978 = vadd.f32 %v9565, %v9977
      %9979 = vmatmul.f32.gmra.mxu0 %v1664
      %v9980 = vpop.f32.mrf.mxu0
      %v9981 = vadd.f32 %v9568, %v9980
      %9982 = vmatmul.f32.gmra.mxu0 %v1667
      %v9983 = vpop.f32.mrf.mxu0
      %v9984 = vadd.f32 %v9571, %v9983
      %9985 = vmatmul.f32.gmra.mxu0 %v1670
      %v9986 = vpop.f32.mrf.mxu0
      %v9987 = vadd.f32 %v9574, %v9986
      %9988 = vmatmul.f32.gmra.mxu0 %v1673
      %v9989 = vpop.f32.mrf.mxu0
      %v9990 = vadd.f32 %v9577, %v9989
      %9991 = vmatmul.f32.gmra.mxu0 %v1676
      %v9992 = vpop.f32.mrf.mxu0
      %v9993 = vadd.f32 %v9580, %v9992
      %9994 = vmatmul.f32.gmra.mxu0 %v1679
      %v9995 = vpop.f32.mrf.mxu0
      %v9996 = vadd.f32 %v9583, %v9995
      %9997 = vmatmul.f32.gmra.mxu0 %v1682
      %v9998 = vpop.f32.mrf.mxu0
      %v9999 = vadd.f32 %v9586, %v9998
      %10000 = vmatmul.f32.gmra.mxu0 %v1685
      %v10001 = vpop.f32.mrf.mxu0
      %v10002 = vadd.f32 %v9589, %v10001
      %10003 = vmatmul.f32.gmra.mxu0 %v1688
      %v10004 = vpop.f32.mrf.mxu0
      %v10005 = vadd.f32 %v9592, %v10004
      %10006 = vmatmul.f32.gmra.mxu0 %v1691
      %v10007 = vpop.f32.mrf.mxu0
      %v10008 = vadd.f32 %v9595, %v10007
      %10009 = vmatmul.f32.gmra.mxu0 %v1694
      %v10010 = vpop.f32.mrf.mxu0
      %v10011 = vadd.f32 %v9598, %v10010
      %10012 = vmatmul.f32.gmra.mxu0 %v1697
      %v10013 = vpop.f32.mrf.mxu0
      %v10014 = vadd.f32 %v9601, %v10013
      %10015 = vmatmul.f32.gmra.mxu0 %v1700
      %v10016 = vpop.f32.mrf.mxu0
      %v10017 = vadd.f32 %v9604, %v10016
      %10018 = vmatmul.f32.gmra.mxu0 %v1703
      %v10019 = vpop.f32.mrf.mxu0
      %v10020 = vadd.f32 %v9607, %v10019
      %10021 = vmatmul.f32.gmra.mxu0 %v1706
      %v10022 = vpop.f32.mrf.mxu0
      %v10023 = vadd.f32 %v9610, %v10022
      %10024 = vmatmul.f32.gmra.mxu0 %v1709
      %v10025 = vpop.f32.mrf.mxu0
      %v10026 = vadd.f32 %v9613, %v10025
      %10027 = vmatmul.f32.gmra.mxu0 %v1712
      %v10028 = vpop.f32.mrf.mxu0
      %v10029 = vadd.f32 %v9616, %v10028
      %10030 = vmatmul.f32.gmra.mxu0 %v1715
      %v10031 = vpop.f32.mrf.mxu0
      %v10032 = vadd.f32 %v9619, %v10031
      %10033 = vmatmul.f32.gmra.mxu0 %v1718
      %v10034 = vpop.f32.mrf.mxu0
      %v10035 = vadd.f32 %v9622, %v10034
      %10036 = vmatmul.f32.gmra.mxu0 %v1721
      %v10037 = vpop.f32.mrf.mxu0
      %v10038 = vadd.f32 %v9625, %v10037
      %10039 = vmatmul.f32.gmra.mxu0 %v1724
      %v10040 = vpop.f32.mrf.mxu0
      %v10041 = vadd.f32 %v9628, %v10040
      %10042 = vmatmul.f32.gmra.mxu0 %v1727
      %v10043 = vpop.f32.mrf.mxu0
      %v10044 = vadd.f32 %v9631, %v10043
      %10045 = vmatmul.f32.gmra.mxu0 %v1730
      %v10046 = vpop.f32.mrf.mxu0
      %v10047 = vadd.f32 %v9634, %v10046
      %10048 = vmatmul.f32.gmra.mxu0 %v1733
      %v10049 = vpop.f32.mrf.mxu0
      %v10050 = vadd.f32 %v9637, %v10049
      %10051 = vmatmul.f32.gmra.mxu0 %v1736
      %v10052 = vpop.f32.mrf.mxu0
      %v10053 = vadd.f32 %v9640, %v10052
      %10054 = vmatmul.f32.gmra.mxu0 %v1739
      %v10055 = vpop.f32.mrf.mxu0
      %v10056 = vadd.f32 %v9643, %v10055
      %10057 = vmatmul.f32.gmra.mxu0 %v1742
      %v10058 = vpop.f32.mrf.mxu0
      %v10059 = vadd.f32 %v9646, %v10058
      %10060 = vmatmul.f32.gmra.mxu0 %v1745
      %v10061 = vpop.f32.mrf.mxu0
      %v10062 = vadd.f32 %v9649, %v10061
      %10063 = vmatmul.f32.gmra.mxu0 %v1748
      %v10064 = vpop.f32.mrf.mxu0
      %v10065 = vadd.f32 %v9652, %v10064
      %10066 = vmatmul.f32.gmra.mxu0 %v1751
      %v10067 = vpop.f32.mrf.mxu0
      %v10068 = vadd.f32 %v9655, %v10067
      %10069 = vmatmul.f32.gmra.mxu0 %v1754
      %v10070 = vpop.f32.mrf.mxu0
      %v10071 = vadd.f32 %v9658, %v10070
      %10072 = vmatmul.f32.gmra.mxu0 %v1757
      %v10073 = vpop.f32.mrf.mxu0
      %v10074 = vadd.f32 %v9661, %v10073
      %10075 = vmatmul.f32.gmra.mxu0 %v1760
      %v10076 = vpop.f32.mrf.mxu0
      %v10077 = vadd.f32 %v9664, %v10076
      %10078 = vmatmul.f32.gmra.mxu0 %v1763
      %v10079 = vpop.f32.mrf.mxu0
      %v10080 = vadd.f32 %v9667, %v10079
      %10081 = vmatmul.f32.gmra.mxu0 %v1766
      %v10082 = vpop.f32.mrf.mxu0
      %v10083 = vadd.f32 %v9670, %v10082
      %10084 = vmatmul.f32.gmra.mxu0 %v1769
      %v10085 = vpop.f32.mrf.mxu0
      %v10086 = vadd.f32 %v9673, %v10085
      %10087 = vmatmul.f32.gmra.mxu0 %v1772
      %v10088 = vpop.f32.mrf.mxu0
      %v10089 = vadd.f32 %v9676, %v10088
      %10090 = vmatmul.f32.gmra.mxu0 %v1775
      %v10091 = vpop.f32.mrf.mxu0
      %v10092 = vadd.f32 %v9679, %v10091
      %10093 = vmatmul.f32.gmra.mxu0 %v1778
      %v10094 = vpop.f32.mrf.mxu0
      %v10095 = vadd.f32 %v9682, %v10094
      %10096 = vmatmul.f32.gmra.mxu0 %v1781
      %v10097 = vpop.f32.mrf.mxu0
      %v10098 = vadd.f32 %v9685, %v10097
      %10099 = vmatmul.f32.gmra.mxu0 %v1784
      %v10100 = vpop.f32.mrf.mxu0
      %v10101 = vadd.f32 %v9688, %v10100
      %10102 = vmatmul.f32.gmra.mxu0 %v1787
      %v10103 = vpop.f32.mrf.mxu0
      %v10104 = vadd.f32 %v9691, %v10103
      %10105 = vmatmul.f32.gmra.mxu0 %v1790
      %v10106 = vpop.f32.mrf.mxu0
      %v10107 = vadd.f32 %v9694, %v10106
      %10108 = vmatmul.f32.gmra.mxu0 %v1793
      %v10109 = vpop.f32.mrf.mxu0
      %v10110 = vadd.f32 %v9697, %v10109
      %10111 = vmatmul.f32.gmra.mxu0 %v1796
      %v10112 = vpop.f32.mrf.mxu0
      %v10113 = vadd.f32 %v9700, %v10112
      %10114 = vmatmul.f32.gmra.mxu0 %v1799
      %v10115 = vpop.f32.mrf.mxu0
      %v10116 = vadd.f32 %v9703, %v10115
      %10117 = vmatmul.f32.gmra.mxu0 %v1802
      %v10118 = vpop.f32.mrf.mxu0
      %v10119 = vadd.f32 %v9706, %v10118
      %10120 = vmatmul.f32.gmra.mxu0 %v1805
      %v10121 = vpop.f32.mrf.mxu0
      %v10122 = vadd.f32 %v9709, %v10121
      %10123 = vmatmul.f32.gmra.mxu0 %v1808
      %v10124 = vpop.f32.mrf.mxu0
      %v10125 = vadd.f32 %v9712, %v10124
      %10126 = vmatmul.f32.gmra.mxu0 %v1811
      %v10127 = vpop.f32.mrf.mxu0
      %v10128 = vadd.f32 %v9715, %v10127
      %10129 = vmatmul.f32.gmra.mxu0 %v1814
      %v10130 = vpop.f32.mrf.mxu0
      %v10131 = vadd.f32 %v9718, %v10130
      %10132 = vmatmul.f32.gmra.mxu0 %v1817
      %v10133 = vpop.f32.mrf.mxu0
      %v10134 = vadd.f32 %v9721, %v10133
      %10135 = vmatmul.f32.gmra.mxu0 %v1820
      %v10136 = vpop.f32.mrf.mxu0
      %v10137 = vadd.f32 %v9724, %v10136
      %10138 = vmatmul.f32.gmra.mxu0 %v1823
      %v10139 = vpop.f32.mrf.mxu0
      %v10140 = vadd.f32 %v9727, %v10139
      %10141 = vmatmul.f32.gmra.mxu0 %v1826
      %v10142 = vpop.f32.mrf.mxu0
      %v10143 = vadd.f32 %v9730, %v10142
      %10144 = vmatmul.f32.gmra.mxu0 %v1829
      %v10145 = vpop.f32.mrf.mxu0
      %v10146 = vadd.f32 %v9733, %v10145
      %10147 = vmatmul.f32.gmra.mxu0 %v1832
      %v10148 = vpop.f32.mrf.mxu0
      %v10149 = vadd.f32 %v9736, %v10148
      %10150 = vmatmul.f32.gmra.mxu0 %v1835
      %v10151 = vpop.f32.mrf.mxu0
      %v10152 = vadd.f32 %v9739, %v10151
      %10153 = vmatmul.f32.gmra.mxu0 %v1838
      %v10154 = vpop.f32.mrf.mxu0
      %v10155 = vadd.f32 %v9742, %v10154
      %10156 = vmatmul.f32.gmra.mxu0 %v1841
      %v10157 = vpop.f32.mrf.mxu0
      %v10158 = vadd.f32 %v9745, %v10157
      %10159 = vmatmul.f32.gmra.mxu0 %v1844
      %v10160 = vpop.f32.mrf.mxu0
      %v10161 = vadd.f32 %v9748, %v10160
      %10162 = vmatmul.f32.gmra.mxu0 %v1847
      %v10163 = vpop.f32.mrf.mxu0
      %v10164 = vadd.f32 %v9751, %v10163
      %10165 = vmatmul.f32.gmra.mxu0 %v1850
      %v10166 = vpop.f32.mrf.mxu0
      %v10167 = vadd.f32 %v9754, %v10166
      %10168 = vmatmul.f32.gmra.mxu0 %v1853
      %v10169 = vpop.f32.mrf.mxu0
      %v10170 = vadd.f32 %v9757, %v10169
      %10171 = vmatmul.f32.gmra.mxu0 %v1856
      %v10172 = vpop.f32.mrf.mxu0
      %v10173 = vadd.f32 %v9760, %v10172
      %10174 = vmatmul.f32.gmra.mxu0 %v1859
      %v10175 = vpop.f32.mrf.mxu0
      %v10176 = vadd.f32 %v9763, %v10175
      %10177 = vmatmul.f32.gmra.mxu0 %v1862
      %v10178 = vpop.f32.mrf.mxu0
      %v10179 = vadd.f32 %v9766, %v10178
      %10180 = vmatmul.f32.gmra.mxu0 %v1865
      %v10181 = vpop.f32.mrf.mxu0
      %v10182 = vadd.f32 %v9769, %v10181
      %10183 = vmatmul.f32.gmra.mxu0 %v1868
      %v10184 = vpop.f32.mrf.mxu0
      %v10185 = vadd.f32 %v9772, %v10184
      %10186 = vmatmul.f32.gmra.mxu0 %v1871
      %v10187 = vpop.f32.mrf.mxu0
      %v10188 = vadd.f32 %v9775, %v10187
      %10189 = vmatmul.f32.gmra.mxu0 %v1874
      %v10190 = vpop.f32.mrf.mxu0
      %v10191 = vadd.f32 %v9778, %v10190
      %10192 = vmatmul.f32.gmra.mxu0 %v1877
      %v10193 = vpop.f32.mrf.mxu0
      %v10194 = vadd.f32 %v9781, %v10193
      %10195 = vmatmul.f32.gmra.mxu0 %v1880
      %v10196 = vpop.f32.mrf.mxu0
      %v10197 = vadd.f32 %v9784, %v10196
      %10198 = vmatmul.f32.gmra.mxu0 %v1883
      %v10199 = vpop.f32.mrf.mxu0
      %v10200 = vadd.f32 %v9787, %v10199
      %10201 = vmatmul.f32.gmra.mxu0 %v1886
      %v10202 = vpop.f32.mrf.mxu0
      %v10203 = vadd.f32 %v9790, %v10202
      %10204 = vmatmul.f32.gmra.mxu0 %v1889
      %v10205 = vpop.f32.mrf.mxu0
      %v10206 = vadd.f32 %v9793, %v10205
      %10207 = vmatmul.f32.gmra.mxu0 %v1892
      %v10208 = vpop.f32.mrf.mxu0
      %v10209 = vadd.f32 %v9796, %v10208
      %10210 = vmatmul.f32.gmra.mxu0 %v1895
      %v10211 = vpop.f32.mrf.mxu0
      %v10212 = vadd.f32 %v9799, %v10211
      %10213 = vmatmul.f32.gmra.mxu0 %v1898
      %v10214 = vpop.f32.mrf.mxu0
      %v10215 = vadd.f32 %v9802, %v10214
      %10216 = vmatmul.f32.gmra.mxu0 %v1901
      %v10217 = vpop.f32.mrf.mxu0
      %v10218 = vadd.f32 %v9805, %v10217
      %10219 = vmatmul.f32.gmra.mxu0 %v1904
      %v10220 = vpop.f32.mrf.mxu0
      %v10221 = vadd.f32 %v9808, %v10220
      %10222 = vmatmul.f32.gmra.mxu0 %v1907
      %v10223 = vpop.f32.mrf.mxu0
      %v10224 = vadd.f32 %v9811, %v10223
      %10225 = vmatmul.f32.gmra.mxu0 %v1910
      %v10226 = vpop.f32.mrf.mxu0
      %v10227 = vadd.f32 %v9814, %v10226
      %10228 = vmatmul.f32.gmra.mxu0 %v1913
      %v10229 = vpop.f32.mrf.mxu0
      %v10230 = vadd.f32 %v9817, %v10229
      %10231 = vmatmul.f32.gmra.mxu0 %v1916
      %v10232 = vpop.f32.mrf.mxu0
      %v10233 = vadd.f32 %v9820, %v10232
      %10234 = vmatmul.f32.gmra.mxu0 %v1919
      %v10235 = vpop.f32.mrf.mxu0
      %v10236 = vadd.f32 %v9823, %v10235
      %10237 = vmatmul.f32.gmra.mxu0 %v1922
      %v10238 = vpop.f32.mrf.mxu0
      %v10239 = vadd.f32 %v9826, %v10238
      %10240 = vmatmul.f32.gmra.mxu0 %v1925
      %v10241 = vpop.f32.mrf.mxu0
      %v10242 = vadd.f32 %v9829, %v10241
      %10243 = vmatmul.f32.gmra.mxu0 %v1928
      %v10244 = vpop.f32.mrf.mxu0
      %v10245 = vadd.f32 %v9832, %v10244
      %10246 = vmatmul.f32.gmra.mxu0 %v1931
      %v10247 = vpop.f32.mrf.mxu0
      %v10248 = vadd.f32 %v9835, %v10247
      %10249 = vmatmul.f32.gmra.mxu0 %v1934
      %v10250 = vpop.f32.mrf.mxu0
      %v10251 = vadd.f32 %v9838, %v10250
      %10252 = vmatmul.f32.gmra.mxu0 %v1937
      %v10253 = vpop.f32.mrf.mxu0
      %v10254 = vadd.f32 %v9841, %v10253
      %10255 = vmatmul.f32.gmra.mxu0 %v1940
      %v10256 = vpop.f32.mrf.mxu0
      %v10257 = vadd.f32 %v9844, %v10256
      %10258 = vmatmul.f32.gmra.mxu0 %v1943
      %v10259 = vpop.f32.mrf.mxu0
      %v10260 = vadd.f32 %v9847, %v10259
      %10261 = vmatmul.f32.gmra.mxu0 %v1946
      %v10262 = vpop.f32.mrf.mxu0
      %v10263 = vadd.f32 %v9850, %v10262
      %10264 = vmatmul.f32.gmra.mxu0 %v1949
      %v10265 = vpop.f32.mrf.mxu0
      %v10266 = vadd.f32 %v9853, %v10265
      %10267 = vmatmul.f32.gmra.mxu0 %v1952
      %v10268 = vpop.f32.mrf.mxu0
      %v10269 = vadd.f32 %v9856, %v10268
      %10270 = vmatmul.f32.gmra.mxu0 %v1955
      %v10271 = vpop.f32.mrf.mxu0
      %v10272 = vadd.f32 %v9859, %v10271
      %10273 = vmatmul.f32.gmra.mxu0 %v1958
      %v10274 = vpop.f32.mrf.mxu0
      %v10275 = vadd.f32 %v9862, %v10274
      %10276 = vmatmul.f32.gmra.mxu0 %v1961
      %v10277 = vpop.f32.mrf.mxu0
      %v10278 = vadd.f32 %v9865, %v10277
      %10279 = vmatmul.f32.gmra.mxu0 %v1964
      %v10280 = vpop.f32.mrf.mxu0
      %v10281 = vadd.f32 %v9868, %v10280
      %10282 = vmatmul.f32.gmra.mxu0 %v1967
      %v10283 = vpop.f32.mrf.mxu0
      %v10284 = vadd.f32 %v9871, %v10283
      %10285 = vmatmul.f32.gmra.mxu0 %v1970
      %v10286 = vpop.f32.mrf.mxu0
      %v10287 = vadd.f32 %v9874, %v10286
      %10288 = vmatmul.f32.gmra.mxu0 %v1973
      %v10289 = vpop.f32.mrf.mxu0
      %v10290 = vadd.f32 %v9877, %v10289
      %10291 = vmatmul.f32.gmra.mxu0 %v1976
      %v10292 = vpop.f32.mrf.mxu0
      %v10293 = vadd.f32 %v9880, %v10292
      %10294 = vmatmul.f32.gmra.mxu0 %v1979
      %v10295 = vpop.f32.mrf.mxu0
      %v10296 = vadd.f32 %v9883, %v10295
      %10297 = vmatmul.f32.gmra.mxu0 %v1982
      %v10298 = vpop.f32.mrf.mxu0
      %v10299 = vadd.f32 %v9886, %v10298
      %10300 = vmatmul.f32.gmra.mxu0 %v1985
      %v10301 = vpop.f32.mrf.mxu0
      %v10302 = vadd.f32 %v9889, %v10301
      %10303 = vmatmul.f32.gmra.mxu0 %v1988
      %v10304 = vpop.f32.mrf.mxu0
      %v10305 = vadd.f32 %v9892, %v10304
      %10306 = vmatmul.f32.gmra.mxu0 %v1991
      %v10307 = vpop.f32.mrf.mxu0
      %v10308 = vadd.f32 %v9895, %v10307
      %10309 = vmatmul.f32.gmra.mxu0 %v1994
      %v10310 = vpop.f32.mrf.mxu0
      %v10311 = vadd.f32 %v9898, %v10310
      %10312 = vmatmul.f32.gmra.mxu0 %v7041
      %v10313 = vpop.f32.mrf.mxu0
      %v10314 = vadd.f32 %v9901, %v10313
      %10315 = vmatmul.f32.gmra.mxu0 %v7044
      %v10316 = vpop.f32.mrf.mxu0
      %v10317 = vadd.f32 %v9904, %v10316
      %10318 = vmatmul.f32.gmra.mxu0 %v7047
      %v10319 = vpop.f32.mrf.mxu0
      %v10320 = vadd.f32 %v9907, %v10319
      %10321 = vmatmul.f32.gmra.mxu0 %v7050
      %v10322 = vpop.f32.mrf.mxu0
      %v10323 = vadd.f32 %v9910, %v10322
      %10324 = vmatmul.f32.gmra.mxu0 %v9925
      %v10325 = vpop.f32.mrf.mxu0
      %v10326 = vadd.f32 %v9913, %v10325
      %10327 = vmatmul.f32.gmra.mxu0 %v9928
      %v10328 = vpop.f32.mrf.mxu0
      %v10329 = vadd.f32 %v9916, %v10328
      %10330 = vmatmul.f32.gmra.mxu0 %v9931
      %v10331 = vpop.f32.mrf.mxu0
      %v10332 = vadd.f32 %v9919, %v10331
      %10333 = vmatmul.f32.gmra.mxu0 %v9934
      %v10334 = vpop.f32.mrf.mxu0
      %v10335 = vadd.f32 %v9922, %v10334
      %10336 = vdwg.mxu0
      %v10337 = vadd.f32 %v9383, %v9954
      %v10338 = vadd.f32 %v9384, %v9957
      %v10339 = vadd.f32 %v9385, %v9960
      %v10340 = vadd.f32 %v9386, %v9963
      %v10341 = vadd.f32 %v9387, %v9966
      %v10342 = vadd.f32 %v9388, %v9969
      %v10343 = vadd.f32 %v9389, %v9972
      %v10344 = vadd.f32 %v9390, %v9975
      %v10345 = vadd.f32 %v9391, %v9978
      %v10346 = vadd.f32 %v9392, %v9981
      %v10347 = vadd.f32 %v9393, %v9984
      %v10348 = vadd.f32 %v9394, %v9987
      %v10349 = vadd.f32 %v9395, %v9990
      %v10350 = vadd.f32 %v9396, %v9993
      %v10351 = vadd.f32 %v9397, %v9996
      %v10352 = vadd.f32 %v9398, %v9999
      %v10353 = vadd.f32 %v9399, %v10002
      %v10354 = vadd.f32 %v9400, %v10005
      %v10355 = vadd.f32 %v9401, %v10008
      %v10356 = vadd.f32 %v9402, %v10011
      %v10357 = vadd.f32 %v9403, %v10014
      %v10358 = vadd.f32 %v9404, %v10017
      %v10359 = vadd.f32 %v9405, %v10020
      %v10360 = vadd.f32 %v9406, %v10023
      %v10361 = vadd.f32 %v9407, %v10026
      %v10362 = vadd.f32 %v9408, %v10029
      %v10363 = vadd.f32 %v9409, %v10032
      %v10364 = vadd.f32 %v9410, %v10035
      %v10365 = vadd.f32 %v9411, %v10038
      %v10366 = vadd.f32 %v9412, %v10041
      %v10367 = vadd.f32 %v9413, %v10044
      %v10368 = vadd.f32 %v9414, %v10047
      %v10369 = vadd.f32 %v9415, %v10050
      %v10370 = vadd.f32 %v9416, %v10053
      %v10371 = vadd.f32 %v9417, %v10056
      %v10372 = vadd.f32 %v9418, %v10059
      %v10373 = vadd.f32 %v9419, %v10062
      %v10374 = vadd.f32 %v9420, %v10065
      %v10375 = vadd.f32 %v9421, %v10068
      %v10376 = vadd.f32 %v9422, %v10071
      %v10377 = vadd.f32 %v9423, %v10074
      %v10378 = vadd.f32 %v9424, %v10077
      %v10379 = vadd.f32 %v9425, %v10080
      %v10380 = vadd.f32 %v9426, %v10083
      %v10381 = vadd.f32 %v9427, %v10086
      %v10382 = vadd.f32 %v9428, %v10089
      %v10383 = vadd.f32 %v9429, %v10092
      %v10384 = vadd.f32 %v9430, %v10095
      %v10385 = vadd.f32 %v9431, %v10098
      %v10386 = vadd.f32 %v9432, %v10101
      %v10387 = vadd.f32 %v9433, %v10104
      %v10388 = vadd.f32 %v9434, %v10107
      %v10389 = vadd.f32 %v9435, %v10110
      %v10390 = vadd.f32 %v9436, %v10113
      %v10391 = vadd.f32 %v9437, %v10116
      %v10392 = vadd.f32 %v9438, %v10119
      %v10393 = vadd.f32 %v9439, %v10122
      %v10394 = vadd.f32 %v9440, %v10125
      %v10395 = vadd.f32 %v9441, %v10128
      %v10396 = vadd.f32 %v9442, %v10131
      %v10397 = vadd.f32 %v9443, %v10134
      %v10398 = vadd.f32 %v9444, %v10137
      %v10399 = vadd.f32 %v9445, %v10140
      %v10400 = vadd.f32 %v9446, %v10143
      %v10401 = vadd.f32 %v9447, %v10146
      %v10402 = vadd.f32 %v9448, %v10149
      %v10403 = vadd.f32 %v9449, %v10152
      %v10404 = vadd.f32 %v9450, %v10155
      %v10405 = vadd.f32 %v9451, %v10158
      %v10406 = vadd.f32 %v9452, %v10161
      %v10407 = vadd.f32 %v9453, %v10164
      %v10408 = vadd.f32 %v9454, %v10167
      %v10409 = vadd.f32 %v9455, %v10170
      %v10410 = vadd.f32 %v9456, %v10173
      %v10411 = vadd.f32 %v9457, %v10176
      %v10412 = vadd.f32 %v9458, %v10179
      %v10413 = vadd.f32 %v9459, %v10182
      %v10414 = vadd.f32 %v9460, %v10185
      %v10415 = vadd.f32 %v9461, %v10188
      %v10416 = vadd.f32 %v9462, %v10191
      %v10417 = vadd.f32 %v9463, %v10194
      %v10418 = vadd.f32 %v9464, %v10197
      %v10419 = vadd.f32 %v9465, %v10200
      %v10420 = vadd.f32 %v9466, %v10203
      %v10421 = vadd.f32 %v9467, %v10206
      %v10422 = vadd.f32 %v9468, %v10209
      %v10423 = vadd.f32 %v9469, %v10212
      %v10424 = vadd.f32 %v9470, %v10215
      %v10425 = vadd.f32 %v9471, %v10218
      %v10426 = vadd.f32 %v9472, %v10221
      %v10427 = vadd.f32 %v9473, %v10224
      %v10428 = vadd.f32 %v9474, %v10227
      %v10429 = vadd.f32 %v9475, %v10230
      %v10430 = vadd.f32 %v9476, %v10233
      %v10431 = vadd.f32 %v9477, %v10236
      %v10432 = vadd.f32 %v9478, %v10239
      %v10433 = vadd.f32 %v9479, %v10242
      %v10434 = vadd.f32 %v9480, %v10245
      %v10435 = vadd.f32 %v9481, %v10248
      %v10436 = vadd.f32 %v9482, %v10251
      %v10437 = vadd.f32 %v9483, %v10254
      %v10438 = vadd.f32 %v9484, %v10257
      %v10439 = vadd.f32 %v9485, %v10260
      %v10440 = vadd.f32 %v9486, %v10263
      %v10441 = vadd.f32 %v9487, %v10266
      %v10442 = vadd.f32 %v9488, %v10269
      %v10443 = vadd.f32 %v9489, %v10272
      %v10444 = vadd.f32 %v9490, %v10275
      %v10445 = vadd.f32 %v9491, %v10278
      %v10446 = vadd.f32 %v9492, %v10281
      %v10447 = vadd.f32 %v9493, %v10284
      %v10448 = vadd.f32 %v9494, %v10287
      %v10449 = vadd.f32 %v9495, %v10290
      %v10450 = vadd.f32 %v9496, %v10293
      %v10451 = vadd.f32 %v9497, %v10296
      %v10452 = vadd.f32 %v9498, %v10299
      %v10453 = vadd.f32 %v9499, %v10302
      %v10454 = vadd.f32 %v9500, %v10305
      %v10455 = vadd.f32 %v9501, %v10308
      %v10456 = vadd.f32 %v9502, %v10311
      %v10457 = vadd.f32 %v9503, %v10314
      %v10458 = vadd.f32 %v9504, %v10317
      %v10459 = vadd.f32 %v9505, %v10320
      %v10460 = vadd.f32 %v9506, %v10323
      %v10461 = vadd.f32 %v9507, %v10326
      %v10462 = vadd.f32 %v9508, %v10329
      %v10463 = vadd.f32 %v9509, %v10332
      %v10464 = vadd.f32 %v9510, %v10335
      %v10466 = vrot.slane %v633, 1
      %v10467 = vrot.slane %v634, 1
      %v10468 = vsel %vm2557, %v10466, %v10467
      %v10469 = vrot.slane %v635, 1
      %v10470 = vsel %vm2557, %v10467, %v10469
      %v10471 = vrot.slane %v636, 1
      %v10472 = vsel %vm2557, %v10469, %v10471
      %v10473 = vrot.slane %v637, 1
      %v10474 = vsel %vm2557, %v10471, %v10473
      %v10476 = vrot.slane %v803, 1
      %v10477 = vrot.slane %v804, 1
      %v10478 = vsel %vm2557, %v10476, %v10477
      %v10479 = vrot.slane %v805, 1
      %v10480 = vsel %vm2557, %v10477, %v10479
      %v10481 = vrot.slane %v806, 1
      %v10482 = vsel %vm2557, %v10479, %v10481
      %v10483 = vrot.slane %v807, 1
      %v10484 = vsel %vm2557, %v10481, %v10483
      %v10485 = vsel %vm826, %v10478, 0
      %v10487 = vsel %vm826, %v10480, 0
      %v10489 = vsel %vm826, %v10482, 0
      %v10491 = vsel %vm826, %v10484, 0
      %10493 = vmatpush.msra.mxu0 0.0
      %10494 = vmatpush.msra.mxu0 0.0
      %10495 = vmatpush.msra.mxu0 0.0
      %10496 = vmatpush.msra.mxu0 0.0
      %10497 = vmatpush.msra.mxu0 0.0
      %10498 = vmatpush.msra.mxu0 0.0
      %10499 = vmatpush.msra.mxu0 0.0
      %10500 = vmatpush.msra.mxu0 0.0
      %10501 = vmatpush.msra.mxu0 0.0
      %10502 = vmatpush.msra.mxu0 0.0
      %10503 = vmatpush.msra.mxu0 0.0
      %10504 = vmatpush.msra.mxu0 0.0
      %10505 = vmatpush.msra.mxu0 0.0
      %10506 = vmatpush.msra.mxu0 0.0
      %10507 = vmatpush.msra.mxu0 0.0
      %10508 = vmatpush.msra.mxu0 %v824
      %10509 = vmatmul.f32.gmra.mxu0 %v3182
      %v10510 = vpop.f32.mrf.mxu0
      %v10511 = vadd.f32 0.0, %v10510
      %10512 = vmatmul.f32.gmra.mxu0 %v3184
      %v10513 = vpop.f32.mrf.mxu0
      %v10514 = vadd.f32 0.0, %v10513
      %10515 = vmatmul.f32.gmra.mxu0 %v3186
      %v10516 = vpop.f32.mrf.mxu0
      %v10517 = vadd.f32 0.0, %v10516
      %10518 = vmatmul.f32.gmra.mxu0 %v3188
      %v10519 = vpop.f32.mrf.mxu0
      %v10520 = vadd.f32 0.0, %v10519
      %10521 = vmatmul.f32.gmra.mxu0 %v3190
      %v10522 = vpop.f32.mrf.mxu0
      %v10523 = vadd.f32 0.0, %v10522
      %10524 = vmatmul.f32.gmra.mxu0 %v3192
      %v10525 = vpop.f32.mrf.mxu0
      %v10526 = vadd.f32 0.0, %v10525
      %10527 = vmatmul.f32.gmra.mxu0 %v3194
      %v10528 = vpop.f32.mrf.mxu0
      %v10529 = vadd.f32 0.0, %v10528
      %10530 = vmatmul.f32.gmra.mxu0 %v3196
      %v10531 = vpop.f32.mrf.mxu0
      %v10532 = vadd.f32 0.0, %v10531
      %10533 = vmatmul.f32.gmra.mxu0 %v3198
      %v10534 = vpop.f32.mrf.mxu0
      %v10535 = vadd.f32 0.0, %v10534
      %10536 = vmatmul.f32.gmra.mxu0 %v3200
      %v10537 = vpop.f32.mrf.mxu0
      %v10538 = vadd.f32 0.0, %v10537
      %10539 = vmatmul.f32.gmra.mxu0 %v3202
      %v10540 = vpop.f32.mrf.mxu0
      %v10541 = vadd.f32 0.0, %v10540
      %10542 = vmatmul.f32.gmra.mxu0 %v3204
      %v10543 = vpop.f32.mrf.mxu0
      %v10544 = vadd.f32 0.0, %v10543
      %10545 = vmatmul.f32.gmra.mxu0 %v3206
      %v10546 = vpop.f32.mrf.mxu0
      %v10547 = vadd.f32 0.0, %v10546
      %10548 = vmatmul.f32.gmra.mxu0 %v3208
      %v10549 = vpop.f32.mrf.mxu0
      %v10550 = vadd.f32 0.0, %v10549
      %10551 = vmatmul.f32.gmra.mxu0 %v3210
      %v10552 = vpop.f32.mrf.mxu0
      %v10553 = vadd.f32 0.0, %v10552
      %10554 = vmatmul.f32.gmra.mxu0 %v3212
      %v10555 = vpop.f32.mrf.mxu0
      %v10556 = vadd.f32 0.0, %v10555
      %10557 = vmatmul.f32.gmra.mxu0 %v3214
      %v10558 = vpop.f32.mrf.mxu0
      %v10559 = vadd.f32 0.0, %v10558
      %10560 = vmatmul.f32.gmra.mxu0 %v3216
      %v10561 = vpop.f32.mrf.mxu0
      %v10562 = vadd.f32 0.0, %v10561
      %10563 = vmatmul.f32.gmra.mxu0 %v3218
      %v10564 = vpop.f32.mrf.mxu0
      %v10565 = vadd.f32 0.0, %v10564
      %10566 = vmatmul.f32.gmra.mxu0 %v3220
      %v10567 = vpop.f32.mrf.mxu0
      %v10568 = vadd.f32 0.0, %v10567
      %10569 = vmatmul.f32.gmra.mxu0 %v3222
      %v10570 = vpop.f32.mrf.mxu0
      %v10571 = vadd.f32 0.0, %v10570
      %10572 = vmatmul.f32.gmra.mxu0 %v3224
      %v10573 = vpop.f32.mrf.mxu0
      %v10574 = vadd.f32 0.0, %v10573
      %10575 = vmatmul.f32.gmra.mxu0 %v3226
      %v10576 = vpop.f32.mrf.mxu0
      %v10577 = vadd.f32 0.0, %v10576
      %10578 = vmatmul.f32.gmra.mxu0 %v3228
      %v10579 = vpop.f32.mrf.mxu0
      %v10580 = vadd.f32 0.0, %v10579
      %10581 = vmatmul.f32.gmra.mxu0 %v3230
      %v10582 = vpop.f32.mrf.mxu0
      %v10583 = vadd.f32 0.0, %v10582
      %10584 = vmatmul.f32.gmra.mxu0 %v3232
      %v10585 = vpop.f32.mrf.mxu0
      %v10586 = vadd.f32 0.0, %v10585
      %10587 = vmatmul.f32.gmra.mxu0 %v3234
      %v10588 = vpop.f32.mrf.mxu0
      %v10589 = vadd.f32 0.0, %v10588
      %10590 = vmatmul.f32.gmra.mxu0 %v3236
      %v10591 = vpop.f32.mrf.mxu0
      %v10592 = vadd.f32 0.0, %v10591
      %10593 = vmatmul.f32.gmra.mxu0 %v3238
      %v10594 = vpop.f32.mrf.mxu0
      %v10595 = vadd.f32 0.0, %v10594
      %10596 = vmatmul.f32.gmra.mxu0 %v3240
      %v10597 = vpop.f32.mrf.mxu0
      %v10598 = vadd.f32 0.0, %v10597
      %10599 = vmatmul.f32.gmra.mxu0 %v3242
      %v10600 = vpop.f32.mrf.mxu0
      %v10601 = vadd.f32 0.0, %v10600
      %10602 = vmatmul.f32.gmra.mxu0 %v3244
      %v10603 = vpop.f32.mrf.mxu0
      %v10604 = vadd.f32 0.0, %v10603
      %10605 = vmatmul.f32.gmra.mxu0 %v3246
      %v10606 = vpop.f32.mrf.mxu0
      %v10607 = vadd.f32 0.0, %v10606
      %10608 = vmatmul.f32.gmra.mxu0 %v3248
      %v10609 = vpop.f32.mrf.mxu0
      %v10610 = vadd.f32 0.0, %v10609
      %10611 = vmatmul.f32.gmra.mxu0 %v3250
      %v10612 = vpop.f32.mrf.mxu0
      %v10613 = vadd.f32 0.0, %v10612
      %10614 = vmatmul.f32.gmra.mxu0 %v3252
      %v10615 = vpop.f32.mrf.mxu0
      %v10616 = vadd.f32 0.0, %v10615
      %10617 = vmatmul.f32.gmra.mxu0 %v3254
      %v10618 = vpop.f32.mrf.mxu0
      %v10619 = vadd.f32 0.0, %v10618
      %10620 = vmatmul.f32.gmra.mxu0 %v3256
      %v10621 = vpop.f32.mrf.mxu0
      %v10622 = vadd.f32 0.0, %v10621
      %10623 = vmatmul.f32.gmra.mxu0 %v3258
      %v10624 = vpop.f32.mrf.mxu0
      %v10625 = vadd.f32 0.0, %v10624
      %10626 = vmatmul.f32.gmra.mxu0 %v3260
      %v10627 = vpop.f32.mrf.mxu0
      %v10628 = vadd.f32 0.0, %v10627
      %10629 = vmatmul.f32.gmra.mxu0 %v3262
      %v10630 = vpop.f32.mrf.mxu0
      %v10631 = vadd.f32 0.0, %v10630
      %10632 = vmatmul.f32.gmra.mxu0 %v3264
      %v10633 = vpop.f32.mrf.mxu0
      %v10634 = vadd.f32 0.0, %v10633
      %10635 = vmatmul.f32.gmra.mxu0 %v3266
      %v10636 = vpop.f32.mrf.mxu0
      %v10637 = vadd.f32 0.0, %v10636
      %10638 = vmatmul.f32.gmra.mxu0 %v3268
      %v10639 = vpop.f32.mrf.mxu0
      %v10640 = vadd.f32 0.0, %v10639
      %10641 = vmatmul.f32.gmra.mxu0 %v3270
      %v10642 = vpop.f32.mrf.mxu0
      %v10643 = vadd.f32 0.0, %v10642
      %10644 = vmatmul.f32.gmra.mxu0 %v3272
      %v10645 = vpop.f32.mrf.mxu0
      %v10646 = vadd.f32 0.0, %v10645
      %10647 = vmatmul.f32.gmra.mxu0 %v3274
      %v10648 = vpop.f32.mrf.mxu0
      %v10649 = vadd.f32 0.0, %v10648
      %10650 = vmatmul.f32.gmra.mxu0 %v3276
      %v10651 = vpop.f32.mrf.mxu0
      %v10652 = vadd.f32 0.0, %v10651
      %10653 = vmatmul.f32.gmra.mxu0 %v3278
      %v10654 = vpop.f32.mrf.mxu0
      %v10655 = vadd.f32 0.0, %v10654
      %10656 = vmatmul.f32.gmra.mxu0 %v3280
      %v10657 = vpop.f32.mrf.mxu0
      %v10658 = vadd.f32 0.0, %v10657
      %10659 = vmatmul.f32.gmra.mxu0 %v3282
      %v10660 = vpop.f32.mrf.mxu0
      %v10661 = vadd.f32 0.0, %v10660
      %10662 = vmatmul.f32.gmra.mxu0 %v3284
      %v10663 = vpop.f32.mrf.mxu0
      %v10664 = vadd.f32 0.0, %v10663
      %10665 = vmatmul.f32.gmra.mxu0 %v3286
      %v10666 = vpop.f32.mrf.mxu0
      %v10667 = vadd.f32 0.0, %v10666
      %10668 = vmatmul.f32.gmra.mxu0 %v3288
      %v10669 = vpop.f32.mrf.mxu0
      %v10670 = vadd.f32 0.0, %v10669
      %10671 = vmatmul.f32.gmra.mxu0 %v3290
      %v10672 = vpop.f32.mrf.mxu0
      %v10673 = vadd.f32 0.0, %v10672
      %10674 = vmatmul.f32.gmra.mxu0 %v3292
      %v10675 = vpop.f32.mrf.mxu0
      %v10676 = vadd.f32 0.0, %v10675
      %10677 = vmatmul.f32.gmra.mxu0 %v3294
      %v10678 = vpop.f32.mrf.mxu0
      %v10679 = vadd.f32 0.0, %v10678
      %10680 = vmatmul.f32.gmra.mxu0 %v3296
      %v10681 = vpop.f32.mrf.mxu0
      %v10682 = vadd.f32 0.0, %v10681
      %10683 = vmatmul.f32.gmra.mxu0 %v3298
      %v10684 = vpop.f32.mrf.mxu0
      %v10685 = vadd.f32 0.0, %v10684
      %10686 = vmatmul.f32.gmra.mxu0 %v3300
      %v10687 = vpop.f32.mrf.mxu0
      %v10688 = vadd.f32 0.0, %v10687
      %10689 = vmatmul.f32.gmra.mxu0 %v3302
      %v10690 = vpop.f32.mrf.mxu0
      %v10691 = vadd.f32 0.0, %v10690
      %10692 = vmatmul.f32.gmra.mxu0 %v3304
      %v10693 = vpop.f32.mrf.mxu0
      %v10694 = vadd.f32 0.0, %v10693
      %10695 = vmatmul.f32.gmra.mxu0 %v3306
      %v10696 = vpop.f32.mrf.mxu0
      %v10697 = vadd.f32 0.0, %v10696
      %10698 = vmatmul.f32.gmra.mxu0 %v3308
      %v10699 = vpop.f32.mrf.mxu0
      %v10700 = vadd.f32 0.0, %v10699
      %10701 = vmatmul.f32.gmra.mxu0 %v3310
      %v10702 = vpop.f32.mrf.mxu0
      %v10703 = vadd.f32 0.0, %v10702
      %10704 = vmatmul.f32.gmra.mxu0 %v3312
      %v10705 = vpop.f32.mrf.mxu0
      %v10706 = vadd.f32 0.0, %v10705
      %10707 = vmatmul.f32.gmra.mxu0 %v3314
      %v10708 = vpop.f32.mrf.mxu0
      %v10709 = vadd.f32 0.0, %v10708
      %10710 = vmatmul.f32.gmra.mxu0 %v3316
      %v10711 = vpop.f32.mrf.mxu0
      %v10712 = vadd.f32 0.0, %v10711
      %10713 = vmatmul.f32.gmra.mxu0 %v3318
      %v10714 = vpop.f32.mrf.mxu0
      %v10715 = vadd.f32 0.0, %v10714
      %10716 = vmatmul.f32.gmra.mxu0 %v3320
      %v10717 = vpop.f32.mrf.mxu0
      %v10718 = vadd.f32 0.0, %v10717
      %10719 = vmatmul.f32.gmra.mxu0 %v3322
      %v10720 = vpop.f32.mrf.mxu0
      %v10721 = vadd.f32 0.0, %v10720
      %10722 = vmatmul.f32.gmra.mxu0 %v3324
      %v10723 = vpop.f32.mrf.mxu0
      %v10724 = vadd.f32 0.0, %v10723
      %10725 = vmatmul.f32.gmra.mxu0 %v3326
      %v10726 = vpop.f32.mrf.mxu0
      %v10727 = vadd.f32 0.0, %v10726
      %10728 = vmatmul.f32.gmra.mxu0 %v3328
      %v10729 = vpop.f32.mrf.mxu0
      %v10730 = vadd.f32 0.0, %v10729
      %10731 = vmatmul.f32.gmra.mxu0 %v3330
      %v10732 = vpop.f32.mrf.mxu0
      %v10733 = vadd.f32 0.0, %v10732
      %10734 = vmatmul.f32.gmra.mxu0 %v3332
      %v10735 = vpop.f32.mrf.mxu0
      %v10736 = vadd.f32 0.0, %v10735
      %10737 = vmatmul.f32.gmra.mxu0 %v3334
      %v10738 = vpop.f32.mrf.mxu0
      %v10739 = vadd.f32 0.0, %v10738
      %10740 = vmatmul.f32.gmra.mxu0 %v3336
      %v10741 = vpop.f32.mrf.mxu0
      %v10742 = vadd.f32 0.0, %v10741
      %10743 = vmatmul.f32.gmra.mxu0 %v3338
      %v10744 = vpop.f32.mrf.mxu0
      %v10745 = vadd.f32 0.0, %v10744
      %10746 = vmatmul.f32.gmra.mxu0 %v3340
      %v10747 = vpop.f32.mrf.mxu0
      %v10748 = vadd.f32 0.0, %v10747
      %10749 = vmatmul.f32.gmra.mxu0 %v3342
      %v10750 = vpop.f32.mrf.mxu0
      %v10751 = vadd.f32 0.0, %v10750
      %10752 = vmatmul.f32.gmra.mxu0 %v3344
      %v10753 = vpop.f32.mrf.mxu0
      %v10754 = vadd.f32 0.0, %v10753
      %10755 = vmatmul.f32.gmra.mxu0 %v3346
      %v10756 = vpop.f32.mrf.mxu0
      %v10757 = vadd.f32 0.0, %v10756
      %10758 = vmatmul.f32.gmra.mxu0 %v3348
      %v10759 = vpop.f32.mrf.mxu0
      %v10760 = vadd.f32 0.0, %v10759
      %10761 = vmatmul.f32.gmra.mxu0 %v3350
      %v10762 = vpop.f32.mrf.mxu0
      %v10763 = vadd.f32 0.0, %v10762
      %10764 = vmatmul.f32.gmra.mxu0 %v3352
      %v10765 = vpop.f32.mrf.mxu0
      %v10766 = vadd.f32 0.0, %v10765
      %10767 = vmatmul.f32.gmra.mxu0 %v3354
      %v10768 = vpop.f32.mrf.mxu0
      %v10769 = vadd.f32 0.0, %v10768
      %10770 = vmatmul.f32.gmra.mxu0 %v3356
      %v10771 = vpop.f32.mrf.mxu0
      %v10772 = vadd.f32 0.0, %v10771
      %10773 = vmatmul.f32.gmra.mxu0 %v3358
      %v10774 = vpop.f32.mrf.mxu0
      %v10775 = vadd.f32 0.0, %v10774
      %10776 = vmatmul.f32.gmra.mxu0 %v3360
      %v10777 = vpop.f32.mrf.mxu0
      %v10778 = vadd.f32 0.0, %v10777
      %10779 = vmatmul.f32.gmra.mxu0 %v3362
      %v10780 = vpop.f32.mrf.mxu0
      %v10781 = vadd.f32 0.0, %v10780
      %10782 = vmatmul.f32.gmra.mxu0 %v3364
      %v10783 = vpop.f32.mrf.mxu0
      %v10784 = vadd.f32 0.0, %v10783
      %10785 = vmatmul.f32.gmra.mxu0 %v3366
      %v10786 = vpop.f32.mrf.mxu0
      %v10787 = vadd.f32 0.0, %v10786
      %10788 = vmatmul.f32.gmra.mxu0 %v3368
      %v10789 = vpop.f32.mrf.mxu0
      %v10790 = vadd.f32 0.0, %v10789
      %10791 = vmatmul.f32.gmra.mxu0 %v3370
      %v10792 = vpop.f32.mrf.mxu0
      %v10793 = vadd.f32 0.0, %v10792
      %10794 = vmatmul.f32.gmra.mxu0 %v3372
      %v10795 = vpop.f32.mrf.mxu0
      %v10796 = vadd.f32 0.0, %v10795
      %10797 = vmatmul.f32.gmra.mxu0 %v3374
      %v10798 = vpop.f32.mrf.mxu0
      %v10799 = vadd.f32 0.0, %v10798
      %10800 = vmatmul.f32.gmra.mxu0 %v3376
      %v10801 = vpop.f32.mrf.mxu0
      %v10802 = vadd.f32 0.0, %v10801
      %10803 = vmatmul.f32.gmra.mxu0 %v3378
      %v10804 = vpop.f32.mrf.mxu0
      %v10805 = vadd.f32 0.0, %v10804
      %10806 = vmatmul.f32.gmra.mxu0 %v3380
      %v10807 = vpop.f32.mrf.mxu0
      %v10808 = vadd.f32 0.0, %v10807
      %10809 = vmatmul.f32.gmra.mxu0 %v3382
      %v10810 = vpop.f32.mrf.mxu0
      %v10811 = vadd.f32 0.0, %v10810
      %10812 = vmatmul.f32.gmra.mxu0 %v3384
      %v10813 = vpop.f32.mrf.mxu0
      %v10814 = vadd.f32 0.0, %v10813
      %10815 = vmatmul.f32.gmra.mxu0 %v3386
      %v10816 = vpop.f32.mrf.mxu0
      %v10817 = vadd.f32 0.0, %v10816
      %10818 = vmatmul.f32.gmra.mxu0 %v3388
      %v10819 = vpop.f32.mrf.mxu0
      %v10820 = vadd.f32 0.0, %v10819
      %10821 = vmatmul.f32.gmra.mxu0 %v3390
      %v10822 = vpop.f32.mrf.mxu0
      %v10823 = vadd.f32 0.0, %v10822
      %10824 = vmatmul.f32.gmra.mxu0 %v3392
      %v10825 = vpop.f32.mrf.mxu0
      %v10826 = vadd.f32 0.0, %v10825
      %10827 = vmatmul.f32.gmra.mxu0 %v3394
      %v10828 = vpop.f32.mrf.mxu0
      %v10829 = vadd.f32 0.0, %v10828
      %10830 = vmatmul.f32.gmra.mxu0 %v3396
      %v10831 = vpop.f32.mrf.mxu0
      %v10832 = vadd.f32 0.0, %v10831
      %10833 = vmatmul.f32.gmra.mxu0 %v3398
      %v10834 = vpop.f32.mrf.mxu0
      %v10835 = vadd.f32 0.0, %v10834
      %10836 = vmatmul.f32.gmra.mxu0 %v3400
      %v10837 = vpop.f32.mrf.mxu0
      %v10838 = vadd.f32 0.0, %v10837
      %10839 = vmatmul.f32.gmra.mxu0 %v3402
      %v10840 = vpop.f32.mrf.mxu0
      %v10841 = vadd.f32 0.0, %v10840
      %10842 = vmatmul.f32.gmra.mxu0 %v3404
      %v10843 = vpop.f32.mrf.mxu0
      %v10844 = vadd.f32 0.0, %v10843
      %10845 = vmatmul.f32.gmra.mxu0 %v3406
      %v10846 = vpop.f32.mrf.mxu0
      %v10847 = vadd.f32 0.0, %v10846
      %10848 = vmatmul.f32.gmra.mxu0 %v3408
      %v10849 = vpop.f32.mrf.mxu0
      %v10850 = vadd.f32 0.0, %v10849
      %10851 = vmatmul.f32.gmra.mxu0 %v3410
      %v10852 = vpop.f32.mrf.mxu0
      %v10853 = vadd.f32 0.0, %v10852
      %10854 = vmatmul.f32.gmra.mxu0 %v3412
      %v10855 = vpop.f32.mrf.mxu0
      %v10856 = vadd.f32 0.0, %v10855
      %10857 = vmatmul.f32.gmra.mxu0 %v3414
      %v10858 = vpop.f32.mrf.mxu0
      %v10859 = vadd.f32 0.0, %v10858
      %10860 = vmatmul.f32.gmra.mxu0 %v3416
      %v10861 = vpop.f32.mrf.mxu0
      %v10862 = vadd.f32 0.0, %v10861
      %10863 = vmatmul.f32.gmra.mxu0 %v3418
      %v10864 = vpop.f32.mrf.mxu0
      %v10865 = vadd.f32 0.0, %v10864
      %10866 = vmatmul.f32.gmra.mxu0 %v3420
      %v10867 = vpop.f32.mrf.mxu0
      %v10868 = vadd.f32 0.0, %v10867
      %10869 = vmatmul.f32.gmra.mxu0 %v7601
      %v10870 = vpop.f32.mrf.mxu0
      %v10871 = vadd.f32 0.0, %v10870
      %10872 = vmatmul.f32.gmra.mxu0 %v7603
      %v10873 = vpop.f32.mrf.mxu0
      %v10874 = vadd.f32 0.0, %v10873
      %10875 = vmatmul.f32.gmra.mxu0 %v7605
      %v10876 = vpop.f32.mrf.mxu0
      %v10877 = vadd.f32 0.0, %v10876
      %10878 = vmatmul.f32.gmra.mxu0 %v7607
      %v10879 = vpop.f32.mrf.mxu0
      %v10880 = vadd.f32 0.0, %v10879
      %10881 = vmatmul.f32.gmra.mxu0 %v10485
      %v10882 = vpop.f32.mrf.mxu0
      %v10883 = vadd.f32 0.0, %v10882
      %10884 = vmatmul.f32.gmra.mxu0 %v10487
      %v10885 = vpop.f32.mrf.mxu0
      %v10886 = vadd.f32 0.0, %v10885
      %10887 = vmatmul.f32.gmra.mxu0 %v10489
      %v10888 = vpop.f32.mrf.mxu0
      %v10889 = vadd.f32 0.0, %v10888
      %10890 = vmatmul.f32.gmra.mxu0 %v10491
      %v10891 = vpop.f32.mrf.mxu0
      %v10892 = vadd.f32 0.0, %v10891
      %10893 = vdwg.mxu0
      %v10894 = vsel %vm826, %v10468, 0
      %v10896 = vsel %vm826, %v10470, 0
      %v10898 = vsel %vm826, %v10472, 0
      %v10900 = vsel %vm826, %v10474, 0
      %10902 = vmatpush.msra.mxu0 0.0
      %10903 = vmatpush.msra.mxu0 0.0
      %10904 = vmatpush.msra.mxu0 0.0
      %10905 = vmatpush.msra.mxu0 0.0
      %10906 = vmatpush.msra.mxu0 0.0
      %10907 = vmatpush.msra.mxu0 0.0
      %10908 = vmatpush.msra.mxu0 0.0
      %10909 = vmatpush.msra.mxu0 0.0
      %10910 = vmatpush.msra.mxu0 0.0
      %10911 = vmatpush.msra.mxu0 0.0
      %10912 = vmatpush.msra.mxu0 0.0
      %10913 = vmatpush.msra.mxu0 0.0
      %10914 = vmatpush.msra.mxu0 0.0
      %10915 = vmatpush.msra.mxu0 0.0
      %10916 = vmatpush.msra.mxu0 0.0
      %10917 = vmatpush.msra.mxu0 %v815
      %10918 = vmatmul.f32.gmra.mxu0 %v3839
      %v10919 = vpop.f32.mrf.mxu0
      %v10920 = vadd.f32 %v10511, %v10919
      %10921 = vmatmul.f32.gmra.mxu0 %v3841
      %v10922 = vpop.f32.mrf.mxu0
      %v10923 = vadd.f32 %v10514, %v10922
      %10924 = vmatmul.f32.gmra.mxu0 %v3843
      %v10925 = vpop.f32.mrf.mxu0
      %v10926 = vadd.f32 %v10517, %v10925
      %10927 = vmatmul.f32.gmra.mxu0 %v3845
      %v10928 = vpop.f32.mrf.mxu0
      %v10929 = vadd.f32 %v10520, %v10928
      %10930 = vmatmul.f32.gmra.mxu0 %v3847
      %v10931 = vpop.f32.mrf.mxu0
      %v10932 = vadd.f32 %v10523, %v10931
      %10933 = vmatmul.f32.gmra.mxu0 %v3849
      %v10934 = vpop.f32.mrf.mxu0
      %v10935 = vadd.f32 %v10526, %v10934
      %10936 = vmatmul.f32.gmra.mxu0 %v3851
      %v10937 = vpop.f32.mrf.mxu0
      %v10938 = vadd.f32 %v10529, %v10937
      %10939 = vmatmul.f32.gmra.mxu0 %v3853
      %v10940 = vpop.f32.mrf.mxu0
      %v10941 = vadd.f32 %v10532, %v10940
      %10942 = vmatmul.f32.gmra.mxu0 %v3855
      %v10943 = vpop.f32.mrf.mxu0
      %v10944 = vadd.f32 %v10535, %v10943
      %10945 = vmatmul.f32.gmra.mxu0 %v3857
      %v10946 = vpop.f32.mrf.mxu0
      %v10947 = vadd.f32 %v10538, %v10946
      %10948 = vmatmul.f32.gmra.mxu0 %v3859
      %v10949 = vpop.f32.mrf.mxu0
      %v10950 = vadd.f32 %v10541, %v10949
      %10951 = vmatmul.f32.gmra.mxu0 %v3861
      %v10952 = vpop.f32.mrf.mxu0
      %v10953 = vadd.f32 %v10544, %v10952
      %10954 = vmatmul.f32.gmra.mxu0 %v3863
      %v10955 = vpop.f32.mrf.mxu0
      %v10956 = vadd.f32 %v10547, %v10955
      %10957 = vmatmul.f32.gmra.mxu0 %v3865
      %v10958 = vpop.f32.mrf.mxu0
      %v10959 = vadd.f32 %v10550, %v10958
      %10960 = vmatmul.f32.gmra.mxu0 %v3867
      %v10961 = vpop.f32.mrf.mxu0
      %v10962 = vadd.f32 %v10553, %v10961
      %10963 = vmatmul.f32.gmra.mxu0 %v3869
      %v10964 = vpop.f32.mrf.mxu0
      %v10965 = vadd.f32 %v10556, %v10964
      %10966 = vmatmul.f32.gmra.mxu0 %v3871
      %v10967 = vpop.f32.mrf.mxu0
      %v10968 = vadd.f32 %v10559, %v10967
      %10969 = vmatmul.f32.gmra.mxu0 %v3873
      %v10970 = vpop.f32.mrf.mxu0
      %v10971 = vadd.f32 %v10562, %v10970
      %10972 = vmatmul.f32.gmra.mxu0 %v3875
      %v10973 = vpop.f32.mrf.mxu0
      %v10974 = vadd.f32 %v10565, %v10973
      %10975 = vmatmul.f32.gmra.mxu0 %v3877
      %v10976 = vpop.f32.mrf.mxu0
      %v10977 = vadd.f32 %v10568, %v10976
      %10978 = vmatmul.f32.gmra.mxu0 %v3879
      %v10979 = vpop.f32.mrf.mxu0
      %v10980 = vadd.f32 %v10571, %v10979
      %10981 = vmatmul.f32.gmra.mxu0 %v3881
      %v10982 = vpop.f32.mrf.mxu0
      %v10983 = vadd.f32 %v10574, %v10982
      %10984 = vmatmul.f32.gmra.mxu0 %v3883
      %v10985 = vpop.f32.mrf.mxu0
      %v10986 = vadd.f32 %v10577, %v10985
      %10987 = vmatmul.f32.gmra.mxu0 %v3885
      %v10988 = vpop.f32.mrf.mxu0
      %v10989 = vadd.f32 %v10580, %v10988
      %10990 = vmatmul.f32.gmra.mxu0 %v3887
      %v10991 = vpop.f32.mrf.mxu0
      %v10992 = vadd.f32 %v10583, %v10991
      %10993 = vmatmul.f32.gmra.mxu0 %v3889
      %v10994 = vpop.f32.mrf.mxu0
      %v10995 = vadd.f32 %v10586, %v10994
      %10996 = vmatmul.f32.gmra.mxu0 %v3891
      %v10997 = vpop.f32.mrf.mxu0
      %v10998 = vadd.f32 %v10589, %v10997
      %10999 = vmatmul.f32.gmra.mxu0 %v3893
      %v11000 = vpop.f32.mrf.mxu0
      %v11001 = vadd.f32 %v10592, %v11000
      %11002 = vmatmul.f32.gmra.mxu0 %v3895
      %v11003 = vpop.f32.mrf.mxu0
      %v11004 = vadd.f32 %v10595, %v11003
      %11005 = vmatmul.f32.gmra.mxu0 %v3897
      %v11006 = vpop.f32.mrf.mxu0
      %v11007 = vadd.f32 %v10598, %v11006
      %11008 = vmatmul.f32.gmra.mxu0 %v3899
      %v11009 = vpop.f32.mrf.mxu0
      %v11010 = vadd.f32 %v10601, %v11009
      %11011 = vmatmul.f32.gmra.mxu0 %v3901
      %v11012 = vpop.f32.mrf.mxu0
      %v11013 = vadd.f32 %v10604, %v11012
      %11014 = vmatmul.f32.gmra.mxu0 %v3903
      %v11015 = vpop.f32.mrf.mxu0
      %v11016 = vadd.f32 %v10607, %v11015
      %11017 = vmatmul.f32.gmra.mxu0 %v3905
      %v11018 = vpop.f32.mrf.mxu0
      %v11019 = vadd.f32 %v10610, %v11018
      %11020 = vmatmul.f32.gmra.mxu0 %v3907
      %v11021 = vpop.f32.mrf.mxu0
      %v11022 = vadd.f32 %v10613, %v11021
      %11023 = vmatmul.f32.gmra.mxu0 %v3909
      %v11024 = vpop.f32.mrf.mxu0
      %v11025 = vadd.f32 %v10616, %v11024
      %11026 = vmatmul.f32.gmra.mxu0 %v3911
      %v11027 = vpop.f32.mrf.mxu0
      %v11028 = vadd.f32 %v10619, %v11027
      %11029 = vmatmul.f32.gmra.mxu0 %v3913
      %v11030 = vpop.f32.mrf.mxu0
      %v11031 = vadd.f32 %v10622, %v11030
      %11032 = vmatmul.f32.gmra.mxu0 %v3915
      %v11033 = vpop.f32.mrf.mxu0
      %v11034 = vadd.f32 %v10625, %v11033
      %11035 = vmatmul.f32.gmra.mxu0 %v3917
      %v11036 = vpop.f32.mrf.mxu0
      %v11037 = vadd.f32 %v10628, %v11036
      %11038 = vmatmul.f32.gmra.mxu0 %v3919
      %v11039 = vpop.f32.mrf.mxu0
      %v11040 = vadd.f32 %v10631, %v11039
      %11041 = vmatmul.f32.gmra.mxu0 %v3921
      %v11042 = vpop.f32.mrf.mxu0
      %v11043 = vadd.f32 %v10634, %v11042
      %11044 = vmatmul.f32.gmra.mxu0 %v3923
      %v11045 = vpop.f32.mrf.mxu0
      %v11046 = vadd.f32 %v10637, %v11045
      %11047 = vmatmul.f32.gmra.mxu0 %v3925
      %v11048 = vpop.f32.mrf.mxu0
      %v11049 = vadd.f32 %v10640, %v11048
      %11050 = vmatmul.f32.gmra.mxu0 %v3927
      %v11051 = vpop.f32.mrf.mxu0
      %v11052 = vadd.f32 %v10643, %v11051
      %11053 = vmatmul.f32.gmra.mxu0 %v3929
      %v11054 = vpop.f32.mrf.mxu0
      %v11055 = vadd.f32 %v10646, %v11054
      %11056 = vmatmul.f32.gmra.mxu0 %v3931
      %v11057 = vpop.f32.mrf.mxu0
      %v11058 = vadd.f32 %v10649, %v11057
      %11059 = vmatmul.f32.gmra.mxu0 %v3933
      %v11060 = vpop.f32.mrf.mxu0
      %v11061 = vadd.f32 %v10652, %v11060
      %11062 = vmatmul.f32.gmra.mxu0 %v3935
      %v11063 = vpop.f32.mrf.mxu0
      %v11064 = vadd.f32 %v10655, %v11063
      %11065 = vmatmul.f32.gmra.mxu0 %v3937
      %v11066 = vpop.f32.mrf.mxu0
      %v11067 = vadd.f32 %v10658, %v11066
      %11068 = vmatmul.f32.gmra.mxu0 %v3939
      %v11069 = vpop.f32.mrf.mxu0
      %v11070 = vadd.f32 %v10661, %v11069
      %11071 = vmatmul.f32.gmra.mxu0 %v3941
      %v11072 = vpop.f32.mrf.mxu0
      %v11073 = vadd.f32 %v10664, %v11072
      %11074 = vmatmul.f32.gmra.mxu0 %v3943
      %v11075 = vpop.f32.mrf.mxu0
      %v11076 = vadd.f32 %v10667, %v11075
      %11077 = vmatmul.f32.gmra.mxu0 %v3945
      %v11078 = vpop.f32.mrf.mxu0
      %v11079 = vadd.f32 %v10670, %v11078
      %11080 = vmatmul.f32.gmra.mxu0 %v3947
      %v11081 = vpop.f32.mrf.mxu0
      %v11082 = vadd.f32 %v10673, %v11081
      %11083 = vmatmul.f32.gmra.mxu0 %v3949
      %v11084 = vpop.f32.mrf.mxu0
      %v11085 = vadd.f32 %v10676, %v11084
      %11086 = vmatmul.f32.gmra.mxu0 %v3951
      %v11087 = vpop.f32.mrf.mxu0
      %v11088 = vadd.f32 %v10679, %v11087
      %11089 = vmatmul.f32.gmra.mxu0 %v3953
      %v11090 = vpop.f32.mrf.mxu0
      %v11091 = vadd.f32 %v10682, %v11090
      %11092 = vmatmul.f32.gmra.mxu0 %v3955
      %v11093 = vpop.f32.mrf.mxu0
      %v11094 = vadd.f32 %v10685, %v11093
      %11095 = vmatmul.f32.gmra.mxu0 %v3957
      %v11096 = vpop.f32.mrf.mxu0
      %v11097 = vadd.f32 %v10688, %v11096
      %11098 = vmatmul.f32.gmra.mxu0 %v3959
      %v11099 = vpop.f32.mrf.mxu0
      %v11100 = vadd.f32 %v10691, %v11099
      %11101 = vmatmul.f32.gmra.mxu0 %v3961
      %v11102 = vpop.f32.mrf.mxu0
      %v11103 = vadd.f32 %v10694, %v11102
      %11104 = vmatmul.f32.gmra.mxu0 %v3963
      %v11105 = vpop.f32.mrf.mxu0
      %v11106 = vadd.f32 %v10697, %v11105
      %11107 = vmatmul.f32.gmra.mxu0 %v3965
      %v11108 = vpop.f32.mrf.mxu0
      %v11109 = vadd.f32 %v10700, %v11108
      %11110 = vmatmul.f32.gmra.mxu0 %v3967
      %v11111 = vpop.f32.mrf.mxu0
      %v11112 = vadd.f32 %v10703, %v11111
      %11113 = vmatmul.f32.gmra.mxu0 %v3969
      %v11114 = vpop.f32.mrf.mxu0
      %v11115 = vadd.f32 %v10706, %v11114
      %11116 = vmatmul.f32.gmra.mxu0 %v3971
      %v11117 = vpop.f32.mrf.mxu0
      %v11118 = vadd.f32 %v10709, %v11117
      %11119 = vmatmul.f32.gmra.mxu0 %v3973
      %v11120 = vpop.f32.mrf.mxu0
      %v11121 = vadd.f32 %v10712, %v11120
      %11122 = vmatmul.f32.gmra.mxu0 %v3975
      %v11123 = vpop.f32.mrf.mxu0
      %v11124 = vadd.f32 %v10715, %v11123
      %11125 = vmatmul.f32.gmra.mxu0 %v3977
      %v11126 = vpop.f32.mrf.mxu0
      %v11127 = vadd.f32 %v10718, %v11126
      %11128 = vmatmul.f32.gmra.mxu0 %v3979
      %v11129 = vpop.f32.mrf.mxu0
      %v11130 = vadd.f32 %v10721, %v11129
      %11131 = vmatmul.f32.gmra.mxu0 %v3981
      %v11132 = vpop.f32.mrf.mxu0
      %v11133 = vadd.f32 %v10724, %v11132
      %11134 = vmatmul.f32.gmra.mxu0 %v3983
      %v11135 = vpop.f32.mrf.mxu0
      %v11136 = vadd.f32 %v10727, %v11135
      %11137 = vmatmul.f32.gmra.mxu0 %v3985
      %v11138 = vpop.f32.mrf.mxu0
      %v11139 = vadd.f32 %v10730, %v11138
      %11140 = vmatmul.f32.gmra.mxu0 %v3987
      %v11141 = vpop.f32.mrf.mxu0
      %v11142 = vadd.f32 %v10733, %v11141
      %11143 = vmatmul.f32.gmra.mxu0 %v3989
      %v11144 = vpop.f32.mrf.mxu0
      %v11145 = vadd.f32 %v10736, %v11144
      %11146 = vmatmul.f32.gmra.mxu0 %v3991
      %v11147 = vpop.f32.mrf.mxu0
      %v11148 = vadd.f32 %v10739, %v11147
      %11149 = vmatmul.f32.gmra.mxu0 %v3993
      %v11150 = vpop.f32.mrf.mxu0
      %v11151 = vadd.f32 %v10742, %v11150
      %11152 = vmatmul.f32.gmra.mxu0 %v3995
      %v11153 = vpop.f32.mrf.mxu0
      %v11154 = vadd.f32 %v10745, %v11153
      %11155 = vmatmul.f32.gmra.mxu0 %v3997
      %v11156 = vpop.f32.mrf.mxu0
      %v11157 = vadd.f32 %v10748, %v11156
      %11158 = vmatmul.f32.gmra.mxu0 %v3999
      %v11159 = vpop.f32.mrf.mxu0
      %v11160 = vadd.f32 %v10751, %v11159
      %11161 = vmatmul.f32.gmra.mxu0 %v4001
      %v11162 = vpop.f32.mrf.mxu0
      %v11163 = vadd.f32 %v10754, %v11162
      %11164 = vmatmul.f32.gmra.mxu0 %v4003
      %v11165 = vpop.f32.mrf.mxu0
      %v11166 = vadd.f32 %v10757, %v11165
      %11167 = vmatmul.f32.gmra.mxu0 %v4005
      %v11168 = vpop.f32.mrf.mxu0
      %v11169 = vadd.f32 %v10760, %v11168
      %11170 = vmatmul.f32.gmra.mxu0 %v4007
      %v11171 = vpop.f32.mrf.mxu0
      %v11172 = vadd.f32 %v10763, %v11171
      %11173 = vmatmul.f32.gmra.mxu0 %v4009
      %v11174 = vpop.f32.mrf.mxu0
      %v11175 = vadd.f32 %v10766, %v11174
      %11176 = vmatmul.f32.gmra.mxu0 %v4011
      %v11177 = vpop.f32.mrf.mxu0
      %v11178 = vadd.f32 %v10769, %v11177
      %11179 = vmatmul.f32.gmra.mxu0 %v4013
      %v11180 = vpop.f32.mrf.mxu0
      %v11181 = vadd.f32 %v10772, %v11180
      %11182 = vmatmul.f32.gmra.mxu0 %v4015
      %v11183 = vpop.f32.mrf.mxu0
      %v11184 = vadd.f32 %v10775, %v11183
      %11185 = vmatmul.f32.gmra.mxu0 %v4017
      %v11186 = vpop.f32.mrf.mxu0
      %v11187 = vadd.f32 %v10778, %v11186
      %11188 = vmatmul.f32.gmra.mxu0 %v4019
      %v11189 = vpop.f32.mrf.mxu0
      %v11190 = vadd.f32 %v10781, %v11189
      %11191 = vmatmul.f32.gmra.mxu0 %v4021
      %v11192 = vpop.f32.mrf.mxu0
      %v11193 = vadd.f32 %v10784, %v11192
      %11194 = vmatmul.f32.gmra.mxu0 %v4023
      %v11195 = vpop.f32.mrf.mxu0
      %v11196 = vadd.f32 %v10787, %v11195
      %11197 = vmatmul.f32.gmra.mxu0 %v4025
      %v11198 = vpop.f32.mrf.mxu0
      %v11199 = vadd.f32 %v10790, %v11198
      %11200 = vmatmul.f32.gmra.mxu0 %v4027
      %v11201 = vpop.f32.mrf.mxu0
      %v11202 = vadd.f32 %v10793, %v11201
      %11203 = vmatmul.f32.gmra.mxu0 %v4029
      %v11204 = vpop.f32.mrf.mxu0
      %v11205 = vadd.f32 %v10796, %v11204
      %11206 = vmatmul.f32.gmra.mxu0 %v4031
      %v11207 = vpop.f32.mrf.mxu0
      %v11208 = vadd.f32 %v10799, %v11207
      %11209 = vmatmul.f32.gmra.mxu0 %v4033
      %v11210 = vpop.f32.mrf.mxu0
      %v11211 = vadd.f32 %v10802, %v11210
      %11212 = vmatmul.f32.gmra.mxu0 %v4035
      %v11213 = vpop.f32.mrf.mxu0
      %v11214 = vadd.f32 %v10805, %v11213
      %11215 = vmatmul.f32.gmra.mxu0 %v4037
      %v11216 = vpop.f32.mrf.mxu0
      %v11217 = vadd.f32 %v10808, %v11216
      %11218 = vmatmul.f32.gmra.mxu0 %v4039
      %v11219 = vpop.f32.mrf.mxu0
      %v11220 = vadd.f32 %v10811, %v11219
      %11221 = vmatmul.f32.gmra.mxu0 %v4041
      %v11222 = vpop.f32.mrf.mxu0
      %v11223 = vadd.f32 %v10814, %v11222
      %11224 = vmatmul.f32.gmra.mxu0 %v4043
      %v11225 = vpop.f32.mrf.mxu0
      %v11226 = vadd.f32 %v10817, %v11225
      %11227 = vmatmul.f32.gmra.mxu0 %v4045
      %v11228 = vpop.f32.mrf.mxu0
      %v11229 = vadd.f32 %v10820, %v11228
      %11230 = vmatmul.f32.gmra.mxu0 %v4047
      %v11231 = vpop.f32.mrf.mxu0
      %v11232 = vadd.f32 %v10823, %v11231
      %11233 = vmatmul.f32.gmra.mxu0 %v4049
      %v11234 = vpop.f32.mrf.mxu0
      %v11235 = vadd.f32 %v10826, %v11234
      %11236 = vmatmul.f32.gmra.mxu0 %v4051
      %v11237 = vpop.f32.mrf.mxu0
      %v11238 = vadd.f32 %v10829, %v11237
      %11239 = vmatmul.f32.gmra.mxu0 %v4053
      %v11240 = vpop.f32.mrf.mxu0
      %v11241 = vadd.f32 %v10832, %v11240
      %11242 = vmatmul.f32.gmra.mxu0 %v4055
      %v11243 = vpop.f32.mrf.mxu0
      %v11244 = vadd.f32 %v10835, %v11243
      %11245 = vmatmul.f32.gmra.mxu0 %v4057
      %v11246 = vpop.f32.mrf.mxu0
      %v11247 = vadd.f32 %v10838, %v11246
      %11248 = vmatmul.f32.gmra.mxu0 %v4059
      %v11249 = vpop.f32.mrf.mxu0
      %v11250 = vadd.f32 %v10841, %v11249
      %11251 = vmatmul.f32.gmra.mxu0 %v4061
      %v11252 = vpop.f32.mrf.mxu0
      %v11253 = vadd.f32 %v10844, %v11252
      %11254 = vmatmul.f32.gmra.mxu0 %v4063
      %v11255 = vpop.f32.mrf.mxu0
      %v11256 = vadd.f32 %v10847, %v11255
      %11257 = vmatmul.f32.gmra.mxu0 %v4065
      %v11258 = vpop.f32.mrf.mxu0
      %v11259 = vadd.f32 %v10850, %v11258
      %11260 = vmatmul.f32.gmra.mxu0 %v4067
      %v11261 = vpop.f32.mrf.mxu0
      %v11262 = vadd.f32 %v10853, %v11261
      %11263 = vmatmul.f32.gmra.mxu0 %v4069
      %v11264 = vpop.f32.mrf.mxu0
      %v11265 = vadd.f32 %v10856, %v11264
      %11266 = vmatmul.f32.gmra.mxu0 %v4071
      %v11267 = vpop.f32.mrf.mxu0
      %v11268 = vadd.f32 %v10859, %v11267
      %11269 = vmatmul.f32.gmra.mxu0 %v4073
      %v11270 = vpop.f32.mrf.mxu0
      %v11271 = vadd.f32 %v10862, %v11270
      %11272 = vmatmul.f32.gmra.mxu0 %v4075
      %v11273 = vpop.f32.mrf.mxu0
      %v11274 = vadd.f32 %v10865, %v11273
      %11275 = vmatmul.f32.gmra.mxu0 %v4077
      %v11276 = vpop.f32.mrf.mxu0
      %v11277 = vadd.f32 %v10868, %v11276
      %11278 = vmatmul.f32.gmra.mxu0 %v8010
      %v11279 = vpop.f32.mrf.mxu0
      %v11280 = vadd.f32 %v10871, %v11279
      %11281 = vmatmul.f32.gmra.mxu0 %v8012
      %v11282 = vpop.f32.mrf.mxu0
      %v11283 = vadd.f32 %v10874, %v11282
      %11284 = vmatmul.f32.gmra.mxu0 %v8014
      %v11285 = vpop.f32.mrf.mxu0
      %v11286 = vadd.f32 %v10877, %v11285
      %11287 = vmatmul.f32.gmra.mxu0 %v8016
      %v11288 = vpop.f32.mrf.mxu0
      %v11289 = vadd.f32 %v10880, %v11288
      %11290 = vmatmul.f32.gmra.mxu0 %v10894
      %v11291 = vpop.f32.mrf.mxu0
      %v11292 = vadd.f32 %v10883, %v11291
      %11293 = vmatmul.f32.gmra.mxu0 %v10896
      %v11294 = vpop.f32.mrf.mxu0
      %v11295 = vadd.f32 %v10886, %v11294
      %11296 = vmatmul.f32.gmra.mxu0 %v10898
      %v11297 = vpop.f32.mrf.mxu0
      %v11298 = vadd.f32 %v10889, %v11297
      %11299 = vmatmul.f32.gmra.mxu0 %v10900
      %v11300 = vpop.f32.mrf.mxu0
      %v11301 = vadd.f32 %v10892, %v11300
      %11302 = vdwg.mxu0
      %v11303 = vadd.f32 %v10337, %v10920
      %v11304 = vadd.f32 %v10338, %v10923
      %v11305 = vadd.f32 %v10339, %v10926
      %v11306 = vadd.f32 %v10340, %v10929
      %v11307 = vadd.f32 %v10341, %v10932
      %v11308 = vadd.f32 %v10342, %v10935
      %v11309 = vadd.f32 %v10343, %v10938
      %v11310 = vadd.f32 %v10344, %v10941
      %v11311 = vadd.f32 %v10345, %v10944
      %v11312 = vadd.f32 %v10346, %v10947
      %v11313 = vadd.f32 %v10347, %v10950
      %v11314 = vadd.f32 %v10348, %v10953
      %v11315 = vadd.f32 %v10349, %v10956
      %v11316 = vadd.f32 %v10350, %v10959
      %v11317 = vadd.f32 %v10351, %v10962
      %v11318 = vadd.f32 %v10352, %v10965
      %v11319 = vadd.f32 %v10353, %v10968
      %v11320 = vadd.f32 %v10354, %v10971
      %v11321 = vadd.f32 %v10355, %v10974
      %v11322 = vadd.f32 %v10356, %v10977
      %v11323 = vadd.f32 %v10357, %v10980
      %v11324 = vadd.f32 %v10358, %v10983
      %v11325 = vadd.f32 %v10359, %v10986
      %v11326 = vadd.f32 %v10360, %v10989
      %v11327 = vadd.f32 %v10361, %v10992
      %v11328 = vadd.f32 %v10362, %v10995
      %v11329 = vadd.f32 %v10363, %v10998
      %v11330 = vadd.f32 %v10364, %v11001
      %v11331 = vadd.f32 %v10365, %v11004
      %v11332 = vadd.f32 %v10366, %v11007
      %v11333 = vadd.f32 %v10367, %v11010
      %v11334 = vadd.f32 %v10368, %v11013
      %v11335 = vadd.f32 %v10369, %v11016
      %v11336 = vadd.f32 %v10370, %v11019
      %v11337 = vadd.f32 %v10371, %v11022
      %v11338 = vadd.f32 %v10372, %v11025
      %v11339 = vadd.f32 %v10373, %v11028
      %v11340 = vadd.f32 %v10374, %v11031
      %v11341 = vadd.f32 %v10375, %v11034
      %v11342 = vadd.f32 %v10376, %v11037
      %v11343 = vadd.f32 %v10377, %v11040
      %v11344 = vadd.f32 %v10378, %v11043
      %v11345 = vadd.f32 %v10379, %v11046
      %v11346 = vadd.f32 %v10380, %v11049
      %v11347 = vadd.f32 %v10381, %v11052
      %v11348 = vadd.f32 %v10382, %v11055
      %v11349 = vadd.f32 %v10383, %v11058
      %v11350 = vadd.f32 %v10384, %v11061
      %v11351 = vadd.f32 %v10385, %v11064
      %v11352 = vadd.f32 %v10386, %v11067
      %v11353 = vadd.f32 %v10387, %v11070
      %v11354 = vadd.f32 %v10388, %v11073
      %v11355 = vadd.f32 %v10389, %v11076
      %v11356 = vadd.f32 %v10390, %v11079
      %v11357 = vadd.f32 %v10391, %v11082
      %v11358 = vadd.f32 %v10392, %v11085
      %v11359 = vadd.f32 %v10393, %v11088
      %v11360 = vadd.f32 %v10394, %v11091
      %v11361 = vadd.f32 %v10395, %v11094
      %v11362 = vadd.f32 %v10396, %v11097
      %v11363 = vadd.f32 %v10397, %v11100
      %v11364 = vadd.f32 %v10398, %v11103
      %v11365 = vadd.f32 %v10399, %v11106
      %v11366 = vadd.f32 %v10400, %v11109
      %v11367 = vadd.f32 %v10401, %v11112
      %v11368 = vadd.f32 %v10402, %v11115
      %v11369 = vadd.f32 %v10403, %v11118
      %v11370 = vadd.f32 %v10404, %v11121
      %v11371 = vadd.f32 %v10405, %v11124
      %v11372 = vadd.f32 %v10406, %v11127
      %v11373 = vadd.f32 %v10407, %v11130
      %v11374 = vadd.f32 %v10408, %v11133
      %v11375 = vadd.f32 %v10409, %v11136
      %v11376 = vadd.f32 %v10410, %v11139
      %v11377 = vadd.f32 %v10411, %v11142
      %v11378 = vadd.f32 %v10412, %v11145
      %v11379 = vadd.f32 %v10413, %v11148
      %v11380 = vadd.f32 %v10414, %v11151
      %v11381 = vadd.f32 %v10415, %v11154
      %v11382 = vadd.f32 %v10416, %v11157
      %v11383 = vadd.f32 %v10417, %v11160
      %v11384 = vadd.f32 %v10418, %v11163
      %v11385 = vadd.f32 %v10419, %v11166
      %v11386 = vadd.f32 %v10420, %v11169
      %v11387 = vadd.f32 %v10421, %v11172
      %v11388 = vadd.f32 %v10422, %v11175
      %v11389 = vadd.f32 %v10423, %v11178
      %v11390 = vadd.f32 %v10424, %v11181
      %v11391 = vadd.f32 %v10425, %v11184
      %v11392 = vadd.f32 %v10426, %v11187
      %v11393 = vadd.f32 %v10427, %v11190
      %v11394 = vadd.f32 %v10428, %v11193
      %v11395 = vadd.f32 %v10429, %v11196
      %v11396 = vadd.f32 %v10430, %v11199
      %v11397 = vadd.f32 %v10431, %v11202
      %v11398 = vadd.f32 %v10432, %v11205
      %v11399 = vadd.f32 %v10433, %v11208
      %v11400 = vadd.f32 %v10434, %v11211
      %v11401 = vadd.f32 %v10435, %v11214
      %v11402 = vadd.f32 %v10436, %v11217
      %v11403 = vadd.f32 %v10437, %v11220
      %v11404 = vadd.f32 %v10438, %v11223
      %v11405 = vadd.f32 %v10439, %v11226
      %v11406 = vadd.f32 %v10440, %v11229
      %v11407 = vadd.f32 %v10441, %v11232
      %v11408 = vadd.f32 %v10442, %v11235
      %v11409 = vadd.f32 %v10443, %v11238
      %v11410 = vadd.f32 %v10444, %v11241
      %v11411 = vadd.f32 %v10445, %v11244
      %v11412 = vadd.f32 %v10446, %v11247
      %v11413 = vadd.f32 %v10447, %v11250
      %v11414 = vadd.f32 %v10448, %v11253
      %v11415 = vadd.f32 %v10449, %v11256
      %v11416 = vadd.f32 %v10450, %v11259
      %v11417 = vadd.f32 %v10451, %v11262
      %v11418 = vadd.f32 %v10452, %v11265
      %v11419 = vadd.f32 %v10453, %v11268
      %v11420 = vadd.f32 %v10454, %v11271
      %v11421 = vadd.f32 %v10455, %v11274
      %v11422 = vadd.f32 %v10456, %v11277
      %v11423 = vadd.f32 %v10457, %v11280
      %v11424 = vadd.f32 %v10458, %v11283
      %v11425 = vadd.f32 %v10459, %v11286
      %v11426 = vadd.f32 %v10460, %v11289
      %v11427 = vadd.f32 %v10461, %v11292
      %v11428 = vadd.f32 %v10462, %v11295
      %v11429 = vadd.f32 %v10463, %v11298
      %v11430 = vadd.f32 %v10464, %v11301
      %v11431 = vrot.slane %v633, 2
      %v11432 = vrot.slane %v634, 2
      %v11433 = vsel %vm4608, %v11431, %v11432
      %v11434 = vrot.slane %v635, 2
      %v11435 = vsel %vm4608, %v11432, %v11434
      %v11436 = vrot.slane %v636, 2
      %v11437 = vsel %vm4608, %v11434, %v11436
      %v11438 = vrot.slane %v637, 2
      %v11439 = vsel %vm4608, %v11436, %v11438
      %v11440 = vrot.slane %v803, 2
      %v11441 = vrot.slane %v804, 2
      %v11442 = vsel %vm4608, %v11440, %v11441
      %v11443 = vrot.slane %v805, 2
      %v11444 = vsel %vm4608, %v11441, %v11443
      %v11445 = vrot.slane %v806, 2
      %v11446 = vsel %vm4608, %v11443, %v11445
      %v11447 = vrot.slane %v807, 2
      %v11448 = vsel %vm4608, %v11445, %v11447
      %v11449 = vsel %vm826, %v11442, 0
      %v11451 = vsel %vm826, %v11444, 0
      %v11453 = vsel %vm826, %v11446, 0
      %v11455 = vsel %vm826, %v11448, 0
      %11457 = vmatpush.msra.mxu0 0.0
      %11458 = vmatpush.msra.mxu0 0.0
      %11459 = vmatpush.msra.mxu0 0.0
      %11460 = vmatpush.msra.mxu0 0.0
      %11461 = vmatpush.msra.mxu0 0.0
      %11462 = vmatpush.msra.mxu0 0.0
      %11463 = vmatpush.msra.mxu0 0.0
      %11464 = vmatpush.msra.mxu0 0.0
      %11465 = vmatpush.msra.mxu0 0.0
      %11466 = vmatpush.msra.mxu0 0.0
      %11467 = vmatpush.msra.mxu0 0.0
      %11468 = vmatpush.msra.mxu0 0.0
      %11469 = vmatpush.msra.mxu0 0.0
      %11470 = vmatpush.msra.mxu0 0.0
      %11471 = vmatpush.msra.mxu0 0.0
      %11472 = vmatpush.msra.mxu0 %v825
      %11473 = vmatmul.f32.gmra.mxu0 %v5201
      %v11474 = vpop.f32.mrf.mxu0
      %v11475 = vadd.f32 0.0, %v11474
      %11476 = vmatmul.f32.gmra.mxu0 %v5203
      %v11477 = vpop.f32.mrf.mxu0
      %v11478 = vadd.f32 0.0, %v11477
      %11479 = vmatmul.f32.gmra.mxu0 %v5205
      %v11480 = vpop.f32.mrf.mxu0
      %v11481 = vadd.f32 0.0, %v11480
      %11482 = vmatmul.f32.gmra.mxu0 %v5207
      %v11483 = vpop.f32.mrf.mxu0
      %v11484 = vadd.f32 0.0, %v11483
      %11485 = vmatmul.f32.gmra.mxu0 %v5209
      %v11486 = vpop.f32.mrf.mxu0
      %v11487 = vadd.f32 0.0, %v11486
      %11488 = vmatmul.f32.gmra.mxu0 %v5211
      %v11489 = vpop.f32.mrf.mxu0
      %v11490 = vadd.f32 0.0, %v11489
      %11491 = vmatmul.f32.gmra.mxu0 %v5213
      %v11492 = vpop.f32.mrf.mxu0
      %v11493 = vadd.f32 0.0, %v11492
      %11494 = vmatmul.f32.gmra.mxu0 %v5215
      %v11495 = vpop.f32.mrf.mxu0
      %v11496 = vadd.f32 0.0, %v11495
      %11497 = vmatmul.f32.gmra.mxu0 %v5217
      %v11498 = vpop.f32.mrf.mxu0
      %v11499 = vadd.f32 0.0, %v11498
      %11500 = vmatmul.f32.gmra.mxu0 %v5219
      %v11501 = vpop.f32.mrf.mxu0
      %v11502 = vadd.f32 0.0, %v11501
      %11503 = vmatmul.f32.gmra.mxu0 %v5221
      %v11504 = vpop.f32.mrf.mxu0
      %v11505 = vadd.f32 0.0, %v11504
      %11506 = vmatmul.f32.gmra.mxu0 %v5223
      %v11507 = vpop.f32.mrf.mxu0
      %v11508 = vadd.f32 0.0, %v11507
      %11509 = vmatmul.f32.gmra.mxu0 %v5225
      %v11510 = vpop.f32.mrf.mxu0
      %v11511 = vadd.f32 0.0, %v11510
      %11512 = vmatmul.f32.gmra.mxu0 %v5227
      %v11513 = vpop.f32.mrf.mxu0
      %v11514 = vadd.f32 0.0, %v11513
      %11515 = vmatmul.f32.gmra.mxu0 %v5229
      %v11516 = vpop.f32.mrf.mxu0
      %v11517 = vadd.f32 0.0, %v11516
      %11518 = vmatmul.f32.gmra.mxu0 %v5231
      %v11519 = vpop.f32.mrf.mxu0
      %v11520 = vadd.f32 0.0, %v11519
      %11521 = vmatmul.f32.gmra.mxu0 %v5233
      %v11522 = vpop.f32.mrf.mxu0
      %v11523 = vadd.f32 0.0, %v11522
      %11524 = vmatmul.f32.gmra.mxu0 %v5235
      %v11525 = vpop.f32.mrf.mxu0
      %v11526 = vadd.f32 0.0, %v11525
      %11527 = vmatmul.f32.gmra.mxu0 %v5237
      %v11528 = vpop.f32.mrf.mxu0
      %v11529 = vadd.f32 0.0, %v11528
      %11530 = vmatmul.f32.gmra.mxu0 %v5239
      %v11531 = vpop.f32.mrf.mxu0
      %v11532 = vadd.f32 0.0, %v11531
      %11533 = vmatmul.f32.gmra.mxu0 %v5241
      %v11534 = vpop.f32.mrf.mxu0
      %v11535 = vadd.f32 0.0, %v11534
      %11536 = vmatmul.f32.gmra.mxu0 %v5243
      %v11537 = vpop.f32.mrf.mxu0
      %v11538 = vadd.f32 0.0, %v11537
      %11539 = vmatmul.f32.gmra.mxu0 %v5245
      %v11540 = vpop.f32.mrf.mxu0
      %v11541 = vadd.f32 0.0, %v11540
      %11542 = vmatmul.f32.gmra.mxu0 %v5247
      %v11543 = vpop.f32.mrf.mxu0
      %v11544 = vadd.f32 0.0, %v11543
      %11545 = vmatmul.f32.gmra.mxu0 %v5249
      %v11546 = vpop.f32.mrf.mxu0
      %v11547 = vadd.f32 0.0, %v11546
      %11548 = vmatmul.f32.gmra.mxu0 %v5251
      %v11549 = vpop.f32.mrf.mxu0
      %v11550 = vadd.f32 0.0, %v11549
      %11551 = vmatmul.f32.gmra.mxu0 %v5253
      %v11552 = vpop.f32.mrf.mxu0
      %v11553 = vadd.f32 0.0, %v11552
      %11554 = vmatmul.f32.gmra.mxu0 %v5255
      %v11555 = vpop.f32.mrf.mxu0
      %v11556 = vadd.f32 0.0, %v11555
      %11557 = vmatmul.f32.gmra.mxu0 %v5257
      %v11558 = vpop.f32.mrf.mxu0
      %v11559 = vadd.f32 0.0, %v11558
      %11560 = vmatmul.f32.gmra.mxu0 %v5259
      %v11561 = vpop.f32.mrf.mxu0
      %v11562 = vadd.f32 0.0, %v11561
      %11563 = vmatmul.f32.gmra.mxu0 %v5261
      %v11564 = vpop.f32.mrf.mxu0
      %v11565 = vadd.f32 0.0, %v11564
      %11566 = vmatmul.f32.gmra.mxu0 %v5263
      %v11567 = vpop.f32.mrf.mxu0
      %v11568 = vadd.f32 0.0, %v11567
      %11569 = vmatmul.f32.gmra.mxu0 %v5265
      %v11570 = vpop.f32.mrf.mxu0
      %v11571 = vadd.f32 0.0, %v11570
      %11572 = vmatmul.f32.gmra.mxu0 %v5267
      %v11573 = vpop.f32.mrf.mxu0
      %v11574 = vadd.f32 0.0, %v11573
      %11575 = vmatmul.f32.gmra.mxu0 %v5269
      %v11576 = vpop.f32.mrf.mxu0
      %v11577 = vadd.f32 0.0, %v11576
      %11578 = vmatmul.f32.gmra.mxu0 %v5271
      %v11579 = vpop.f32.mrf.mxu0
      %v11580 = vadd.f32 0.0, %v11579
      %11581 = vmatmul.f32.gmra.mxu0 %v5273
      %v11582 = vpop.f32.mrf.mxu0
      %v11583 = vadd.f32 0.0, %v11582
      %11584 = vmatmul.f32.gmra.mxu0 %v5275
      %v11585 = vpop.f32.mrf.mxu0
      %v11586 = vadd.f32 0.0, %v11585
      %11587 = vmatmul.f32.gmra.mxu0 %v5277
      %v11588 = vpop.f32.mrf.mxu0
      %v11589 = vadd.f32 0.0, %v11588
      %11590 = vmatmul.f32.gmra.mxu0 %v5279
      %v11591 = vpop.f32.mrf.mxu0
      %v11592 = vadd.f32 0.0, %v11591
      %11593 = vmatmul.f32.gmra.mxu0 %v5281
      %v11594 = vpop.f32.mrf.mxu0
      %v11595 = vadd.f32 0.0, %v11594
      %11596 = vmatmul.f32.gmra.mxu0 %v5283
      %v11597 = vpop.f32.mrf.mxu0
      %v11598 = vadd.f32 0.0, %v11597
      %11599 = vmatmul.f32.gmra.mxu0 %v5285
      %v11600 = vpop.f32.mrf.mxu0
      %v11601 = vadd.f32 0.0, %v11600
      %11602 = vmatmul.f32.gmra.mxu0 %v5287
      %v11603 = vpop.f32.mrf.mxu0
      %v11604 = vadd.f32 0.0, %v11603
      %11605 = vmatmul.f32.gmra.mxu0 %v5289
      %v11606 = vpop.f32.mrf.mxu0
      %v11607 = vadd.f32 0.0, %v11606
      %11608 = vmatmul.f32.gmra.mxu0 %v5291
      %v11609 = vpop.f32.mrf.mxu0
      %v11610 = vadd.f32 0.0, %v11609
      %11611 = vmatmul.f32.gmra.mxu0 %v5293
      %v11612 = vpop.f32.mrf.mxu0
      %v11613 = vadd.f32 0.0, %v11612
      %11614 = vmatmul.f32.gmra.mxu0 %v5295
      %v11615 = vpop.f32.mrf.mxu0
      %v11616 = vadd.f32 0.0, %v11615
      %11617 = vmatmul.f32.gmra.mxu0 %v5297
      %v11618 = vpop.f32.mrf.mxu0
      %v11619 = vadd.f32 0.0, %v11618
      %11620 = vmatmul.f32.gmra.mxu0 %v5299
      %v11621 = vpop.f32.mrf.mxu0
      %v11622 = vadd.f32 0.0, %v11621
      %11623 = vmatmul.f32.gmra.mxu0 %v5301
      %v11624 = vpop.f32.mrf.mxu0
      %v11625 = vadd.f32 0.0, %v11624
      %11626 = vmatmul.f32.gmra.mxu0 %v5303
      %v11627 = vpop.f32.mrf.mxu0
      %v11628 = vadd.f32 0.0, %v11627
      %11629 = vmatmul.f32.gmra.mxu0 %v5305
      %v11630 = vpop.f32.mrf.mxu0
      %v11631 = vadd.f32 0.0, %v11630
      %11632 = vmatmul.f32.gmra.mxu0 %v5307
      %v11633 = vpop.f32.mrf.mxu0
      %v11634 = vadd.f32 0.0, %v11633
      %11635 = vmatmul.f32.gmra.mxu0 %v5309
      %v11636 = vpop.f32.mrf.mxu0
      %v11637 = vadd.f32 0.0, %v11636
      %11638 = vmatmul.f32.gmra.mxu0 %v5311
      %v11639 = vpop.f32.mrf.mxu0
      %v11640 = vadd.f32 0.0, %v11639
      %11641 = vmatmul.f32.gmra.mxu0 %v5313
      %v11642 = vpop.f32.mrf.mxu0
      %v11643 = vadd.f32 0.0, %v11642
      %11644 = vmatmul.f32.gmra.mxu0 %v5315
      %v11645 = vpop.f32.mrf.mxu0
      %v11646 = vadd.f32 0.0, %v11645
      %11647 = vmatmul.f32.gmra.mxu0 %v5317
      %v11648 = vpop.f32.mrf.mxu0
      %v11649 = vadd.f32 0.0, %v11648
      %11650 = vmatmul.f32.gmra.mxu0 %v5319
      %v11651 = vpop.f32.mrf.mxu0
      %v11652 = vadd.f32 0.0, %v11651
      %11653 = vmatmul.f32.gmra.mxu0 %v5321
      %v11654 = vpop.f32.mrf.mxu0
      %v11655 = vadd.f32 0.0, %v11654
      %11656 = vmatmul.f32.gmra.mxu0 %v5323
      %v11657 = vpop.f32.mrf.mxu0
      %v11658 = vadd.f32 0.0, %v11657
      %11659 = vmatmul.f32.gmra.mxu0 %v5325
      %v11660 = vpop.f32.mrf.mxu0
      %v11661 = vadd.f32 0.0, %v11660
      %11662 = vmatmul.f32.gmra.mxu0 %v5327
      %v11663 = vpop.f32.mrf.mxu0
      %v11664 = vadd.f32 0.0, %v11663
      %11665 = vmatmul.f32.gmra.mxu0 %v5329
      %v11666 = vpop.f32.mrf.mxu0
      %v11667 = vadd.f32 0.0, %v11666
      %11668 = vmatmul.f32.gmra.mxu0 %v5331
      %v11669 = vpop.f32.mrf.mxu0
      %v11670 = vadd.f32 0.0, %v11669
      %11671 = vmatmul.f32.gmra.mxu0 %v5333
      %v11672 = vpop.f32.mrf.mxu0
      %v11673 = vadd.f32 0.0, %v11672
      %11674 = vmatmul.f32.gmra.mxu0 %v5335
      %v11675 = vpop.f32.mrf.mxu0
      %v11676 = vadd.f32 0.0, %v11675
      %11677 = vmatmul.f32.gmra.mxu0 %v5337
      %v11678 = vpop.f32.mrf.mxu0
      %v11679 = vadd.f32 0.0, %v11678
      %11680 = vmatmul.f32.gmra.mxu0 %v5339
      %v11681 = vpop.f32.mrf.mxu0
      %v11682 = vadd.f32 0.0, %v11681
      %11683 = vmatmul.f32.gmra.mxu0 %v5341
      %v11684 = vpop.f32.mrf.mxu0
      %v11685 = vadd.f32 0.0, %v11684
      %11686 = vmatmul.f32.gmra.mxu0 %v5343
      %v11687 = vpop.f32.mrf.mxu0
      %v11688 = vadd.f32 0.0, %v11687
      %11689 = vmatmul.f32.gmra.mxu0 %v5345
      %v11690 = vpop.f32.mrf.mxu0
      %v11691 = vadd.f32 0.0, %v11690
      %11692 = vmatmul.f32.gmra.mxu0 %v5347
      %v11693 = vpop.f32.mrf.mxu0
      %v11694 = vadd.f32 0.0, %v11693
      %11695 = vmatmul.f32.gmra.mxu0 %v5349
      %v11696 = vpop.f32.mrf.mxu0
      %v11697 = vadd.f32 0.0, %v11696
      %11698 = vmatmul.f32.gmra.mxu0 %v5351
      %v11699 = vpop.f32.mrf.mxu0
      %v11700 = vadd.f32 0.0, %v11699
      %11701 = vmatmul.f32.gmra.mxu0 %v5353
      %v11702 = vpop.f32.mrf.mxu0
      %v11703 = vadd.f32 0.0, %v11702
      %11704 = vmatmul.f32.gmra.mxu0 %v5355
      %v11705 = vpop.f32.mrf.mxu0
      %v11706 = vadd.f32 0.0, %v11705
      %11707 = vmatmul.f32.gmra.mxu0 %v5357
      %v11708 = vpop.f32.mrf.mxu0
      %v11709 = vadd.f32 0.0, %v11708
      %11710 = vmatmul.f32.gmra.mxu0 %v5359
      %v11711 = vpop.f32.mrf.mxu0
      %v11712 = vadd.f32 0.0, %v11711
      %11713 = vmatmul.f32.gmra.mxu0 %v5361
      %v11714 = vpop.f32.mrf.mxu0
      %v11715 = vadd.f32 0.0, %v11714
      %11716 = vmatmul.f32.gmra.mxu0 %v5363
      %v11717 = vpop.f32.mrf.mxu0
      %v11718 = vadd.f32 0.0, %v11717
      %11719 = vmatmul.f32.gmra.mxu0 %v5365
      %v11720 = vpop.f32.mrf.mxu0
      %v11721 = vadd.f32 0.0, %v11720
      %11722 = vmatmul.f32.gmra.mxu0 %v5367
      %v11723 = vpop.f32.mrf.mxu0
      %v11724 = vadd.f32 0.0, %v11723
      %11725 = vmatmul.f32.gmra.mxu0 %v5369
      %v11726 = vpop.f32.mrf.mxu0
      %v11727 = vadd.f32 0.0, %v11726
      %11728 = vmatmul.f32.gmra.mxu0 %v5371
      %v11729 = vpop.f32.mrf.mxu0
      %v11730 = vadd.f32 0.0, %v11729
      %11731 = vmatmul.f32.gmra.mxu0 %v5373
      %v11732 = vpop.f32.mrf.mxu0
      %v11733 = vadd.f32 0.0, %v11732
      %11734 = vmatmul.f32.gmra.mxu0 %v5375
      %v11735 = vpop.f32.mrf.mxu0
      %v11736 = vadd.f32 0.0, %v11735
      %11737 = vmatmul.f32.gmra.mxu0 %v5377
      %v11738 = vpop.f32.mrf.mxu0
      %v11739 = vadd.f32 0.0, %v11738
      %11740 = vmatmul.f32.gmra.mxu0 %v5379
      %v11741 = vpop.f32.mrf.mxu0
      %v11742 = vadd.f32 0.0, %v11741
      %11743 = vmatmul.f32.gmra.mxu0 %v5381
      %v11744 = vpop.f32.mrf.mxu0
      %v11745 = vadd.f32 0.0, %v11744
      %11746 = vmatmul.f32.gmra.mxu0 %v5383
      %v11747 = vpop.f32.mrf.mxu0
      %v11748 = vadd.f32 0.0, %v11747
      %11749 = vmatmul.f32.gmra.mxu0 %v5385
      %v11750 = vpop.f32.mrf.mxu0
      %v11751 = vadd.f32 0.0, %v11750
      %11752 = vmatmul.f32.gmra.mxu0 %v5387
      %v11753 = vpop.f32.mrf.mxu0
      %v11754 = vadd.f32 0.0, %v11753
      %11755 = vmatmul.f32.gmra.mxu0 %v5389
      %v11756 = vpop.f32.mrf.mxu0
      %v11757 = vadd.f32 0.0, %v11756
      %11758 = vmatmul.f32.gmra.mxu0 %v5391
      %v11759 = vpop.f32.mrf.mxu0
      %v11760 = vadd.f32 0.0, %v11759
      %11761 = vmatmul.f32.gmra.mxu0 %v5393
      %v11762 = vpop.f32.mrf.mxu0
      %v11763 = vadd.f32 0.0, %v11762
      %11764 = vmatmul.f32.gmra.mxu0 %v5395
      %v11765 = vpop.f32.mrf.mxu0
      %v11766 = vadd.f32 0.0, %v11765
      %11767 = vmatmul.f32.gmra.mxu0 %v5397
      %v11768 = vpop.f32.mrf.mxu0
      %v11769 = vadd.f32 0.0, %v11768
      %11770 = vmatmul.f32.gmra.mxu0 %v5399
      %v11771 = vpop.f32.mrf.mxu0
      %v11772 = vadd.f32 0.0, %v11771
      %11773 = vmatmul.f32.gmra.mxu0 %v5401
      %v11774 = vpop.f32.mrf.mxu0
      %v11775 = vadd.f32 0.0, %v11774
      %11776 = vmatmul.f32.gmra.mxu0 %v5403
      %v11777 = vpop.f32.mrf.mxu0
      %v11778 = vadd.f32 0.0, %v11777
      %11779 = vmatmul.f32.gmra.mxu0 %v5405
      %v11780 = vpop.f32.mrf.mxu0
      %v11781 = vadd.f32 0.0, %v11780
      %11782 = vmatmul.f32.gmra.mxu0 %v5407
      %v11783 = vpop.f32.mrf.mxu0
      %v11784 = vadd.f32 0.0, %v11783
      %11785 = vmatmul.f32.gmra.mxu0 %v5409
      %v11786 = vpop.f32.mrf.mxu0
      %v11787 = vadd.f32 0.0, %v11786
      %11788 = vmatmul.f32.gmra.mxu0 %v5411
      %v11789 = vpop.f32.mrf.mxu0
      %v11790 = vadd.f32 0.0, %v11789
      %11791 = vmatmul.f32.gmra.mxu0 %v5413
      %v11792 = vpop.f32.mrf.mxu0
      %v11793 = vadd.f32 0.0, %v11792
      %11794 = vmatmul.f32.gmra.mxu0 %v5415
      %v11795 = vpop.f32.mrf.mxu0
      %v11796 = vadd.f32 0.0, %v11795
      %11797 = vmatmul.f32.gmra.mxu0 %v5417
      %v11798 = vpop.f32.mrf.mxu0
      %v11799 = vadd.f32 0.0, %v11798
      %11800 = vmatmul.f32.gmra.mxu0 %v5419
      %v11801 = vpop.f32.mrf.mxu0
      %v11802 = vadd.f32 0.0, %v11801
      %11803 = vmatmul.f32.gmra.mxu0 %v5421
      %v11804 = vpop.f32.mrf.mxu0
      %v11805 = vadd.f32 0.0, %v11804
      %11806 = vmatmul.f32.gmra.mxu0 %v5423
      %v11807 = vpop.f32.mrf.mxu0
      %v11808 = vadd.f32 0.0, %v11807
      %11809 = vmatmul.f32.gmra.mxu0 %v5425
      %v11810 = vpop.f32.mrf.mxu0
      %v11811 = vadd.f32 0.0, %v11810
      %11812 = vmatmul.f32.gmra.mxu0 %v5427
      %v11813 = vpop.f32.mrf.mxu0
      %v11814 = vadd.f32 0.0, %v11813
      %11815 = vmatmul.f32.gmra.mxu0 %v5429
      %v11816 = vpop.f32.mrf.mxu0
      %v11817 = vadd.f32 0.0, %v11816
      %11818 = vmatmul.f32.gmra.mxu0 %v5431
      %v11819 = vpop.f32.mrf.mxu0
      %v11820 = vadd.f32 0.0, %v11819
      %11821 = vmatmul.f32.gmra.mxu0 %v5433
      %v11822 = vpop.f32.mrf.mxu0
      %v11823 = vadd.f32 0.0, %v11822
      %11824 = vmatmul.f32.gmra.mxu0 %v5435
      %v11825 = vpop.f32.mrf.mxu0
      %v11826 = vadd.f32 0.0, %v11825
      %11827 = vmatmul.f32.gmra.mxu0 %v5437
      %v11828 = vpop.f32.mrf.mxu0
      %v11829 = vadd.f32 0.0, %v11828
      %11830 = vmatmul.f32.gmra.mxu0 %v5439
      %v11831 = vpop.f32.mrf.mxu0
      %v11832 = vadd.f32 0.0, %v11831
      %11833 = vmatmul.f32.gmra.mxu0 %v8565
      %v11834 = vpop.f32.mrf.mxu0
      %v11835 = vadd.f32 0.0, %v11834
      %11836 = vmatmul.f32.gmra.mxu0 %v8567
      %v11837 = vpop.f32.mrf.mxu0
      %v11838 = vadd.f32 0.0, %v11837
      %11839 = vmatmul.f32.gmra.mxu0 %v8569
      %v11840 = vpop.f32.mrf.mxu0
      %v11841 = vadd.f32 0.0, %v11840
      %11842 = vmatmul.f32.gmra.mxu0 %v8571
      %v11843 = vpop.f32.mrf.mxu0
      %v11844 = vadd.f32 0.0, %v11843
      %11845 = vmatmul.f32.gmra.mxu0 %v11449
      %v11846 = vpop.f32.mrf.mxu0
      %v11847 = vadd.f32 0.0, %v11846
      %11848 = vmatmul.f32.gmra.mxu0 %v11451
      %v11849 = vpop.f32.mrf.mxu0
      %v11850 = vadd.f32 0.0, %v11849
      %11851 = vmatmul.f32.gmra.mxu0 %v11453
      %v11852 = vpop.f32.mrf.mxu0
      %v11853 = vadd.f32 0.0, %v11852
      %11854 = vmatmul.f32.gmra.mxu0 %v11455
      %v11855 = vpop.f32.mrf.mxu0
      %v11856 = vadd.f32 0.0, %v11855
      %11857 = vdwg.mxu0
      %v11858 = vsel %vm826, %v11433, 0
      %v11860 = vsel %vm826, %v11435, 0
      %v11862 = vsel %vm826, %v11437, 0
      %v11864 = vsel %vm826, %v11439, 0
      %11866 = vmatpush.msra.mxu0 0.0
      %11867 = vmatpush.msra.mxu0 0.0
      %11868 = vmatpush.msra.mxu0 0.0
      %11869 = vmatpush.msra.mxu0 0.0
      %11870 = vmatpush.msra.mxu0 0.0
      %11871 = vmatpush.msra.mxu0 0.0
      %11872 = vmatpush.msra.mxu0 0.0
      %11873 = vmatpush.msra.mxu0 0.0
      %11874 = vmatpush.msra.mxu0 0.0
      %11875 = vmatpush.msra.mxu0 0.0
      %11876 = vmatpush.msra.mxu0 0.0
      %11877 = vmatpush.msra.mxu0 0.0
      %11878 = vmatpush.msra.mxu0 0.0
      %11879 = vmatpush.msra.mxu0 0.0
      %11880 = vmatpush.msra.mxu0 0.0
      %11881 = vmatpush.msra.mxu0 %v816
      %11882 = vmatmul.f32.gmra.mxu0 %v5858
      %v11883 = vpop.f32.mrf.mxu0
      %v11884 = vadd.f32 %v11475, %v11883
      %11885 = vmatmul.f32.gmra.mxu0 %v5860
      %v11886 = vpop.f32.mrf.mxu0
      %v11887 = vadd.f32 %v11478, %v11886
      %11888 = vmatmul.f32.gmra.mxu0 %v5862
      %v11889 = vpop.f32.mrf.mxu0
      %v11890 = vadd.f32 %v11481, %v11889
      %11891 = vmatmul.f32.gmra.mxu0 %v5864
      %v11892 = vpop.f32.mrf.mxu0
      %v11893 = vadd.f32 %v11484, %v11892
      %11894 = vmatmul.f32.gmra.mxu0 %v5866
      %v11895 = vpop.f32.mrf.mxu0
      %v11896 = vadd.f32 %v11487, %v11895
      %11897 = vmatmul.f32.gmra.mxu0 %v5868
      %v11898 = vpop.f32.mrf.mxu0
      %v11899 = vadd.f32 %v11490, %v11898
      %11900 = vmatmul.f32.gmra.mxu0 %v5870
      %v11901 = vpop.f32.mrf.mxu0
      %v11902 = vadd.f32 %v11493, %v11901
      %11903 = vmatmul.f32.gmra.mxu0 %v5872
      %v11904 = vpop.f32.mrf.mxu0
      %v11905 = vadd.f32 %v11496, %v11904
      %11906 = vmatmul.f32.gmra.mxu0 %v5874
      %v11907 = vpop.f32.mrf.mxu0
      %v11908 = vadd.f32 %v11499, %v11907
      %11909 = vmatmul.f32.gmra.mxu0 %v5876
      %v11910 = vpop.f32.mrf.mxu0
      %v11911 = vadd.f32 %v11502, %v11910
      %11912 = vmatmul.f32.gmra.mxu0 %v5878
      %v11913 = vpop.f32.mrf.mxu0
      %v11914 = vadd.f32 %v11505, %v11913
      %11915 = vmatmul.f32.gmra.mxu0 %v5880
      %v11916 = vpop.f32.mrf.mxu0
      %v11917 = vadd.f32 %v11508, %v11916
      %11918 = vmatmul.f32.gmra.mxu0 %v5882
      %v11919 = vpop.f32.mrf.mxu0
      %v11920 = vadd.f32 %v11511, %v11919
      %11921 = vmatmul.f32.gmra.mxu0 %v5884
      %v11922 = vpop.f32.mrf.mxu0
      %v11923 = vadd.f32 %v11514, %v11922
      %11924 = vmatmul.f32.gmra.mxu0 %v5886
      %v11925 = vpop.f32.mrf.mxu0
      %v11926 = vadd.f32 %v11517, %v11925
      %11927 = vmatmul.f32.gmra.mxu0 %v5888
      %v11928 = vpop.f32.mrf.mxu0
      %v11929 = vadd.f32 %v11520, %v11928
      %11930 = vmatmul.f32.gmra.mxu0 %v5890
      %v11931 = vpop.f32.mrf.mxu0
      %v11932 = vadd.f32 %v11523, %v11931
      %11933 = vmatmul.f32.gmra.mxu0 %v5892
      %v11934 = vpop.f32.mrf.mxu0
      %v11935 = vadd.f32 %v11526, %v11934
      %11936 = vmatmul.f32.gmra.mxu0 %v5894
      %v11937 = vpop.f32.mrf.mxu0
      %v11938 = vadd.f32 %v11529, %v11937
      %11939 = vmatmul.f32.gmra.mxu0 %v5896
      %v11940 = vpop.f32.mrf.mxu0
      %v11941 = vadd.f32 %v11532, %v11940
      %11942 = vmatmul.f32.gmra.mxu0 %v5898
      %v11943 = vpop.f32.mrf.mxu0
      %v11944 = vadd.f32 %v11535, %v11943
      %11945 = vmatmul.f32.gmra.mxu0 %v5900
      %v11946 = vpop.f32.mrf.mxu0
      %v11947 = vadd.f32 %v11538, %v11946
      %11948 = vmatmul.f32.gmra.mxu0 %v5902
      %v11949 = vpop.f32.mrf.mxu0
      %v11950 = vadd.f32 %v11541, %v11949
      %11951 = vmatmul.f32.gmra.mxu0 %v5904
      %v11952 = vpop.f32.mrf.mxu0
      %v11953 = vadd.f32 %v11544, %v11952
      %11954 = vmatmul.f32.gmra.mxu0 %v5906
      %v11955 = vpop.f32.mrf.mxu0
      %v11956 = vadd.f32 %v11547, %v11955
      %11957 = vmatmul.f32.gmra.mxu0 %v5908
      %v11958 = vpop.f32.mrf.mxu0
      %v11959 = vadd.f32 %v11550, %v11958
      %11960 = vmatmul.f32.gmra.mxu0 %v5910
      %v11961 = vpop.f32.mrf.mxu0
      %v11962 = vadd.f32 %v11553, %v11961
      %11963 = vmatmul.f32.gmra.mxu0 %v5912
      %v11964 = vpop.f32.mrf.mxu0
      %v11965 = vadd.f32 %v11556, %v11964
      %11966 = vmatmul.f32.gmra.mxu0 %v5914
      %v11967 = vpop.f32.mrf.mxu0
      %v11968 = vadd.f32 %v11559, %v11967
      %11969 = vmatmul.f32.gmra.mxu0 %v5916
      %v11970 = vpop.f32.mrf.mxu0
      %v11971 = vadd.f32 %v11562, %v11970
      %11972 = vmatmul.f32.gmra.mxu0 %v5918
      %v11973 = vpop.f32.mrf.mxu0
      %v11974 = vadd.f32 %v11565, %v11973
      %11975 = vmatmul.f32.gmra.mxu0 %v5920
      %v11976 = vpop.f32.mrf.mxu0
      %v11977 = vadd.f32 %v11568, %v11976
      %11978 = vmatmul.f32.gmra.mxu0 %v5922
      %v11979 = vpop.f32.mrf.mxu0
      %v11980 = vadd.f32 %v11571, %v11979
      %11981 = vmatmul.f32.gmra.mxu0 %v5924
      %v11982 = vpop.f32.mrf.mxu0
      %v11983 = vadd.f32 %v11574, %v11982
      %11984 = vmatmul.f32.gmra.mxu0 %v5926
      %v11985 = vpop.f32.mrf.mxu0
      %v11986 = vadd.f32 %v11577, %v11985
      %11987 = vmatmul.f32.gmra.mxu0 %v5928
      %v11988 = vpop.f32.mrf.mxu0
      %v11989 = vadd.f32 %v11580, %v11988
      %11990 = vmatmul.f32.gmra.mxu0 %v5930
      %v11991 = vpop.f32.mrf.mxu0
      %v11992 = vadd.f32 %v11583, %v11991
      %11993 = vmatmul.f32.gmra.mxu0 %v5932
      %v11994 = vpop.f32.mrf.mxu0
      %v11995 = vadd.f32 %v11586, %v11994
      %11996 = vmatmul.f32.gmra.mxu0 %v5934
      %v11997 = vpop.f32.mrf.mxu0
      %v11998 = vadd.f32 %v11589, %v11997
      %11999 = vmatmul.f32.gmra.mxu0 %v5936
      %v12000 = vpop.f32.mrf.mxu0
      %v12001 = vadd.f32 %v11592, %v12000
      %12002 = vmatmul.f32.gmra.mxu0 %v5938
      %v12003 = vpop.f32.mrf.mxu0
      %v12004 = vadd.f32 %v11595, %v12003
      %12005 = vmatmul.f32.gmra.mxu0 %v5940
      %v12006 = vpop.f32.mrf.mxu0
      %v12007 = vadd.f32 %v11598, %v12006
      %12008 = vmatmul.f32.gmra.mxu0 %v5942
      %v12009 = vpop.f32.mrf.mxu0
      %v12010 = vadd.f32 %v11601, %v12009
      %12011 = vmatmul.f32.gmra.mxu0 %v5944
      %v12012 = vpop.f32.mrf.mxu0
      %v12013 = vadd.f32 %v11604, %v12012
      %12014 = vmatmul.f32.gmra.mxu0 %v5946
      %v12015 = vpop.f32.mrf.mxu0
      %v12016 = vadd.f32 %v11607, %v12015
      %12017 = vmatmul.f32.gmra.mxu0 %v5948
      %v12018 = vpop.f32.mrf.mxu0
      %v12019 = vadd.f32 %v11610, %v12018
      %12020 = vmatmul.f32.gmra.mxu0 %v5950
      %v12021 = vpop.f32.mrf.mxu0
      %v12022 = vadd.f32 %v11613, %v12021
      %12023 = vmatmul.f32.gmra.mxu0 %v5952
      %v12024 = vpop.f32.mrf.mxu0
      %v12025 = vadd.f32 %v11616, %v12024
      %12026 = vmatmul.f32.gmra.mxu0 %v5954
      %v12027 = vpop.f32.mrf.mxu0
      %v12028 = vadd.f32 %v11619, %v12027
      %12029 = vmatmul.f32.gmra.mxu0 %v5956
      %v12030 = vpop.f32.mrf.mxu0
      %v12031 = vadd.f32 %v11622, %v12030
      %12032 = vmatmul.f32.gmra.mxu0 %v5958
      %v12033 = vpop.f32.mrf.mxu0
      %v12034 = vadd.f32 %v11625, %v12033
      %12035 = vmatmul.f32.gmra.mxu0 %v5960
      %v12036 = vpop.f32.mrf.mxu0
      %v12037 = vadd.f32 %v11628, %v12036
      %12038 = vmatmul.f32.gmra.mxu0 %v5962
      %v12039 = vpop.f32.mrf.mxu0
      %v12040 = vadd.f32 %v11631, %v12039
      %12041 = vmatmul.f32.gmra.mxu0 %v5964
      %v12042 = vpop.f32.mrf.mxu0
      %v12043 = vadd.f32 %v11634, %v12042
      %12044 = vmatmul.f32.gmra.mxu0 %v5966
      %v12045 = vpop.f32.mrf.mxu0
      %v12046 = vadd.f32 %v11637, %v12045
      %12047 = vmatmul.f32.gmra.mxu0 %v5968
      %v12048 = vpop.f32.mrf.mxu0
      %v12049 = vadd.f32 %v11640, %v12048
      %12050 = vmatmul.f32.gmra.mxu0 %v5970
      %v12051 = vpop.f32.mrf.mxu0
      %v12052 = vadd.f32 %v11643, %v12051
      %12053 = vmatmul.f32.gmra.mxu0 %v5972
      %v12054 = vpop.f32.mrf.mxu0
      %v12055 = vadd.f32 %v11646, %v12054
      %12056 = vmatmul.f32.gmra.mxu0 %v5974
      %v12057 = vpop.f32.mrf.mxu0
      %v12058 = vadd.f32 %v11649, %v12057
      %12059 = vmatmul.f32.gmra.mxu0 %v5976
      %v12060 = vpop.f32.mrf.mxu0
      %v12061 = vadd.f32 %v11652, %v12060
      %12062 = vmatmul.f32.gmra.mxu0 %v5978
      %v12063 = vpop.f32.mrf.mxu0
      %v12064 = vadd.f32 %v11655, %v12063
      %12065 = vmatmul.f32.gmra.mxu0 %v5980
      %v12066 = vpop.f32.mrf.mxu0
      %v12067 = vadd.f32 %v11658, %v12066
      %12068 = vmatmul.f32.gmra.mxu0 %v5982
      %v12069 = vpop.f32.mrf.mxu0
      %v12070 = vadd.f32 %v11661, %v12069
      %12071 = vmatmul.f32.gmra.mxu0 %v5984
      %v12072 = vpop.f32.mrf.mxu0
      %v12073 = vadd.f32 %v11664, %v12072
      %12074 = vmatmul.f32.gmra.mxu0 %v5986
      %v12075 = vpop.f32.mrf.mxu0
      %v12076 = vadd.f32 %v11667, %v12075
      %12077 = vmatmul.f32.gmra.mxu0 %v5988
      %v12078 = vpop.f32.mrf.mxu0
      %v12079 = vadd.f32 %v11670, %v12078
      %12080 = vmatmul.f32.gmra.mxu0 %v5990
      %v12081 = vpop.f32.mrf.mxu0
      %v12082 = vadd.f32 %v11673, %v12081
      %12083 = vmatmul.f32.gmra.mxu0 %v5992
      %v12084 = vpop.f32.mrf.mxu0
      %v12085 = vadd.f32 %v11676, %v12084
      %12086 = vmatmul.f32.gmra.mxu0 %v5994
      %v12087 = vpop.f32.mrf.mxu0
      %v12088 = vadd.f32 %v11679, %v12087
      %12089 = vmatmul.f32.gmra.mxu0 %v5996
      %v12090 = vpop.f32.mrf.mxu0
      %v12091 = vadd.f32 %v11682, %v12090
      %12092 = vmatmul.f32.gmra.mxu0 %v5998
      %v12093 = vpop.f32.mrf.mxu0
      %v12094 = vadd.f32 %v11685, %v12093
      %12095 = vmatmul.f32.gmra.mxu0 %v6000
      %v12096 = vpop.f32.mrf.mxu0
      %v12097 = vadd.f32 %v11688, %v12096
      %12098 = vmatmul.f32.gmra.mxu0 %v6002
      %v12099 = vpop.f32.mrf.mxu0
      %v12100 = vadd.f32 %v11691, %v12099
      %12101 = vmatmul.f32.gmra.mxu0 %v6004
      %v12102 = vpop.f32.mrf.mxu0
      %v12103 = vadd.f32 %v11694, %v12102
      %12104 = vmatmul.f32.gmra.mxu0 %v6006
      %v12105 = vpop.f32.mrf.mxu0
      %v12106 = vadd.f32 %v11697, %v12105
      %12107 = vmatmul.f32.gmra.mxu0 %v6008
      %v12108 = vpop.f32.mrf.mxu0
      %v12109 = vadd.f32 %v11700, %v12108
      %12110 = vmatmul.f32.gmra.mxu0 %v6010
      %v12111 = vpop.f32.mrf.mxu0
      %v12112 = vadd.f32 %v11703, %v12111
      %12113 = vmatmul.f32.gmra.mxu0 %v6012
      %v12114 = vpop.f32.mrf.mxu0
      %v12115 = vadd.f32 %v11706, %v12114
      %12116 = vmatmul.f32.gmra.mxu0 %v6014
      %v12117 = vpop.f32.mrf.mxu0
      %v12118 = vadd.f32 %v11709, %v12117
      %12119 = vmatmul.f32.gmra.mxu0 %v6016
      %v12120 = vpop.f32.mrf.mxu0
      %v12121 = vadd.f32 %v11712, %v12120
      %12122 = vmatmul.f32.gmra.mxu0 %v6018
      %v12123 = vpop.f32.mrf.mxu0
      %v12124 = vadd.f32 %v11715, %v12123
      %12125 = vmatmul.f32.gmra.mxu0 %v6020
      %v12126 = vpop.f32.mrf.mxu0
      %v12127 = vadd.f32 %v11718, %v12126
      %12128 = vmatmul.f32.gmra.mxu0 %v6022
      %v12129 = vpop.f32.mrf.mxu0
      %v12130 = vadd.f32 %v11721, %v12129
      %12131 = vmatmul.f32.gmra.mxu0 %v6024
      %v12132 = vpop.f32.mrf.mxu0
      %v12133 = vadd.f32 %v11724, %v12132
      %12134 = vmatmul.f32.gmra.mxu0 %v6026
      %v12135 = vpop.f32.mrf.mxu0
      %v12136 = vadd.f32 %v11727, %v12135
      %12137 = vmatmul.f32.gmra.mxu0 %v6028
      %v12138 = vpop.f32.mrf.mxu0
      %v12139 = vadd.f32 %v11730, %v12138
      %12140 = vmatmul.f32.gmra.mxu0 %v6030
      %v12141 = vpop.f32.mrf.mxu0
      %v12142 = vadd.f32 %v11733, %v12141
      %12143 = vmatmul.f32.gmra.mxu0 %v6032
      %v12144 = vpop.f32.mrf.mxu0
      %v12145 = vadd.f32 %v11736, %v12144
      %12146 = vmatmul.f32.gmra.mxu0 %v6034
      %v12147 = vpop.f32.mrf.mxu0
      %v12148 = vadd.f32 %v11739, %v12147
      %12149 = vmatmul.f32.gmra.mxu0 %v6036
      %v12150 = vpop.f32.mrf.mxu0
      %v12151 = vadd.f32 %v11742, %v12150
      %12152 = vmatmul.f32.gmra.mxu0 %v6038
      %v12153 = vpop.f32.mrf.mxu0
      %v12154 = vadd.f32 %v11745, %v12153
      %12155 = vmatmul.f32.gmra.mxu0 %v6040
      %v12156 = vpop.f32.mrf.mxu0
      %v12157 = vadd.f32 %v11748, %v12156
      %12158 = vmatmul.f32.gmra.mxu0 %v6042
      %v12159 = vpop.f32.mrf.mxu0
      %v12160 = vadd.f32 %v11751, %v12159
      %12161 = vmatmul.f32.gmra.mxu0 %v6044
      %v12162 = vpop.f32.mrf.mxu0
      %v12163 = vadd.f32 %v11754, %v12162
      %12164 = vmatmul.f32.gmra.mxu0 %v6046
      %v12165 = vpop.f32.mrf.mxu0
      %v12166 = vadd.f32 %v11757, %v12165
      %12167 = vmatmul.f32.gmra.mxu0 %v6048
      %v12168 = vpop.f32.mrf.mxu0
      %v12169 = vadd.f32 %v11760, %v12168
      %12170 = vmatmul.f32.gmra.mxu0 %v6050
      %v12171 = vpop.f32.mrf.mxu0
      %v12172 = vadd.f32 %v11763, %v12171
      %12173 = vmatmul.f32.gmra.mxu0 %v6052
      %v12174 = vpop.f32.mrf.mxu0
      %v12175 = vadd.f32 %v11766, %v12174
      %12176 = vmatmul.f32.gmra.mxu0 %v6054
      %v12177 = vpop.f32.mrf.mxu0
      %v12178 = vadd.f32 %v11769, %v12177
      %12179 = vmatmul.f32.gmra.mxu0 %v6056
      %v12180 = vpop.f32.mrf.mxu0
      %v12181 = vadd.f32 %v11772, %v12180
      %12182 = vmatmul.f32.gmra.mxu0 %v6058
      %v12183 = vpop.f32.mrf.mxu0
      %v12184 = vadd.f32 %v11775, %v12183
      %12185 = vmatmul.f32.gmra.mxu0 %v6060
      %v12186 = vpop.f32.mrf.mxu0
      %v12187 = vadd.f32 %v11778, %v12186
      %12188 = vmatmul.f32.gmra.mxu0 %v6062
      %v12189 = vpop.f32.mrf.mxu0
      %v12190 = vadd.f32 %v11781, %v12189
      %12191 = vmatmul.f32.gmra.mxu0 %v6064
      %v12192 = vpop.f32.mrf.mxu0
      %v12193 = vadd.f32 %v11784, %v12192
      %12194 = vmatmul.f32.gmra.mxu0 %v6066
      %v12195 = vpop.f32.mrf.mxu0
      %v12196 = vadd.f32 %v11787, %v12195
      %12197 = vmatmul.f32.gmra.mxu0 %v6068
      %v12198 = vpop.f32.mrf.mxu0
      %v12199 = vadd.f32 %v11790, %v12198
      %12200 = vmatmul.f32.gmra.mxu0 %v6070
      %v12201 = vpop.f32.mrf.mxu0
      %v12202 = vadd.f32 %v11793, %v12201
      %12203 = vmatmul.f32.gmra.mxu0 %v6072
      %v12204 = vpop.f32.mrf.mxu0
      %v12205 = vadd.f32 %v11796, %v12204
      %12206 = vmatmul.f32.gmra.mxu0 %v6074
      %v12207 = vpop.f32.mrf.mxu0
      %v12208 = vadd.f32 %v11799, %v12207
      %12209 = vmatmul.f32.gmra.mxu0 %v6076
      %v12210 = vpop.f32.mrf.mxu0
      %v12211 = vadd.f32 %v11802, %v12210
      %12212 = vmatmul.f32.gmra.mxu0 %v6078
      %v12213 = vpop.f32.mrf.mxu0
      %v12214 = vadd.f32 %v11805, %v12213
      %12215 = vmatmul.f32.gmra.mxu0 %v6080
      %v12216 = vpop.f32.mrf.mxu0
      %v12217 = vadd.f32 %v11808, %v12216
      %12218 = vmatmul.f32.gmra.mxu0 %v6082
      %v12219 = vpop.f32.mrf.mxu0
      %v12220 = vadd.f32 %v11811, %v12219
      %12221 = vmatmul.f32.gmra.mxu0 %v6084
      %v12222 = vpop.f32.mrf.mxu0
      %v12223 = vadd.f32 %v11814, %v12222
      %12224 = vmatmul.f32.gmra.mxu0 %v6086
      %v12225 = vpop.f32.mrf.mxu0
      %v12226 = vadd.f32 %v11817, %v12225
      %12227 = vmatmul.f32.gmra.mxu0 %v6088
      %v12228 = vpop.f32.mrf.mxu0
      %v12229 = vadd.f32 %v11820, %v12228
      %12230 = vmatmul.f32.gmra.mxu0 %v6090
      %v12231 = vpop.f32.mrf.mxu0
      %v12232 = vadd.f32 %v11823, %v12231
      %12233 = vmatmul.f32.gmra.mxu0 %v6092
      %v12234 = vpop.f32.mrf.mxu0
      %v12235 = vadd.f32 %v11826, %v12234
      %12236 = vmatmul.f32.gmra.mxu0 %v6094
      %v12237 = vpop.f32.mrf.mxu0
      %v12238 = vadd.f32 %v11829, %v12237
      %12239 = vmatmul.f32.gmra.mxu0 %v6096
      %v12240 = vpop.f32.mrf.mxu0
      %v12241 = vadd.f32 %v11832, %v12240
      %12242 = vmatmul.f32.gmra.mxu0 %v8974
      %v12243 = vpop.f32.mrf.mxu0
      %v12244 = vadd.f32 %v11835, %v12243
      %12245 = vmatmul.f32.gmra.mxu0 %v8976
      %v12246 = vpop.f32.mrf.mxu0
      %v12247 = vadd.f32 %v11838, %v12246
      %12248 = vmatmul.f32.gmra.mxu0 %v8978
      %v12249 = vpop.f32.mrf.mxu0
      %v12250 = vadd.f32 %v11841, %v12249
      %12251 = vmatmul.f32.gmra.mxu0 %v8980
      %v12252 = vpop.f32.mrf.mxu0
      %v12253 = vadd.f32 %v11844, %v12252
      %12254 = vmatmul.f32.gmra.mxu0 %v11858
      %v12255 = vpop.f32.mrf.mxu0
      %v12256 = vadd.f32 %v11847, %v12255
      %12257 = vmatmul.f32.gmra.mxu0 %v11860
      %v12258 = vpop.f32.mrf.mxu0
      %v12259 = vadd.f32 %v11850, %v12258
      %12260 = vmatmul.f32.gmra.mxu0 %v11862
      %v12261 = vpop.f32.mrf.mxu0
      %v12262 = vadd.f32 %v11853, %v12261
      %12263 = vmatmul.f32.gmra.mxu0 %v11864
      %v12264 = vpop.f32.mrf.mxu0
      %v12265 = vadd.f32 %v11856, %v12264
      %12266 = vdwg.mxu0
      %v12267 = vadd.f32 %v11303, %v11884
      %v12268 = vadd.f32 %v11304, %v11887
      %v12269 = vadd.f32 %v11305, %v11890
      %v12270 = vadd.f32 %v11306, %v11893
      %v12271 = vadd.f32 %v11307, %v11896
      %v12272 = vadd.f32 %v11308, %v11899
      %v12273 = vadd.f32 %v11309, %v11902
      %v12274 = vadd.f32 %v11310, %v11905
      %v12275 = vadd.f32 %v11311, %v11908
      %v12276 = vadd.f32 %v11312, %v11911
      %v12277 = vadd.f32 %v11313, %v11914
      %v12278 = vadd.f32 %v11314, %v11917
      %v12279 = vadd.f32 %v11315, %v11920
      %v12280 = vadd.f32 %v11316, %v11923
      %v12281 = vadd.f32 %v11317, %v11926
      %v12282 = vadd.f32 %v11318, %v11929
      %v12283 = vadd.f32 %v11319, %v11932
      %v12284 = vadd.f32 %v11320, %v11935
      %v12285 = vadd.f32 %v11321, %v11938
      %v12286 = vadd.f32 %v11322, %v11941
      %v12287 = vadd.f32 %v11323, %v11944
      %v12288 = vadd.f32 %v11324, %v11947
      %v12289 = vadd.f32 %v11325, %v11950
      %v12290 = vadd.f32 %v11326, %v11953
      %v12291 = vadd.f32 %v11327, %v11956
      %v12292 = vadd.f32 %v11328, %v11959
      %v12293 = vadd.f32 %v11329, %v11962
      %v12294 = vadd.f32 %v11330, %v11965
      %v12295 = vadd.f32 %v11331, %v11968
      %v12296 = vadd.f32 %v11332, %v11971
      %v12297 = vadd.f32 %v11333, %v11974
      %v12298 = vadd.f32 %v11334, %v11977
      %v12299 = vadd.f32 %v11335, %v11980
      %v12300 = vadd.f32 %v11336, %v11983
      %v12301 = vadd.f32 %v11337, %v11986
      %v12302 = vadd.f32 %v11338, %v11989
      %v12303 = vadd.f32 %v11339, %v11992
      %v12304 = vadd.f32 %v11340, %v11995
      %v12305 = vadd.f32 %v11341, %v11998
      %v12306 = vadd.f32 %v11342, %v12001
      %v12307 = vadd.f32 %v11343, %v12004
      %v12308 = vadd.f32 %v11344, %v12007
      %v12309 = vadd.f32 %v11345, %v12010
      %v12310 = vadd.f32 %v11346, %v12013
      %v12311 = vadd.f32 %v11347, %v12016
      %v12312 = vadd.f32 %v11348, %v12019
      %v12313 = vadd.f32 %v11349, %v12022
      %v12314 = vadd.f32 %v11350, %v12025
      %v12315 = vadd.f32 %v11351, %v12028
      %v12316 = vadd.f32 %v11352, %v12031
      %v12317 = vadd.f32 %v11353, %v12034
      %v12318 = vadd.f32 %v11354, %v12037
      %v12319 = vadd.f32 %v11355, %v12040
      %v12320 = vadd.f32 %v11356, %v12043
      %v12321 = vadd.f32 %v11357, %v12046
      %v12322 = vadd.f32 %v11358, %v12049
      %v12323 = vadd.f32 %v11359, %v12052
      %v12324 = vadd.f32 %v11360, %v12055
      %v12325 = vadd.f32 %v11361, %v12058
      %v12326 = vadd.f32 %v11362, %v12061
      %v12327 = vadd.f32 %v11363, %v12064
      %v12328 = vadd.f32 %v11364, %v12067
      %v12329 = vadd.f32 %v11365, %v12070
      %v12330 = vadd.f32 %v11366, %v12073
      %v12331 = vadd.f32 %v11367, %v12076
      %v12332 = vadd.f32 %v11368, %v12079
      %v12333 = vadd.f32 %v11369, %v12082
      %v12334 = vadd.f32 %v11370, %v12085
      %v12335 = vadd.f32 %v11371, %v12088
      %v12336 = vadd.f32 %v11372, %v12091
      %v12337 = vadd.f32 %v11373, %v12094
      %v12338 = vadd.f32 %v11374, %v12097
      %v12339 = vadd.f32 %v11375, %v12100
      %v12340 = vadd.f32 %v11376, %v12103
      %v12341 = vadd.f32 %v11377, %v12106
      %v12342 = vadd.f32 %v11378, %v12109
      %v12343 = vadd.f32 %v11379, %v12112
      %v12344 = vadd.f32 %v11380, %v12115
      %v12345 = vadd.f32 %v11381, %v12118
      %v12346 = vadd.f32 %v11382, %v12121
      %v12347 = vadd.f32 %v11383, %v12124
      %v12348 = vadd.f32 %v11384, %v12127
      %v12349 = vadd.f32 %v11385, %v12130
      %v12350 = vadd.f32 %v11386, %v12133
      %v12351 = vadd.f32 %v11387, %v12136
      %v12352 = vadd.f32 %v11388, %v12139
      %v12353 = vadd.f32 %v11389, %v12142
      %v12354 = vadd.f32 %v11390, %v12145
      %v12355 = vadd.f32 %v11391, %v12148
      %v12356 = vadd.f32 %v11392, %v12151
      %v12357 = vadd.f32 %v11393, %v12154
      %v12358 = vadd.f32 %v11394, %v12157
      %v12359 = vadd.f32 %v11395, %v12160
      %v12360 = vadd.f32 %v11396, %v12163
      %v12361 = vadd.f32 %v11397, %v12166
      %v12362 = vadd.f32 %v11398, %v12169
      %v12363 = vadd.f32 %v11399, %v12172
      %v12364 = vadd.f32 %v11400, %v12175
      %v12365 = vadd.f32 %v11401, %v12178
      %v12366 = vadd.f32 %v11402, %v12181
      %v12367 = vadd.f32 %v11403, %v12184
      %v12368 = vadd.f32 %v11404, %v12187
      %v12369 = vadd.f32 %v11405, %v12190
      %v12370 = vadd.f32 %v11406, %v12193
      %v12371 = vadd.f32 %v11407, %v12196
      %v12372 = vadd.f32 %v11408, %v12199
      %v12373 = vadd.f32 %v11409, %v12202
      %v12374 = vadd.f32 %v11410, %v12205
      %v12375 = vadd.f32 %v11411, %v12208
      %v12376 = vadd.f32 %v11412, %v12211
      %v12377 = vadd.f32 %v11413, %v12214
      %v12378 = vadd.f32 %v11414, %v12217
      %v12379 = vadd.f32 %v11415, %v12220
      %v12380 = vadd.f32 %v11416, %v12223
      %v12381 = vadd.f32 %v11417, %v12226
      %v12382 = vadd.f32 %v11418, %v12229
      %v12383 = vadd.f32 %v11419, %v12232
      %v12384 = vadd.f32 %v11420, %v12235
      %v12385 = vadd.f32 %v11421, %v12238
      %v12386 = vadd.f32 %v11422, %v12241
      %v12387 = vadd.f32 %v11423, %v12244
      %v12388 = vadd.f32 %v11424, %v12247
      %v12389 = vadd.f32 %v11425, %v12250
      %v12390 = vadd.f32 %v11426, %v12253
      %v12391 = vadd.f32 %v11427, %v12256
      %v12392 = vadd.f32 %v11428, %v12259
      %v12393 = vadd.f32 %v11429, %v12262
      %v12394 = vadd.f32 %v11430, %v12265
      %v12395 = vld [vmem:[%s6] sm:$0x1]
      %v12397 = vperm.slane %v12395, 0
      %v12399 = vadd.f32 %v12267, %v12397
      %v12400 = vadd.f32 %v12268, %v12397
      %v12401 = vadd.f32 %v12269, %v12397
      %v12402 = vadd.f32 %v12270, %v12397
      %v12403 = vadd.f32 %v12271, %v12397
      %v12404 = vadd.f32 %v12272, %v12397
      %v12405 = vadd.f32 %v12273, %v12397
      %v12406 = vadd.f32 %v12274, %v12397
      %v12407 = vadd.f32 %v12275, %v12397
      %v12408 = vadd.f32 %v12276, %v12397
      %v12409 = vadd.f32 %v12277, %v12397
      %v12410 = vadd.f32 %v12278, %v12397
      %v12411 = vadd.f32 %v12279, %v12397
      %v12412 = vadd.f32 %v12280, %v12397
      %v12413 = vadd.f32 %v12281, %v12397
      %v12414 = vadd.f32 %v12282, %v12397
      %v12415 = vadd.f32 %v12283, %v12397
      %v12416 = vadd.f32 %v12284, %v12397
      %v12417 = vadd.f32 %v12285, %v12397
      %v12418 = vadd.f32 %v12286, %v12397
      %v12419 = vadd.f32 %v12287, %v12397
      %v12420 = vadd.f32 %v12288, %v12397
      %v12421 = vadd.f32 %v12289, %v12397
      %v12422 = vadd.f32 %v12290, %v12397
      %v12423 = vadd.f32 %v12291, %v12397
      %v12424 = vadd.f32 %v12292, %v12397
      %v12425 = vadd.f32 %v12293, %v12397
      %v12426 = vadd.f32 %v12294, %v12397
      %v12427 = vadd.f32 %v12295, %v12397
      %v12428 = vadd.f32 %v12296, %v12397
      %v12429 = vadd.f32 %v12297, %v12397
      %v12430 = vadd.f32 %v12298, %v12397
      %v12431 = vadd.f32 %v12299, %v12397
      %v12432 = vadd.f32 %v12300, %v12397
      %v12433 = vadd.f32 %v12301, %v12397
      %v12434 = vadd.f32 %v12302, %v12397
      %v12435 = vadd.f32 %v12303, %v12397
      %v12436 = vadd.f32 %v12304, %v12397
      %v12437 = vadd.f32 %v12305, %v12397
      %v12438 = vadd.f32 %v12306, %v12397
      %v12439 = vadd.f32 %v12307, %v12397
      %v12440 = vadd.f32 %v12308, %v12397
      %v12441 = vadd.f32 %v12309, %v12397
      %v12442 = vadd.f32 %v12310, %v12397
      %v12443 = vadd.f32 %v12311, %v12397
      %v12444 = vadd.f32 %v12312, %v12397
      %v12445 = vadd.f32 %v12313, %v12397
      %v12446 = vadd.f32 %v12314, %v12397
      %v12447 = vadd.f32 %v12315, %v12397
      %v12448 = vadd.f32 %v12316, %v12397
      %v12449 = vadd.f32 %v12317, %v12397
      %v12450 = vadd.f32 %v12318, %v12397
      %v12451 = vadd.f32 %v12319, %v12397
      %v12452 = vadd.f32 %v12320, %v12397
      %v12453 = vadd.f32 %v12321, %v12397
      %v12454 = vadd.f32 %v12322, %v12397
      %v12455 = vadd.f32 %v12323, %v12397
      %v12456 = vadd.f32 %v12324, %v12397
      %v12457 = vadd.f32 %v12325, %v12397
      %v12458 = vadd.f32 %v12326, %v12397
      %v12459 = vadd.f32 %v12327, %v12397
      %v12460 = vadd.f32 %v12328, %v12397
      %v12461 = vadd.f32 %v12329, %v12397
      %v12462 = vadd.f32 %v12330, %v12397
      %v12463 = vadd.f32 %v12331, %v12397
      %v12464 = vadd.f32 %v12332, %v12397
      %v12465 = vadd.f32 %v12333, %v12397
      %v12466 = vadd.f32 %v12334, %v12397
      %v12467 = vadd.f32 %v12335, %v12397
      %v12468 = vadd.f32 %v12336, %v12397
      %v12469 = vadd.f32 %v12337, %v12397
      %v12470 = vadd.f32 %v12338, %v12397
      %v12471 = vadd.f32 %v12339, %v12397
      %v12472 = vadd.f32 %v12340, %v12397
      %v12473 = vadd.f32 %v12341, %v12397
      %v12474 = vadd.f32 %v12342, %v12397
      %v12475 = vadd.f32 %v12343, %v12397
      %v12476 = vadd.f32 %v12344, %v12397
      %v12477 = vadd.f32 %v12345, %v12397
      %v12478 = vadd.f32 %v12346, %v12397
      %v12479 = vadd.f32 %v12347, %v12397
      %v12480 = vadd.f32 %v12348, %v12397
      %v12481 = vadd.f32 %v12349, %v12397
      %v12482 = vadd.f32 %v12350, %v12397
      %v12483 = vadd.f32 %v12351, %v12397
      %v12484 = vadd.f32 %v12352, %v12397
      %v12485 = vadd.f32 %v12353, %v12397
      %v12486 = vadd.f32 %v12354, %v12397
      %v12487 = vadd.f32 %v12355, %v12397
      %v12488 = vadd.f32 %v12356, %v12397
      %v12489 = vadd.f32 %v12357, %v12397
      %v12490 = vadd.f32 %v12358, %v12397
      %v12491 = vadd.f32 %v12359, %v12397
      %v12492 = vadd.f32 %v12360, %v12397
      %v12493 = vadd.f32 %v12361, %v12397
      %v12494 = vadd.f32 %v12362, %v12397
      %v12495 = vadd.f32 %v12363, %v12397
      %v12496 = vadd.f32 %v12364, %v12397
      %v12497 = vadd.f32 %v12365, %v12397
      %v12498 = vadd.f32 %v12366, %v12397
      %v12499 = vadd.f32 %v12367, %v12397
      %v12500 = vadd.f32 %v12368, %v12397
      %v12501 = vadd.f32 %v12369, %v12397
      %v12502 = vadd.f32 %v12370, %v12397
      %v12503 = vadd.f32 %v12371, %v12397
      %v12504 = vadd.f32 %v12372, %v12397
      %v12505 = vadd.f32 %v12373, %v12397
      %v12506 = vadd.f32 %v12374, %v12397
      %v12507 = vadd.f32 %v12375, %v12397
      %v12508 = vadd.f32 %v12376, %v12397
      %v12509 = vadd.f32 %v12377, %v12397
      %v12510 = vadd.f32 %v12378, %v12397
      %v12511 = vadd.f32 %v12379, %v12397
      %v12512 = vadd.f32 %v12380, %v12397
      %v12513 = vadd.f32 %v12381, %v12397
      %v12514 = vadd.f32 %v12382, %v12397
      %v12515 = vadd.f32 %v12383, %v12397
      %v12516 = vadd.f32 %v12384, %v12397
      %v12517 = vadd.f32 %v12385, %v12397
      %v12518 = vadd.f32 %v12386, %v12397
      %v12519 = vadd.f32 %v12387, %v12397
      %v12520 = vadd.f32 %v12388, %v12397
      %v12521 = vadd.f32 %v12389, %v12397
      %v12522 = vadd.f32 %v12390, %v12397
      %v12523 = vadd.f32 %v12391, %v12397
      %v12524 = vadd.f32 %v12392, %v12397
      %v12525 = vadd.f32 %v12393, %v12397
      %v12526 = vadd.f32 %v12394, %v12397
      %12527 = vst.msk [vmem:[%s466] sm:$0xff] %vm826, %v12399
      %12528 = vst.msk [vmem:[%s466 + $0x8] sm:$0xff] %vm826, %v12400
      %12529 = vst.msk [vmem:[%s466 + $0x10] sm:$0xff] %vm826, %v12401
      %12530 = vst.msk [vmem:[%s466 + $0x18] sm:$0xff] %vm826, %v12402
      %12531 = vst.msk [vmem:[%s466 + $0x20] sm:$0xff] %vm826, %v12403
      %12532 = vst.msk [vmem:[%s466 + $0x28] sm:$0xff] %vm826, %v12404
      %12533 = vst.msk [vmem:[%s466 + $0x30] sm:$0xff] %vm826, %v12405
      %12534 = vst.msk [vmem:[%s466 + $0x38] sm:$0xff] %vm826, %v12406
      %12535 = vst.msk [vmem:[%s466 + $0x40] sm:$0xff] %vm826, %v12407
      %12536 = vst.msk [vmem:[%s466 + $0x48] sm:$0xff] %vm826, %v12408
      %12537 = vst.msk [vmem:[%s466 + $0x50] sm:$0xff] %vm826, %v12409
      %12538 = vst.msk [vmem:[%s466 + $0x58] sm:$0xff] %vm826, %v12410
      %12539 = vst.msk [vmem:[%s466 + $0x60] sm:$0xff] %vm826, %v12411
      %12540 = vst.msk [vmem:[%s466 + $0x68] sm:$0xff] %vm826, %v12412
      %12541 = vst.msk [vmem:[%s466 + $0x70] sm:$0xff] %vm826, %v12413
      %12542 = vst.msk [vmem:[%s466 + $0x78] sm:$0xff] %vm826, %v12414
      %12543 = vst.msk [vmem:[%s466 + $0x80] sm:$0xff] %vm826, %v12415
      %12544 = vst.msk [vmem:[%s466 + $0x88] sm:$0xff] %vm826, %v12416
      %12545 = vst.msk [vmem:[%s466 + $0x90] sm:$0xff] %vm826, %v12417
      %12546 = vst.msk [vmem:[%s466 + $0x98] sm:$0xff] %vm826, %v12418
      %12547 = vst.msk [vmem:[%s466 + $0xa0] sm:$0xff] %vm826, %v12419
      %12548 = vst.msk [vmem:[%s466 + $0xa8] sm:$0xff] %vm826, %v12420
      %12549 = vst.msk [vmem:[%s466 + $0xb0] sm:$0xff] %vm826, %v12421
      %12550 = vst.msk [vmem:[%s466 + $0xb8] sm:$0xff] %vm826, %v12422
      %12551 = vst.msk [vmem:[%s466 + $0xc0] sm:$0xff] %vm826, %v12423
      %12552 = vst.msk [vmem:[%s466 + $0xc8] sm:$0xff] %vm826, %v12424
      %12553 = vst.msk [vmem:[%s466 + $0xd0] sm:$0xff] %vm826, %v12425
      %12554 = vst.msk [vmem:[%s466 + $0xd8] sm:$0xff] %vm826, %v12426
      %12555 = vst.msk [vmem:[%s466 + $0xe0] sm:$0xff] %vm826, %v12427
      %12556 = vst.msk [vmem:[%s466 + $0xe8] sm:$0xff] %vm826, %v12428
      %12557 = vst.msk [vmem:[%s466 + $0xf0] sm:$0xff] %vm826, %v12429
      %12558 = vst.msk [vmem:[%s466 + $0xf8] sm:$0xff] %vm826, %v12430
      %12559 = vst.msk [vmem:[%s466 + $0x100] sm:$0xff] %vm826, %v12431
      %12560 = vst.msk [vmem:[%s466 + $0x108] sm:$0xff] %vm826, %v12432
      %12561 = vst.msk [vmem:[%s466 + $0x110] sm:$0xff] %vm826, %v12433
      %12562 = vst.msk [vmem:[%s466 + $0x118] sm:$0xff] %vm826, %v12434
      %12563 = vst.msk [vmem:[%s466 + $0x120] sm:$0xff] %vm826, %v12435
      %12564 = vst.msk [vmem:[%s466 + $0x128] sm:$0xff] %vm826, %v12436
      %12565 = vst.msk [vmem:[%s466 + $0x130] sm:$0xff] %vm826, %v12437
      %12566 = vst.msk [vmem:[%s466 + $0x138] sm:$0xff] %vm826, %v12438
      %12567 = vst.msk [vmem:[%s466 + $0x140] sm:$0xff] %vm826, %v12439
      %12568 = vst.msk [vmem:[%s466 + $0x148] sm:$0xff] %vm826, %v12440
      %12569 = vst.msk [vmem:[%s466 + $0x150] sm:$0xff] %vm826, %v12441
      %12570 = vst.msk [vmem:[%s466 + $0x158] sm:$0xff] %vm826, %v12442
      %12571 = vst.msk [vmem:[%s466 + $0x160] sm:$0xff] %vm826, %v12443
      %12572 = vst.msk [vmem:[%s466 + $0x168] sm:$0xff] %vm826, %v12444
      %12573 = vst.msk [vmem:[%s466 + $0x170] sm:$0xff] %vm826, %v12445
      %12574 = vst.msk [vmem:[%s466 + $0x178] sm:$0xff] %vm826, %v12446
      %12575 = vst.msk [vmem:[%s466 + $0x180] sm:$0xff] %vm826, %v12447
      %12576 = vst.msk [vmem:[%s466 + $0x188] sm:$0xff] %vm826, %v12448
      %12577 = vst.msk [vmem:[%s466 + $0x190] sm:$0xff] %vm826, %v12449
      %12578 = vst.msk [vmem:[%s466 + $0x198] sm:$0xff] %vm826, %v12450
      %12579 = vst.msk [vmem:[%s466 + $0x1a0] sm:$0xff] %vm826, %v12451
      %12580 = vst.msk [vmem:[%s466 + $0x1a8] sm:$0xff] %vm826, %v12452
      %12581 = vst.msk [vmem:[%s466 + $0x1b0] sm:$0xff] %vm826, %v12453
      %12582 = vst.msk [vmem:[%s466 + $0x1b8] sm:$0xff] %vm826, %v12454
      %12583 = vst.msk [vmem:[%s466 + $0x1c0] sm:$0xff] %vm826, %v12455
      %12584 = vst.msk [vmem:[%s466 + $0x1c8] sm:$0xff] %vm826, %v12456
      %12585 = vst.msk [vmem:[%s466 + $0x1d0] sm:$0xff] %vm826, %v12457
      %12586 = vst.msk [vmem:[%s466 + $0x1d8] sm:$0xff] %vm826, %v12458
      %12587 = vst.msk [vmem:[%s466 + $0x1e0] sm:$0xff] %vm826, %v12459
      %12588 = vst.msk [vmem:[%s466 + $0x1e8] sm:$0xff] %vm826, %v12460
      %12589 = vst.msk [vmem:[%s466 + $0x1f0] sm:$0xff] %vm826, %v12461
      %12590 = vst.msk [vmem:[%s466 + $0x1f8] sm:$0xff] %vm826, %v12462
      %12591 = vst.msk [vmem:[%s466 + $0x200] sm:$0xff] %vm826, %v12463
      %12592 = vst.msk [vmem:[%s466 + $0x208] sm:$0xff] %vm826, %v12464
      %12593 = vst.msk [vmem:[%s466 + $0x210] sm:$0xff] %vm826, %v12465
      %12594 = vst.msk [vmem:[%s466 + $0x218] sm:$0xff] %vm826, %v12466
      %12595 = vst.msk [vmem:[%s466 + $0x220] sm:$0xff] %vm826, %v12467
      %12596 = vst.msk [vmem:[%s466 + $0x228] sm:$0xff] %vm826, %v12468
      %12597 = vst.msk [vmem:[%s466 + $0x230] sm:$0xff] %vm826, %v12469
      %12598 = vst.msk [vmem:[%s466 + $0x238] sm:$0xff] %vm826, %v12470
      %12599 = vst.msk [vmem:[%s466 + $0x240] sm:$0xff] %vm826, %v12471
      %12600 = vst.msk [vmem:[%s466 + $0x248] sm:$0xff] %vm826, %v12472
      %12601 = vst.msk [vmem:[%s466 + $0x250] sm:$0xff] %vm826, %v12473
      %12602 = vst.msk [vmem:[%s466 + $0x258] sm:$0xff] %vm826, %v12474
      %12603 = vst.msk [vmem:[%s466 + $0x260] sm:$0xff] %vm826, %v12475
      %12604 = vst.msk [vmem:[%s466 + $0x268] sm:$0xff] %vm826, %v12476
      %12605 = vst.msk [vmem:[%s466 + $0x270] sm:$0xff] %vm826, %v12477
      %12606 = vst.msk [vmem:[%s466 + $0x278] sm:$0xff] %vm826, %v12478
      %12607 = vst.msk [vmem:[%s466 + $0x280] sm:$0xff] %vm826, %v12479
      %12608 = vst.msk [vmem:[%s466 + $0x288] sm:$0xff] %vm826, %v12480
      %12609 = vst.msk [vmem:[%s466 + $0x290] sm:$0xff] %vm826, %v12481
      %12610 = vst.msk [vmem:[%s466 + $0x298] sm:$0xff] %vm826, %v12482
      %12611 = vst.msk [vmem:[%s466 + $0x2a0] sm:$0xff] %vm826, %v12483
      %12612 = vst.msk [vmem:[%s466 + $0x2a8] sm:$0xff] %vm826, %v12484
      %12613 = vst.msk [vmem:[%s466 + $0x2b0] sm:$0xff] %vm826, %v12485
      %12614 = vst.msk [vmem:[%s466 + $0x2b8] sm:$0xff] %vm826, %v12486
      %12615 = vst.msk [vmem:[%s466 + $0x2c0] sm:$0xff] %vm826, %v12487
      %12616 = vst.msk [vmem:[%s466 + $0x2c8] sm:$0xff] %vm826, %v12488
      %12617 = vst.msk [vmem:[%s466 + $0x2d0] sm:$0xff] %vm826, %v12489
      %12618 = vst.msk [vmem:[%s466 + $0x2d8] sm:$0xff] %vm826, %v12490
      %12619 = vst.msk [vmem:[%s466 + $0x2e0] sm:$0xff] %vm826, %v12491
      %12620 = vst.msk [vmem:[%s466 + $0x2e8] sm:$0xff] %vm826, %v12492
      %12621 = vst.msk [vmem:[%s466 + $0x2f0] sm:$0xff] %vm826, %v12493
      %12622 = vst.msk [vmem:[%s466 + $0x2f8] sm:$0xff] %vm826, %v12494
      %12623 = vst.msk [vmem:[%s466 + $0x300] sm:$0xff] %vm826, %v12495
      %12624 = vst.msk [vmem:[%s466 + $0x308] sm:$0xff] %vm826, %v12496
      %12625 = vst.msk [vmem:[%s466 + $0x310] sm:$0xff] %vm826, %v12497
      %12626 = vst.msk [vmem:[%s466 + $0x318] sm:$0xff] %vm826, %v12498
      %12627 = vst.msk [vmem:[%s466 + $0x320] sm:$0xff] %vm826, %v12499
      %12628 = vst.msk [vmem:[%s466 + $0x328] sm:$0xff] %vm826, %v12500
      %12629 = vst.msk [vmem:[%s466 + $0x330] sm:$0xff] %vm826, %v12501
      %12630 = vst.msk [vmem:[%s466 + $0x338] sm:$0xff] %vm826, %v12502
      %12631 = vst.msk [vmem:[%s466 + $0x340] sm:$0xff] %vm826, %v12503
      %12632 = vst.msk [vmem:[%s466 + $0x348] sm:$0xff] %vm826, %v12504
      %12633 = vst.msk [vmem:[%s466 + $0x350] sm:$0xff] %vm826, %v12505
      %12634 = vst.msk [vmem:[%s466 + $0x358] sm:$0xff] %vm826, %v12506
      %12635 = vst.msk [vmem:[%s466 + $0x360] sm:$0xff] %vm826, %v12507
      %12636 = vst.msk [vmem:[%s466 + $0x368] sm:$0xff] %vm826, %v12508
      %12637 = vst.msk [vmem:[%s466 + $0x370] sm:$0xff] %vm826, %v12509
      %12638 = vst.msk [vmem:[%s466 + $0x378] sm:$0xff] %vm826, %v12510
      %12639 = vst.msk [vmem:[%s466 + $0x380] sm:$0xff] %vm826, %v12511
      %12640 = vst.msk [vmem:[%s466 + $0x388] sm:$0xff] %vm826, %v12512
      %12641 = vst.msk [vmem:[%s466 + $0x390] sm:$0xff] %vm826, %v12513
      %12642 = vst.msk [vmem:[%s466 + $0x398] sm:$0xff] %vm826, %v12514
      %12643 = vst.msk [vmem:[%s466 + $0x3a0] sm:$0xff] %vm826, %v12515
      %12644 = vst.msk [vmem:[%s466 + $0x3a8] sm:$0xff] %vm826, %v12516
      %12645 = vst.msk [vmem:[%s466 + $0x3b0] sm:$0xff] %vm826, %v12517
      %12646 = vst.msk [vmem:[%s466 + $0x3b8] sm:$0xff] %vm826, %v12518
      %12647 = vst.msk [vmem:[%s466 + $0x3c0] sm:$0xff] %vm826, %v12519
      %12648 = vst.msk [vmem:[%s466 + $0x3c8] sm:$0xff] %vm826, %v12520
      %12649 = vst.msk [vmem:[%s466 + $0x3d0] sm:$0xff] %vm826, %v12521
      %12650 = vst.msk [vmem:[%s466 + $0x3d8] sm:$0xff] %vm826, %v12522
      %12651 = vst.msk [vmem:[%s466 + $0x3e0] sm:$0xff] %vm826, %v12523
      %12652 = vst.msk [vmem:[%s466 + $0x3e8] sm:$0xff] %vm826, %v12524
      %12653 = vst.msk [vmem:[%s466 + $0x3f0] sm:$0xff] %vm826, %v12525
      %12654 = vst.msk [vmem:[%s466 + $0x3f8] sm:$0xff] %vm826, %v12526
      %s12655 = smul.u32 32, %s23
      %p12656 = scmp.lt.s32.totalorder %s22, 1
      %s12657 = scalar_select %p12656, %s22, 1
      %p12658 = scmp.lt.s32.totalorder %s12655, 31
      %s12659 = scalar_select %p12658, %s12655, 31
      %s12660 = smul.addr %s12659, 4
      %s12661 = smul.addr %s12657, 128
      %s12662 = sadd.s32 %s12660, %s12661
      %s12663 = smul.addr %s12662, 8
      %s12664 = scalar_lea.vmem %s7, %s12663
      // Predicated region
      $region49: #{complex_conv_transpose2d.1} parent=47 // pred_check
        %p12665 = pneg %p233
      $region50: #{complex_conv_transpose2d.1} parent=47 // pred_check_branch
        %12667 = sbr.rel (%p12665) target = $region52
      $region51: #{complex_conv_transpose2d.1} parent=47 // pred_region
        %s12668 = smul.u32 32, %s23
      $region52: #{complex_conv_transpose2d.1} parent=47 // pred_fallthru
        _
    $region48: #{complex_conv_transpose2d.1} parent=5 // pred_fallthru
      _
    %p12669 = scmp.le.s32.totalorder 2, %s13
    // Predicated region
    $region53: #{complex_conv_transpose2d.1} parent=5 // pred_check
      %p12670 = pneg %p12669
    $region54: #{complex_conv_transpose2d.1} parent=5 // pred_check_branch
      %12672 = sbr.rel (%p12670) target = $region56
    $region55: #{complex_conv_transpose2d.1} parent=5 // pred_region
      %s12673 = ssub.s32 %s13, 2
      // Predicated region
      $region57: #{complex_conv_transpose2d.1} parent=55 // pred_check
        %p12674 = pneg %p239
      $region58: #{complex_conv_transpose2d.1} parent=55 // pred_check_branch
        %12676 = sbr.rel (%p12674) target = $region60
      $region59: #{complex_conv_transpose2d.1} parent=55 // pred_region
        %s12677 = smul.u32 32, %s25
        %p12678 = scmp.lt.s32.totalorder %s24, 1
        %s12679 = scalar_select %p12678, %s24, 1
        %p12680 = scmp.lt.s32.totalorder %s12677, 31
        %s12681 = scalar_select %p12680, %s12677, 31
        %s12682 = smul.addr %s12681, 4
        %s12683 = smul.addr %s12679, 128
        %s12684 = sadd.s32 %s12682, %s12683
        %s12685 = smul.addr %s12684, 8
        %s12686 = scalar_lea.vmem %s7, %s12685
      $region60: #{complex_conv_transpose2d.1} parent=55 // pred_fallthru
        _
    $region56: #{complex_conv_transpose2d.1} parent=5 // pred_fallthru
      _
  $region6: #{complex_conv_transpose2d.1} parent=0 // loop_footer
    %s17 = sadd.s32 1, %s13
  $region7: #{complex_conv_transpose2d.1} parent=0 // loop_footer_branch
    %12 = sbr.rel target = $region3
  $region8: #{complex_conv_transpose2d.1} parent=0 // loop_exit
    _

</llo_original>
